<compile_context>
chip_gen: v5e
topology: v5e:2x2
jax: 0.10.0
libtpu: 0.0.40
codegen_flags: <defaults>
</compile_context>

<pallas_src>
import functools
import math

import numpy as np
import jax
import jax.numpy as jnp
from jax.experimental import pallas as pl

# ---------------- model config (matches the PyTorch module instantiation) ----------------
MODEL_MAX_SENSORS = 4
SEQ_LEN = 16
SENSOR_INPUT_DIM = 1
TCN_PROJ_DIM = 16          # sensor_tcn_proj_dim
TCN_OUT_DIM = 32           # sensor_tcn_out_dim (== transformer_d_model -> Identity proj)
TCN_LEVELS = 2
TCN_KERNEL = 3
D_MODEL = 32               # transformer_d_model
NHEAD = 4
NLAYERS = 2
NUM_EXPERTS = 4
MOE_HIDDEN = 32
MOE_OUT = 32
PRED_H = 3
FAIL_H = 2
TOP_K = 2
EFF_K = min(TOP_K, NUM_EXPERTS)
AUX_COEFF = 0.01
LN_EPS = 1e-5
NEG_INF = -1e9


# ---------------- small in-kernel helpers (pure value functions) ----------------
def _ln(x, g, b, eps=LN_EPS):
    mu = jnp.mean(x, axis=-1, keepdims=True)
    var = jnp.mean((x - mu) ** 2, axis=-1, keepdims=True)
    return (x - mu) * jax.lax.rsqrt(var + eps) * g + b


def _top2_route(logits, expert_outs, n_experts, tok_mask, n_tok_static):
    """Top-2 expert routing + load-balance aux loss (matches _apply_moe_topk, eval)."""
    idx = jax.lax.broadcasted_iota(jnp.int32, logits.shape, 1).astype(jnp.float32)
    big = jnp.float32(n_experts)
    v1 = jnp.max(logits, axis=-1, keepdims=True)
    i1 = jnp.min(jnp.where(logits >= v1, idx, big), axis=-1, keepdims=True)
    oh1 = (idx == i1).astype(jnp.float32)
    l2 = jnp.where(oh1 > 0.5, -1e30, logits)
    v2 = jnp.max(l2, axis=-1, keepdims=True)
    i2 = jnp.min(jnp.where(l2 >= v2, idx, big), axis=-1, keepdims=True)
    oh2 = (idx == i2).astype(jnp.float32)

    # softmax over the two selected logits (v1 >= v2)
    e2 = jnp.exp(v2 - v1)
    inv = 1.0 / (1.0 + e2)
    w1, w2 = inv, e2 * inv

    y = None
    for e in range(n_experts):
        ce = w1 * oh1[:, e:e + 1] + w2 * oh2[:, e:e + 1]          # (N, 1)
        contrib = ce * expert_outs[e]
        y = contrib if y is None else y + contrib

    # load-balance auxiliary loss
    pz = jnp.exp(logits - v1)
    rp = pz / jnp.sum(pz, axis=-1, keepdims=True)                 # router softmax
    sel = oh1 + oh2                                               # top-2 indicator
    if tok_mask is None:
        denom = jnp.float32(max(n_tok_static, 1))
        avg_rp = jnp.sum(rp, axis=0, keepdims=True) / denom
        frac = jnp.sum(sel, axis=0, keepdims=True) / (denom * float(EFF_K))
    else:
        nv = jnp.maximum(jnp.sum(tok_mask, axis=0, keepdims=True), 1.0)
        avg_rp = jnp.sum(rp * tok_mask, axis=0, keepdims=True) / nv
        frac = jnp.sum(sel * tok_mask, axis=0, keepdims=True) / (nv * float(EFF_K))
    lb = jnp.float32(n_experts) * jnp.sum(avg_rp * frac, axis=-1, keepdims=True)   # (1,1)
    return y, lb


# ---------------- kernel A: per-sensor TCN encoder ----------------
def _tcn_kernel(x_ref, mask_ref, pe_ref, shift_ref, pool_ref, lastsel_ref,
                w_in_ref, b_in_ref,
                w1a_ref, b1a_ref, w1b_ref, b1b_ref, wd_ref, bd_ref,
                w2a_ref, b2a_ref, w2b_ref, b2b_ref,
                g_ref, beta_ref,
                pooled_ref, last_ref, *, kernel_size, shift_index):
    # input projection (K == 1 -> broadcast multiply-add) + positional encoding
    h = x_ref[...] * w_in_ref[...] + b_in_ref[...] + pe_ref[...]          # (NL, P)

    def conv(hin, w_ref, b_ref, dilation):
        acc = None
        for j in range(kernel_size):
            p = jnp.dot(hin, w_ref[j], preferred_element_type=jnp.float32)
            s = (kernel_size - 1 - j) * dilation
            if s > 0:
                # causal shift with zero fill inside each sequence (constant matmul)
                p = jnp.dot(shift_ref[shift_index[s]], p,
                            preferred_element_type=jnp.float32)
            acc = p if acc is None else acc + p
        return jnp.maximum(acc + b_ref[...], 0.0)                         # bias + ReLU

    # TemporalBlock 1 (dilation 1, 1x1-conv downsample residual)
    o = conv(h, w1a_ref, b1a_ref, 1)
    o = conv(o, w1b_ref, b1b_ref, 1)
    res = jnp.dot(h, wd_ref[...], preferred_element_type=jnp.float32) + bd_ref[...]
    h = jnp.maximum(o + res, 0.0)

    # TemporalBlock 2 (dilation 2, identity residual)
    o = conv(h, w2a_ref, b2a_ref, 2)
    o = conv(o, w2b_ref, b2b_ref, 2)
    h = jnp.maximum(o + h, 0.0)

    # final LayerNorm over channels
    h = _ln(h, g_ref[...], beta_ref[...])

    # masked mean over time + last-timestep features, via constant selector matmuls
    m = mask_ref[...]                                                     # (N, 1)
    pooled_ref[...] = jnp.dot(pool_ref[...], h, preferred_element_type=jnp.float32) * m
    last_ref[...] = jnp.dot(lastsel_ref[...], h, preferred_element_type=jnp.float32) * m


# ---------------- kernel B: NLAYERS pre-norm transformer encoder ----------------
def _encoder_kernel(x_ref, bias_ref,
                    ln1g_ref, ln1b_ref, wqkv_ref, bqkv_ref, wo_ref, bo_ref,
                    ln2g_ref, ln2b_ref, wf1_ref, bf1_ref, wf2_ref, bf2_ref,
                    o_ref, *, nlayers, nhead):
    x = x_ref[...]                                                        # (T, D)
    d = x.shape[-1]
    hd = d // nhead
    scale = 1.0 / math.sqrt(hd)
    bias = bias_ref[...]                                                  # (T, T)
    for l in range(nlayers):
        # --- self-attention block (pre-norm) ---
        h = _ln(x, ln1g_ref[l], ln1b_ref[l])
        qkv = jnp.dot(h, wqkv_ref[l], preferred_element_type=jnp.float32) + bqkv_ref[l]
        wo_l = wo_ref[l]
        attn = None
        for hh in range(nhead):
            q = qkv[:, hh * hd:(hh + 1) * hd]
            k = qkv[:, d + hh * hd: d + (hh + 1) * hd]
            v = qkv[:, 2 * d + hh * hd: 2 * d + (hh + 1) * hd]
            s = jax.lax.dot_general(q, k, (((1,), (1,)), ((), ())),
                                    preferred_element_type=jnp.float32) * scale + bias
            s = s - jnp.max(s, axis=-1, keepdims=True)
            p = jnp.exp(s)
            p = p * pl.reciprocal(jnp.sum(p, axis=-1, keepdims=True), approx=True)
            head = jnp.dot(p, v, preferred_element_type=jnp.float32)      # (T, hd)
            # fold the head-concat into a row-block of the output projection
            contrib = jnp.dot(head, wo_l[hh * hd:(hh + 1) * hd, :],
                              preferred_element_type=jnp.float32)
            attn = contrib if attn is None else attn + contrib
        x = x + attn + bo_ref[l]
        # --- feed-forward block (pre-norm, ReLU, dim_ff = 2*D) ---
        h = _ln(x, ln2g_ref[l], ln2b_ref[l])
        f = jnp.maximum(jnp.dot(h, wf1_ref[l], preferred_element_type=jnp.float32)
                        + bf1_ref[l], 0.0)
        f = jnp.dot(f, wf2_ref[l], preferred_element_type=jnp.float32) + bf2_ref[l]
        x = x + f
    o_ref[...] = x


# ---------------- kernel C: output norm + MoE (3 gates, 4 experts) + heads ----------------
def _heads_kernel(h_ref, tcn_last_ref, mask_ref, lastval_ref, bsum_ref, bexp_ref,
                  on_g_ref, on_b_ref,
                  gf_w_ref, gf_b_ref, ga_w_ref, ga_b_ref, gr_w_ref, gr_b_ref,
                  e_w1_ref, e_b1_ref, e_w2_ref, e_b2_ref,
                  pred_w_ref, pred_b_ref, fail_w_ref, fail_b_ref,
                  rca_w_ref, rca_b_ref,
                  pred_ref, fail_ref, rca_ref, aux_ref,
                  *, n_batch, n_experts, moe_hidden, d_model):
    mask = mask_ref[...]                                                  # (T, 1)
    ctx = _ln(h_ref[...], on_g_ref[...], on_b_ref[...])                   # output_norm
    ctx_m = ctx * mask                                                    # (T, D)

    # masked per-batch mean / std over sensors (constant batch-sum matmul)
    bsum = bsum_ref[...]                                                  # (B, T)
    active = jnp.maximum(jnp.dot(bsum, mask, preferred_element_type=jnp.float32), 1.0)
    mean_ctx = jnp.dot(bsum, ctx_m, preferred_element_type=jnp.float32) / active
    mean_sq = jnp.dot(bsum, ctx_m * ctx_m * mask,
                      preferred_element_type=jnp.float32) / active
    std_ctx = jnp.sqrt(jnp.maximum(mean_sq - mean_ctx * mean_ctx, 1e-6))

    # gate logits; router input [mean | std] realized as row-blocked matmuls (no concat)
    gf_w, ga_w = gf_w_ref[...], ga_w_ref[...]
    lg_f = (jnp.dot(mean_ctx, gf_w[:d_model], preferred_element_type=jnp.float32)
            + jnp.dot(std_ctx, gf_w[d_model:], preferred_element_type=jnp.float32)
            + gf_b_ref[...])
    lg_a = (jnp.dot(mean_ctx, ga_w[:d_model], preferred_element_type=jnp.float32)
            + jnp.dot(std_ctx, ga_w[d_model:], preferred_element_type=jnp.float32)
            + ga_b_ref[...])
    lg_r = jnp.dot(ctx_m, gr_w_ref[...], preferred_element_type=jnp.float32) + gr_b_ref[...]

    # shared experts: first layer of all 4 experts batched into one (D, E*H) matmul
    e_w1, e_b1 = e_w1_ref[...], e_b1_ref[...]

    def run_experts(xin):
        hid = jnp.maximum(jnp.dot(xin, e_w1, preferred_element_type=jnp.float32) + e_b1, 0.0)
        outs = []
        for e in range(n_experts):
            he = hid[:, e * moe_hidden:(e + 1) * moe_hidden]
            outs.append(jnp.dot(he, e_w2_ref[e], preferred_element_type=jnp.float32)
                        + e_b2_ref[e])
        return outs

    out_g = run_experts(mean_ctx)        # shared by forecast / fail MoE (same expert input)
    out_r = run_experts(ctx_m)           # per-token RCA MoE

    moe_f, aux_f = _top2_route(lg_f, out_g, n_experts, None, n_batch)
    moe_a, aux_a = _top2_route(lg_a, out_g, n_experts, None, n_batch)
    moe_r, aux_r = _top2_route(lg_r, out_r, n_experts, mask, 0)
    moe_r = moe_r * mask                 # padded tokens get zero MoE output (torch semantics)

    aux_ref[...] = AUX_COEFF * (aux_f + aux_a + aux_r)                    # (1, 1)

    # fail head (on the fail-MoE output)
    fail_ref[...] = (jnp.dot(moe_a, fail_w_ref[...], preferred_element_type=jnp.float32)
                     + fail_b_ref[...])

    # pred head: [tcn_last | ctx_masked | broadcast(moe_forecast)] via row-blocked matmuls
    tcn_last = tcn_last_ref[...]
    moe_f_tok = jnp.dot(bexp_ref[...], moe_f, preferred_element_type=jnp.float32)  # (T, O)
    pred_w = pred_w_ref[...]
    delta = (jnp.dot(tcn_last, pred_w[:d_model], preferred_element_type=jnp.float32)
             + jnp.dot(ctx_m, pred_w[d_model:2 * d_model], preferred_element_type=jnp.float32)
             + jnp.dot(moe_f_tok, pred_w[2 * d_model:], preferred_element_type=jnp.float32)
             + pred_b_ref[...])
    pred_ref[...] = (lastval_ref[...] + delta) * mask

    # rca head: [tcn_last | ctx_masked | moe_rca]
    rca_w = rca_w_ref[...]
    rca_ref[...] = (jnp.dot(tcn_last, rca_w[:d_model], preferred_element_type=jnp.float32)
                    + jnp.dot(ctx_m, rca_w[d_model:2 * d_model], preferred_element_type=jnp.float32)
                    + jnp.dot(moe_r, rca_w[2 * d_model:], preferred_element_type=jnp.float32)
                    + rca_b_ref[...])


# ---------------- constant (shape-only) helper matrices ----------------
def _pool_matrices(n_seq, L):
    pool = np.zeros((n_seq, n_seq * L), np.float32)
    last = np.zeros((n_seq, n_seq * L), np.float32)
    for n in range(n_seq):
        pool[n, n * L:(n + 1) * L] = 1.0 / L
        last[n, n * L + L - 1] = 1.0
    return jnp.asarray(pool), jnp.asarray(last)


def _shift_matrices(n_seq, L, kernel_size, dilations):
    shifts = sorted({(kernel_size - 1 - j) * d
                     for d in dilations for j in range(kernel_size)} - {0})
    mats = np.zeros((len(shifts), n_seq * L, n_seq * L), np.float32)
    index = {}
    for si, s in enumerate(shifts):
        index[s] = si
        for n in range(n_seq):
            for t in range(s, L):
                mats[si, n * L + t, n * L + t - s] = 1.0
    return jnp.asarray(mats), index


def _batch_matrices(B, M):
    bsum = np.zeros((B, B * M), np.float32)
    for b in range(B):
        bsum[b, b * M:(b + 1) * M] = 1.0
    return jnp.asarray(bsum), jnp.asarray(bsum.T)


# ---------------- parameters (already in kernel-ready layout, all f32) ----------------
def init_params(key):
    keys = iter(jax.random.split(key, 128))

    def uniform(shape, bound):
        return jax.random.uniform(next(keys), shape, jnp.float32, -bound, bound)

    def linear(fan_in, fan_out):
        b = 1.0 / math.sqrt(fan_in)
        return uniform((fan_in, fan_out), b), uniform((1, fan_out), b)

    def conv(cin, cout, k):
        b = 1.0 / math.sqrt(cin * k)
        return uniform((k, cin, cout), b), uniform((1, cout), b)

    p = {}

    # ---- per-sensor TCN encoder ----
    w_in, b_in = linear(SENSOR_INPUT_DIM, TCN_PROJ_DIM)

    position = jnp.arange(SEQ_LEN, dtype=jnp.float32)[:, None]
    div_term = jnp.exp(jnp.arange(0, TCN_PROJ_DIM, 2, dtype=jnp.float32)
                       * (-math.log(10000.0) / TCN_PROJ_DIM))
    pe = jnp.zeros((SEQ_LEN, TCN_PROJ_DIM), jnp.float32)
    pe = pe.at[:, 0::2].set(jnp.sin(position * div_term))
    pe = pe.at[:, 1::2].set(jnp.cos(position * div_term))
    p["pe"] = pe

    w1a, b1a = conv(TCN_PROJ_DIM, TCN_OUT_DIM, TCN_KERNEL)
    w1b, b1b = conv(TCN_OUT_DIM, TCN_OUT_DIM, TCN_KERNEL)
    wd, bd = linear(TCN_PROJ_DIM, TCN_OUT_DIM)                 # 1x1 downsample conv
    w2a, b2a = conv(TCN_OUT_DIM, TCN_OUT_DIM, TCN_KERNEL)
    w2b, b2b = conv(TCN_OUT_DIM, TCN_OUT_DIM, TCN_KERNEL)
    p["tcn"] = dict(w_in=w_in, b_in=b_in,
                    w1a=w1a, b1a=b1a, w1b=w1b, b1b=b1b, wd=wd, bd=bd,
                    w2a=w2a, b2a=b2a, w2b=w2b, b2b=b2b,
                    ln_g=jnp.ones((1, TCN_OUT_DIM), jnp.float32),
                    ln_b=jnp.zeros((1, TCN_OUT_DIM), jnp.float32))

    # ---- inter-sensor transformer (per-layer weights stacked on a leading axis) ----
    p["pos_inter"] = jnp.zeros((1, MODEL_MAX_SENSORS, D_MODEL), jnp.float32)

    def stack(fn):
        ws, bs = zip(*[fn() for _ in range(NLAYERS)])
        return jnp.stack(ws), jnp.stack(bs)

    wqkv, bqkv = stack(lambda: linear(D_MODEL, 3 * D_MODEL))
    wo, bo = stack(lambda: linear(D_MODEL, D_MODEL))
    wf1, bf1 = stack(lambda: linear(D_MODEL, 2 * D_MODEL))
    wf2, bf2 = stack(lambda: linear(2 * D_MODEL, D_MODEL))
    ones = jnp.ones((NLAYERS, 1, D_MODEL), jnp.float32)
    zeros = jnp.zeros((NLAYERS, 1, D_MODEL), jnp.float32)
    p["enc"] = dict(ln1_g=ones, ln1_b=zeros, ln2_g=ones, ln2_b=zeros,
                    wqkv=wqkv, bqkv=bqkv, wo=wo, bo=bo,
                    wf1=wf1, bf1=bf1, wf2=wf2, bf2=bf2)

    # ---- MoE experts / gates / heads ----
    e_w1s, e_b1s, e_w2s, e_b2s = [], [], [], []
    for _ in range(NUM_EXPERTS):
        w1, b1 = linear(D_MODEL, MOE_HIDDEN)
        w2, b2 = linear(MOE_HIDDEN, MOE_OUT)
        e_w1s.append(w1); e_b1s.append(b1); e_w2s.append(w2); e_b2s.append(b2)
    e_w1 = jnp.concatenate(e_w1s, axis=1)                      # (D, E*H) = (32, 128)
    e_b1 = jnp.concatenate(e_b1s, axis=1)                      # (1, E*H)
    e_w2 = jnp.stack(e_w2s)                                    # (E, H, O)
    e_b2 = jnp.stack(e_b2s)                                    # (E, 1, O)

    gf_w, gf_b = linear(2 * D_MODEL, NUM_EXPERTS)
    ga_w, ga_b = linear(2 * D_MODEL, NUM_EXPERTS)
    gr_w, gr_b = linear(D_MODEL, NUM_EXPERTS)

    pred_w, pred_b = linear(TCN_OUT_DIM + D_MODEL + MOE_OUT, PRED_H)
    fail_w, fail_b = linear(MOE_OUT, FAIL_H)
    rca_w, rca_b = linear(TCN_OUT_DIM + D_MODEL + MOE_OUT, 1)

    p["heads"] = dict(on_g=jnp.ones((1, D_MODEL), jnp.float32),
                      on_b=jnp.zeros((1, D_MODEL), jnp.float32),
                      gf_w=gf_w, gf_b=gf_b, ga_w=ga_w, ga_b=ga_b, gr_w=gr_w, gr_b=gr_b,
                      e_w1=e_w1, e_b1=e_b1, e_w2=e_w2, e_b2=e_b2,
                      pred_w=pred_w, pred_b=pred_b, fail_w=fail_w, fail_b=fail_b,
                      rca_w=rca_w, rca_b=rca_b)
    return p


# ---------------- full forward ----------------
def forward(params, x, sensor_mask):
    B, S, M = x.shape
    T = B * M
    NL = T * S
    f32 = jnp.float32

    x = x.astype(f32)
    sensor_mask = sensor_mask.astype(f32)

    # ---- cheap XLA glue (reproduces PyTorch's row-major reshape exactly) ----
    x_masked = x * sensor_mask[:, None, :]                      # (B, S, M)
    x_flat = x_masked.reshape(NL, 1)                            # == reshape(B*M, S, 1) flattened
    mask_flat = sensor_mask.reshape(T, 1)
    last_val = (x[:, -1, :] * sensor_mask).reshape(T, 1)

    pe_tiled = jnp.tile(params["pe"], (T, 1))                   # (NL, P)
    pos_inter = jnp.tile(params["pos_inter"][0, :M, :], (B, 1))  # (T, D)

    # constant selector / shift matrices (shape-only; folded under jit)
    pool_mat, last_mat = _pool_matrices(T, S)
    dilations = tuple(2 ** i for i in range(TCN_LEVELS))
    shift_mats, shift_index = _shift_matrices(T, S, TCN_KERNEL, dilations)
    bsum, bexp = _batch_matrices(B, M)

    # additive attention bias: key-padding + cross-batch block mask, (T, T)
    tok_b = jnp.arange(T, dtype=jnp.int32) // M
    same_batch = tok_b[:, None] == tok_b[None, :]
    key_valid = mask_flat[:, 0][None, :] > 0.0
    attn_bias = jnp.where(same_batch & key_valid, 0.0, NEG_INF).astype(f32)

    # ---- kernel A: per-sensor TCN encoder (whole batch in one call) ----
    tp = params["tcn"]
    pooled, tcn_last = pl.pallas_call(
        functools.partial(_tcn_kernel, kernel_size=TCN_KERNEL, shift_index=shift_index),
        out_shape=(jax.ShapeDtypeStruct((T, TCN_OUT_DIM), f32),
                   jax.ShapeDtypeStruct((T, TCN_OUT_DIM), f32)),
    )(x_flat, mask_flat, pe_tiled, shift_mats, pool_mat, last_mat,
      tp["w_in"], tp["b_in"],
      tp["w1a"], tp["b1a"], tp["w1b"], tp["b1b"], tp["wd"], tp["bd"],
      tp["w2a"], tp["b2a"], tp["w2b"], tp["b2b"],
      tp["ln_g"], tp["ln_b"])

    # ---- kernel B: 2-layer pre-norm transformer encoder over sensors ----
    h0 = pooled + pos_inter                                     # identity proj (Dtcn == d_model)
    enc = params["enc"]
    ctx_in = pl.pallas_call(
        functools.partial(_encoder_kernel, nlayers=NLAYERS, nhead=NHEAD),
        out_shape=jax.ShapeDtypeStruct((T, D_MODEL), f32),
    )(h0, attn_bias,
      enc["ln1_g"], enc["ln1_b"], enc["wqkv"], enc["bqkv"], enc["wo"], enc["bo"],
      enc["ln2_g"], enc["ln2_b"], enc["wf1"], enc["bf1"], enc["wf2"], enc["bf2"])

    # ---- kernel C: output norm + MoE (3 gates, 4 shared experts) + all heads ----
    hp = params["heads"]
    pred, fail_logits, rca, aux = pl.pallas_call(
        functools.partial(_heads_kernel, n_batch=B, n_experts=NUM_EXPERTS,
                          moe_hidden=MOE_HIDDEN, d_model=D_MODEL),
        out_shape=(jax.ShapeDtypeStruct((T, PRED_H), f32),
                   jax.ShapeDtypeStruct((B, FAIL_H), f32),
                   jax.ShapeDtypeStruct((T, 1), f32),
                   jax.ShapeDtypeStruct((1, 1), f32)),
    )(ctx_in, tcn_last, mask_flat, last_val, bsum, bexp,
      hp["on_g"], hp["on_b"],
      hp["gf_w"], hp["gf_b"], hp["ga_w"], hp["ga_b"], hp["gr_w"], hp["gr_b"],
      hp["e_w1"], hp["e_b1"], hp["e_w2"], hp["e_b2"],
      hp["pred_w"], hp["pred_b"], hp["fail_w"], hp["fail_b"],
      hp["rca_w"], hp["rca_b"])

    pred_abs = pred.reshape(B, M, PRED_H)
    rca_logits = rca.reshape(B, M)
    total_aux = aux[0, 0]
    total_entropy = jnp.asarray(0.0, f32)
    return pred_abs, fail_logits, rca_logits, total_aux, total_entropy


# TODO(synk): dropout layers and MoE gate noise are training-only; eval semantics
# (identity / no noise) are implemented, training-mode RNG is not.
# Note: a parallel batch grid axis for v7x's 2 TensorCores was omitted — at B=2 the
# workload is launch-bound and a grid would add per-step overhead on v5e/v6e.

if __name__ == "__main__":
    key = jax.random.PRNGKey(0)
    kp, kx = jax.random.split(key)
    params = init_params(kp)

    B = 2
    x = jax.random.normal(kx, (B, SEQ_LEN, MODEL_MAX_SENSORS), dtype=jnp.float32)
    sensor_mask = jnp.array([[1.0, 1.0, 1.0, 0.0],
                             [1.0, 1.0, 0.0, 0.0]], dtype=jnp.float32)

    fwd = jax.jit(forward)
    outs = fwd(params, x, sensor_mask)
    jax.block_until_ready(outs)
    pred_abs, fail_logits, rca_logits, aux, ent = outs
    assert pred_abs.shape == (B, MODEL_MAX_SENSORS, PRED_H)
    assert fail_logits.shape == (B, FAIL_H)
    assert rca_logits.shape == (B, MODEL_MAX_SENSORS)
    assert bool(jnp.all(jnp.isfinite(pred_abs)))
    assert bool(jnp.all(jnp.isfinite(rca_logits)))
    print("KERNEL_OK")
</pallas_src>

<mosaic_0001>
module attributes {stable_mosaic.version = 11 : i64} {
  func.func @_tcn_kernel(%arg0: memref<128x1xf32, #tpu.memory_space<vmem>>, %arg1: memref<8x1xf32, #tpu.memory_space<vmem>>, %arg2: memref<128x16xf32, #tpu.memory_space<vmem>>, %arg3: memref<3x128x128xf32, #tpu.memory_space<vmem>>, %arg4: memref<8x128xf32, #tpu.memory_space<vmem>>, %arg5: memref<8x128xf32, #tpu.memory_space<vmem>>, %arg6: memref<1x16xf32, #tpu.memory_space<vmem>>, %arg7: memref<1x16xf32, #tpu.memory_space<vmem>>, %arg8: memref<3x16x32xf32, #tpu.memory_space<vmem>>, %arg9: memref<1x32xf32, #tpu.memory_space<vmem>>, %arg10: memref<3x32x32xf32, #tpu.memory_space<vmem>>, %arg11: memref<1x32xf32, #tpu.memory_space<vmem>>, %arg12: memref<16x32xf32, #tpu.memory_space<vmem>>, %arg13: memref<1x32xf32, #tpu.memory_space<vmem>>, %arg14: memref<3x32x32xf32, #tpu.memory_space<vmem>>, %arg15: memref<1x32xf32, #tpu.memory_space<vmem>>, %arg16: memref<3x32x32xf32, #tpu.memory_space<vmem>>, %arg17: memref<1x32xf32, #tpu.memory_space<vmem>>, %arg18: memref<1x32xf32, #tpu.memory_space<vmem>>, %arg19: memref<1x32xf32, #tpu.memory_space<vmem>>, %arg20: memref<8x32xf32, #tpu.memory_space<vmem>>, %arg21: memref<8x32xf32, #tpu.memory_space<vmem>>) attributes {dimension_semantics = [], scalar_prefetch = 0 : i64, scratch_operands = 0 : i64, tpu.core_type = #tpu.core_type<tc>} {
    %c0 = arith.constant 0 : index
    %c0_0 = arith.constant 0 : index
    %0 = vector.load %arg0[%c0, %c0_0] : memref<128x1xf32, #tpu.memory_space<vmem>>, vector<128x1xf32>
    %c0_1 = arith.constant 0 : index
    %c0_2 = arith.constant 0 : index
    %1 = vector.load %arg6[%c0_1, %c0_2] : memref<1x16xf32, #tpu.memory_space<vmem>>, vector<1x16xf32>
    %2 = vector.broadcast %0 : vector<128x1xf32> to vector<128x16xf32>
    %3 = vector.broadcast %1 : vector<1x16xf32> to vector<128x16xf32>
    %4 = arith.mulf %2, %3 : vector<128x16xf32>
    %c0_3 = arith.constant 0 : index
    %c0_4 = arith.constant 0 : index
    %5 = vector.load %arg7[%c0_3, %c0_4] : memref<1x16xf32, #tpu.memory_space<vmem>>, vector<1x16xf32>
    %6 = vector.broadcast %5 : vector<1x16xf32> to vector<128x16xf32>
    %7 = arith.addf %4, %6 : vector<128x16xf32>
    %c0_5 = arith.constant 0 : index
    %c0_6 = arith.constant 0 : index
    %8 = vector.load %arg2[%c0_5, %c0_6] : memref<128x16xf32, #tpu.memory_space<vmem>>, vector<128x16xf32>
    %9 = arith.addf %7, %8 : vector<128x16xf32>
    %c0_7 = arith.constant 0 : index
    %c0_8 = arith.constant 0 : index
    %c0_9 = arith.constant 0 : index
    %10 = vector.load %arg8[%c0_7, %c0_8, %c0_9] : memref<3x16x32xf32, #tpu.memory_space<vmem>>, vector<1x16x32xf32>
    %11 = vector.shape_cast %10 : vector<1x16x32xf32> to vector<16x32xf32>
    %cst = arith.constant dense<0.000000e+00> : vector<128x32xf32>
    %12 = tpu.matmul %9, %11, %cst {dimension_numbers = #tpu.dot_dimension_numbers<[1], [0], [0], [1], [0, 0, 1, 1], [], []>} : vector<128x16xf32>, vector<16x32xf32>, vector<128x32xf32> -> vector<128x32xf32>
    %c1 = arith.constant 1 : index
    %c0_10 = arith.constant 0 : index
    %c0_11 = arith.constant 0 : index
    %13 = vector.load %arg3[%c1, %c0_10, %c0_11] : memref<3x128x128xf32, #tpu.memory_space<vmem>>, vector<1x128x128xf32>
    %14 = vector.shape_cast %13 : vector<1x128x128xf32> to vector<128x128xf32>
    %cst_12 = arith.constant dense<0.000000e+00> : vector<128x32xf32>
    %15 = tpu.matmul %14, %12, %cst_12 {dimension_numbers = #tpu.dot_dimension_numbers<[1], [0], [0], [1], [0, 0, 1, 1], [], []>} : vector<128x128xf32>, vector<128x32xf32>, vector<128x32xf32> -> vector<128x32xf32>
    %c1_13 = arith.constant 1 : index
    %c0_14 = arith.constant 0 : index
    %c0_15 = arith.constant 0 : index
    %16 = vector.load %arg8[%c1_13, %c0_14, %c0_15] : memref<3x16x32xf32, #tpu.memory_space<vmem>>, vector<1x16x32xf32>
    %17 = vector.shape_cast %16 : vector<1x16x32xf32> to vector<16x32xf32>
    %cst_16 = arith.constant dense<0.000000e+00> : vector<128x32xf32>
    %18 = tpu.matmul %9, %17, %cst_16 {dimension_numbers = #tpu.dot_dimension_numbers<[1], [0], [0], [1], [0, 0, 1, 1], [], []>} : vector<128x16xf32>, vector<16x32xf32>, vector<128x32xf32> -> vector<128x32xf32>
    %c0_17 = arith.constant 0 : index
    %c0_18 = arith.constant 0 : index
    %c0_19 = arith.constant 0 : index
    %19 = vector.load %arg3[%c0_17, %c0_18, %c0_19] : memref<3x128x128xf32, #tpu.memory_space<vmem>>, vector<1x128x128xf32>
    %20 = vector.shape_cast %19 : vector<1x128x128xf32> to vector<128x128xf32>
    %cst_20 = arith.constant dense<0.000000e+00> : vector<128x32xf32>
    %21 = tpu.matmul %20, %18, %cst_20 {dimension_numbers = #tpu.dot_dimension_numbers<[1], [0], [0], [1], [0, 0, 1, 1], [], []>} : vector<128x128xf32>, vector<128x32xf32>, vector<128x32xf32> -> vector<128x32xf32>
    %22 = arith.addf %15, %21 : vector<128x32xf32>
    %c2 = arith.constant 2 : index
    %c0_21 = arith.constant 0 : index
    %c0_22 = arith.constant 0 : index
    %23 = vector.load %arg8[%c2, %c0_21, %c0_22] : memref<3x16x32xf32, #tpu.memory_space<vmem>>, vector<1x16x32xf32>
    %24 = vector.shape_cast %23 : vector<1x16x32xf32> to vector<16x32xf32>
    %cst_23 = arith.constant dense<0.000000e+00> : vector<128x32xf32>
    %25 = tpu.matmul %9, %24, %cst_23 {dimension_numbers = #tpu.dot_dimension_numbers<[1], [0], [0], [1], [0, 0, 1, 1], [], []>} : vector<128x16xf32>, vector<16x32xf32>, vector<128x32xf32> -> vector<128x32xf32>
    %26 = arith.addf %22, %25 : vector<128x32xf32>
    %c0_24 = arith.constant 0 : index
    %c0_25 = arith.constant 0 : index
    %27 = vector.load %arg9[%c0_24, %c0_25] : memref<1x32xf32, #tpu.memory_space<vmem>>, vector<1x32xf32>
    %28 = vector.broadcast %27 : vector<1x32xf32> to vector<128x32xf32>
    %29 = arith.addf %26, %28 : vector<128x32xf32>
    %cst_26 = arith.constant 0.000000e+00 : f32
    %30 = vector.broadcast %cst_26 : f32 to vector<128x32xf32>
    %31 = arith.maximumf %29, %30 : vector<128x32xf32>
    %c0_27 = arith.constant 0 : index
    %c0_28 = arith.constant 0 : index
    %c0_29 = arith.constant 0 : index
    %32 = vector.load %arg10[%c0_27, %c0_28, %c0_29] : memref<3x32x32xf32, #tpu.memory_space<vmem>>, vector<1x32x32xf32>
    %33 = vector.shape_cast %32 : vector<1x32x32xf32> to vector<32x32xf32>
    %cst_30 = arith.constant dense<0.000000e+00> : vector<128x32xf32>
    %34 = tpu.matmul %31, %33, %cst_30 {dimension_numbers = #tpu.dot_dimension_numbers<[1], [0], [0], [1], [0, 0, 1, 1], [], []>} : vector<128x32xf32>, vector<32x32xf32>, vector<128x32xf32> -> vector<128x32xf32>
    %c1_31 = arith.constant 1 : index
    %c0_32 = arith.constant 0 : index
    %c0_33 = arith.constant 0 : index
    %35 = vector.load %arg3[%c1_31, %c0_32, %c0_33] : memref<3x128x128xf32, #tpu.memory_space<vmem>>, vector<1x128x128xf32>
    %36 = vector.shape_cast %35 : vector<1x128x128xf32> to vector<128x128xf32>
    %cst_34 = arith.constant dense<0.000000e+00> : vector<128x32xf32>
    %37 = tpu.matmul %36, %34, %cst_34 {dimension_numbers = #tpu.dot_dimension_numbers<[1], [0], [0], [1], [0, 0, 1, 1], [], []>} : vector<128x128xf32>, vector<128x32xf32>, vector<128x32xf32> -> vector<128x32xf32>
    %c1_35 = arith.constant 1 : index
    %c0_36 = arith.constant 0 : index
    %c0_37 = arith.constant 0 : index
    %38 = vector.load %arg10[%c1_35, %c0_36, %c0_37] : memref<3x32x32xf32, #tpu.memory_space<vmem>>, vector<1x32x32xf32>
    %39 = vector.shape_cast %38 : vector<1x32x32xf32> to vector<32x32xf32>
    %cst_38 = arith.constant dense<0.000000e+00> : vector<128x32xf32>
    %40 = tpu.matmul %31, %39, %cst_38 {dimension_numbers = #tpu.dot_dimension_numbers<[1], [0], [0], [1], [0, 0, 1, 1], [], []>} : vector<128x32xf32>, vector<32x32xf32>, vector<128x32xf32> -> vector<128x32xf32>
    %c0_39 = arith.constant 0 : index
    %c0_40 = arith.constant 0 : index
    %c0_41 = arith.constant 0 : index
    %41 = vector.load %arg3[%c0_39, %c0_40, %c0_41] : memref<3x128x128xf32, #tpu.memory_space<vmem>>, vector<1x128x128xf32>
    %42 = vector.shape_cast %41 : vector<1x128x128xf32> to vector<128x128xf32>
    %cst_42 = arith.constant dense<0.000000e+00> : vector<128x32xf32>
    %43 = tpu.matmul %42, %40, %cst_42 {dimension_numbers = #tpu.dot_dimension_numbers<[1], [0], [0], [1], [0, 0, 1, 1], [], []>} : vector<128x128xf32>, vector<128x32xf32>, vector<128x32xf32> -> vector<128x32xf32>
    %44 = arith.addf %37, %43 : vector<128x32xf32>
    %c2_43 = arith.constant 2 : index
    %c0_44 = arith.constant 0 : index
    %c0_45 = arith.constant 0 : index
    %45 = vector.load %arg10[%c2_43, %c0_44, %c0_45] : memref<3x32x32xf32, #tpu.memory_space<vmem>>, vector<1x32x32xf32>
    %46 = vector.shape_cast %45 : vector<1x32x32xf32> to vector<32x32xf32>
    %cst_46 = arith.constant dense<0.000000e+00> : vector<128x32xf32>
    %47 = tpu.matmul %31, %46, %cst_46 {dimension_numbers = #tpu.dot_dimension_numbers<[1], [0], [0], [1], [0, 0, 1, 1], [], []>} : vector<128x32xf32>, vector<32x32xf32>, vector<128x32xf32> -> vector<128x32xf32>
    %48 = arith.addf %44, %47 : vector<128x32xf32>
    %c0_47 = arith.constant 0 : index
    %c0_48 = arith.constant 0 : index
    %49 = vector.load %arg11[%c0_47, %c0_48] : memref<1x32xf32, #tpu.memory_space<vmem>>, vector<1x32xf32>
    %50 = vector.broadcast %49 : vector<1x32xf32> to vector<128x32xf32>
    %51 = arith.addf %48, %50 : vector<128x32xf32>
    %cst_49 = arith.constant 0.000000e+00 : f32
    %52 = vector.broadcast %cst_49 : f32 to vector<128x32xf32>
    %53 = arith.maximumf %51, %52 : vector<128x32xf32>
    %c0_50 = arith.constant 0 : index
    %c0_51 = arith.constant 0 : index
    %54 = vector.load %arg12[%c0_50, %c0_51] : memref<16x32xf32, #tpu.memory_space<vmem>>, vector<16x32xf32>
    %cst_52 = arith.constant dense<0.000000e+00> : vector<128x32xf32>
    %55 = tpu.matmul %9, %54, %cst_52 {dimension_numbers = #tpu.dot_dimension_numbers<[1], [0], [0], [1], [0, 0, 1, 1], [], []>} : vector<128x16xf32>, vector<16x32xf32>, vector<128x32xf32> -> vector<128x32xf32>
    %c0_53 = arith.constant 0 : index
    %c0_54 = arith.constant 0 : index
    %56 = vector.load %arg13[%c0_53, %c0_54] : memref<1x32xf32, #tpu.memory_space<vmem>>, vector<1x32xf32>
    %57 = vector.broadcast %56 : vector<1x32xf32> to vector<128x32xf32>
    %58 = arith.addf %55, %57 : vector<128x32xf32>
    %59 = arith.addf %53, %58 : vector<128x32xf32>
    %cst_55 = arith.constant 0.000000e+00 : f32
    %60 = vector.broadcast %cst_55 : f32 to vector<128x32xf32>
    %61 = arith.maximumf %59, %60 : vector<128x32xf32>
    %c0_56 = arith.constant 0 : index
    %c0_57 = arith.constant 0 : index
    %c0_58 = arith.constant 0 : index
    %62 = vector.load %arg14[%c0_56, %c0_57, %c0_58] : memref<3x32x32xf32, #tpu.memory_space<vmem>>, vector<1x32x32xf32>
    %63 = vector.shape_cast %62 : vector<1x32x32xf32> to vector<32x32xf32>
    %cst_59 = arith.constant dense<0.000000e+00> : vector<128x32xf32>
    %64 = tpu.matmul %61, %63, %cst_59 {dimension_numbers = #tpu.dot_dimension_numbers<[1], [0], [0], [1], [0, 0, 1, 1], [], []>} : vector<128x32xf32>, vector<32x32xf32>, vector<128x32xf32> -> vector<128x32xf32>
    %c2_60 = arith.constant 2 : index
    %c0_61 = arith.constant 0 : index
    %c0_62 = arith.constant 0 : index
    %65 = vector.load %arg3[%c2_60, %c0_61, %c0_62] : memref<3x128x128xf32, #tpu.memory_space<vmem>>, vector<1x128x128xf32>
    %66 = vector.shape_cast %65 : vector<1x128x128xf32> to vector<128x128xf32>
    %cst_63 = arith.constant dense<0.000000e+00> : vector<128x32xf32>
    %67 = tpu.matmul %66, %64, %cst_63 {dimension_numbers = #tpu.dot_dimension_numbers<[1], [0], [0], [1], [0, 0, 1, 1], [], []>} : vector<128x128xf32>, vector<128x32xf32>, vector<128x32xf32> -> vector<128x32xf32>
    %c1_64 = arith.constant 1 : index
    %c0_65 = arith.constant 0 : index
    %c0_66 = arith.constant 0 : index
    %68 = vector.load %arg14[%c1_64, %c0_65, %c0_66] : memref<3x32x32xf32, #tpu.memory_space<vmem>>, vector<1x32x32xf32>
    %69 = vector.shape_cast %68 : vector<1x32x32xf32> to vector<32x32xf32>
    %cst_67 = arith.constant dense<0.000000e+00> : vector<128x32xf32>
    %70 = tpu.matmul %61, %69, %cst_67 {dimension_numbers = #tpu.dot_dimension_numbers<[1], [0], [0], [1], [0, 0, 1, 1], [], []>} : vector<128x32xf32>, vector<32x32xf32>, vector<128x32xf32> -> vector<128x32xf32>
    %c1_68 = arith.constant 1 : index
    %c0_69 = arith.constant 0 : index
    %c0_70 = arith.constant 0 : index
    %71 = vector.load %arg3[%c1_68, %c0_69, %c0_70] : memref<3x128x128xf32, #tpu.memory_space<vmem>>, vector<1x128x128xf32>
    %72 = vector.shape_cast %71 : vector<1x128x128xf32> to vector<128x128xf32>
    %cst_71 = arith.constant dense<0.000000e+00> : vector<128x32xf32>
    %73 = tpu.matmul %72, %70, %cst_71 {dimension_numbers = #tpu.dot_dimension_numbers<[1], [0], [0], [1], [0, 0, 1, 1], [], []>} : vector<128x128xf32>, vector<128x32xf32>, vector<128x32xf32> -> vector<128x32xf32>
    %74 = arith.addf %67, %73 : vector<128x32xf32>
    %c2_72 = arith.constant 2 : index
    %c0_73 = arith.constant 0 : index
    %c0_74 = arith.constant 0 : index
    %75 = vector.load %arg14[%c2_72, %c0_73, %c0_74] : memref<3x32x32xf32, #tpu.memory_space<vmem>>, vector<1x32x32xf32>
    %76 = vector.shape_cast %75 : vector<1x32x32xf32> to vector<32x32xf32>
    %cst_75 = arith.constant dense<0.000000e+00> : vector<128x32xf32>
    %77 = tpu.matmul %61, %76, %cst_75 {dimension_numbers = #tpu.dot_dimension_numbers<[1], [0], [0], [1], [0, 0, 1, 1], [], []>} : vector<128x32xf32>, vector<32x32xf32>, vector<128x32xf32> -> vector<128x32xf32>
    %78 = arith.addf %74, %77 : vector<128x32xf32>
    %c0_76 = arith.constant 0 : index
    %c0_77 = arith.constant 0 : index
    %79 = vector.load %arg15[%c0_76, %c0_77] : memref<1x32xf32, #tpu.memory_space<vmem>>, vector<1x32xf32>
    %80 = vector.broadcast %79 : vector<1x32xf32> to vector<128x32xf32>
    %81 = arith.addf %78, %80 : vector<128x32xf32>
    %cst_78 = arith.constant 0.000000e+00 : f32
    %82 = vector.broadcast %cst_78 : f32 to vector<128x32xf32>
    %83 = arith.maximumf %81, %82 : vector<128x32xf32>
    %c0_79 = arith.constant 0 : index
    %c0_80 = arith.constant 0 : index
    %c0_81 = arith.constant 0 : index
    %84 = vector.load %arg16[%c0_79, %c0_80, %c0_81] : memref<3x32x32xf32, #tpu.memory_space<vmem>>, vector<1x32x32xf32>
    %85 = vector.shape_cast %84 : vector<1x32x32xf32> to vector<32x32xf32>
    %cst_82 = arith.constant dense<0.000000e+00> : vector<128x32xf32>
    %86 = tpu.matmul %83, %85, %cst_82 {dimension_numbers = #tpu.dot_dimension_numbers<[1], [0], [0], [1], [0, 0, 1, 1], [], []>} : vector<128x32xf32>, vector<32x32xf32>, vector<128x32xf32> -> vector<128x32xf32>
    %c2_83 = arith.constant 2 : index
    %c0_84 = arith.constant 0 : index
    %c0_85 = arith.constant 0 : index
    %87 = vector.load %arg3[%c2_83, %c0_84, %c0_85] : memref<3x128x128xf32, #tpu.memory_space<vmem>>, vector<1x128x128xf32>
    %88 = vector.shape_cast %87 : vector<1x128x128xf32> to vector<128x128xf32>
    %cst_86 = arith.constant dense<0.000000e+00> : vector<128x32xf32>
    %89 = tpu.matmul %88, %86, %cst_86 {dimension_numbers = #tpu.dot_dimension_numbers<[1], [0], [0], [1], [0, 0, 1, 1], [], []>} : vector<128x128xf32>, vector<128x32xf32>, vector<128x32xf32> -> vector<128x32xf32>
    %c1_87 = arith.constant 1 : index
    %c0_88 = arith.constant 0 : index
    %c0_89 = arith.constant 0 : index
    %90 = vector.load %arg16[%c1_87, %c0_88, %c0_89] : memref<3x32x32xf32, #tpu.memory_space<vmem>>, vector<1x32x32xf32>
    %91 = vector.shape_cast %90 : vector<1x32x32xf32> to vector<32x32xf32>
    %cst_90 = arith.constant dense<0.000000e+00> : vector<128x32xf32>
    %92 = tpu.matmul %83, %91, %cst_90 {dimension_numbers = #tpu.dot_dimension_numbers<[1], [0], [0], [1], [0, 0, 1, 1], [], []>} : vector<128x32xf32>, vector<32x32xf32>, vector<128x32xf32> -> vector<128x32xf32>
    %c1_91 = arith.constant 1 : index
    %c0_92 = arith.constant 0 : index
    %c0_93 = arith.constant 0 : index
    %93 = vector.load %arg3[%c1_91, %c0_92, %c0_93] : memref<3x128x128xf32, #tpu.memory_space<vmem>>, vector<1x128x128xf32>
    %94 = vector.shape_cast %93 : vector<1x128x128xf32> to vector<128x128xf32>
    %cst_94 = arith.constant dense<0.000000e+00> : vector<128x32xf32>
    %95 = tpu.matmul %94, %92, %cst_94 {dimension_numbers = #tpu.dot_dimension_numbers<[1], [0], [0], [1], [0, 0, 1, 1], [], []>} : vector<128x128xf32>, vector<128x32xf32>, vector<128x32xf32> -> vector<128x32xf32>
    %96 = arith.addf %89, %95 : vector<128x32xf32>
    %c2_95 = arith.constant 2 : index
    %c0_96 = arith.constant 0 : index
    %c0_97 = arith.constant 0 : index
    %97 = vector.load %arg16[%c2_95, %c0_96, %c0_97] : memref<3x32x32xf32, #tpu.memory_space<vmem>>, vector<1x32x32xf32>
    %98 = vector.shape_cast %97 : vector<1x32x32xf32> to vector<32x32xf32>
    %cst_98 = arith.constant dense<0.000000e+00> : vector<128x32xf32>
    %99 = tpu.matmul %83, %98, %cst_98 {dimension_numbers = #tpu.dot_dimension_numbers<[1], [0], [0], [1], [0, 0, 1, 1], [], []>} : vector<128x32xf32>, vector<32x32xf32>, vector<128x32xf32> -> vector<128x32xf32>
    %100 = arith.addf %96, %99 : vector<128x32xf32>
    %c0_99 = arith.constant 0 : index
    %c0_100 = arith.constant 0 : index
    %101 = vector.load %arg17[%c0_99, %c0_100] : memref<1x32xf32, #tpu.memory_space<vmem>>, vector<1x32xf32>
    %102 = vector.broadcast %101 : vector<1x32xf32> to vector<128x32xf32>
    %103 = arith.addf %100, %102 : vector<128x32xf32>
    %cst_101 = arith.constant 0.000000e+00 : f32
    %104 = vector.broadcast %cst_101 : f32 to vector<128x32xf32>
    %105 = arith.maximumf %103, %104 : vector<128x32xf32>
    %106 = arith.addf %105, %61 : vector<128x32xf32>
    %cst_102 = arith.constant 0.000000e+00 : f32
    %107 = vector.broadcast %cst_102 : f32 to vector<128x32xf32>
    %108 = arith.maximumf %106, %107 : vector<128x32xf32>
    %c0_103 = arith.constant 0 : index
    %c0_104 = arith.constant 0 : index
    %109 = vector.load %arg18[%c0_103, %c0_104] : memref<1x32xf32, #tpu.memory_space<vmem>>, vector<1x32xf32>
    %c0_105 = arith.constant 0 : index
    %c0_106 = arith.constant 0 : index
    %110 = vector.load %arg19[%c0_105, %c0_106] : memref<1x32xf32, #tpu.memory_space<vmem>>, vector<1x32xf32>
    %cst_107 = arith.constant dense<0.000000e+00> : vector<128xf32>
    %111 = vector.multi_reduction <add>, %108, %cst_107 [1] : vector<128x32xf32> to vector<128xf32>
    %112 = vector.shape_cast %111 : vector<128xf32> to vector<128x1xf32>
    %cst_108 = arith.constant 3.200000e+01 : f32
    %113 = vector.broadcast %cst_108 : f32 to vector<128x1xf32>
    %114 = arith.divf %112, %113 : vector<128x1xf32>
    %115 = vector.broadcast %114 : vector<128x1xf32> to vector<128x32xf32>
    %116 = arith.subf %108, %115 : vector<128x32xf32>
    %117 = arith.mulf %116, %116 : vector<128x32xf32>
    %cst_109 = arith.constant dense<0.000000e+00> : vector<128xf32>
    %118 = vector.multi_reduction <add>, %117, %cst_109 [1] : vector<128x32xf32> to vector<128xf32>
    %119 = vector.shape_cast %118 : vector<128xf32> to vector<128x1xf32>
    %cst_110 = arith.constant 3.200000e+01 : f32
    %120 = vector.broadcast %cst_110 : f32 to vector<128x1xf32>
    %121 = arith.divf %119, %120 : vector<128x1xf32>
    %122 = vector.broadcast %114 : vector<128x1xf32> to vector<128x32xf32>
    %123 = arith.subf %108, %122 : vector<128x32xf32>
    %cst_111 = arith.constant 9.99999974E-6 : f32
    %124 = vector.broadcast %cst_111 : f32 to vector<128x1xf32>
    %125 = arith.addf %121, %124 : vector<128x1xf32>
    %126 = math.rsqrt %125 : vector<128x1xf32>
    %127 = vector.broadcast %126 : vector<128x1xf32> to vector<128x32xf32>
    %128 = arith.mulf %123, %127 : vector<128x32xf32>
    %129 = vector.broadcast %109 : vector<1x32xf32> to vector<128x32xf32>
    %130 = arith.mulf %128, %129 : vector<128x32xf32>
    %131 = vector.broadcast %110 : vector<1x32xf32> to vector<128x32xf32>
    %132 = arith.addf %130, %131 : vector<128x32xf32>
    %c0_112 = arith.constant 0 : index
    %c0_113 = arith.constant 0 : index
    %133 = vector.load %arg1[%c0_112, %c0_113] : memref<8x1xf32, #tpu.memory_space<vmem>>, vector<8x1xf32>
    %c0_114 = arith.constant 0 : index
    %c0_115 = arith.constant 0 : index
    %134 = vector.load %arg4[%c0_114, %c0_115] : memref<8x128xf32, #tpu.memory_space<vmem>>, vector<8x128xf32>
    %cst_116 = arith.constant dense<0.000000e+00> : vector<8x32xf32>
    %135 = tpu.matmul %134, %132, %cst_116 {dimension_numbers = #tpu.dot_dimension_numbers<[1], [0], [0], [1], [0, 0, 1, 1], [], []>} : vector<8x128xf32>, vector<128x32xf32>, vector<8x32xf32> -> vector<8x32xf32>
    %136 = vector.broadcast %133 : vector<8x1xf32> to vector<8x32xf32>
    %137 = arith.mulf %135, %136 : vector<8x32xf32>
    %c0_117 = arith.constant 0 : index
    %c0_118 = arith.constant 0 : index
    %138 = vector.load %arg20[%c0_117, %c0_118] : memref<8x32xf32, #tpu.memory_space<vmem>>, vector<8x32xf32>
    tpu.vector_store %arg20[%c0_117, %c0_118], %137 {strides = array<i32>} : memref<8x32xf32, #tpu.memory_space<vmem>>, vector<8x32xf32>,
    %c0_119 = arith.constant 0 : index
    %c0_120 = arith.constant 0 : index
    %139 = vector.load %arg5[%c0_119, %c0_120] : memref<8x128xf32, #tpu.memory_space<vmem>>, vector<8x128xf32>
    %cst_121 = arith.constant dense<0.000000e+00> : vector<8x32xf32>
    %140 = tpu.matmul %139, %132, %cst_121 {dimension_numbers = #tpu.dot_dimension_numbers<[1], [0], [0], [1], [0, 0, 1, 1], [], []>} : vector<8x128xf32>, vector<128x32xf32>, vector<8x32xf32> -> vector<8x32xf32>
    %141 = vector.broadcast %133 : vector<8x1xf32> to vector<8x32xf32>
    %142 = arith.mulf %140, %141 : vector<8x32xf32>
    %c0_122 = arith.constant 0 : index
    %c0_123 = arith.constant 0 : index
    %143 = vector.load %arg21[%c0_122, %c0_123] : memref<8x32xf32, #tpu.memory_space<vmem>>, vector<8x32xf32>
    tpu.vector_store %arg21[%c0_122, %c0_123], %142 {strides = array<i32>} : memref<8x32xf32, #tpu.memory_space<vmem>>, vector<8x32xf32>,
    return
  }
}

module attributes {stable_mosaic.version = 11 : i64} {
  func.func @_encoder_kernel(%arg0: memref<8x32xf32, #tpu.memory_space<vmem>>, %arg1: memref<8x8xf32, #tpu.memory_space<vmem>>, %arg2: memref<2x1x32xf32, #tpu.memory_space<vmem>>, %arg3: memref<2x1x32xf32, #tpu.memory_space<vmem>>, %arg4: memref<2x32x96xf32, #tpu.memory_space<vmem>>, %arg5: memref<2x1x96xf32, #tpu.memory_space<vmem>>, %arg6: memref<2x32x32xf32, #tpu.memory_space<vmem>>, %arg7: memref<2x1x32xf32, #tpu.memory_space<vmem>>, %arg8: memref<2x1x32xf32, #tpu.memory_space<vmem>>, %arg9: memref<2x1x32xf32, #tpu.memory_space<vmem>>, %arg10: memref<2x32x64xf32, #tpu.memory_space<vmem>>, %arg11: memref<2x1x64xf32, #tpu.memory_space<vmem>>, %arg12: memref<2x64x32xf32, #tpu.memory_space<vmem>>, %arg13: memref<2x1x32xf32, #tpu.memory_space<vmem>>, %arg14: memref<8x32xf32, #tpu.memory_space<vmem>>) attributes {dimension_semantics = [], scalar_prefetch = 0 : i64, scratch_operands = 0 : i64, tpu.core_type = #tpu.core_type<tc>} {
    %c0 = arith.constant 0 : index
    %c0_0 = arith.constant 0 : index
    %0 = vector.load %arg0[%c0, %c0_0] : memref<8x32xf32, #tpu.memory_space<vmem>>, vector<8x32xf32>
    %c0_1 = arith.constant 0 : index
    %c0_2 = arith.constant 0 : index
    %1 = vector.load %arg1[%c0_1, %c0_2] : memref<8x8xf32, #tpu.memory_space<vmem>>, vector<8x8xf32>
    %c0_3 = arith.constant 0 : index
    %c0_4 = arith.constant 0 : index
    %c0_5 = arith.constant 0 : index
    %2 = vector.load %arg2[%c0_3, %c0_4, %c0_5] : memref<2x1x32xf32, #tpu.memory_space<vmem>>, vector<1x1x32xf32>
    %3 = vector.shape_cast %2 : vector<1x1x32xf32> to vector<1x32xf32>
    %c0_6 = arith.constant 0 : index
    %c0_7 = arith.constant 0 : index
    %c0_8 = arith.constant 0 : index
    %4 = vector.load %arg3[%c0_6, %c0_7, %c0_8] : memref<2x1x32xf32, #tpu.memory_space<vmem>>, vector<1x1x32xf32>
    %5 = vector.shape_cast %4 : vector<1x1x32xf32> to vector<1x32xf32>
    %cst = arith.constant dense<0.000000e+00> : vector<8xf32>
    %6 = vector.multi_reduction <add>, %0, %cst [1] : vector<8x32xf32> to vector<8xf32>
    %7 = vector.shape_cast %6 : vector<8xf32> to vector<8x1xf32>
    %cst_9 = arith.constant 3.200000e+01 : f32
    %8 = vector.broadcast %cst_9 : f32 to vector<8x1xf32>
    %9 = arith.divf %7, %8 : vector<8x1xf32>
    %10 = vector.broadcast %9 : vector<8x1xf32> to vector<8x32xf32>
    %11 = arith.subf %0, %10 : vector<8x32xf32>
    %12 = arith.mulf %11, %11 : vector<8x32xf32>
    %cst_10 = arith.constant dense<0.000000e+00> : vector<8xf32>
    %13 = vector.multi_reduction <add>, %12, %cst_10 [1] : vector<8x32xf32> to vector<8xf32>
    %14 = vector.shape_cast %13 : vector<8xf32> to vector<8x1xf32>
    %cst_11 = arith.constant 3.200000e+01 : f32
    %15 = vector.broadcast %cst_11 : f32 to vector<8x1xf32>
    %16 = arith.divf %14, %15 : vector<8x1xf32>
    %17 = vector.broadcast %9 : vector<8x1xf32> to vector<8x32xf32>
    %18 = arith.subf %0, %17 : vector<8x32xf32>
    %cst_12 = arith.constant 9.99999974E-6 : f32
    %19 = vector.broadcast %cst_12 : f32 to vector<8x1xf32>
    %20 = arith.addf %16, %19 : vector<8x1xf32>
    %21 = math.rsqrt %20 : vector<8x1xf32>
    %22 = vector.broadcast %21 : vector<8x1xf32> to vector<8x32xf32>
    %23 = arith.mulf %18, %22 : vector<8x32xf32>
    %24 = vector.broadcast %3 : vector<1x32xf32> to vector<8x32xf32>
    %25 = arith.mulf %23, %24 : vector<8x32xf32>
    %26 = vector.broadcast %5 : vector<1x32xf32> to vector<8x32xf32>
    %27 = arith.addf %25, %26 : vector<8x32xf32>
    %c0_13 = arith.constant 0 : index
    %c0_14 = arith.constant 0 : index
    %c0_15 = arith.constant 0 : index
    %28 = vector.load %arg4[%c0_13, %c0_14, %c0_15] : memref<2x32x96xf32, #tpu.memory_space<vmem>>, vector<1x32x96xf32>
    %29 = vector.shape_cast %28 : vector<1x32x96xf32> to vector<32x96xf32>
    %cst_16 = arith.constant dense<0.000000e+00> : vector<8x96xf32>
    %30 = tpu.matmul %27, %29, %cst_16 {dimension_numbers = #tpu.dot_dimension_numbers<[1], [0], [0], [1], [0, 0, 1, 1], [], []>} : vector<8x32xf32>, vector<32x96xf32>, vector<8x96xf32> -> vector<8x96xf32>
    %c0_17 = arith.constant 0 : index
    %c0_18 = arith.constant 0 : index
    %c0_19 = arith.constant 0 : index
    %31 = vector.load %arg5[%c0_17, %c0_18, %c0_19] : memref<2x1x96xf32, #tpu.memory_space<vmem>>, vector<1x1x96xf32>
    %32 = vector.shape_cast %31 : vector<1x1x96xf32> to vector<1x96xf32>
    %33 = vector.broadcast %32 : vector<1x96xf32> to vector<8x96xf32>
    %34 = arith.addf %30, %33 : vector<8x96xf32>
    %c0_20 = arith.constant 0 : index
    %c0_21 = arith.constant 0 : index
    %c0_22 = arith.constant 0 : index
    %35 = vector.load %arg6[%c0_20, %c0_21, %c0_22] : memref<2x32x32xf32, #tpu.memory_space<vmem>>, vector<1x32x32xf32>
    %36 = vector.shape_cast %35 : vector<1x32x32xf32> to vector<32x32xf32>
    %37 = vector.extract_strided_slice %34 {offsets = [0, 0], sizes = [8, 8], strides = [1, 1]} : vector<8x96xf32> to vector<8x8xf32>
    %38 = vector.extract_strided_slice %34 {offsets = [0, 32], sizes = [8, 8], strides = [1, 1]} : vector<8x96xf32> to vector<8x8xf32>
    %39 = vector.extract_strided_slice %34 {offsets = [0, 64], sizes = [8, 8], strides = [1, 1]} : vector<8x96xf32> to vector<8x8xf32>
    %cst_23 = arith.constant dense<0.000000e+00> : vector<8x8xf32>
    %40 = tpu.matmul %37, %38, %cst_23 {dimension_numbers = #tpu.dot_dimension_numbers<[1], [1], [0], [0], [0, 0, 1, 0], [], []>} : vector<8x8xf32>, vector<8x8xf32>, vector<8x8xf32> -> vector<8x8xf32>
    %cst_24 = arith.constant 0.353553385 : f32
    %41 = vector.broadcast %cst_24 : f32 to vector<8x8xf32>
    %42 = arith.mulf %40, %41 : vector<8x8xf32>
    %43 = arith.addf %42, %1 : vector<8x8xf32>
    %cst_25 = arith.constant dense<0xFF800000> : vector<8xf32>
    %44 = vector.multi_reduction <maximumf>, %43, %cst_25 [1] : vector<8x8xf32> to vector<8xf32>
    %45 = vector.shape_cast %44 : vector<8xf32> to vector<8x1xf32>
    %46 = vector.broadcast %45 : vector<8x1xf32> to vector<8x8xf32>
    %47 = arith.subf %43, %46 : vector<8x8xf32>
    %48 = math.exp %47 : vector<8x8xf32>
    %cst_26 = arith.constant dense<0.000000e+00> : vector<8xf32>
    %49 = vector.multi_reduction <add>, %48, %cst_26 [1] : vector<8x8xf32> to vector<8xf32>
    %50 = vector.shape_cast %49 : vector<8xf32> to vector<8x1xf32>
    %51 = tpu.reciprocal %50 {approx = true} : vector<8x1xf32> -> vector<8x1xf32>
    %52 = vector.broadcast %51 : vector<8x1xf32> to vector<8x8xf32>
    %53 = arith.mulf %48, %52 : vector<8x8xf32>
    %cst_27 = arith.constant dense<0.000000e+00> : vector<8x8xf32>
    %54 = tpu.matmul %53, %39, %cst_27 {dimension_numbers = #tpu.dot_dimension_numbers<[1], [0], [0], [1], [0, 0, 1, 1], [], []>} : vector<8x8xf32>, vector<8x8xf32>, vector<8x8xf32> -> vector<8x8xf32>
    %55 = vector.extract_strided_slice %36 {offsets = [0, 0], sizes = [8, 32], strides = [1, 1]} : vector<32x32xf32> to vector<8x32xf32>
    %cst_28 = arith.constant dense<0.000000e+00> : vector<8x32xf32>
    %56 = tpu.matmul %54, %55, %cst_28 {dimension_numbers = #tpu.dot_dimension_numbers<[1], [0], [0], [1], [0, 0, 1, 1], [], []>} : vector<8x8xf32>, vector<8x32xf32>, vector<8x32xf32> -> vector<8x32xf32>
    %57 = vector.extract_strided_slice %34 {offsets = [0, 8], sizes = [8, 8], strides = [1, 1]} : vector<8x96xf32> to vector<8x8xf32>
    %58 = vector.extract_strided_slice %34 {offsets = [0, 40], sizes = [8, 8], strides = [1, 1]} : vector<8x96xf32> to vector<8x8xf32>
    %59 = vector.extract_strided_slice %34 {offsets = [0, 72], sizes = [8, 8], strides = [1, 1]} : vector<8x96xf32> to vector<8x8xf32>
    %cst_29 = arith.constant dense<0.000000e+00> : vector<8x8xf32>
    %60 = tpu.matmul %57, %58, %cst_29 {dimension_numbers = #tpu.dot_dimension_numbers<[1], [1], [0], [0], [0, 0, 1, 0], [], []>} : vector<8x8xf32>, vector<8x8xf32>, vector<8x8xf32> -> vector<8x8xf32>
    %cst_30 = arith.constant 0.353553385 : f32
    %61 = vector.broadcast %cst_30 : f32 to vector<8x8xf32>
    %62 = arith.mulf %60, %61 : vector<8x8xf32>
    %63 = arith.addf %62, %1 : vector<8x8xf32>
    %cst_31 = arith.constant dense<0xFF800000> : vector<8xf32>
    %64 = vector.multi_reduction <maximumf>, %63, %cst_31 [1] : vector<8x8xf32> to vector<8xf32>
    %65 = vector.shape_cast %64 : vector<8xf32> to vector<8x1xf32>
    %66 = vector.broadcast %65 : vector<8x1xf32> to vector<8x8xf32>
    %67 = arith.subf %63, %66 : vector<8x8xf32>
    %68 = math.exp %67 : vector<8x8xf32>
    %cst_32 = arith.constant dense<0.000000e+00> : vector<8xf32>
    %69 = vector.multi_reduction <add>, %68, %cst_32 [1] : vector<8x8xf32> to vector<8xf32>
    %70 = vector.shape_cast %69 : vector<8xf32> to vector<8x1xf32>
    %71 = tpu.reciprocal %70 {approx = true} : vector<8x1xf32> -> vector<8x1xf32>
    %72 = vector.broadcast %71 : vector<8x1xf32> to vector<8x8xf32>
    %73 = arith.mulf %68, %72 : vector<8x8xf32>
    %cst_33 = arith.constant dense<0.000000e+00> : vector<8x8xf32>
    %74 = tpu.matmul %73, %59, %cst_33 {dimension_numbers = #tpu.dot_dimension_numbers<[1], [0], [0], [1], [0, 0, 1, 1], [], []>} : vector<8x8xf32>, vector<8x8xf32>, vector<8x8xf32> -> vector<8x8xf32>
    %75 = vector.extract_strided_slice %36 {offsets = [8, 0], sizes = [8, 32], strides = [1, 1]} : vector<32x32xf32> to vector<8x32xf32>
    %cst_34 = arith.constant dense<0.000000e+00> : vector<8x32xf32>
    %76 = tpu.matmul %74, %75, %cst_34 {dimension_numbers = #tpu.dot_dimension_numbers<[1], [0], [0], [1], [0, 0, 1, 1], [], []>} : vector<8x8xf32>, vector<8x32xf32>, vector<8x32xf32> -> vector<8x32xf32>
    %77 = arith.addf %56, %76 : vector<8x32xf32>
    %78 = vector.extract_strided_slice %34 {offsets = [0, 16], sizes = [8, 8], strides = [1, 1]} : vector<8x96xf32> to vector<8x8xf32>
    %79 = vector.extract_strided_slice %34 {offsets = [0, 48], sizes = [8, 8], strides = [1, 1]} : vector<8x96xf32> to vector<8x8xf32>
    %80 = vector.extract_strided_slice %34 {offsets = [0, 80], sizes = [8, 8], strides = [1, 1]} : vector<8x96xf32> to vector<8x8xf32>
    %cst_35 = arith.constant dense<0.000000e+00> : vector<8x8xf32>
    %81 = tpu.matmul %78, %79, %cst_35 {dimension_numbers = #tpu.dot_dimension_numbers<[1], [1], [0], [0], [0, 0, 1, 0], [], []>} : vector<8x8xf32>, vector<8x8xf32>, vector<8x8xf32> -> vector<8x8xf32>
    %cst_36 = arith.constant 0.353553385 : f32
    %82 = vector.broadcast %cst_36 : f32 to vector<8x8xf32>
    %83 = arith.mulf %81, %82 : vector<8x8xf32>
    %84 = arith.addf %83, %1 : vector<8x8xf32>
    %cst_37 = arith.constant dense<0xFF800000> : vector<8xf32>
    %85 = vector.multi_reduction <maximumf>, %84, %cst_37 [1] : vector<8x8xf32> to vector<8xf32>
    %86 = vector.shape_cast %85 : vector<8xf32> to vector<8x1xf32>
    %87 = vector.broadcast %86 : vector<8x1xf32> to vector<8x8xf32>
    %88 = arith.subf %84, %87 : vector<8x8xf32>
    %89 = math.exp %88 : vector<8x8xf32>
    %cst_38 = arith.constant dense<0.000000e+00> : vector<8xf32>
    %90 = vector.multi_reduction <add>, %89, %cst_38 [1] : vector<8x8xf32> to vector<8xf32>
    %91 = vector.shape_cast %90 : vector<8xf32> to vector<8x1xf32>
    %92 = tpu.reciprocal %91 {approx = true} : vector<8x1xf32> -> vector<8x1xf32>
    %93 = vector.broadcast %92 : vector<8x1xf32> to vector<8x8xf32>
    %94 = arith.mulf %89, %93 : vector<8x8xf32>
    %cst_39 = arith.constant dense<0.000000e+00> : vector<8x8xf32>
    %95 = tpu.matmul %94, %80, %cst_39 {dimension_numbers = #tpu.dot_dimension_numbers<[1], [0], [0], [1], [0, 0, 1, 1], [], []>} : vector<8x8xf32>, vector<8x8xf32>, vector<8x8xf32> -> vector<8x8xf32>
    %96 = vector.extract_strided_slice %36 {offsets = [16, 0], sizes = [8, 32], strides = [1, 1]} : vector<32x32xf32> to vector<8x32xf32>
    %cst_40 = arith.constant dense<0.000000e+00> : vector<8x32xf32>
    %97 = tpu.matmul %95, %96, %cst_40 {dimension_numbers = #tpu.dot_dimension_numbers<[1], [0], [0], [1], [0, 0, 1, 1], [], []>} : vector<8x8xf32>, vector<8x32xf32>, vector<8x32xf32> -> vector<8x32xf32>
    %98 = arith.addf %77, %97 : vector<8x32xf32>
    %99 = vector.extract_strided_slice %34 {offsets = [0, 24], sizes = [8, 8], strides = [1, 1]} : vector<8x96xf32> to vector<8x8xf32>
    %100 = vector.extract_strided_slice %34 {offsets = [0, 56], sizes = [8, 8], strides = [1, 1]} : vector<8x96xf32> to vector<8x8xf32>
    %101 = vector.extract_strided_slice %34 {offsets = [0, 88], sizes = [8, 8], strides = [1, 1]} : vector<8x96xf32> to vector<8x8xf32>
    %cst_41 = arith.constant dense<0.000000e+00> : vector<8x8xf32>
    %102 = tpu.matmul %99, %100, %cst_41 {dimension_numbers = #tpu.dot_dimension_numbers<[1], [1], [0], [0], [0, 0, 1, 0], [], []>} : vector<8x8xf32>, vector<8x8xf32>, vector<8x8xf32> -> vector<8x8xf32>
    %cst_42 = arith.constant 0.353553385 : f32
    %103 = vector.broadcast %cst_42 : f32 to vector<8x8xf32>
    %104 = arith.mulf %102, %103 : vector<8x8xf32>
    %105 = arith.addf %104, %1 : vector<8x8xf32>
    %cst_43 = arith.constant dense<0xFF800000> : vector<8xf32>
    %106 = vector.multi_reduction <maximumf>, %105, %cst_43 [1] : vector<8x8xf32> to vector<8xf32>
    %107 = vector.shape_cast %106 : vector<8xf32> to vector<8x1xf32>
    %108 = vector.broadcast %107 : vector<8x1xf32> to vector<8x8xf32>
    %109 = arith.subf %105, %108 : vector<8x8xf32>
    %110 = math.exp %109 : vector<8x8xf32>
    %cst_44 = arith.constant dense<0.000000e+00> : vector<8xf32>
    %111 = vector.multi_reduction <add>, %110, %cst_44 [1] : vector<8x8xf32> to vector<8xf32>
    %112 = vector.shape_cast %111 : vector<8xf32> to vector<8x1xf32>
    %113 = tpu.reciprocal %112 {approx = true} : vector<8x1xf32> -> vector<8x1xf32>
    %114 = vector.broadcast %113 : vector<8x1xf32> to vector<8x8xf32>
    %115 = arith.mulf %110, %114 : vector<8x8xf32>
    %cst_45 = arith.constant dense<0.000000e+00> : vector<8x8xf32>
    %116 = tpu.matmul %115, %101, %cst_45 {dimension_numbers = #tpu.dot_dimension_numbers<[1], [0], [0], [1], [0, 0, 1, 1], [], []>} : vector<8x8xf32>, vector<8x8xf32>, vector<8x8xf32> -> vector<8x8xf32>
    %117 = vector.extract_strided_slice %36 {offsets = [24, 0], sizes = [8, 32], strides = [1, 1]} : vector<32x32xf32> to vector<8x32xf32>
    %cst_46 = arith.constant dense<0.000000e+00> : vector<8x32xf32>
    %118 = tpu.matmul %116, %117, %cst_46 {dimension_numbers = #tpu.dot_dimension_numbers<[1], [0], [0], [1], [0, 0, 1, 1], [], []>} : vector<8x8xf32>, vector<8x32xf32>, vector<8x32xf32> -> vector<8x32xf32>
    %119 = arith.addf %98, %118 : vector<8x32xf32>
    %120 = arith.addf %0, %119 : vector<8x32xf32>
    %c0_47 = arith.constant 0 : index
    %c0_48 = arith.constant 0 : index
    %c0_49 = arith.constant 0 : index
    %121 = vector.load %arg7[%c0_47, %c0_48, %c0_49] : memref<2x1x32xf32, #tpu.memory_space<vmem>>, vector<1x1x32xf32>
    %122 = vector.shape_cast %121 : vector<1x1x32xf32> to vector<1x32xf32>
    %123 = vector.broadcast %122 : vector<1x32xf32> to vector<8x32xf32>
    %124 = arith.addf %120, %123 : vector<8x32xf32>
    %c0_50 = arith.constant 0 : index
    %c0_51 = arith.constant 0 : index
    %c0_52 = arith.constant 0 : index
    %125 = vector.load %arg8[%c0_50, %c0_51, %c0_52] : memref<2x1x32xf32, #tpu.memory_space<vmem>>, vector<1x1x32xf32>
    %126 = vector.shape_cast %125 : vector<1x1x32xf32> to vector<1x32xf32>
    %c0_53 = arith.constant 0 : index
    %c0_54 = arith.constant 0 : index
    %c0_55 = arith.constant 0 : index
    %127 = vector.load %arg9[%c0_53, %c0_54, %c0_55] : memref<2x1x32xf32, #tpu.memory_space<vmem>>, vector<1x1x32xf32>
    %128 = vector.shape_cast %127 : vector<1x1x32xf32> to vector<1x32xf32>
    %cst_56 = arith.constant dense<0.000000e+00> : vector<8xf32>
    %129 = vector.multi_reduction <add>, %124, %cst_56 [1] : vector<8x32xf32> to vector<8xf32>
    %130 = vector.shape_cast %129 : vector<8xf32> to vector<8x1xf32>
    %cst_57 = arith.constant 3.200000e+01 : f32
    %131 = vector.broadcast %cst_57 : f32 to vector<8x1xf32>
    %132 = arith.divf %130, %131 : vector<8x1xf32>
    %133 = vector.broadcast %132 : vector<8x1xf32> to vector<8x32xf32>
    %134 = arith.subf %124, %133 : vector<8x32xf32>
    %135 = arith.mulf %134, %134 : vector<8x32xf32>
    %cst_58 = arith.constant dense<0.000000e+00> : vector<8xf32>
    %136 = vector.multi_reduction <add>, %135, %cst_58 [1] : vector<8x32xf32> to vector<8xf32>
    %137 = vector.shape_cast %136 : vector<8xf32> to vector<8x1xf32>
    %cst_59 = arith.constant 3.200000e+01 : f32
    %138 = vector.broadcast %cst_59 : f32 to vector<8x1xf32>
    %139 = arith.divf %137, %138 : vector<8x1xf32>
    %140 = vector.broadcast %132 : vector<8x1xf32> to vector<8x32xf32>
    %141 = arith.subf %124, %140 : vector<8x32xf32>
    %cst_60 = arith.constant 9.99999974E-6 : f32
    %142 = vector.broadcast %cst_60 : f32 to vector<8x1xf32>
    %143 = arith.addf %139, %142 : vector<8x1xf32>
    %144 = math.rsqrt %143 : vector<8x1xf32>
    %145 = vector.broadcast %144 : vector<8x1xf32> to vector<8x32xf32>
    %146 = arith.mulf %141, %145 : vector<8x32xf32>
    %147 = vector.broadcast %126 : vector<1x32xf32> to vector<8x32xf32>
    %148 = arith.mulf %146, %147 : vector<8x32xf32>
    %149 = vector.broadcast %128 : vector<1x32xf32> to vector<8x32xf32>
    %150 = arith.addf %148, %149 : vector<8x32xf32>
    %c0_61 = arith.constant 0 : index
    %c0_62 = arith.constant 0 : index
    %c0_63 = arith.constant 0 : index
    %151 = vector.load %arg10[%c0_61, %c0_62, %c0_63] : memref<2x32x64xf32, #tpu.memory_space<vmem>>, vector<1x32x64xf32>
    %152 = vector.shape_cast %151 : vector<1x32x64xf32> to vector<32x64xf32>
    %cst_64 = arith.constant dense<0.000000e+00> : vector<8x64xf32>
    %153 = tpu.matmul %150, %152, %cst_64 {dimension_numbers = #tpu.dot_dimension_numbers<[1], [0], [0], [1], [0, 0, 1, 1], [], []>} : vector<8x32xf32>, vector<32x64xf32>, vector<8x64xf32> -> vector<8x64xf32>
    %c0_65 = arith.constant 0 : index
    %c0_66 = arith.constant 0 : index
    %c0_67 = arith.constant 0 : index
    %154 = vector.load %arg11[%c0_65, %c0_66, %c0_67] : memref<2x1x64xf32, #tpu.memory_space<vmem>>, vector<1x1x64xf32>
    %155 = vector.shape_cast %154 : vector<1x1x64xf32> to vector<1x64xf32>
    %156 = vector.broadcast %155 : vector<1x64xf32> to vector<8x64xf32>
    %157 = arith.addf %153, %156 : vector<8x64xf32>
    %cst_68 = arith.constant 0.000000e+00 : f32
    %158 = vector.broadcast %cst_68 : f32 to vector<8x64xf32>
    %159 = arith.maximumf %157, %158 : vector<8x64xf32>
    %c0_69 = arith.constant 0 : index
    %c0_70 = arith.constant 0 : index
    %c0_71 = arith.constant 0 : index
    %160 = vector.load %arg12[%c0_69, %c0_70, %c0_71] : memref<2x64x32xf32, #tpu.memory_space<vmem>>, vector<1x64x32xf32>
    %161 = vector.shape_cast %160 : vector<1x64x32xf32> to vector<64x32xf32>
    %cst_72 = arith.constant dense<0.000000e+00> : vector<8x32xf32>
    %162 = tpu.matmul %159, %161, %cst_72 {dimension_numbers = #tpu.dot_dimension_numbers<[1], [0], [0], [1], [0, 0, 1, 1], [], []>} : vector<8x64xf32>, vector<64x32xf32>, vector<8x32xf32> -> vector<8x32xf32>
    %c0_73 = arith.constant 0 : index
    %c0_74 = arith.constant 0 : index
    %c0_75 = arith.constant 0 : index
    %163 = vector.load %arg13[%c0_73, %c0_74, %c0_75] : memref<2x1x32xf32, #tpu.memory_space<vmem>>, vector<1x1x32xf32>
    %164 = vector.shape_cast %163 : vector<1x1x32xf32> to vector<1x32xf32>
    %165 = vector.broadcast %164 : vector<1x32xf32> to vector<8x32xf32>
    %166 = arith.addf %162, %165 : vector<8x32xf32>
    %167 = arith.addf %124, %166 : vector<8x32xf32>
    %c1 = arith.constant 1 : index
    %c0_76 = arith.constant 0 : index
    %c0_77 = arith.constant 0 : index
    %168 = vector.load %arg2[%c1, %c0_76, %c0_77] : memref<2x1x32xf32, #tpu.memory_space<vmem>>, vector<1x1x32xf32>
    %169 = vector.shape_cast %168 : vector<1x1x32xf32> to vector<1x32xf32>
    %c1_78 = arith.constant 1 : index
    %c0_79 = arith.constant 0 : index
    %c0_80 = arith.constant 0 : index
    %170 = vector.load %arg3[%c1_78, %c0_79, %c0_80] : memref<2x1x32xf32, #tpu.memory_space<vmem>>, vector<1x1x32xf32>
    %171 = vector.shape_cast %170 : vector<1x1x32xf32> to vector<1x32xf32>
    %cst_81 = arith.constant dense<0.000000e+00> : vector<8xf32>
    %172 = vector.multi_reduction <add>, %167, %cst_81 [1] : vector<8x32xf32> to vector<8xf32>
    %173 = vector.shape_cast %172 : vector<8xf32> to vector<8x1xf32>
    %cst_82 = arith.constant 3.200000e+01 : f32
    %174 = vector.broadcast %cst_82 : f32 to vector<8x1xf32>
    %175 = arith.divf %173, %174 : vector<8x1xf32>
    %176 = vector.broadcast %175 : vector<8x1xf32> to vector<8x32xf32>
    %177 = arith.subf %167, %176 : vector<8x32xf32>
    %178 = arith.mulf %177, %177 : vector<8x32xf32>
    %cst_83 = arith.constant dense<0.000000e+00> : vector<8xf32>
    %179 = vector.multi_reduction <add>, %178, %cst_83 [1] : vector<8x32xf32> to vector<8xf32>
    %180 = vector.shape_cast %179 : vector<8xf32> to vector<8x1xf32>
    %cst_84 = arith.constant 3.200000e+01 : f32
    %181 = vector.broadcast %cst_84 : f32 to vector<8x1xf32>
    %182 = arith.divf %180, %181 : vector<8x1xf32>
    %183 = vector.broadcast %175 : vector<8x1xf32> to vector<8x32xf32>
    %184 = arith.subf %167, %183 : vector<8x32xf32>
    %cst_85 = arith.constant 9.99999974E-6 : f32
    %185 = vector.broadcast %cst_85 : f32 to vector<8x1xf32>
    %186 = arith.addf %182, %185 : vector<8x1xf32>
    %187 = math.rsqrt %186 : vector<8x1xf32>
    %188 = vector.broadcast %187 : vector<8x1xf32> to vector<8x32xf32>
    %189 = arith.mulf %184, %188 : vector<8x32xf32>
    %190 = vector.broadcast %169 : vector<1x32xf32> to vector<8x32xf32>
    %191 = arith.mulf %189, %190 : vector<8x32xf32>
    %192 = vector.broadcast %171 : vector<1x32xf32> to vector<8x32xf32>
    %193 = arith.addf %191, %192 : vector<8x32xf32>
    %c1_86 = arith.constant 1 : index
    %c0_87 = arith.constant 0 : index
    %c0_88 = arith.constant 0 : index
    %194 = vector.load %arg4[%c1_86, %c0_87, %c0_88] : memref<2x32x96xf32, #tpu.memory_space<vmem>>, vector<1x32x96xf32>
    %195 = vector.shape_cast %194 : vector<1x32x96xf32> to vector<32x96xf32>
    %cst_89 = arith.constant dense<0.000000e+00> : vector<8x96xf32>
    %196 = tpu.matmul %193, %195, %cst_89 {dimension_numbers = #tpu.dot_dimension_numbers<[1], [0], [0], [1], [0, 0, 1, 1], [], []>} : vector<8x32xf32>, vector<32x96xf32>, vector<8x96xf32> -> vector<8x96xf32>
    %c1_90 = arith.constant 1 : index
    %c0_91 = arith.constant 0 : index
    %c0_92 = arith.constant 0 : index
    %197 = vector.load %arg5[%c1_90, %c0_91, %c0_92] : memref<2x1x96xf32, #tpu.memory_space<vmem>>, vector<1x1x96xf32>
    %198 = vector.shape_cast %197 : vector<1x1x96xf32> to vector<1x96xf32>
    %199 = vector.broadcast %198 : vector<1x96xf32> to vector<8x96xf32>
    %200 = arith.addf %196, %199 : vector<8x96xf32>
    %c1_93 = arith.constant 1 : index
    %c0_94 = arith.constant 0 : index
    %c0_95 = arith.constant 0 : index
    %201 = vector.load %arg6[%c1_93, %c0_94, %c0_95] : memref<2x32x32xf32, #tpu.memory_space<vmem>>, vector<1x32x32xf32>
    %202 = vector.shape_cast %201 : vector<1x32x32xf32> to vector<32x32xf32>
    %203 = vector.extract_strided_slice %200 {offsets = [0, 0], sizes = [8, 8], strides = [1, 1]} : vector<8x96xf32> to vector<8x8xf32>
    %204 = vector.extract_strided_slice %200 {offsets = [0, 32], sizes = [8, 8], strides = [1, 1]} : vector<8x96xf32> to vector<8x8xf32>
    %205 = vector.extract_strided_slice %200 {offsets = [0, 64], sizes = [8, 8], strides = [1, 1]} : vector<8x96xf32> to vector<8x8xf32>
    %cst_96 = arith.constant dense<0.000000e+00> : vector<8x8xf32>
    %206 = tpu.matmul %203, %204, %cst_96 {dimension_numbers = #tpu.dot_dimension_numbers<[1], [1], [0], [0], [0, 0, 1, 0], [], []>} : vector<8x8xf32>, vector<8x8xf32>, vector<8x8xf32> -> vector<8x8xf32>
    %cst_97 = arith.constant 0.353553385 : f32
    %207 = vector.broadcast %cst_97 : f32 to vector<8x8xf32>
    %208 = arith.mulf %206, %207 : vector<8x8xf32>
    %209 = arith.addf %208, %1 : vector<8x8xf32>
    %cst_98 = arith.constant dense<0xFF800000> : vector<8xf32>
    %210 = vector.multi_reduction <maximumf>, %209, %cst_98 [1] : vector<8x8xf32> to vector<8xf32>
    %211 = vector.shape_cast %210 : vector<8xf32> to vector<8x1xf32>
    %212 = vector.broadcast %211 : vector<8x1xf32> to vector<8x8xf32>
    %213 = arith.subf %209, %212 : vector<8x8xf32>
    %214 = math.exp %213 : vector<8x8xf32>
    %cst_99 = arith.constant dense<0.000000e+00> : vector<8xf32>
    %215 = vector.multi_reduction <add>, %214, %cst_99 [1] : vector<8x8xf32> to vector<8xf32>
    %216 = vector.shape_cast %215 : vector<8xf32> to vector<8x1xf32>
    %217 = tpu.reciprocal %216 {approx = true} : vector<8x1xf32> -> vector<8x1xf32>
    %218 = vector.broadcast %217 : vector<8x1xf32> to vector<8x8xf32>
    %219 = arith.mulf %214, %218 : vector<8x8xf32>
    %cst_100 = arith.constant dense<0.000000e+00> : vector<8x8xf32>
    %220 = tpu.matmul %219, %205, %cst_100 {dimension_numbers = #tpu.dot_dimension_numbers<[1], [0], [0], [1], [0, 0, 1, 1], [], []>} : vector<8x8xf32>, vector<8x8xf32>, vector<8x8xf32> -> vector<8x8xf32>
    %221 = vector.extract_strided_slice %202 {offsets = [0, 0], sizes = [8, 32], strides = [1, 1]} : vector<32x32xf32> to vector<8x32xf32>
    %cst_101 = arith.constant dense<0.000000e+00> : vector<8x32xf32>
    %222 = tpu.matmul %220, %221, %cst_101 {dimension_numbers = #tpu.dot_dimension_numbers<[1], [0], [0], [1], [0, 0, 1, 1], [], []>} : vector<8x8xf32>, vector<8x32xf32>, vector<8x32xf32> -> vector<8x32xf32>
    %223 = vector.extract_strided_slice %200 {offsets = [0, 8], sizes = [8, 8], strides = [1, 1]} : vector<8x96xf32> to vector<8x8xf32>
    %224 = vector.extract_strided_slice %200 {offsets = [0, 40], sizes = [8, 8], strides = [1, 1]} : vector<8x96xf32> to vector<8x8xf32>
    %225 = vector.extract_strided_slice %200 {offsets = [0, 72], sizes = [8, 8], strides = [1, 1]} : vector<8x96xf32> to vector<8x8xf32>
    %cst_102 = arith.constant dense<0.000000e+00> : vector<8x8xf32>
    %226 = tpu.matmul %223, %224, %cst_102 {dimension_numbers = #tpu.dot_dimension_numbers<[1], [1], [0], [0], [0, 0, 1, 0], [], []>} : vector<8x8xf32>, vector<8x8xf32>, vector<8x8xf32> -> vector<8x8xf32>
    %cst_103 = arith.constant 0.353553385 : f32
    %227 = vector.broadcast %cst_103 : f32 to vector<8x8xf32>
    %228 = arith.mulf %226, %227 : vector<8x8xf32>
    %229 = arith.addf %228, %1 : vector<8x8xf32>
    %cst_104 = arith.constant dense<0xFF800000> : vector<8xf32>
    %230 = vector.multi_reduction <maximumf>, %229, %cst_104 [1] : vector<8x8xf32> to vector<8xf32>
    %231 = vector.shape_cast %230 : vector<8xf32> to vector<8x1xf32>
    %232 = vector.broadcast %231 : vector<8x1xf32> to vector<8x8xf32>
    %233 = arith.subf %229, %232 : vector<8x8xf32>
    %234 = math.exp %233 : vector<8x8xf32>
    %cst_105 = arith.constant dense<0.000000e+00> : vector<8xf32>
    %235 = vector.multi_reduction <add>, %234, %cst_105 [1] : vector<8x8xf32> to vector<8xf32>
    %236 = vector.shape_cast %235 : vector<8xf32> to vector<8x1xf32>
    %237 = tpu.reciprocal %236 {approx = true} : vector<8x1xf32> -> vector<8x1xf32>
    %238 = vector.broadcast %237 : vector<8x1xf32> to vector<8x8xf32>
    %239 = arith.mulf %234, %238 : vector<8x8xf32>
    %cst_106 = arith.constant dense<0.000000e+00> : vector<8x8xf32>
    %240 = tpu.matmul %239, %225, %cst_106 {dimension_numbers = #tpu.dot_dimension_numbers<[1], [0], [0], [1], [0, 0, 1, 1], [], []>} : vector<8x8xf32>, vector<8x8xf32>, vector<8x8xf32> -> vector<8x8xf32>
    %241 = vector.extract_strided_slice %202 {offsets = [8, 0], sizes = [8, 32], strides = [1, 1]} : vector<32x32xf32> to vector<8x32xf32>
    %cst_107 = arith.constant dense<0.000000e+00> : vector<8x32xf32>
    %242 = tpu.matmul %240, %241, %cst_107 {dimension_numbers = #tpu.dot_dimension_numbers<[1], [0], [0], [1], [0, 0, 1, 1], [], []>} : vector<8x8xf32>, vector<8x32xf32>, vector<8x32xf32> -> vector<8x32xf32>
    %243 = arith.addf %222, %242 : vector<8x32xf32>
    %244 = vector.extract_strided_slice %200 {offsets = [0, 16], sizes = [8, 8], strides = [1, 1]} : vector<8x96xf32> to vector<8x8xf32>
    %245 = vector.extract_strided_slice %200 {offsets = [0, 48], sizes = [8, 8], strides = [1, 1]} : vector<8x96xf32> to vector<8x8xf32>
    %246 = vector.extract_strided_slice %200 {offsets = [0, 80], sizes = [8, 8], strides = [1, 1]} : vector<8x96xf32> to vector<8x8xf32>
    %cst_108 = arith.constant dense<0.000000e+00> : vector<8x8xf32>
    %247 = tpu.matmul %244, %245, %cst_108 {dimension_numbers = #tpu.dot_dimension_numbers<[1], [1], [0], [0], [0, 0, 1, 0], [], []>} : vector<8x8xf32>, vector<8x8xf32>, vector<8x8xf32> -> vector<8x8xf32>
    %cst_109 = arith.constant 0.353553385 : f32
    %248 = vector.broadcast %cst_109 : f32 to vector<8x8xf32>
    %249 = arith.mulf %247, %248 : vector<8x8xf32>
    %250 = arith.addf %249, %1 : vector<8x8xf32>
    %cst_110 = arith.constant dense<0xFF800000> : vector<8xf32>
    %251 = vector.multi_reduction <maximumf>, %250, %cst_110 [1] : vector<8x8xf32> to vector<8xf32>
    %252 = vector.shape_cast %251 : vector<8xf32> to vector<8x1xf32>
    %253 = vector.broadcast %252 : vector<8x1xf32> to vector<8x8xf32>
    %254 = arith.subf %250, %253 : vector<8x8xf32>
    %255 = math.exp %254 : vector<8x8xf32>
    %cst_111 = arith.constant dense<0.000000e+00> : vector<8xf32>
    %256 = vector.multi_reduction <add>, %255, %cst_111 [1] : vector<8x8xf32> to vector<8xf32>
    %257 = vector.shape_cast %256 : vector<8xf32> to vector<8x1xf32>
    %258 = tpu.reciprocal %257 {approx = true} : vector<8x1xf32> -> vector<8x1xf32>
    %259 = vector.broadcast %258 : vector<8x1xf32> to vector<8x8xf32>
    %260 = arith.mulf %255, %259 : vector<8x8xf32>
    %cst_112 = arith.constant dense<0.000000e+00> : vector<8x8xf32>
    %261 = tpu.matmul %260, %246, %cst_112 {dimension_numbers = #tpu.dot_dimension_numbers<[1], [0], [0], [1], [0, 0, 1, 1], [], []>} : vector<8x8xf32>, vector<8x8xf32>, vector<8x8xf32> -> vector<8x8xf32>
    %262 = vector.extract_strided_slice %202 {offsets = [16, 0], sizes = [8, 32], strides = [1, 1]} : vector<32x32xf32> to vector<8x32xf32>
    %cst_113 = arith.constant dense<0.000000e+00> : vector<8x32xf32>
    %263 = tpu.matmul %261, %262, %cst_113 {dimension_numbers = #tpu.dot_dimension_numbers<[1], [0], [0], [1], [0, 0, 1, 1], [], []>} : vector<8x8xf32>, vector<8x32xf32>, vector<8x32xf32> -> vector<8x32xf32>
    %264 = arith.addf %243, %263 : vector<8x32xf32>
    %265 = vector.extract_strided_slice %200 {offsets = [0, 24], sizes = [8, 8], strides = [1, 1]} : vector<8x96xf32> to vector<8x8xf32>
    %266 = vector.extract_strided_slice %200 {offsets = [0, 56], sizes = [8, 8], strides = [1, 1]} : vector<8x96xf32> to vector<8x8xf32>
    %267 = vector.extract_strided_slice %200 {offsets = [0, 88], sizes = [8, 8], strides = [1, 1]} : vector<8x96xf32> to vector<8x8xf32>
    %cst_114 = arith.constant dense<0.000000e+00> : vector<8x8xf32>
    %268 = tpu.matmul %265, %266, %cst_114 {dimension_numbers = #tpu.dot_dimension_numbers<[1], [1], [0], [0], [0, 0, 1, 0], [], []>} : vector<8x8xf32>, vector<8x8xf32>, vector<8x8xf32> -> vector<8x8xf32>
    %cst_115 = arith.constant 0.353553385 : f32
    %269 = vector.broadcast %cst_115 : f32 to vector<8x8xf32>
    %270 = arith.mulf %268, %269 : vector<8x8xf32>
    %271 = arith.addf %270, %1 : vector<8x8xf32>
    %cst_116 = arith.constant dense<0xFF800000> : vector<8xf32>
    %272 = vector.multi_reduction <maximumf>, %271, %cst_116 [1] : vector<8x8xf32> to vector<8xf32>
    %273 = vector.shape_cast %272 : vector<8xf32> to vector<8x1xf32>
    %274 = vector.broadcast %273 : vector<8x1xf32> to vector<8x8xf32>
    %275 = arith.subf %271, %274 : vector<8x8xf32>
    %276 = math.exp %275 : vector<8x8xf32>
    %cst_117 = arith.constant dense<0.000000e+00> : vector<8xf32>
    %277 = vector.multi_reduction <add>, %276, %cst_117 [1] : vector<8x8xf32> to vector<8xf32>
    %278 = vector.shape_cast %277 : vector<8xf32> to vector<8x1xf32>
    %279 = tpu.reciprocal %278 {approx = true} : vector<8x1xf32> -> vector<8x1xf32>
    %280 = vector.broadcast %279 : vector<8x1xf32> to vector<8x8xf32>
    %281 = arith.mulf %276, %280 : vector<8x8xf32>
    %cst_118 = arith.constant dense<0.000000e+00> : vector<8x8xf32>
    %282 = tpu.matmul %281, %267, %cst_118 {dimension_numbers = #tpu.dot_dimension_numbers<[1], [0], [0], [1], [0, 0, 1, 1], [], []>} : vector<8x8xf32>, vector<8x8xf32>, vector<8x8xf32> -> vector<8x8xf32>
    %283 = vector.extract_strided_slice %202 {offsets = [24, 0], sizes = [8, 32], strides = [1, 1]} : vector<32x32xf32> to vector<8x32xf32>
    %cst_119 = arith.constant dense<0.000000e+00> : vector<8x32xf32>
    %284 = tpu.matmul %282, %283, %cst_119 {dimension_numbers = #tpu.dot_dimension_numbers<[1], [0], [0], [1], [0, 0, 1, 1], [], []>} : vector<8x8xf32>, vector<8x32xf32>, vector<8x32xf32> -> vector<8x32xf32>
    %285 = arith.addf %264, %284 : vector<8x32xf32>
    %286 = arith.addf %167, %285 : vector<8x32xf32>
    %c1_120 = arith.constant 1 : index
    %c0_121 = arith.constant 0 : index
    %c0_122 = arith.constant 0 : index
    %287 = vector.load %arg7[%c1_120, %c0_121, %c0_122] : memref<2x1x32xf32, #tpu.memory_space<vmem>>, vector<1x1x32xf32>
    %288 = vector.shape_cast %287 : vector<1x1x32xf32> to vector<1x32xf32>
    %289 = vector.broadcast %288 : vector<1x32xf32> to vector<8x32xf32>
    %290 = arith.addf %286, %289 : vector<8x32xf32>
    %c1_123 = arith.constant 1 : index
    %c0_124 = arith.constant 0 : index
    %c0_125 = arith.constant 0 : index
    %291 = vector.load %arg8[%c1_123, %c0_124, %c0_125] : memref<2x1x32xf32, #tpu.memory_space<vmem>>, vector<1x1x32xf32>
    %292 = vector.shape_cast %291 : vector<1x1x32xf32> to vector<1x32xf32>
    %c1_126 = arith.constant 1 : index
    %c0_127 = arith.constant 0 : index
    %c0_128 = arith.constant 0 : index
    %293 = vector.load %arg9[%c1_126, %c0_127, %c0_128] : memref<2x1x32xf32, #tpu.memory_space<vmem>>, vector<1x1x32xf32>
    %294 = vector.shape_cast %293 : vector<1x1x32xf32> to vector<1x32xf32>
    %cst_129 = arith.constant dense<0.000000e+00> : vector<8xf32>
    %295 = vector.multi_reduction <add>, %290, %cst_129 [1] : vector<8x32xf32> to vector<8xf32>
    %296 = vector.shape_cast %295 : vector<8xf32> to vector<8x1xf32>
    %cst_130 = arith.constant 3.200000e+01 : f32
    %297 = vector.broadcast %cst_130 : f32 to vector<8x1xf32>
    %298 = arith.divf %296, %297 : vector<8x1xf32>
    %299 = vector.broadcast %298 : vector<8x1xf32> to vector<8x32xf32>
    %300 = arith.subf %290, %299 : vector<8x32xf32>
    %301 = arith.mulf %300, %300 : vector<8x32xf32>
    %cst_131 = arith.constant dense<0.000000e+00> : vector<8xf32>
    %302 = vector.multi_reduction <add>, %301, %cst_131 [1] : vector<8x32xf32> to vector<8xf32>
    %303 = vector.shape_cast %302 : vector<8xf32> to vector<8x1xf32>
    %cst_132 = arith.constant 3.200000e+01 : f32
    %304 = vector.broadcast %cst_132 : f32 to vector<8x1xf32>
    %305 = arith.divf %303, %304 : vector<8x1xf32>
    %306 = vector.broadcast %298 : vector<8x1xf32> to vector<8x32xf32>
    %307 = arith.subf %290, %306 : vector<8x32xf32>
    %cst_133 = arith.constant 9.99999974E-6 : f32
    %308 = vector.broadcast %cst_133 : f32 to vector<8x1xf32>
    %309 = arith.addf %305, %308 : vector<8x1xf32>
    %310 = math.rsqrt %309 : vector<8x1xf32>
    %311 = vector.broadcast %310 : vector<8x1xf32> to vector<8x32xf32>
    %312 = arith.mulf %307, %311 : vector<8x32xf32>
    %313 = vector.broadcast %292 : vector<1x32xf32> to vector<8x32xf32>
    %314 = arith.mulf %312, %313 : vector<8x32xf32>
    %315 = vector.broadcast %294 : vector<1x32xf32> to vector<8x32xf32>
    %316 = arith.addf %314, %315 : vector<8x32xf32>
    %c1_134 = arith.constant 1 : index
    %c0_135 = arith.constant 0 : index
    %c0_136 = arith.constant 0 : index
    %317 = vector.load %arg10[%c1_134, %c0_135, %c0_136] : memref<2x32x64xf32, #tpu.memory_space<vmem>>, vector<1x32x64xf32>
    %318 = vector.shape_cast %317 : vector<1x32x64xf32> to vector<32x64xf32>
    %cst_137 = arith.constant dense<0.000000e+00> : vector<8x64xf32>
    %319 = tpu.matmul %316, %318, %cst_137 {dimension_numbers = #tpu.dot_dimension_numbers<[1], [0], [0], [1], [0, 0, 1, 1], [], []>} : vector<8x32xf32>, vector<32x64xf32>, vector<8x64xf32> -> vector<8x64xf32>
    %c1_138 = arith.constant 1 : index
    %c0_139 = arith.constant 0 : index
    %c0_140 = arith.constant 0 : index
    %320 = vector.load %arg11[%c1_138, %c0_139, %c0_140] : memref<2x1x64xf32, #tpu.memory_space<vmem>>, vector<1x1x64xf32>
    %321 = vector.shape_cast %320 : vector<1x1x64xf32> to vector<1x64xf32>
    %322 = vector.broadcast %321 : vector<1x64xf32> to vector<8x64xf32>
    %323 = arith.addf %319, %322 : vector<8x64xf32>
    %cst_141 = arith.constant 0.000000e+00 : f32
    %324 = vector.broadcast %cst_141 : f32 to vector<8x64xf32>
    %325 = arith.maximumf %323, %324 : vector<8x64xf32>
    %c1_142 = arith.constant 1 : index
    %c0_143 = arith.constant 0 : index
    %c0_144 = arith.constant 0 : index
    %326 = vector.load %arg12[%c1_142, %c0_143, %c0_144] : memref<2x64x32xf32, #tpu.memory_space<vmem>>, vector<1x64x32xf32>
    %327 = vector.shape_cast %326 : vector<1x64x32xf32> to vector<64x32xf32>
    %cst_145 = arith.constant dense<0.000000e+00> : vector<8x32xf32>
    %328 = tpu.matmul %325, %327, %cst_145 {dimension_numbers = #tpu.dot_dimension_numbers<[1], [0], [0], [1], [0, 0, 1, 1], [], []>} : vector<8x64xf32>, vector<64x32xf32>, vector<8x32xf32> -> vector<8x32xf32>
    %c1_146 = arith.constant 1 : index
    %c0_147 = arith.constant 0 : index
    %c0_148 = arith.constant 0 : index
    %329 = vector.load %arg13[%c1_146, %c0_147, %c0_148] : memref<2x1x32xf32, #tpu.memory_space<vmem>>, vector<1x1x32xf32>
    %330 = vector.shape_cast %329 : vector<1x1x32xf32> to vector<1x32xf32>
    %331 = vector.broadcast %330 : vector<1x32xf32> to vector<8x32xf32>
    %332 = arith.addf %328, %331 : vector<8x32xf32>
    %333 = arith.addf %290, %332 : vector<8x32xf32>
    %c0_149 = arith.constant 0 : index
    %c0_150 = arith.constant 0 : index
    %334 = vector.load %arg14[%c0_149, %c0_150] : memref<8x32xf32, #tpu.memory_space<vmem>>, vector<8x32xf32>
    tpu.vector_store %arg14[%c0_149, %c0_150], %333 {strides = array<i32>} : memref<8x32xf32, #tpu.memory_space<vmem>>, vector<8x32xf32>,
    return
  }
}

module attributes {stable_mosaic.version = 11 : i64} {
  func.func @_heads_kernel(%arg0: memref<8x32xf32, #tpu.memory_space<vmem>>, %arg1: memref<8x32xf32, #tpu.memory_space<vmem>>, %arg2: memref<8x1xf32, #tpu.memory_space<vmem>>, %arg3: memref<8x1xf32, #tpu.memory_space<vmem>>, %arg4: memref<2x8xf32, #tpu.memory_space<vmem>>, %arg5: memref<8x2xf32, #tpu.memory_space<vmem>>, %arg6: memref<1x32xf32, #tpu.memory_space<vmem>>, %arg7: memref<1x32xf32, #tpu.memory_space<vmem>>, %arg8: memref<64x4xf32, #tpu.memory_space<vmem>>, %arg9: memref<1x4xf32, #tpu.memory_space<vmem>>, %arg10: memref<64x4xf32, #tpu.memory_space<vmem>>, %arg11: memref<1x4xf32, #tpu.memory_space<vmem>>, %arg12: memref<32x4xf32, #tpu.memory_space<vmem>>, %arg13: memref<1x4xf32, #tpu.memory_space<vmem>>, %arg14: memref<32x128xf32, #tpu.memory_space<vmem>>, %arg15: memref<1x128xf32, #tpu.memory_space<vmem>>, %arg16: memref<4x32x32xf32, #tpu.memory_space<vmem>>, %arg17: memref<4x1x32xf32, #tpu.memory_space<vmem>>, %arg18: memref<96x3xf32, #tpu.memory_space<vmem>>, %arg19: memref<1x3xf32, #tpu.memory_space<vmem>>, %arg20: memref<32x2xf32, #tpu.memory_space<vmem>>, %arg21: memref<1x2xf32, #tpu.memory_space<vmem>>, %arg22: memref<96x1xf32, #tpu.memory_space<vmem>>, %arg23: memref<1x1xf32, #tpu.memory_space<vmem>>, %arg24: memref<8x3xf32, #tpu.memory_space<vmem>>, %arg25: memref<2x2xf32, #tpu.memory_space<vmem>>, %arg26: memref<8x1xf32, #tpu.memory_space<vmem>>, %arg27: memref<1x1xf32, #tpu.memory_space<vmem>>) attributes {dimension_semantics = [], scalar_prefetch = 0 : i64, scratch_operands = 0 : i64, tpu.core_type = #tpu.core_type<tc>} {
    %c0 = arith.constant 0 : index
    %c0_0 = arith.constant 0 : index
    %0 = vector.load %arg2[%c0, %c0_0] : memref<8x1xf32, #tpu.memory_space<vmem>>, vector<8x1xf32>
    %c0_1 = arith.constant 0 : index
    %c0_2 = arith.constant 0 : index
    %1 = vector.load %arg0[%c0_1, %c0_2] : memref<8x32xf32, #tpu.memory_space<vmem>>, vector<8x32xf32>
    %c0_3 = arith.constant 0 : index
    %c0_4 = arith.constant 0 : index
    %2 = vector.load %arg6[%c0_3, %c0_4] : memref<1x32xf32, #tpu.memory_space<vmem>>, vector<1x32xf32>
    %c0_5 = arith.constant 0 : index
    %c0_6 = arith.constant 0 : index
    %3 = vector.load %arg7[%c0_5, %c0_6] : memref<1x32xf32, #tpu.memory_space<vmem>>, vector<1x32xf32>
    %cst = arith.constant dense<0.000000e+00> : vector<8xf32>
    %4 = vector.multi_reduction <add>, %1, %cst [1] : vector<8x32xf32> to vector<8xf32>
    %5 = vector.shape_cast %4 : vector<8xf32> to vector<8x1xf32>
    %cst_7 = arith.constant 3.200000e+01 : f32
    %6 = vector.broadcast %cst_7 : f32 to vector<8x1xf32>
    %7 = arith.divf %5, %6 : vector<8x1xf32>
    %8 = vector.broadcast %7 : vector<8x1xf32> to vector<8x32xf32>
    %9 = arith.subf %1, %8 : vector<8x32xf32>
    %10 = arith.mulf %9, %9 : vector<8x32xf32>
    %cst_8 = arith.constant dense<0.000000e+00> : vector<8xf32>
    %11 = vector.multi_reduction <add>, %10, %cst_8 [1] : vector<8x32xf32> to vector<8xf32>
    %12 = vector.shape_cast %11 : vector<8xf32> to vector<8x1xf32>
    %cst_9 = arith.constant 3.200000e+01 : f32
    %13 = vector.broadcast %cst_9 : f32 to vector<8x1xf32>
    %14 = arith.divf %12, %13 : vector<8x1xf32>
    %15 = vector.broadcast %7 : vector<8x1xf32> to vector<8x32xf32>
    %16 = arith.subf %1, %15 : vector<8x32xf32>
    %cst_10 = arith.constant 9.99999974E-6 : f32
    %17 = vector.broadcast %cst_10 : f32 to vector<8x1xf32>
    %18 = arith.addf %14, %17 : vector<8x1xf32>
    %19 = math.rsqrt %18 : vector<8x1xf32>
    %20 = vector.broadcast %19 : vector<8x1xf32> to vector<8x32xf32>
    %21 = arith.mulf %16, %20 : vector<8x32xf32>
    %22 = vector.broadcast %2 : vector<1x32xf32> to vector<8x32xf32>
    %23 = arith.mulf %21, %22 : vector<8x32xf32>
    %24 = vector.broadcast %3 : vector<1x32xf32> to vector<8x32xf32>
    %25 = arith.addf %23, %24 : vector<8x32xf32>
    %26 = vector.broadcast %0 : vector<8x1xf32> to vector<8x32xf32>
    %27 = arith.mulf %25, %26 : vector<8x32xf32>
    %c0_11 = arith.constant 0 : index
    %c0_12 = arith.constant 0 : index
    %28 = vector.load %arg4[%c0_11, %c0_12] : memref<2x8xf32, #tpu.memory_space<vmem>>, vector<2x8xf32>
    %cst_13 = arith.constant dense<0.000000e+00> : vector<2x1xf32>
    %29 = tpu.matmul %28, %0, %cst_13 {dimension_numbers = #tpu.dot_dimension_numbers<[1], [0], [0], [1], [0, 0, 1, 1], [], []>} : vector<2x8xf32>, vector<8x1xf32>, vector<2x1xf32> -> vector<2x1xf32>
    %cst_14 = arith.constant 1.000000e+00 : f32
    %30 = vector.broadcast %cst_14 : f32 to vector<2x1xf32>
    %31 = arith.maximumf %29, %30 : vector<2x1xf32>
    %cst_15 = arith.constant dense<0.000000e+00> : vector<2x32xf32>
    %32 = tpu.matmul %28, %27, %cst_15 {dimension_numbers = #tpu.dot_dimension_numbers<[1], [0], [0], [1], [0, 0, 1, 1], [], []>} : vector<2x8xf32>, vector<8x32xf32>, vector<2x32xf32> -> vector<2x32xf32>
    %33 = vector.broadcast %31 : vector<2x1xf32> to vector<2x32xf32>
    %34 = arith.divf %32, %33 : vector<2x32xf32>
    %35 = arith.mulf %27, %27 : vector<8x32xf32>
    %36 = vector.broadcast %0 : vector<8x1xf32> to vector<8x32xf32>
    %37 = arith.mulf %35, %36 : vector<8x32xf32>
    %cst_16 = arith.constant dense<0.000000e+00> : vector<2x32xf32>
    %38 = tpu.matmul %28, %37, %cst_16 {dimension_numbers = #tpu.dot_dimension_numbers<[1], [0], [0], [1], [0, 0, 1, 1], [], []>} : vector<2x8xf32>, vector<8x32xf32>, vector<2x32xf32> -> vector<2x32xf32>
    %39 = vector.broadcast %31 : vector<2x1xf32> to vector<2x32xf32>
    %40 = arith.divf %38, %39 : vector<2x32xf32>
    %41 = arith.mulf %34, %34 : vector<2x32xf32>
    %42 = arith.subf %40, %41 : vector<2x32xf32>
    %cst_17 = arith.constant 9.99999997E-7 : f32
    %43 = vector.broadcast %cst_17 : f32 to vector<2x32xf32>
    %44 = arith.maximumf %42, %43 : vector<2x32xf32>
    %45 = math.sqrt %44 : vector<2x32xf32>
    %c0_18 = arith.constant 0 : index
    %c0_19 = arith.constant 0 : index
    %46 = vector.load %arg8[%c0_18, %c0_19] : memref<64x4xf32, #tpu.memory_space<vmem>>, vector<64x4xf32>
    %c0_20 = arith.constant 0 : index
    %c0_21 = arith.constant 0 : index
    %47 = vector.load %arg10[%c0_20, %c0_21] : memref<64x4xf32, #tpu.memory_space<vmem>>, vector<64x4xf32>
    %48 = vector.extract_strided_slice %46 {offsets = [0, 0], sizes = [32, 4], strides = [1, 1]} : vector<64x4xf32> to vector<32x4xf32>
    %cst_22 = arith.constant dense<0.000000e+00> : vector<2x4xf32>
    %49 = tpu.matmul %34, %48, %cst_22 {dimension_numbers = #tpu.dot_dimension_numbers<[1], [0], [0], [1], [0, 0, 1, 1], [], []>} : vector<2x32xf32>, vector<32x4xf32>, vector<2x4xf32> -> vector<2x4xf32>
    %50 = vector.extract_strided_slice %46 {offsets = [32, 0], sizes = [32, 4], strides = [1, 1]} : vector<64x4xf32> to vector<32x4xf32>
    %cst_23 = arith.constant dense<0.000000e+00> : vector<2x4xf32>
    %51 = tpu.matmul %45, %50, %cst_23 {dimension_numbers = #tpu.dot_dimension_numbers<[1], [0], [0], [1], [0, 0, 1, 1], [], []>} : vector<2x32xf32>, vector<32x4xf32>, vector<2x4xf32> -> vector<2x4xf32>
    %52 = arith.addf %49, %51 : vector<2x4xf32>
    %c0_24 = arith.constant 0 : index
    %c0_25 = arith.constant 0 : index
    %53 = vector.load %arg9[%c0_24, %c0_25] : memref<1x4xf32, #tpu.memory_space<vmem>>, vector<1x4xf32>
    %54 = vector.broadcast %53 : vector<1x4xf32> to vector<2x4xf32>
    %55 = arith.addf %52, %54 : vector<2x4xf32>
    %56 = vector.extract_strided_slice %47 {offsets = [0, 0], sizes = [32, 4], strides = [1, 1]} : vector<64x4xf32> to vector<32x4xf32>
    %cst_26 = arith.constant dense<0.000000e+00> : vector<2x4xf32>
    %57 = tpu.matmul %34, %56, %cst_26 {dimension_numbers = #tpu.dot_dimension_numbers<[1], [0], [0], [1], [0, 0, 1, 1], [], []>} : vector<2x32xf32>, vector<32x4xf32>, vector<2x4xf32> -> vector<2x4xf32>
    %58 = vector.extract_strided_slice %47 {offsets = [32, 0], sizes = [32, 4], strides = [1, 1]} : vector<64x4xf32> to vector<32x4xf32>
    %cst_27 = arith.constant dense<0.000000e+00> : vector<2x4xf32>
    %59 = tpu.matmul %45, %58, %cst_27 {dimension_numbers = #tpu.dot_dimension_numbers<[1], [0], [0], [1], [0, 0, 1, 1], [], []>} : vector<2x32xf32>, vector<32x4xf32>, vector<2x4xf32> -> vector<2x4xf32>
    %60 = arith.addf %57, %59 : vector<2x4xf32>
    %c0_28 = arith.constant 0 : index
    %c0_29 = arith.constant 0 : index
    %61 = vector.load %arg11[%c0_28, %c0_29] : memref<1x4xf32, #tpu.memory_space<vmem>>, vector<1x4xf32>
    %62 = vector.broadcast %61 : vector<1x4xf32> to vector<2x4xf32>
    %63 = arith.addf %60, %62 : vector<2x4xf32>
    %c0_30 = arith.constant 0 : index
    %c0_31 = arith.constant 0 : index
    %64 = vector.load %arg12[%c0_30, %c0_31] : memref<32x4xf32, #tpu.memory_space<vmem>>, vector<32x4xf32>
    %cst_32 = arith.constant dense<0.000000e+00> : vector<8x4xf32>
    %65 = tpu.matmul %27, %64, %cst_32 {dimension_numbers = #tpu.dot_dimension_numbers<[1], [0], [0], [1], [0, 0, 1, 1], [], []>} : vector<8x32xf32>, vector<32x4xf32>, vector<8x4xf32> -> vector<8x4xf32>
    %c0_33 = arith.constant 0 : index
    %c0_34 = arith.constant 0 : index
    %66 = vector.load %arg13[%c0_33, %c0_34] : memref<1x4xf32, #tpu.memory_space<vmem>>, vector<1x4xf32>
    %67 = vector.broadcast %66 : vector<1x4xf32> to vector<8x4xf32>
    %68 = arith.addf %65, %67 : vector<8x4xf32>
    %c0_35 = arith.constant 0 : index
    %c0_36 = arith.constant 0 : index
    %69 = vector.load %arg14[%c0_35, %c0_36] : memref<32x128xf32, #tpu.memory_space<vmem>>, vector<32x128xf32>
    %c0_37 = arith.constant 0 : index
    %c0_38 = arith.constant 0 : index
    %70 = vector.load %arg15[%c0_37, %c0_38] : memref<1x128xf32, #tpu.memory_space<vmem>>, vector<1x128xf32>
    %cst_39 = arith.constant dense<0.000000e+00> : vector<2x128xf32>
    %71 = tpu.matmul %34, %69, %cst_39 {dimension_numbers = #tpu.dot_dimension_numbers<[1], [0], [0], [1], [0, 0, 1, 1], [], []>} : vector<2x32xf32>, vector<32x128xf32>, vector<2x128xf32> -> vector<2x128xf32>
    %72 = vector.broadcast %70 : vector<1x128xf32> to vector<2x128xf32>
    %73 = arith.addf %71, %72 : vector<2x128xf32>
    %cst_40 = arith.constant 0.000000e+00 : f32
    %74 = vector.broadcast %cst_40 : f32 to vector<2x128xf32>
    %75 = arith.maximumf %73, %74 : vector<2x128xf32>
    %76 = vector.extract_strided_slice %75 {offsets = [0, 0], sizes = [2, 32], strides = [1, 1]} : vector<2x128xf32> to vector<2x32xf32>
    %c0_41 = arith.constant 0 : index
    %c0_42 = arith.constant 0 : index
    %c0_43 = arith.constant 0 : index
    %77 = vector.load %arg16[%c0_41, %c0_42, %c0_43] : memref<4x32x32xf32, #tpu.memory_space<vmem>>, vector<1x32x32xf32>
    %78 = vector.shape_cast %77 : vector<1x32x32xf32> to vector<32x32xf32>
    %cst_44 = arith.constant dense<0.000000e+00> : vector<2x32xf32>
    %79 = tpu.matmul %76, %78, %cst_44 {dimension_numbers = #tpu.dot_dimension_numbers<[1], [0], [0], [1], [0, 0, 1, 1], [], []>} : vector<2x32xf32>, vector<32x32xf32>, vector<2x32xf32> -> vector<2x32xf32>
    %c0_45 = arith.constant 0 : index
    %c0_46 = arith.constant 0 : index
    %c0_47 = arith.constant 0 : index
    %80 = vector.load %arg17[%c0_45, %c0_46, %c0_47] : memref<4x1x32xf32, #tpu.memory_space<vmem>>, vector<1x1x32xf32>
    %81 = vector.shape_cast %80 : vector<1x1x32xf32> to vector<1x32xf32>
    %82 = vector.broadcast %81 : vector<1x32xf32> to vector<2x32xf32>
    %83 = arith.addf %79, %82 : vector<2x32xf32>
    %84 = vector.extract_strided_slice %75 {offsets = [0, 32], sizes = [2, 32], strides = [1, 1]} : vector<2x128xf32> to vector<2x32xf32>
    %c1 = arith.constant 1 : index
    %c0_48 = arith.constant 0 : index
    %c0_49 = arith.constant 0 : index
    %85 = vector.load %arg16[%c1, %c0_48, %c0_49] : memref<4x32x32xf32, #tpu.memory_space<vmem>>, vector<1x32x32xf32>
    %86 = vector.shape_cast %85 : vector<1x32x32xf32> to vector<32x32xf32>
    %cst_50 = arith.constant dense<0.000000e+00> : vector<2x32xf32>
    %87 = tpu.matmul %84, %86, %cst_50 {dimension_numbers = #tpu.dot_dimension_numbers<[1], [0], [0], [1], [0, 0, 1, 1], [], []>} : vector<2x32xf32>, vector<32x32xf32>, vector<2x32xf32> -> vector<2x32xf32>
    %c1_51 = arith.constant 1 : index
    %c0_52 = arith.constant 0 : index
    %c0_53 = arith.constant 0 : index
    %88 = vector.load %arg17[%c1_51, %c0_52, %c0_53] : memref<4x1x32xf32, #tpu.memory_space<vmem>>, vector<1x1x32xf32>
    %89 = vector.shape_cast %88 : vector<1x1x32xf32> to vector<1x32xf32>
    %90 = vector.broadcast %89 : vector<1x32xf32> to vector<2x32xf32>
    %91 = arith.addf %87, %90 : vector<2x32xf32>
    %92 = vector.extract_strided_slice %75 {offsets = [0, 64], sizes = [2, 32], strides = [1, 1]} : vector<2x128xf32> to vector<2x32xf32>
    %c2 = arith.constant 2 : index
    %c0_54 = arith.constant 0 : index
    %c0_55 = arith.constant 0 : index
    %93 = vector.load %arg16[%c2, %c0_54, %c0_55] : memref<4x32x32xf32, #tpu.memory_space<vmem>>, vector<1x32x32xf32>
    %94 = vector.shape_cast %93 : vector<1x32x32xf32> to vector<32x32xf32>
    %cst_56 = arith.constant dense<0.000000e+00> : vector<2x32xf32>
    %95 = tpu.matmul %92, %94, %cst_56 {dimension_numbers = #tpu.dot_dimension_numbers<[1], [0], [0], [1], [0, 0, 1, 1], [], []>} : vector<2x32xf32>, vector<32x32xf32>, vector<2x32xf32> -> vector<2x32xf32>
    %c2_57 = arith.constant 2 : index
    %c0_58 = arith.constant 0 : index
    %c0_59 = arith.constant 0 : index
    %96 = vector.load %arg17[%c2_57, %c0_58, %c0_59] : memref<4x1x32xf32, #tpu.memory_space<vmem>>, vector<1x1x32xf32>
    %97 = vector.shape_cast %96 : vector<1x1x32xf32> to vector<1x32xf32>
    %98 = vector.broadcast %97 : vector<1x32xf32> to vector<2x32xf32>
    %99 = arith.addf %95, %98 : vector<2x32xf32>
    %100 = vector.extract_strided_slice %75 {offsets = [0, 96], sizes = [2, 32], strides = [1, 1]} : vector<2x128xf32> to vector<2x32xf32>
    %c3 = arith.constant 3 : index
    %c0_60 = arith.constant 0 : index
    %c0_61 = arith.constant 0 : index
    %101 = vector.load %arg16[%c3, %c0_60, %c0_61] : memref<4x32x32xf32, #tpu.memory_space<vmem>>, vector<1x32x32xf32>
    %102 = vector.shape_cast %101 : vector<1x32x32xf32> to vector<32x32xf32>
    %cst_62 = arith.constant dense<0.000000e+00> : vector<2x32xf32>
    %103 = tpu.matmul %100, %102, %cst_62 {dimension_numbers = #tpu.dot_dimension_numbers<[1], [0], [0], [1], [0, 0, 1, 1], [], []>} : vector<2x32xf32>, vector<32x32xf32>, vector<2x32xf32> -> vector<2x32xf32>
    %c3_63 = arith.constant 3 : index
    %c0_64 = arith.constant 0 : index
    %c0_65 = arith.constant 0 : index
    %104 = vector.load %arg17[%c3_63, %c0_64, %c0_65] : memref<4x1x32xf32, #tpu.memory_space<vmem>>, vector<1x1x32xf32>
    %105 = vector.shape_cast %104 : vector<1x1x32xf32> to vector<1x32xf32>
    %106 = vector.broadcast %105 : vector<1x32xf32> to vector<2x32xf32>
    %107 = arith.addf %103, %106 : vector<2x32xf32>
    %cst_66 = arith.constant dense<0.000000e+00> : vector<8x128xf32>
    %108 = tpu.matmul %27, %69, %cst_66 {dimension_numbers = #tpu.dot_dimension_numbers<[1], [0], [0], [1], [0, 0, 1, 1], [], []>} : vector<8x32xf32>, vector<32x128xf32>, vector<8x128xf32> -> vector<8x128xf32>
    %109 = vector.broadcast %70 : vector<1x128xf32> to vector<8x128xf32>
    %110 = arith.addf %108, %109 : vector<8x128xf32>
    %cst_67 = arith.constant 0.000000e+00 : f32
    %111 = vector.broadcast %cst_67 : f32 to vector<8x128xf32>
    %112 = arith.maximumf %110, %111 : vector<8x128xf32>
    %113 = vector.extract_strided_slice %112 {offsets = [0, 0], sizes = [8, 32], strides = [1, 1]} : vector<8x128xf32> to vector<8x32xf32>
    %c0_68 = arith.constant 0 : index
    %c0_69 = arith.constant 0 : index
    %c0_70 = arith.constant 0 : index
    %114 = vector.load %arg16[%c0_68, %c0_69, %c0_70] : memref<4x32x32xf32, #tpu.memory_space<vmem>>, vector<1x32x32xf32>
    %115 = vector.shape_cast %114 : vector<1x32x32xf32> to vector<32x32xf32>
    %cst_71 = arith.constant dense<0.000000e+00> : vector<8x32xf32>
    %116 = tpu.matmul %113, %115, %cst_71 {dimension_numbers = #tpu.dot_dimension_numbers<[1], [0], [0], [1], [0, 0, 1, 1], [], []>} : vector<8x32xf32>, vector<32x32xf32>, vector<8x32xf32> -> vector<8x32xf32>
    %c0_72 = arith.constant 0 : index
    %c0_73 = arith.constant 0 : index
    %c0_74 = arith.constant 0 : index
    %117 = vector.load %arg17[%c0_72, %c0_73, %c0_74] : memref<4x1x32xf32, #tpu.memory_space<vmem>>, vector<1x1x32xf32>
    %118 = vector.shape_cast %117 : vector<1x1x32xf32> to vector<1x32xf32>
    %119 = vector.broadcast %118 : vector<1x32xf32> to vector<8x32xf32>
    %120 = arith.addf %116, %119 : vector<8x32xf32>
    %121 = vector.extract_strided_slice %112 {offsets = [0, 32], sizes = [8, 32], strides = [1, 1]} : vector<8x128xf32> to vector<8x32xf32>
    %c1_75 = arith.constant 1 : index
    %c0_76 = arith.constant 0 : index
    %c0_77 = arith.constant 0 : index
    %122 = vector.load %arg16[%c1_75, %c0_76, %c0_77] : memref<4x32x32xf32, #tpu.memory_space<vmem>>, vector<1x32x32xf32>
    %123 = vector.shape_cast %122 : vector<1x32x32xf32> to vector<32x32xf32>
    %cst_78 = arith.constant dense<0.000000e+00> : vector<8x32xf32>
    %124 = tpu.matmul %121, %123, %cst_78 {dimension_numbers = #tpu.dot_dimension_numbers<[1], [0], [0], [1], [0, 0, 1, 1], [], []>} : vector<8x32xf32>, vector<32x32xf32>, vector<8x32xf32> -> vector<8x32xf32>
    %c1_79 = arith.constant 1 : index
    %c0_80 = arith.constant 0 : index
    %c0_81 = arith.constant 0 : index
    %125 = vector.load %arg17[%c1_79, %c0_80, %c0_81] : memref<4x1x32xf32, #tpu.memory_space<vmem>>, vector<1x1x32xf32>
    %126 = vector.shape_cast %125 : vector<1x1x32xf32> to vector<1x32xf32>
    %127 = vector.broadcast %126 : vector<1x32xf32> to vector<8x32xf32>
    %128 = arith.addf %124, %127 : vector<8x32xf32>
    %129 = vector.extract_strided_slice %112 {offsets = [0, 64], sizes = [8, 32], strides = [1, 1]} : vector<8x128xf32> to vector<8x32xf32>
    %c2_82 = arith.constant 2 : index
    %c0_83 = arith.constant 0 : index
    %c0_84 = arith.constant 0 : index
    %130 = vector.load %arg16[%c2_82, %c0_83, %c0_84] : memref<4x32x32xf32, #tpu.memory_space<vmem>>, vector<1x32x32xf32>
    %131 = vector.shape_cast %130 : vector<1x32x32xf32> to vector<32x32xf32>
    %cst_85 = arith.constant dense<0.000000e+00> : vector<8x32xf32>
    %132 = tpu.matmul %129, %131, %cst_85 {dimension_numbers = #tpu.dot_dimension_numbers<[1], [0], [0], [1], [0, 0, 1, 1], [], []>} : vector<8x32xf32>, vector<32x32xf32>, vector<8x32xf32> -> vector<8x32xf32>
    %c2_86 = arith.constant 2 : index
    %c0_87 = arith.constant 0 : index
    %c0_88 = arith.constant 0 : index
    %133 = vector.load %arg17[%c2_86, %c0_87, %c0_88] : memref<4x1x32xf32, #tpu.memory_space<vmem>>, vector<1x1x32xf32>
    %134 = vector.shape_cast %133 : vector<1x1x32xf32> to vector<1x32xf32>
    %135 = vector.broadcast %134 : vector<1x32xf32> to vector<8x32xf32>
    %136 = arith.addf %132, %135 : vector<8x32xf32>
    %137 = vector.extract_strided_slice %112 {offsets = [0, 96], sizes = [8, 32], strides = [1, 1]} : vector<8x128xf32> to vector<8x32xf32>
    %c3_89 = arith.constant 3 : index
    %c0_90 = arith.constant 0 : index
    %c0_91 = arith.constant 0 : index
    %138 = vector.load %arg16[%c3_89, %c0_90, %c0_91] : memref<4x32x32xf32, #tpu.memory_space<vmem>>, vector<1x32x32xf32>
    %139 = vector.shape_cast %138 : vector<1x32x32xf32> to vector<32x32xf32>
    %cst_92 = arith.constant dense<0.000000e+00> : vector<8x32xf32>
    %140 = tpu.matmul %137, %139, %cst_92 {dimension_numbers = #tpu.dot_dimension_numbers<[1], [0], [0], [1], [0, 0, 1, 1], [], []>} : vector<8x32xf32>, vector<32x32xf32>, vector<8x32xf32> -> vector<8x32xf32>
    %c3_93 = arith.constant 3 : index
    %c0_94 = arith.constant 0 : index
    %c0_95 = arith.constant 0 : index
    %141 = vector.load %arg17[%c3_93, %c0_94, %c0_95] : memref<4x1x32xf32, #tpu.memory_space<vmem>>, vector<1x1x32xf32>
    %142 = vector.shape_cast %141 : vector<1x1x32xf32> to vector<1x32xf32>
    %143 = vector.broadcast %142 : vector<1x32xf32> to vector<8x32xf32>
    %144 = arith.addf %140, %143 : vector<8x32xf32>
    %145 = tpu.iota {dimensions = array<i32: 1>} : vector<2x4xi32>
    %146 = arith.sitofp %145 : vector<2x4xi32> to vector<2x4xf32>
    %cst_96 = arith.constant dense<0xFF800000> : vector<2xf32>
    %147 = vector.multi_reduction <maximumf>, %55, %cst_96 [1] : vector<2x4xf32> to vector<2xf32>
    %148 = vector.shape_cast %147 : vector<2xf32> to vector<2x1xf32>
    %149 = vector.broadcast %148 : vector<2x1xf32> to vector<2x4xf32>
    %150 = arith.cmpf oge, %55, %149 : vector<2x4xf32>
    %cst_97 = arith.constant 4.000000e+00 : f32
    %151 = vector.broadcast %cst_97 : f32 to vector<2x4xf32>
    %152 = arith.select %150, %146, %151 : vector<2x4xi1>, vector<2x4xf32>
    %cst_98 = arith.constant dense<0x7F800000> : vector<2xf32>
    %153 = vector.multi_reduction <minimumf>, %152, %cst_98 [1] : vector<2x4xf32> to vector<2xf32>
    %154 = vector.shape_cast %153 : vector<2xf32> to vector<2x1xf32>
    %155 = vector.broadcast %154 : vector<2x1xf32> to vector<2x4xf32>
    %156 = arith.cmpf oeq, %146, %155 : vector<2x4xf32>
    %157 = arith.extui %156 : vector<2x4xi1> to vector<2x4xi32>
    %158 = arith.sitofp %157 : vector<2x4xi32> to vector<2x4xf32>
    %cst_99 = arith.constant 5.000000e-01 : f32
    %159 = vector.broadcast %cst_99 : f32 to vector<2x4xf32>
    %160 = arith.cmpf ogt, %158, %159 : vector<2x4xf32>
    %cst_100 = arith.constant -1.000000e+30 : f32
    %161 = vector.broadcast %cst_100 : f32 to vector<2x4xf32>
    %162 = arith.select %160, %161, %55 : vector<2x4xi1>, vector<2x4xf32>
    %cst_101 = arith.constant dense<0xFF800000> : vector<2xf32>
    %163 = vector.multi_reduction <maximumf>, %162, %cst_101 [1] : vector<2x4xf32> to vector<2xf32>
    %164 = vector.shape_cast %163 : vector<2xf32> to vector<2x1xf32>
    %165 = vector.broadcast %164 : vector<2x1xf32> to vector<2x4xf32>
    %166 = arith.cmpf oge, %162, %165 : vector<2x4xf32>
    %cst_102 = arith.constant 4.000000e+00 : f32
    %167 = vector.broadcast %cst_102 : f32 to vector<2x4xf32>
    %168 = arith.select %166, %146, %167 : vector<2x4xi1>, vector<2x4xf32>
    %cst_103 = arith.constant dense<0x7F800000> : vector<2xf32>
    %169 = vector.multi_reduction <minimumf>, %168, %cst_103 [1] : vector<2x4xf32> to vector<2xf32>
    %170 = vector.shape_cast %169 : vector<2xf32> to vector<2x1xf32>
    %171 = vector.broadcast %170 : vector<2x1xf32> to vector<2x4xf32>
    %172 = arith.cmpf oeq, %146, %171 : vector<2x4xf32>
    %173 = arith.extui %172 : vector<2x4xi1> to vector<2x4xi32>
    %174 = arith.sitofp %173 : vector<2x4xi32> to vector<2x4xf32>
    %175 = arith.subf %164, %148 : vector<2x1xf32>
    %176 = math.exp %175 : vector<2x1xf32>
    %cst_104 = arith.constant 1.000000e+00 : f32
    %177 = vector.broadcast %cst_104 : f32 to vector<2x1xf32>
    %178 = arith.addf %177, %176 : vector<2x1xf32>
    %cst_105 = arith.constant 1.000000e+00 : f32
    %179 = vector.broadcast %cst_105 : f32 to vector<2x1xf32>
    %180 = arith.divf %179, %178 : vector<2x1xf32>
    %181 = arith.mulf %176, %180 : vector<2x1xf32>
    %182 = vector.extract_strided_slice %158 {offsets = [0, 0], sizes = [2, 1], strides = [1, 1]} : vector<2x4xf32> to vector<2x1xf32>
    %183 = arith.mulf %180, %182 : vector<2x1xf32>
    %184 = vector.extract_strided_slice %174 {offsets = [0, 0], sizes = [2, 1], strides = [1, 1]} : vector<2x4xf32> to vector<2x1xf32>
    %185 = arith.mulf %181, %184 : vector<2x1xf32>
    %186 = arith.addf %183, %185 : vector<2x1xf32>
    %187 = vector.broadcast %186 : vector<2x1xf32> to vector<2x32xf32>
    %188 = arith.mulf %187, %83 : vector<2x32xf32>
    %189 = vector.extract_strided_slice %158 {offsets = [0, 1], sizes = [2, 1], strides = [1, 1]} : vector<2x4xf32> to vector<2x1xf32>
    %190 = arith.mulf %180, %189 : vector<2x1xf32>
    %191 = vector.extract_strided_slice %174 {offsets = [0, 1], sizes = [2, 1], strides = [1, 1]} : vector<2x4xf32> to vector<2x1xf32>
    %192 = arith.mulf %181, %191 : vector<2x1xf32>
    %193 = arith.addf %190, %192 : vector<2x1xf32>
    %194 = vector.broadcast %193 : vector<2x1xf32> to vector<2x32xf32>
    %195 = arith.mulf %194, %91 : vector<2x32xf32>
    %196 = arith.addf %188, %195 : vector<2x32xf32>
    %197 = vector.extract_strided_slice %158 {offsets = [0, 2], sizes = [2, 1], strides = [1, 1]} : vector<2x4xf32> to vector<2x1xf32>
    %198 = arith.mulf %180, %197 : vector<2x1xf32>
    %199 = vector.extract_strided_slice %174 {offsets = [0, 2], sizes = [2, 1], strides = [1, 1]} : vector<2x4xf32> to vector<2x1xf32>
    %200 = arith.mulf %181, %199 : vector<2x1xf32>
    %201 = arith.addf %198, %200 : vector<2x1xf32>
    %202 = vector.broadcast %201 : vector<2x1xf32> to vector<2x32xf32>
    %203 = arith.mulf %202, %99 : vector<2x32xf32>
    %204 = arith.addf %196, %203 : vector<2x32xf32>
    %205 = vector.extract_strided_slice %158 {offsets = [0, 3], sizes = [2, 1], strides = [1, 1]} : vector<2x4xf32> to vector<2x1xf32>
    %206 = arith.mulf %180, %205 : vector<2x1xf32>
    %207 = vector.extract_strided_slice %174 {offsets = [0, 3], sizes = [2, 1], strides = [1, 1]} : vector<2x4xf32> to vector<2x1xf32>
    %208 = arith.mulf %181, %207 : vector<2x1xf32>
    %209 = arith.addf %206, %208 : vector<2x1xf32>
    %210 = vector.broadcast %209 : vector<2x1xf32> to vector<2x32xf32>
    %211 = arith.mulf %210, %107 : vector<2x32xf32>
    %212 = arith.addf %204, %211 : vector<2x32xf32>
    %213 = vector.broadcast %148 : vector<2x1xf32> to vector<2x4xf32>
    %214 = arith.subf %55, %213 : vector<2x4xf32>
    %215 = math.exp %214 : vector<2x4xf32>
    %cst_106 = arith.constant dense<0.000000e+00> : vector<2xf32>
    %216 = vector.multi_reduction <add>, %215, %cst_106 [1] : vector<2x4xf32> to vector<2xf32>
    %217 = vector.shape_cast %216 : vector<2xf32> to vector<2x1xf32>
    %218 = vector.broadcast %217 : vector<2x1xf32> to vector<2x4xf32>
    %219 = arith.divf %215, %218 : vector<2x4xf32>
    %220 = arith.addf %158, %174 : vector<2x4xf32>
    %cst_107 = arith.constant dense<0.000000e+00> : vector<4xf32>
    %221 = vector.multi_reduction <add>, %219, %cst_107 [0] : vector<2x4xf32> to vector<4xf32>
    %222 = vector.shape_cast %221 : vector<4xf32> to vector<1x4xf32>
    %cst_108 = arith.constant 2.000000e+00 : f32
    %223 = vector.broadcast %cst_108 : f32 to vector<1x4xf32>
    %224 = arith.divf %222, %223 : vector<1x4xf32>
    %cst_109 = arith.constant dense<0.000000e+00> : vector<4xf32>
    %225 = vector.multi_reduction <add>, %220, %cst_109 [0] : vector<2x4xf32> to vector<4xf32>
    %226 = vector.shape_cast %225 : vector<4xf32> to vector<1x4xf32>
    %cst_110 = arith.constant 2.000000e+00 : f32
    %cst_111 = arith.constant 2.000000e+00 : f32
    %227 = arith.mulf %cst_110, %cst_111 : f32
    %228 = vector.broadcast %227 : f32 to vector<1x4xf32>
    %229 = arith.divf %226, %228 : vector<1x4xf32>
    %230 = arith.mulf %224, %229 : vector<1x4xf32>
    %cst_112 = arith.constant dense<0.000000e+00> : vector<1xf32>
    %231 = vector.multi_reduction <add>, %230, %cst_112 [1] : vector<1x4xf32> to vector<1xf32>
    %232 = vector.shape_cast %231 : vector<1xf32> to vector<1x1xf32>
    %cst_113 = arith.constant 4.000000e+00 : f32
    %233 = vector.broadcast %cst_113 : f32 to vector<1x1xf32>
    %234 = arith.mulf %233, %232 : vector<1x1xf32>
    %235 = tpu.iota {dimensions = array<i32: 1>} : vector<2x4xi32>
    %236 = arith.sitofp %235 : vector<2x4xi32> to vector<2x4xf32>
    %cst_114 = arith.constant dense<0xFF800000> : vector<2xf32>
    %237 = vector.multi_reduction <maximumf>, %63, %cst_114 [1] : vector<2x4xf32> to vector<2xf32>
    %238 = vector.shape_cast %237 : vector<2xf32> to vector<2x1xf32>
    %239 = vector.broadcast %238 : vector<2x1xf32> to vector<2x4xf32>
    %240 = arith.cmpf oge, %63, %239 : vector<2x4xf32>
    %cst_115 = arith.constant 4.000000e+00 : f32
    %241 = vector.broadcast %cst_115 : f32 to vector<2x4xf32>
    %242 = arith.select %240, %236, %241 : vector<2x4xi1>, vector<2x4xf32>
    %cst_116 = arith.constant dense<0x7F800000> : vector<2xf32>
    %243 = vector.multi_reduction <minimumf>, %242, %cst_116 [1] : vector<2x4xf32> to vector<2xf32>
    %244 = vector.shape_cast %243 : vector<2xf32> to vector<2x1xf32>
    %245 = vector.broadcast %244 : vector<2x1xf32> to vector<2x4xf32>
    %246 = arith.cmpf oeq, %236, %245 : vector<2x4xf32>
    %247 = arith.extui %246 : vector<2x4xi1> to vector<2x4xi32>
    %248 = arith.sitofp %247 : vector<2x4xi32> to vector<2x4xf32>
    %cst_117 = arith.constant 5.000000e-01 : f32
    %249 = vector.broadcast %cst_117 : f32 to vector<2x4xf32>
    %250 = arith.cmpf ogt, %248, %249 : vector<2x4xf32>
    %cst_118 = arith.constant -1.000000e+30 : f32
    %251 = vector.broadcast %cst_118 : f32 to vector<2x4xf32>
    %252 = arith.select %250, %251, %63 : vector<2x4xi1>, vector<2x4xf32>
    %cst_119 = arith.constant dense<0xFF800000> : vector<2xf32>
    %253 = vector.multi_reduction <maximumf>, %252, %cst_119 [1] : vector<2x4xf32> to vector<2xf32>
    %254 = vector.shape_cast %253 : vector<2xf32> to vector<2x1xf32>
    %255 = vector.broadcast %254 : vector<2x1xf32> to vector<2x4xf32>
    %256 = arith.cmpf oge, %252, %255 : vector<2x4xf32>
    %cst_120 = arith.constant 4.000000e+00 : f32
    %257 = vector.broadcast %cst_120 : f32 to vector<2x4xf32>
    %258 = arith.select %256, %236, %257 : vector<2x4xi1>, vector<2x4xf32>
    %cst_121 = arith.constant dense<0x7F800000> : vector<2xf32>
    %259 = vector.multi_reduction <minimumf>, %258, %cst_121 [1] : vector<2x4xf32> to vector<2xf32>
    %260 = vector.shape_cast %259 : vector<2xf32> to vector<2x1xf32>
    %261 = vector.broadcast %260 : vector<2x1xf32> to vector<2x4xf32>
    %262 = arith.cmpf oeq, %236, %261 : vector<2x4xf32>
    %263 = arith.extui %262 : vector<2x4xi1> to vector<2x4xi32>
    %264 = arith.sitofp %263 : vector<2x4xi32> to vector<2x4xf32>
    %265 = arith.subf %254, %238 : vector<2x1xf32>
    %266 = math.exp %265 : vector<2x1xf32>
    %cst_122 = arith.constant 1.000000e+00 : f32
    %267 = vector.broadcast %cst_122 : f32 to vector<2x1xf32>
    %268 = arith.addf %267, %266 : vector<2x1xf32>
    %cst_123 = arith.constant 1.000000e+00 : f32
    %269 = vector.broadcast %cst_123 : f32 to vector<2x1xf32>
    %270 = arith.divf %269, %268 : vector<2x1xf32>
    %271 = arith.mulf %266, %270 : vector<2x1xf32>
    %272 = vector.extract_strided_slice %248 {offsets = [0, 0], sizes = [2, 1], strides = [1, 1]} : vector<2x4xf32> to vector<2x1xf32>
    %273 = arith.mulf %270, %272 : vector<2x1xf32>
    %274 = vector.extract_strided_slice %264 {offsets = [0, 0], sizes = [2, 1], strides = [1, 1]} : vector<2x4xf32> to vector<2x1xf32>
    %275 = arith.mulf %271, %274 : vector<2x1xf32>
    %276 = arith.addf %273, %275 : vector<2x1xf32>
    %277 = vector.broadcast %276 : vector<2x1xf32> to vector<2x32xf32>
    %278 = arith.mulf %277, %83 : vector<2x32xf32>
    %279 = vector.extract_strided_slice %248 {offsets = [0, 1], sizes = [2, 1], strides = [1, 1]} : vector<2x4xf32> to vector<2x1xf32>
    %280 = arith.mulf %270, %279 : vector<2x1xf32>
    %281 = vector.extract_strided_slice %264 {offsets = [0, 1], sizes = [2, 1], strides = [1, 1]} : vector<2x4xf32> to vector<2x1xf32>
    %282 = arith.mulf %271, %281 : vector<2x1xf32>
    %283 = arith.addf %280, %282 : vector<2x1xf32>
    %284 = vector.broadcast %283 : vector<2x1xf32> to vector<2x32xf32>
    %285 = arith.mulf %284, %91 : vector<2x32xf32>
    %286 = arith.addf %278, %285 : vector<2x32xf32>
    %287 = vector.extract_strided_slice %248 {offsets = [0, 2], sizes = [2, 1], strides = [1, 1]} : vector<2x4xf32> to vector<2x1xf32>
    %288 = arith.mulf %270, %287 : vector<2x1xf32>
    %289 = vector.extract_strided_slice %264 {offsets = [0, 2], sizes = [2, 1], strides = [1, 1]} : vector<2x4xf32> to vector<2x1xf32>
    %290 = arith.mulf %271, %289 : vector<2x1xf32>
    %291 = arith.addf %288, %290 : vector<2x1xf32>
    %292 = vector.broadcast %291 : vector<2x1xf32> to vector<2x32xf32>
    %293 = arith.mulf %292, %99 : vector<2x32xf32>
    %294 = arith.addf %286, %293 : vector<2x32xf32>
    %295 = vector.extract_strided_slice %248 {offsets = [0, 3], sizes = [2, 1], strides = [1, 1]} : vector<2x4xf32> to vector<2x1xf32>
    %296 = arith.mulf %270, %295 : vector<2x1xf32>
    %297 = vector.extract_strided_slice %264 {offsets = [0, 3], sizes = [2, 1], strides = [1, 1]} : vector<2x4xf32> to vector<2x1xf32>
    %298 = arith.mulf %271, %297 : vector<2x1xf32>
    %299 = arith.addf %296, %298 : vector<2x1xf32>
    %300 = vector.broadcast %299 : vector<2x1xf32> to vector<2x32xf32>
    %301 = arith.mulf %300, %107 : vector<2x32xf32>
    %302 = arith.addf %294, %301 : vector<2x32xf32>
    %303 = vector.broadcast %238 : vector<2x1xf32> to vector<2x4xf32>
    %304 = arith.subf %63, %303 : vector<2x4xf32>
    %305 = math.exp %304 : vector<2x4xf32>
    %cst_124 = arith.constant dense<0.000000e+00> : vector<2xf32>
    %306 = vector.multi_reduction <add>, %305, %cst_124 [1] : vector<2x4xf32> to vector<2xf32>
    %307 = vector.shape_cast %306 : vector<2xf32> to vector<2x1xf32>
    %308 = vector.broadcast %307 : vector<2x1xf32> to vector<2x4xf32>
    %309 = arith.divf %305, %308 : vector<2x4xf32>
    %310 = arith.addf %248, %264 : vector<2x4xf32>
    %cst_125 = arith.constant dense<0.000000e+00> : vector<4xf32>
    %311 = vector.multi_reduction <add>, %309, %cst_125 [0] : vector<2x4xf32> to vector<4xf32>
    %312 = vector.shape_cast %311 : vector<4xf32> to vector<1x4xf32>
    %cst_126 = arith.constant 2.000000e+00 : f32
    %313 = vector.broadcast %cst_126 : f32 to vector<1x4xf32>
    %314 = arith.divf %312, %313 : vector<1x4xf32>
    %cst_127 = arith.constant dense<0.000000e+00> : vector<4xf32>
    %315 = vector.multi_reduction <add>, %310, %cst_127 [0] : vector<2x4xf32> to vector<4xf32>
    %316 = vector.shape_cast %315 : vector<4xf32> to vector<1x4xf32>
    %cst_128 = arith.constant 2.000000e+00 : f32
    %cst_129 = arith.constant 2.000000e+00 : f32
    %317 = arith.mulf %cst_128, %cst_129 : f32
    %318 = vector.broadcast %317 : f32 to vector<1x4xf32>
    %319 = arith.divf %316, %318 : vector<1x4xf32>
    %320 = arith.mulf %314, %319 : vector<1x4xf32>
    %cst_130 = arith.constant dense<0.000000e+00> : vector<1xf32>
    %321 = vector.multi_reduction <add>, %320, %cst_130 [1] : vector<1x4xf32> to vector<1xf32>
    %322 = vector.shape_cast %321 : vector<1xf32> to vector<1x1xf32>
    %cst_131 = arith.constant 4.000000e+00 : f32
    %323 = vector.broadcast %cst_131 : f32 to vector<1x1xf32>
    %324 = arith.mulf %323, %322 : vector<1x1xf32>
    %325 = tpu.iota {dimensions = array<i32: 1>} : vector<8x4xi32>
    %326 = arith.sitofp %325 : vector<8x4xi32> to vector<8x4xf32>
    %cst_132 = arith.constant dense<0xFF800000> : vector<8xf32>
    %327 = vector.multi_reduction <maximumf>, %68, %cst_132 [1] : vector<8x4xf32> to vector<8xf32>
    %328 = vector.shape_cast %327 : vector<8xf32> to vector<8x1xf32>
    %329 = vector.broadcast %328 : vector<8x1xf32> to vector<8x4xf32>
    %330 = arith.cmpf oge, %68, %329 : vector<8x4xf32>
    %cst_133 = arith.constant 4.000000e+00 : f32
    %331 = vector.broadcast %cst_133 : f32 to vector<8x4xf32>
    %332 = arith.select %330, %326, %331 : vector<8x4xi1>, vector<8x4xf32>
    %cst_134 = arith.constant dense<0x7F800000> : vector<8xf32>
    %333 = vector.multi_reduction <minimumf>, %332, %cst_134 [1] : vector<8x4xf32> to vector<8xf32>
    %334 = vector.shape_cast %333 : vector<8xf32> to vector<8x1xf32>
    %335 = vector.broadcast %334 : vector<8x1xf32> to vector<8x4xf32>
    %336 = arith.cmpf oeq, %326, %335 : vector<8x4xf32>
    %337 = arith.extui %336 : vector<8x4xi1> to vector<8x4xi32>
    %338 = arith.sitofp %337 : vector<8x4xi32> to vector<8x4xf32>
    %cst_135 = arith.constant 5.000000e-01 : f32
    %339 = vector.broadcast %cst_135 : f32 to vector<8x4xf32>
    %340 = arith.cmpf ogt, %338, %339 : vector<8x4xf32>
    %cst_136 = arith.constant -1.000000e+30 : f32
    %341 = vector.broadcast %cst_136 : f32 to vector<8x4xf32>
    %342 = arith.select %340, %341, %68 : vector<8x4xi1>, vector<8x4xf32>
    %cst_137 = arith.constant dense<0xFF800000> : vector<8xf32>
    %343 = vector.multi_reduction <maximumf>, %342, %cst_137 [1] : vector<8x4xf32> to vector<8xf32>
    %344 = vector.shape_cast %343 : vector<8xf32> to vector<8x1xf32>
    %345 = vector.broadcast %344 : vector<8x1xf32> to vector<8x4xf32>
    %346 = arith.cmpf oge, %342, %345 : vector<8x4xf32>
    %cst_138 = arith.constant 4.000000e+00 : f32
    %347 = vector.broadcast %cst_138 : f32 to vector<8x4xf32>
    %348 = arith.select %346, %326, %347 : vector<8x4xi1>, vector<8x4xf32>
    %cst_139 = arith.constant dense<0x7F800000> : vector<8xf32>
    %349 = vector.multi_reduction <minimumf>, %348, %cst_139 [1] : vector<8x4xf32> to vector<8xf32>
    %350 = vector.shape_cast %349 : vector<8xf32> to vector<8x1xf32>
    %351 = vector.broadcast %350 : vector<8x1xf32> to vector<8x4xf32>
    %352 = arith.cmpf oeq, %326, %351 : vector<8x4xf32>
    %353 = arith.extui %352 : vector<8x4xi1> to vector<8x4xi32>
    %354 = arith.sitofp %353 : vector<8x4xi32> to vector<8x4xf32>
    %355 = arith.subf %344, %328 : vector<8x1xf32>
    %356 = math.exp %355 : vector<8x1xf32>
    %cst_140 = arith.constant 1.000000e+00 : f32
    %357 = vector.broadcast %cst_140 : f32 to vector<8x1xf32>
    %358 = arith.addf %357, %356 : vector<8x1xf32>
    %cst_141 = arith.constant 1.000000e+00 : f32
    %359 = vector.broadcast %cst_141 : f32 to vector<8x1xf32>
    %360 = arith.divf %359, %358 : vector<8x1xf32>
    %361 = arith.mulf %356, %360 : vector<8x1xf32>
    %362 = vector.extract_strided_slice %338 {offsets = [0, 0], sizes = [8, 1], strides = [1, 1]} : vector<8x4xf32> to vector<8x1xf32>
    %363 = arith.mulf %360, %362 : vector<8x1xf32>
    %364 = vector.extract_strided_slice %354 {offsets = [0, 0], sizes = [8, 1], strides = [1, 1]} : vector<8x4xf32> to vector<8x1xf32>
    %365 = arith.mulf %361, %364 : vector<8x1xf32>
    %366 = arith.addf %363, %365 : vector<8x1xf32>
    %367 = vector.broadcast %366 : vector<8x1xf32> to vector<8x32xf32>
    %368 = arith.mulf %367, %120 : vector<8x32xf32>
    %369 = vector.extract_strided_slice %338 {offsets = [0, 1], sizes = [8, 1], strides = [1, 1]} : vector<8x4xf32> to vector<8x1xf32>
    %370 = arith.mulf %360, %369 : vector<8x1xf32>
    %371 = vector.extract_strided_slice %354 {offsets = [0, 1], sizes = [8, 1], strides = [1, 1]} : vector<8x4xf32> to vector<8x1xf32>
    %372 = arith.mulf %361, %371 : vector<8x1xf32>
    %373 = arith.addf %370, %372 : vector<8x1xf32>
    %374 = vector.broadcast %373 : vector<8x1xf32> to vector<8x32xf32>
    %375 = arith.mulf %374, %128 : vector<8x32xf32>
    %376 = arith.addf %368, %375 : vector<8x32xf32>
    %377 = vector.extract_strided_slice %338 {offsets = [0, 2], sizes = [8, 1], strides = [1, 1]} : vector<8x4xf32> to vector<8x1xf32>
    %378 = arith.mulf %360, %377 : vector<8x1xf32>
    %379 = vector.extract_strided_slice %354 {offsets = [0, 2], sizes = [8, 1], strides = [1, 1]} : vector<8x4xf32> to vector<8x1xf32>
    %380 = arith.mulf %361, %379 : vector<8x1xf32>
    %381 = arith.addf %378, %380 : vector<8x1xf32>
    %382 = vector.broadcast %381 : vector<8x1xf32> to vector<8x32xf32>
    %383 = arith.mulf %382, %136 : vector<8x32xf32>
    %384 = arith.addf %376, %383 : vector<8x32xf32>
    %385 = vector.extract_strided_slice %338 {offsets = [0, 3], sizes = [8, 1], strides = [1, 1]} : vector<8x4xf32> to vector<8x1xf32>
    %386 = arith.mulf %360, %385 : vector<8x1xf32>
    %387 = vector.extract_strided_slice %354 {offsets = [0, 3], sizes = [8, 1], strides = [1, 1]} : vector<8x4xf32> to vector<8x1xf32>
    %388 = arith.mulf %361, %387 : vector<8x1xf32>
    %389 = arith.addf %386, %388 : vector<8x1xf32>
    %390 = vector.broadcast %389 : vector<8x1xf32> to vector<8x32xf32>
    %391 = arith.mulf %390, %144 : vector<8x32xf32>
    %392 = arith.addf %384, %391 : vector<8x32xf32>
    %393 = vector.broadcast %328 : vector<8x1xf32> to vector<8x4xf32>
    %394 = arith.subf %68, %393 : vector<8x4xf32>
    %395 = math.exp %394 : vector<8x4xf32>
    %cst_142 = arith.constant dense<0.000000e+00> : vector<8xf32>
    %396 = vector.multi_reduction <add>, %395, %cst_142 [1] : vector<8x4xf32> to vector<8xf32>
    %397 = vector.shape_cast %396 : vector<8xf32> to vector<8x1xf32>
    %398 = vector.broadcast %397 : vector<8x1xf32> to vector<8x4xf32>
    %399 = arith.divf %395, %398 : vector<8x4xf32>
    %400 = arith.addf %338, %354 : vector<8x4xf32>
    %cst_143 = arith.constant dense<0.000000e+00> : vector<1xf32>
    %401 = vector.multi_reduction <add>, %0, %cst_143 [0] : vector<8x1xf32> to vector<1xf32>
    %402 = vector.shape_cast %401 : vector<1xf32> to vector<1x1xf32>
    %cst_144 = arith.constant 1.000000e+00 : f32
    %403 = vector.broadcast %cst_144 : f32 to vector<1x1xf32>
    %404 = arith.maximumf %402, %403 : vector<1x1xf32>
    %405 = vector.broadcast %0 : vector<8x1xf32> to vector<8x4xf32>
    %406 = arith.mulf %399, %405 : vector<8x4xf32>
    %cst_145 = arith.constant dense<0.000000e+00> : vector<4xf32>
    %407 = vector.multi_reduction <add>, %406, %cst_145 [0] : vector<8x4xf32> to vector<4xf32>
    %408 = vector.shape_cast %407 : vector<4xf32> to vector<1x4xf32>
    %409 = vector.broadcast %404 : vector<1x1xf32> to vector<1x4xf32>
    %410 = arith.divf %408, %409 : vector<1x4xf32>
    %411 = vector.broadcast %0 : vector<8x1xf32> to vector<8x4xf32>
    %412 = arith.mulf %400, %411 : vector<8x4xf32>
    %cst_146 = arith.constant dense<0.000000e+00> : vector<4xf32>
    %413 = vector.multi_reduction <add>, %412, %cst_146 [0] : vector<8x4xf32> to vector<4xf32>
    %414 = vector.shape_cast %413 : vector<4xf32> to vector<1x4xf32>
    %cst_147 = arith.constant 2.000000e+00 : f32
    %415 = vector.broadcast %cst_147 : f32 to vector<1x1xf32>
    %416 = arith.mulf %404, %415 : vector<1x1xf32>
    %417 = vector.broadcast %416 : vector<1x1xf32> to vector<1x4xf32>
    %418 = arith.divf %414, %417 : vector<1x4xf32>
    %419 = arith.mulf %410, %418 : vector<1x4xf32>
    %cst_148 = arith.constant dense<0.000000e+00> : vector<1xf32>
    %420 = vector.multi_reduction <add>, %419, %cst_148 [1] : vector<1x4xf32> to vector<1xf32>
    %421 = vector.shape_cast %420 : vector<1xf32> to vector<1x1xf32>
    %cst_149 = arith.constant 4.000000e+00 : f32
    %422 = vector.broadcast %cst_149 : f32 to vector<1x1xf32>
    %423 = arith.mulf %422, %421 : vector<1x1xf32>
    %424 = vector.broadcast %0 : vector<8x1xf32> to vector<8x32xf32>
    %425 = arith.mulf %392, %424 : vector<8x32xf32>
    %426 = arith.addf %234, %324 : vector<1x1xf32>
    %427 = arith.addf %426, %423 : vector<1x1xf32>
    %cst_150 = arith.constant 0.00999999977 : f32
    %428 = vector.broadcast %cst_150 : f32 to vector<1x1xf32>
    %429 = arith.mulf %428, %427 : vector<1x1xf32>
    %c0_151 = arith.constant 0 : index
    %c0_152 = arith.constant 0 : index
    %430 = vector.load %arg27[%c0_151, %c0_152] : memref<1x1xf32, #tpu.memory_space<vmem>>, vector<1x1xf32>
    tpu.vector_store %arg27[%c0_151, %c0_152], %429 {strides = array<i32>} : memref<1x1xf32, #tpu.memory_space<vmem>>, vector<1x1xf32>,
    %c0_153 = arith.constant 0 : index
    %c0_154 = arith.constant 0 : index
    %431 = vector.load %arg20[%c0_153, %c0_154] : memref<32x2xf32, #tpu.memory_space<vmem>>, vector<32x2xf32>
    %cst_155 = arith.constant dense<0.000000e+00> : vector<2x2xf32>
    %432 = tpu.matmul %302, %431, %cst_155 {dimension_numbers = #tpu.dot_dimension_numbers<[1], [0], [0], [1], [0, 0, 1, 1], [], []>} : vector<2x32xf32>, vector<32x2xf32>, vector<2x2xf32> -> vector<2x2xf32>
    %c0_156 = arith.constant 0 : index
    %c0_157 = arith.constant 0 : index
    %433 = vector.load %arg21[%c0_156, %c0_157] : memref<1x2xf32, #tpu.memory_space<vmem>>, vector<1x2xf32>
    %434 = vector.broadcast %433 : vector<1x2xf32> to vector<2x2xf32>
    %435 = arith.addf %432, %434 : vector<2x2xf32>
    %c0_158 = arith.constant 0 : index
    %c0_159 = arith.constant 0 : index
    %436 = vector.load %arg25[%c0_158, %c0_159] : memref<2x2xf32, #tpu.memory_space<vmem>>, vector<2x2xf32>
    tpu.vector_store %arg25[%c0_158, %c0_159], %435 {strides = array<i32>} : memref<2x2xf32, #tpu.memory_space<vmem>>, vector<2x2xf32>,
    %c0_160 = arith.constant 0 : index
    %c0_161 = arith.constant 0 : index
    %437 = vector.load %arg1[%c0_160, %c0_161] : memref<8x32xf32, #tpu.memory_space<vmem>>, vector<8x32xf32>
    %c0_162 = arith.constant 0 : index
    %c0_163 = arith.constant 0 : index
    %438 = vector.load %arg5[%c0_162, %c0_163] : memref<8x2xf32, #tpu.memory_space<vmem>>, vector<8x2xf32>
    %cst_164 = arith.constant dense<0.000000e+00> : vector<8x32xf32>
    %439 = tpu.matmul %438, %212, %cst_164 {dimension_numbers = #tpu.dot_dimension_numbers<[1], [0], [0], [1], [0, 0, 1, 1], [], []>} : vector<8x2xf32>, vector<2x32xf32>, vector<8x32xf32> -> vector<8x32xf32>
    %c0_165 = arith.constant 0 : index
    %c0_166 = arith.constant 0 : index
    %440 = vector.load %arg18[%c0_165, %c0_166] : memref<96x3xf32, #tpu.memory_space<vmem>>, vector<96x3xf32>
    %441 = vector.extract_strided_slice %440 {offsets = [0, 0], sizes = [32, 3], strides = [1, 1]} : vector<96x3xf32> to vector<32x3xf32>
    %cst_167 = arith.constant dense<0.000000e+00> : vector<8x3xf32>
    %442 = tpu.matmul %437, %441, %cst_167 {dimension_numbers = #tpu.dot_dimension_numbers<[1], [0], [0], [1], [0, 0, 1, 1], [], []>} : vector<8x32xf32>, vector<32x3xf32>, vector<8x3xf32> -> vector<8x3xf32>
    %443 = vector.extract_strided_slice %440 {offsets = [32, 0], sizes = [32, 3], strides = [1, 1]} : vector<96x3xf32> to vector<32x3xf32>
    %cst_168 = arith.constant dense<0.000000e+00> : vector<8x3xf32>
    %444 = tpu.matmul %27, %443, %cst_168 {dimension_numbers = #tpu.dot_dimension_numbers<[1], [0], [0], [1], [0, 0, 1, 1], [], []>} : vector<8x32xf32>, vector<32x3xf32>, vector<8x3xf32> -> vector<8x3xf32>
    %445 = arith.addf %442, %444 : vector<8x3xf32>
    %446 = vector.extract_strided_slice %440 {offsets = [64, 0], sizes = [32, 3], strides = [1, 1]} : vector<96x3xf32> to vector<32x3xf32>
    %cst_169 = arith.constant dense<0.000000e+00> : vector<8x3xf32>
    %447 = tpu.matmul %439, %446, %cst_169 {dimension_numbers = #tpu.dot_dimension_numbers<[1], [0], [0], [1], [0, 0, 1, 1], [], []>} : vector<8x32xf32>, vector<32x3xf32>, vector<8x3xf32> -> vector<8x3xf32>
    %448 = arith.addf %445, %447 : vector<8x3xf32>
    %c0_170 = arith.constant 0 : index
    %c0_171 = arith.constant 0 : index
    %449 = vector.load %arg19[%c0_170, %c0_171] : memref<1x3xf32, #tpu.memory_space<vmem>>, vector<1x3xf32>
    %450 = vector.broadcast %449 : vector<1x3xf32> to vector<8x3xf32>
    %451 = arith.addf %448, %450 : vector<8x3xf32>
    %c0_172 = arith.constant 0 : index
    %c0_173 = arith.constant 0 : index
    %452 = vector.load %arg3[%c0_172, %c0_173] : memref<8x1xf32, #tpu.memory_space<vmem>>, vector<8x1xf32>
    %453 = vector.broadcast %452 : vector<8x1xf32> to vector<8x3xf32>
    %454 = arith.addf %453, %451 : vector<8x3xf32>
    %455 = vector.broadcast %0 : vector<8x1xf32> to vector<8x3xf32>
    %456 = arith.mulf %454, %455 : vector<8x3xf32>
    %c0_174 = arith.constant 0 : index
    %c0_175 = arith.constant 0 : index
    %457 = vector.load %arg24[%c0_174, %c0_175] : memref<8x3xf32, #tpu.memory_space<vmem>>, vector<8x3xf32>
    tpu.vector_store %arg24[%c0_174, %c0_175], %456 {strides = array<i32>} : memref<8x3xf32, #tpu.memory_space<vmem>>, vector<8x3xf32>,
    %c0_176 = arith.constant 0 : index
    %c0_177 = arith.constant 0 : index
    %458 = vector.load %arg22[%c0_176, %c0_177] : memref<96x1xf32, #tpu.memory_space<vmem>>, vector<96x1xf32>
    %459 = vector.extract_strided_slice %458 {offsets = [0, 0], sizes = [32, 1], strides = [1, 1]} : vector<96x1xf32> to vector<32x1xf32>
    %cst_178 = arith.constant dense<0.000000e+00> : vector<8x1xf32>
    %460 = tpu.matmul %437, %459, %cst_178 {dimension_numbers = #tpu.dot_dimension_numbers<[1], [0], [0], [1], [0, 0, 1, 1], [], []>} : vector<8x32xf32>, vector<32x1xf32>, vector<8x1xf32> -> vector<8x1xf32>
    %461 = vector.extract_strided_slice %458 {offsets = [32, 0], sizes = [32, 1], strides = [1, 1]} : vector<96x1xf32> to vector<32x1xf32>
    %cst_179 = arith.constant dense<0.000000e+00> : vector<8x1xf32>
    %462 = tpu.matmul %27, %461, %cst_179 {dimension_numbers = #tpu.dot_dimension_numbers<[1], [0], [0], [1], [0, 0, 1, 1], [], []>} : vector<8x32xf32>, vector<32x1xf32>, vector<8x1xf32> -> vector<8x1xf32>
    %463 = arith.addf %460, %462 : vector<8x1xf32>
    %464 = vector.extract_strided_slice %458 {offsets = [64, 0], sizes = [32, 1], strides = [1, 1]} : vector<96x1xf32> to vector<32x1xf32>
    %cst_180 = arith.constant dense<0.000000e+00> : vector<8x1xf32>
    %465 = tpu.matmul %425, %464, %cst_180 {dimension_numbers = #tpu.dot_dimension_numbers<[1], [0], [0], [1], [0, 0, 1, 1], [], []>} : vector<8x32xf32>, vector<32x1xf32>, vector<8x1xf32> -> vector<8x1xf32>
    %466 = arith.addf %463, %465 : vector<8x1xf32>
    %c0_181 = arith.constant 0 : index
    %c0_182 = arith.constant 0 : index
    %467 = vector.load %arg23[%c0_181, %c0_182] : memref<1x1xf32, #tpu.memory_space<vmem>>, vector<1x1xf32>
    %468 = vector.broadcast %467 : vector<1x1xf32> to vector<8x1xf32>
    %469 = arith.addf %466, %468 : vector<8x1xf32>
    %c0_183 = arith.constant 0 : index
    %c0_184 = arith.constant 0 : index
    %470 = vector.load %arg26[%c0_183, %c0_184] : memref<8x1xf32, #tpu.memory_space<vmem>>, vector<8x1xf32>
    tpu.vector_store %arg26[%c0_183, %c0_184], %469 {strides = array<i32>} : memref<8x1xf32, #tpu.memory_space<vmem>>, vector<8x1xf32>,
    return
  }
}

</mosaic_0001>

<llo_original>
// kernel: mul.9
$region0: #{mul.9}
  #allocation0 [shape = 's32[1]{0}', space=sflag, size = 0x4, scoped, tag = 'scoped memory for mul.9']
  %s0 = inlined_call_operand.vmem [shape: f32[2,4], index: 0, kind: input, shape index: {}]
  %s1 = inlined_call_operand.vmem [shape: f32[2,4], index: 1, kind: input, shape index: {}]
  %s2 = inlined_call_operand.vmem [shape: f32[2,4], index: 2, kind: output, shape index: {}]
  %v3 = vld [vmem:[%s0] sm:$0x3]
  %v4 = vld [vmem:[%s1] sm:$0x3]
  %5 = xla_tuple %v3, %v4
  %6 = xla_tuple %5
  %v7 = vmul.f32 %v3, %v4
  %8 = xla_tuple %v7
  %9 = vst [vmem:[%s2] sm:$0x3] %v7

// kernel: forward.4
$region0: #{forward.4}
  #allocation0 [shape = 'u32[]', space=smem, size = 0x4, offset = 0x4, fixed_abs, tag = 'smem constant byte address 0x4 - core index']
  #allocation1 [shape = 'u32[72,128]{1,0:T(1,128)}', space=vmem, size = 0x9000, scoped, tag = 'internal scratch']
  %s0 = inlined_call_operand.vmem [shape: f32[8,32], index: 0, kind: input, shape index: {}]
  %s1 = inlined_call_operand.vmem [shape: f32[8,8], index: 1, kind: input, shape index: {}]
  %s2 = inlined_call_operand.vmem [shape: f32[2,1,32], index: 2, kind: input, shape index: {}]
  %s3 = inlined_call_operand.vmem [shape: f32[2,1,32], index: 3, kind: input, shape index: {}]
  %s4 = inlined_call_operand.vmem [shape: f32[2,32,96], index: 4, kind: input, shape index: {}]
  %s5 = inlined_call_operand.vmem [shape: f32[2,1,96], index: 5, kind: input, shape index: {}]
  %s6 = inlined_call_operand.vmem [shape: f32[2,32,32], index: 6, kind: input, shape index: {}]
  %s7 = inlined_call_operand.vmem [shape: f32[2,1,32], index: 7, kind: input, shape index: {}]
  %s8 = inlined_call_operand.vmem [shape: f32[2,1,32], index: 8, kind: input, shape index: {}]
  %s9 = inlined_call_operand.vmem [shape: f32[2,1,32], index: 9, kind: input, shape index: {}]
  %s10 = inlined_call_operand.vmem [shape: f32[2,32,64], index: 10, kind: input, shape index: {}]
  %s11 = inlined_call_operand.vmem [shape: f32[2,1,64], index: 11, kind: input, shape index: {}]
  %s12 = inlined_call_operand.vmem [shape: f32[2,64,32], index: 12, kind: input, shape index: {}]
  %s13 = inlined_call_operand.vmem [shape: f32[2,1,32], index: 13, kind: input, shape index: {}]
  %s14 = inlined_call_operand.vmem [shape: f32[8,32], index: 14, kind: output, shape index: {}]
  %s15 = sld [smem:[#allocation0]]
  $region66: #{forward.4} parent=0
    _
  %s17 = ssub.s32 1, %s15
  %s18 = scalar_select 0, %s17, %s15
  // Predicated region
  $region2: #{forward.4} parent=0 // pred_check
    _
  $region3: #{forward.4} parent=0 // pred_check_branch
    %20 = sbr.rel (0) target = $region5
  $region4: #{forward.4} parent=0 // pred_region
    _
  $region5: #{forward.4} parent=0 // pred_fallthru
    _
  // Predicated region
  $region6: #{forward.4} parent=0 // pred_check
    _
  $region7: #{forward.4} parent=0 // pred_check_branch
    %22 = sbr.rel (0) target = $region9
  $region8: #{forward.4} parent=0 // pred_region
    _
  $region9: #{forward.4} parent=0 // pred_fallthru
    _
  // Predicated region
  $region10: #{forward.4} parent=0 // pred_check
    _
  $region11: #{forward.4} parent=0 // pred_check_branch
    %24 = sbr.rel (0) target = $region13
  $region12: #{forward.4} parent=0 // pred_region
    _
  $region13: #{forward.4} parent=0 // pred_fallthru
    _
  // Predicated region
  $region14: #{forward.4} parent=0 // pred_check
    _
  $region15: #{forward.4} parent=0 // pred_check_branch
    %26 = sbr.rel (0) target = $region17
  $region16: #{forward.4} parent=0 // pred_region
    _
  $region17: #{forward.4} parent=0 // pred_fallthru
    _
  // Predicated region
  $region18: #{forward.4} parent=0 // pred_check
    _
  $region19: #{forward.4} parent=0 // pred_check_branch
    %28 = sbr.rel (0) target = $region21
  $region20: #{forward.4} parent=0 // pred_region
    _
  $region21: #{forward.4} parent=0 // pred_fallthru
    _
  // Predicated region
  $region22: #{forward.4} parent=0 // pred_check
    _
  $region23: #{forward.4} parent=0 // pred_check_branch
    %30 = sbr.rel (0) target = $region25
  $region24: #{forward.4} parent=0 // pred_region
    _
  $region25: #{forward.4} parent=0 // pred_fallthru
    _
  // Predicated region
  $region26: #{forward.4} parent=0 // pred_check
    _
  $region27: #{forward.4} parent=0 // pred_check_branch
    %32 = sbr.rel (0) target = $region29
  $region28: #{forward.4} parent=0 // pred_region
    _
  $region29: #{forward.4} parent=0 // pred_fallthru
    _
  // Predicated region
  $region30: #{forward.4} parent=0 // pred_check
    _
  $region31: #{forward.4} parent=0 // pred_check_branch
    %34 = sbr.rel (0) target = $region33
  $region32: #{forward.4} parent=0 // pred_region
    _
  $region33: #{forward.4} parent=0 // pred_fallthru
    _
  // Predicated region
  $region34: #{forward.4} parent=0 // pred_check
    _
  $region35: #{forward.4} parent=0 // pred_check_branch
    %36 = sbr.rel (0) target = $region37
  $region36: #{forward.4} parent=0 // pred_region
    _
  $region37: #{forward.4} parent=0 // pred_fallthru
    _
  // Predicated region
  $region38: #{forward.4} parent=0 // pred_check
    _
  $region39: #{forward.4} parent=0 // pred_check_branch
    %38 = sbr.rel (0) target = $region41
  $region40: #{forward.4} parent=0 // pred_region
    _
  $region41: #{forward.4} parent=0 // pred_fallthru
    _
  // Predicated region
  $region42: #{forward.4} parent=0 // pred_check
    _
  $region43: #{forward.4} parent=0 // pred_check_branch
    %40 = sbr.rel (0) target = $region45
  $region44: #{forward.4} parent=0 // pred_region
    _
  $region45: #{forward.4} parent=0 // pred_fallthru
    _
  // Predicated region
  $region46: #{forward.4} parent=0 // pred_check
    _
  $region47: #{forward.4} parent=0 // pred_check_branch
    %42 = sbr.rel (0) target = $region49
  $region48: #{forward.4} parent=0 // pred_region
    _
  $region49: #{forward.4} parent=0 // pred_fallthru
    _
  // Predicated region
  $region50: #{forward.4} parent=0 // pred_check
    _
  $region51: #{forward.4} parent=0 // pred_check_branch
    %44 = sbr.rel (0) target = $region53
  $region52: #{forward.4} parent=0 // pred_region
    _
  $region53: #{forward.4} parent=0 // pred_fallthru
    _
  // Predicated region
  $region54: #{forward.4} parent=0 // pred_check
    _
  $region55: #{forward.4} parent=0 // pred_check_branch
    %46 = sbr.rel (0) target = $region57
  $region56: #{forward.4} parent=0 // pred_region
    _
  $region57: #{forward.4} parent=0 // pred_fallthru
    _
  %v47 = vld [vmem:[%s0] sm:$0xff]
  %v48 = vld [vmem:[%s1] sm:$0xff]
  %v49 = vld [vmem:[%s2] sm:$0x1]
  %v50 = vld [vmem:[%s3] sm:$0x1]
  %vm51 = vcmask 261120
  %v52 = vsel %vm51, %v47, 0.0
  %53 = vadd.xlane.f32.xlu0 %v52
  %v54 = vpop.xlane.xlu0 %53
  %v55 = vrcp.pop 32.0
  %v56 = vmul.f32 32.0, %v55
  %v57 = vsub.f32 1.0, %v56
  %v58 = vmul.f32 %v55, %v57
  %v59 = vadd.f32 %v55, %v58
  %vm60 = vweird.f32 %v55
  %v61 = vsel %vm60, %v55, %v59
  %v62 = vmul.f32 %v54, %v61
  %v63 = vsub.f32 %v47, %v62
  %v64 = vmul.f32 %v63, %v63
  %v65 = vsel %vm51, %v64, 0.0
  %66 = vadd.xlane.f32.xlu0 %v65
  %v67 = vpop.xlane.xlu0 %66
  %v68 = vmul.f32 %v67, %v61
  %v69 = vadd.f32 %v68, 1e-05
  %v70 = vrsqrt.pop %v69
  %v71 = vmul.f32 %v70, %v69
  %v72 = vmul.f32 %v71, %v70
  %v73 = vmul.f32 0.5, %v72
  %v74 = vsub.f32 1.5, %v73
  %v75 = vmul.f32 %v70, %v74
  %vm76 = vweird.f32 %v69
  %vm77 = vweird.f32 %v70
  %vm78 = vmor %vm76, %vm77
  %v79 = vsel %vm78, %v70, %v75
  %v80 = vmul.f32 %v63, %v79
  %v82 = vperm.slane %v49, 0
  %v84 = vmul.f32 %v80, %v82
  %v86 = vperm.slane %v50, 0
  %v88 = vadd.f32 %v84, %v86
  %v89 = vld [vmem:[%s4] sm:$0xff]
  %v90 = vld [vmem:[%s4 + $0x8] sm:$0xff]
  %v91 = vld [vmem:[%s4 + $0x10] sm:$0xff]
  %v92 = vld [vmem:[%s4 + $0x18] sm:$0xff]
  %v93 = vld [vmem:[%s5] sm:$0x1]
  %v95 = vperm.slane %v93, 0
  %v98 = vsel %vm51, %v88, 0
  %100 = vmatpush.msra.mxu0 0.0
  %101 = vmatpush.msra.mxu0 0.0
  %102 = vmatpush.msra.mxu0 0.0
  %103 = vmatpush.msra.mxu0 0.0
  %104 = vmatpush.msra.mxu0 0.0
  %105 = vmatpush.msra.mxu0 0.0
  %106 = vmatpush.msra.mxu0 0.0
  %107 = vmatpush.msra.mxu0 0.0
  %108 = vmatpush.msra.mxu0 0.0
  %109 = vmatpush.msra.mxu0 0.0
  %110 = vmatpush.msra.mxu0 0.0
  %111 = vmatpush.msra.mxu0 0.0
  %112 = vmatpush.msra.mxu0 %v92
  %113 = vmatpush.msra.mxu0 %v91
  %114 = vmatpush.msra.mxu0 %v90
  %115 = vmatpush.msra.mxu0 %v89
  %116 = vmatmul.f32.gmra.mxu0 %v98
  %v117 = vpop.f32.mrf.mxu0
  %v118 = vadd.f32 %v95, %v117
  %119 = vdwg.mxu0
  %v120 = vld [vmem:[%s6] sm:$0xff]
  %v121 = vld [vmem:[%s6 + $0x8] sm:$0xff]
  %v122 = vld [vmem:[%s6 + $0x10] sm:$0xff]
  %v123 = vld [vmem:[%s6 + $0x18] sm:$0xff]
  %125 = vrot.lane.b32.xlu0 %v118, 96
  %v126 = vpop.permute.xlu0 %125
  %vm127 = vcmask 64512
  %v128 = vsel %vm127, %v118, 0
  %v130 = vsel %vm127, %v126, 0
  %132 = vmatpush.xpose.msra.mxu0 0.0
  %133 = vmatpush.xpose.msra.mxu0 0.0
  %134 = vmatpush.xpose.msra.mxu0 0.0
  %135 = vmatpush.xpose.msra.mxu0 0.0
  %136 = vmatpush.xpose.msra.mxu0 0.0
  %137 = vmatpush.xpose.msra.mxu0 0.0
  %138 = vmatpush.xpose.msra.mxu0 0.0
  %139 = vmatpush.xpose.msra.mxu0 0.0
  %140 = vmatpush.xpose.msra.mxu0 0.0
  %141 = vmatpush.xpose.msra.mxu0 0.0
  %142 = vmatpush.xpose.msra.mxu0 0.0
  %143 = vmatpush.xpose.msra.mxu0 0.0
  %144 = vmatpush.xpose.msra.mxu0 0.0
  %145 = vmatpush.xpose.msra.mxu0 0.0
  %146 = vmatpush.xpose.msra.mxu0 0.0
  %147 = vmatpush.xpose.msra.mxu0 %v130
  %148 = vmatmul.f32.gmra.mxu0 %v128
  %v149 = vpop.f32.mrf.mxu0
  %v150 = vadd.f32 0.0, %v149
  %151 = vdwg.mxu0
  %v152 = vmul.f32 %v150, 0.35355338
  %v153 = vadd.f32 %v152, %v48
  %v154 = vsel %vm127, %v153, -inf
  %155 = vmax.xlane.f32.xlu0 %v154
  %v156 = vpop.xlane.xlu0 %155
  %v157 = vsub.f32 %v153, %v156
  %v158 = vmul.f32 %v157, 1.442695
  %v159 = vpow.pop %v158
  %v160 = vsel %vm127, %v159, 0.0
  %161 = vadd.xlane.f32.xlu0 %v160
  %v162 = vpop.xlane.xlu0 %161
  %v163 = vrcp.pop %v162
  %v164 = vmul.f32 %v159, %v163
  %165 = vrot.lane.b32.xlu0 %v118, 64
  %v166 = vpop.permute.xlu0 %165
  %v169 = vsel %vm127, %v164, 0
  %171 = vmatpush.msra.mxu0 0.0
  %172 = vmatpush.msra.mxu0 0.0
  %173 = vmatpush.msra.mxu0 0.0
  %174 = vmatpush.msra.mxu0 0.0
  %175 = vmatpush.msra.mxu0 0.0
  %176 = vmatpush.msra.mxu0 0.0
  %177 = vmatpush.msra.mxu0 0.0
  %178 = vmatpush.msra.mxu0 0.0
  %179 = vmatpush.msra.mxu0 0.0
  %180 = vmatpush.msra.mxu0 0.0
  %181 = vmatpush.msra.mxu0 0.0
  %182 = vmatpush.msra.mxu0 0.0
  %183 = vmatpush.msra.mxu0 0.0
  %184 = vmatpush.msra.mxu0 0.0
  %185 = vmatpush.msra.mxu0 0.0
  %186 = vmatpush.msra.mxu0 %v166
  %187 = vmatmul.f32.gmra.mxu0 %v169
  %v188 = vpop.f32.mrf.mxu0
  %v189 = vadd.f32 0.0, %v188
  %190 = vdwg.mxu0
  %191 = vrot.lane.b32.xlu0 %v118, 120
  %v192 = vpop.permute.xlu0 %191
  %193 = vrot.lane.b32.xlu0 %v118, 88
  %v194 = vpop.permute.xlu0 %193
  %v195 = vsel %vm127, %v192, 0
  %v197 = vsel %vm127, %v194, 0
  %199 = vmatpush.xpose.msra.mxu0 0.0
  %200 = vmatpush.xpose.msra.mxu0 0.0
  %201 = vmatpush.xpose.msra.mxu0 0.0
  %202 = vmatpush.xpose.msra.mxu0 0.0
  %203 = vmatpush.xpose.msra.mxu0 0.0
  %204 = vmatpush.xpose.msra.mxu0 0.0
  %205 = vmatpush.xpose.msra.mxu0 0.0
  %206 = vmatpush.xpose.msra.mxu0 0.0
  %207 = vmatpush.xpose.msra.mxu0 0.0
  %208 = vmatpush.xpose.msra.mxu0 0.0
  %209 = vmatpush.xpose.msra.mxu0 0.0
  %210 = vmatpush.xpose.msra.mxu0 0.0
  %211 = vmatpush.xpose.msra.mxu0 0.0
  %212 = vmatpush.xpose.msra.mxu0 0.0
  %213 = vmatpush.xpose.msra.mxu0 0.0
  %214 = vmatpush.xpose.msra.mxu0 %v197
  %215 = vmatmul.f32.gmra.mxu0 %v195
  %v216 = vpop.f32.mrf.mxu0
  %v217 = vadd.f32 0.0, %v216
  %218 = vdwg.mxu0
  %v219 = vmul.f32 %v217, 0.35355338
  %v220 = vadd.f32 %v219, %v48
  %v221 = vsel %vm127, %v220, -inf
  %222 = vmax.xlane.f32.xlu0 %v221
  %v223 = vpop.xlane.xlu0 %222
  %v224 = vsub.f32 %v220, %v223
  %v225 = vmul.f32 %v224, 1.442695
  %v226 = vpow.pop %v225
  %v227 = vsel %vm127, %v226, 0.0
  %228 = vadd.xlane.f32.xlu0 %v227
  %v229 = vpop.xlane.xlu0 %228
  %v230 = vrcp.pop %v229
  %v231 = vmul.f32 %v226, %v230
  %232 = vrot.lane.b32.xlu0 %v118, 56
  %v233 = vpop.permute.xlu0 %232
  %v236 = vsel %vm127, %v231, 0
  %238 = vmatpush.msra.mxu0 0.0
  %239 = vmatpush.msra.mxu0 0.0
  %240 = vmatpush.msra.mxu0 0.0
  %241 = vmatpush.msra.mxu0 0.0
  %242 = vmatpush.msra.mxu0 0.0
  %243 = vmatpush.msra.mxu0 0.0
  %244 = vmatpush.msra.mxu0 0.0
  %245 = vmatpush.msra.mxu0 0.0
  %246 = vmatpush.msra.mxu0 0.0
  %247 = vmatpush.msra.mxu0 0.0
  %248 = vmatpush.msra.mxu0 0.0
  %249 = vmatpush.msra.mxu0 0.0
  %250 = vmatpush.msra.mxu0 0.0
  %251 = vmatpush.msra.mxu0 0.0
  %252 = vmatpush.msra.mxu0 0.0
  %253 = vmatpush.msra.mxu0 %v233
  %254 = vmatmul.f32.gmra.mxu0 %v236
  %v255 = vpop.f32.mrf.mxu0
  %v256 = vadd.f32 0.0, %v255
  %257 = vdwg.mxu0
  %v259 = vsel %vm127, %v256, 0
  %261 = vmatpush.msra.mxu0 0.0
  %262 = vmatpush.msra.mxu0 0.0
  %263 = vmatpush.msra.mxu0 0.0
  %264 = vmatpush.msra.mxu0 0.0
  %265 = vmatpush.msra.mxu0 0.0
  %266 = vmatpush.msra.mxu0 0.0
  %267 = vmatpush.msra.mxu0 0.0
  %268 = vmatpush.msra.mxu0 0.0
  %269 = vmatpush.msra.mxu0 0.0
  %270 = vmatpush.msra.mxu0 0.0
  %271 = vmatpush.msra.mxu0 0.0
  %272 = vmatpush.msra.mxu0 0.0
  %273 = vmatpush.msra.mxu0 0.0
  %274 = vmatpush.msra.mxu0 0.0
  %275 = vmatpush.msra.mxu0 0.0
  %276 = vmatpush.msra.mxu0 %v121
  %277 = vmatmul.f32.gmra.mxu0 %v259
  %v278 = vpop.f32.mrf.mxu0
  %v279 = vadd.f32 0.0, %v278
  %280 = vdwg.mxu0
  %v282 = vsel %vm127, %v189, 0
  %284 = vmatpush.msra.mxu0 0.0
  %285 = vmatpush.msra.mxu0 0.0
  %286 = vmatpush.msra.mxu0 0.0
  %287 = vmatpush.msra.mxu0 0.0
  %288 = vmatpush.msra.mxu0 0.0
  %289 = vmatpush.msra.mxu0 0.0
  %290 = vmatpush.msra.mxu0 0.0
  %291 = vmatpush.msra.mxu0 0.0
  %292 = vmatpush.msra.mxu0 0.0
  %293 = vmatpush.msra.mxu0 0.0
  %294 = vmatpush.msra.mxu0 0.0
  %295 = vmatpush.msra.mxu0 0.0
  %296 = vmatpush.msra.mxu0 0.0
  %297 = vmatpush.msra.mxu0 0.0
  %298 = vmatpush.msra.mxu0 0.0
  %299 = vmatpush.msra.mxu0 %v120
  %300 = vmatmul.f32.gmra.mxu0 %v282
  %v301 = vpop.f32.mrf.mxu0
  %v302 = vadd.f32 %v279, %v301
  %303 = vdwg.mxu0
  %304 = vrot.lane.b32.xlu0 %v118, 112
  %v305 = vpop.permute.xlu0 %304
  %306 = vrot.lane.b32.xlu0 %v118, 80
  %v307 = vpop.permute.xlu0 %306
  %v308 = vsel %vm127, %v305, 0
  %v310 = vsel %vm127, %v307, 0
  %312 = vmatpush.xpose.msra.mxu0 0.0
  %313 = vmatpush.xpose.msra.mxu0 0.0
  %314 = vmatpush.xpose.msra.mxu0 0.0
  %315 = vmatpush.xpose.msra.mxu0 0.0
  %316 = vmatpush.xpose.msra.mxu0 0.0
  %317 = vmatpush.xpose.msra.mxu0 0.0
  %318 = vmatpush.xpose.msra.mxu0 0.0
  %319 = vmatpush.xpose.msra.mxu0 0.0
  %320 = vmatpush.xpose.msra.mxu0 0.0
  %321 = vmatpush.xpose.msra.mxu0 0.0
  %322 = vmatpush.xpose.msra.mxu0 0.0
  %323 = vmatpush.xpose.msra.mxu0 0.0
  %324 = vmatpush.xpose.msra.mxu0 0.0
  %325 = vmatpush.xpose.msra.mxu0 0.0
  %326 = vmatpush.xpose.msra.mxu0 0.0
  %327 = vmatpush.xpose.msra.mxu0 %v310
  %328 = vmatmul.f32.gmra.mxu0 %v308
  %v329 = vpop.f32.mrf.mxu0
  %v330 = vadd.f32 0.0, %v329
  %331 = vdwg.mxu0
  %v332 = vmul.f32 %v330, 0.35355338
  %v333 = vadd.f32 %v332, %v48
  %v334 = vsel %vm127, %v333, -inf
  %335 = vmax.xlane.f32.xlu0 %v334
  %v336 = vpop.xlane.xlu0 %335
  %v337 = vsub.f32 %v333, %v336
  %v338 = vmul.f32 %v337, 1.442695
  %v339 = vpow.pop %v338
  %v340 = vsel %vm127, %v339, 0.0
  %341 = vadd.xlane.f32.xlu0 %v340
  %v342 = vpop.xlane.xlu0 %341
  %v343 = vrcp.pop %v342
  %v344 = vmul.f32 %v339, %v343
  %345 = vrot.lane.b32.xlu0 %v118, 48
  %v346 = vpop.permute.xlu0 %345
  %v349 = vsel %vm127, %v344, 0
  %351 = vmatpush.msra.mxu0 0.0
  %352 = vmatpush.msra.mxu0 0.0
  %353 = vmatpush.msra.mxu0 0.0
  %354 = vmatpush.msra.mxu0 0.0
  %355 = vmatpush.msra.mxu0 0.0
  %356 = vmatpush.msra.mxu0 0.0
  %357 = vmatpush.msra.mxu0 0.0
  %358 = vmatpush.msra.mxu0 0.0
  %359 = vmatpush.msra.mxu0 0.0
  %360 = vmatpush.msra.mxu0 0.0
  %361 = vmatpush.msra.mxu0 0.0
  %362 = vmatpush.msra.mxu0 0.0
  %363 = vmatpush.msra.mxu0 0.0
  %364 = vmatpush.msra.mxu0 0.0
  %365 = vmatpush.msra.mxu0 0.0
  %366 = vmatpush.msra.mxu0 %v346
  %367 = vmatmul.f32.gmra.mxu0 %v349
  %v368 = vpop.f32.mrf.mxu0
  %v369 = vadd.f32 0.0, %v368
  %370 = vdwg.mxu0
  %v372 = vsel %vm127, %v369, 0
  %374 = vmatpush.msra.mxu0 0.0
  %375 = vmatpush.msra.mxu0 0.0
  %376 = vmatpush.msra.mxu0 0.0
  %377 = vmatpush.msra.mxu0 0.0
  %378 = vmatpush.msra.mxu0 0.0
  %379 = vmatpush.msra.mxu0 0.0
  %380 = vmatpush.msra.mxu0 0.0
  %381 = vmatpush.msra.mxu0 0.0
  %382 = vmatpush.msra.mxu0 0.0
  %383 = vmatpush.msra.mxu0 0.0
  %384 = vmatpush.msra.mxu0 0.0
  %385 = vmatpush.msra.mxu0 0.0
  %386 = vmatpush.msra.mxu0 0.0
  %387 = vmatpush.msra.mxu0 0.0
  %388 = vmatpush.msra.mxu0 0.0
  %389 = vmatpush.msra.mxu0 %v122
  %390 = vmatmul.f32.gmra.mxu0 %v372
  %v391 = vpop.f32.mrf.mxu0
  %v392 = vadd.f32 0.0, %v391
  %393 = vdwg.mxu0
  %v394 = vadd.f32 %v302, %v392
  %395 = vrot.lane.b32.xlu0 %v118, 104
  %v396 = vpop.permute.xlu0 %395
  %397 = vrot.lane.b32.xlu0 %v118, 72
  %v398 = vpop.permute.xlu0 %397
  %v399 = vsel %vm127, %v396, 0
  %v401 = vsel %vm127, %v398, 0
  %403 = vmatpush.xpose.msra.mxu0 0.0
  %404 = vmatpush.xpose.msra.mxu0 0.0
  %405 = vmatpush.xpose.msra.mxu0 0.0
  %406 = vmatpush.xpose.msra.mxu0 0.0
  %407 = vmatpush.xpose.msra.mxu0 0.0
  %408 = vmatpush.xpose.msra.mxu0 0.0
  %409 = vmatpush.xpose.msra.mxu0 0.0
  %410 = vmatpush.xpose.msra.mxu0 0.0
  %411 = vmatpush.xpose.msra.mxu0 0.0
  %412 = vmatpush.xpose.msra.mxu0 0.0
  %413 = vmatpush.xpose.msra.mxu0 0.0
  %414 = vmatpush.xpose.msra.mxu0 0.0
  %415 = vmatpush.xpose.msra.mxu0 0.0
  %416 = vmatpush.xpose.msra.mxu0 0.0
  %417 = vmatpush.xpose.msra.mxu0 0.0
  %418 = vmatpush.xpose.msra.mxu0 %v401
  %419 = vmatmul.f32.gmra.mxu0 %v399
  %v420 = vpop.f32.mrf.mxu0
  %v421 = vadd.f32 0.0, %v420
  %422 = vdwg.mxu0
  %v423 = vmul.f32 %v421, 0.35355338
  %v424 = vadd.f32 %v423, %v48
  %v425 = vsel %vm127, %v424, -inf
  %426 = vmax.xlane.f32.xlu0 %v425
  %v427 = vpop.xlane.xlu0 %426
  %v428 = vsub.f32 %v424, %v427
  %v429 = vmul.f32 %v428, 1.442695
  %v430 = vpow.pop %v429
  %v431 = vsel %vm127, %v430, 0.0
  %432 = vadd.xlane.f32.xlu0 %v431
  %v433 = vpop.xlane.xlu0 %432
  %v434 = vrcp.pop %v433
  %v435 = vmul.f32 %v430, %v434
  %436 = vrot.lane.b32.xlu0 %v118, 40
  %v437 = vpop.permute.xlu0 %436
  %v440 = vsel %vm127, %v435, 0
  %442 = vmatpush.msra.mxu0 0.0
  %443 = vmatpush.msra.mxu0 0.0
  %444 = vmatpush.msra.mxu0 0.0
  %445 = vmatpush.msra.mxu0 0.0
  %446 = vmatpush.msra.mxu0 0.0
  %447 = vmatpush.msra.mxu0 0.0
  %448 = vmatpush.msra.mxu0 0.0
  %449 = vmatpush.msra.mxu0 0.0
  %450 = vmatpush.msra.mxu0 0.0
  %451 = vmatpush.msra.mxu0 0.0
  %452 = vmatpush.msra.mxu0 0.0
  %453 = vmatpush.msra.mxu0 0.0
  %454 = vmatpush.msra.mxu0 0.0
  %455 = vmatpush.msra.mxu0 0.0
  %456 = vmatpush.msra.mxu0 0.0
  %457 = vmatpush.msra.mxu0 %v437
  %458 = vmatmul.f32.gmra.mxu0 %v440
  %v459 = vpop.f32.mrf.mxu0
  %v460 = vadd.f32 0.0, %v459
  %461 = vdwg.mxu0
  %v463 = vsel %vm127, %v460, 0
  %465 = vmatpush.msra.mxu0 0.0
  %466 = vmatpush.msra.mxu0 0.0
  %467 = vmatpush.msra.mxu0 0.0
  %468 = vmatpush.msra.mxu0 0.0
  %469 = vmatpush.msra.mxu0 0.0
  %470 = vmatpush.msra.mxu0 0.0
  %471 = vmatpush.msra.mxu0 0.0
  %472 = vmatpush.msra.mxu0 0.0
  %473 = vmatpush.msra.mxu0 0.0
  %474 = vmatpush.msra.mxu0 0.0
  %475 = vmatpush.msra.mxu0 0.0
  %476 = vmatpush.msra.mxu0 0.0
  %477 = vmatpush.msra.mxu0 0.0
  %478 = vmatpush.msra.mxu0 0.0
  %479 = vmatpush.msra.mxu0 0.0
  %480 = vmatpush.msra.mxu0 %v123
  %481 = vmatmul.f32.gmra.mxu0 %v463
  %v482 = vpop.f32.mrf.mxu0
  %v483 = vadd.f32 0.0, %v482
  %484 = vdwg.mxu0
  %v485 = vadd.f32 %v394, %v483
  %v486 = vadd.f32 %v47, %v485
  %v487 = vld [vmem:[%s7] sm:$0x1]
  %v489 = vperm.slane %v487, 0
  %v491 = vadd.f32 %v486, %v489
  %v492 = vld [vmem:[%s8] sm:$0x1]
  %v493 = vld [vmem:[%s9] sm:$0x1]
  %v494 = vsel %vm51, %v491, 0.0
  %495 = vadd.xlane.f32.xlu0 %v494
  %v496 = vpop.xlane.xlu0 %495
  %v497 = vmul.f32 %v496, %v61
  %v498 = vsub.f32 %v491, %v497
  %v499 = vmul.f32 %v498, %v498
  %v500 = vsel %vm51, %v499, 0.0
  %501 = vadd.xlane.f32.xlu0 %v500
  %v502 = vpop.xlane.xlu0 %501
  %v503 = vmul.f32 %v502, %v61
  %v504 = vadd.f32 %v503, 1e-05
  %v505 = vrsqrt.pop %v504
  %v506 = vmul.f32 %v505, %v504
  %v507 = vmul.f32 %v506, %v505
  %v508 = vmul.f32 0.5, %v507
  %v509 = vsub.f32 1.5, %v508
  %v510 = vmul.f32 %v505, %v509
  %vm511 = vweird.f32 %v504
  %vm512 = vweird.f32 %v505
  %vm513 = vmor %vm511, %vm512
  %v514 = vsel %vm513, %v505, %v510
  %v515 = vmul.f32 %v498, %v514
  %v517 = vperm.slane %v492, 0
  %v519 = vmul.f32 %v515, %v517
  %v521 = vperm.slane %v493, 0
  %v523 = vadd.f32 %v519, %v521
  %v524 = vld [vmem:[%s10] sm:$0xff]
  %v525 = vld [vmem:[%s10 + $0x8] sm:$0xff]
  %v526 = vld [vmem:[%s10 + $0x10] sm:$0xff]
  %v527 = vld [vmem:[%s10 + $0x18] sm:$0xff]
  %v528 = vld [vmem:[%s11] sm:$0x1]
  %v530 = vperm.slane %v528, 0
  %v533 = vsel %vm51, %v523, 0
  %535 = vmatpush.msra.mxu0 0.0
  %536 = vmatpush.msra.mxu0 0.0
  %537 = vmatpush.msra.mxu0 0.0
  %538 = vmatpush.msra.mxu0 0.0
  %539 = vmatpush.msra.mxu0 0.0
  %540 = vmatpush.msra.mxu0 0.0
  %541 = vmatpush.msra.mxu0 0.0
  %542 = vmatpush.msra.mxu0 0.0
  %543 = vmatpush.msra.mxu0 0.0
  %544 = vmatpush.msra.mxu0 0.0
  %545 = vmatpush.msra.mxu0 0.0
  %546 = vmatpush.msra.mxu0 0.0
  %547 = vmatpush.msra.mxu0 %v527
  %548 = vmatpush.msra.mxu0 %v526
  %549 = vmatpush.msra.mxu0 %v525
  %550 = vmatpush.msra.mxu0 %v524
  %551 = vmatmul.f32.gmra.mxu0 %v533
  %v552 = vpop.f32.mrf.mxu0
  %v553 = vadd.f32 %v530, %v552
  %554 = vdwg.mxu0
  %v555 = vmax.f32 %v553, 0.0
  %v556 = vld [vmem:[%s12] sm:$0xff]
  %v557 = vld [vmem:[%s12 + $0x8] sm:$0xff]
  %v558 = vld [vmem:[%s12 + $0x10] sm:$0xff]
  %v559 = vld [vmem:[%s12 + $0x18] sm:$0xff]
  %v560 = vld [vmem:[%s12 + $0x20] sm:$0xff]
  %v561 = vld [vmem:[%s12 + $0x28] sm:$0xff]
  %v562 = vld [vmem:[%s12 + $0x30] sm:$0xff]
  %v563 = vld [vmem:[%s12 + $0x38] sm:$0xff]
  %v564 = vld [vmem:[%s13] sm:$0x1]
  %v566 = vperm.slane %v564, 0
  %vm568 = vcmask 523264
  %v570 = vsel %vm568, %v555, 0
  %572 = vmatpush.msra.mxu0 0.0
  %573 = vmatpush.msra.mxu0 0.0
  %574 = vmatpush.msra.mxu0 0.0
  %575 = vmatpush.msra.mxu0 0.0
  %576 = vmatpush.msra.mxu0 0.0
  %577 = vmatpush.msra.mxu0 0.0
  %578 = vmatpush.msra.mxu0 0.0
  %579 = vmatpush.msra.mxu0 0.0
  %580 = vmatpush.msra.mxu0 %v563
  %581 = vmatpush.msra.mxu0 %v562
  %582 = vmatpush.msra.mxu0 %v561
  %583 = vmatpush.msra.mxu0 %v560
  %584 = vmatpush.msra.mxu0 %v559
  %585 = vmatpush.msra.mxu0 %v558
  %586 = vmatpush.msra.mxu0 %v557
  %587 = vmatpush.msra.mxu0 %v556
  %588 = vmatmul.f32.gmra.mxu0 %v570
  %v589 = vpop.f32.mrf.mxu0
  %v590 = vadd.f32 %v566, %v589
  %591 = vdwg.mxu0
  %v592 = vadd.f32 %v491, %v590
  %s593 = scalar_lea.vmem %s2, 1
  %v594 = vld [vmem:[%s593] sm:$0x1]
  %s595 = scalar_lea.vmem %s3, 1
  %v596 = vld [vmem:[%s595] sm:$0x1]
  %v597 = vsel %vm51, %v592, 0.0
  %598 = vadd.xlane.f32.xlu0 %v597
  %v599 = vpop.xlane.xlu0 %598
  %v600 = vmul.f32 %v599, %v61
  %v601 = vsub.f32 %v592, %v600
  %v602 = vmul.f32 %v601, %v601
  %v603 = vsel %vm51, %v602, 0.0
  %604 = vadd.xlane.f32.xlu0 %v603
  %v605 = vpop.xlane.xlu0 %604
  %v606 = vmul.f32 %v605, %v61
  %v607 = vadd.f32 %v606, 1e-05
  %v608 = vrsqrt.pop %v607
  %v609 = vmul.f32 %v608, %v607
  %v610 = vmul.f32 %v609, %v608
  %v611 = vmul.f32 0.5, %v610
  %v612 = vsub.f32 1.5, %v611
  %v613 = vmul.f32 %v608, %v612
  %vm614 = vweird.f32 %v607
  %vm615 = vweird.f32 %v608
  %vm616 = vmor %vm614, %vm615
  %v617 = vsel %vm616, %v608, %v613
  %v618 = vmul.f32 %v601, %v617
  %v620 = vperm.slane %v594, 0
  %v622 = vmul.f32 %v618, %v620
  %v624 = vperm.slane %v596, 0
  %v626 = vadd.f32 %v622, %v624
  %s627 = scalar_lea.vmem %s4, 32
  %v628 = vld [vmem:[%s627] sm:$0xff]
  %v629 = vld [vmem:[%s627 + $0x8] sm:$0xff]
  %v630 = vld [vmem:[%s627 + $0x10] sm:$0xff]
  %v631 = vld [vmem:[%s627 + $0x18] sm:$0xff]
  %s632 = scalar_lea.vmem %s5, 1
  %v633 = vld [vmem:[%s632] sm:$0x1]
  %v635 = vperm.slane %v633, 0
  %v638 = vsel %vm51, %v626, 0
  %640 = vmatpush.msra.mxu0 0.0
  %641 = vmatpush.msra.mxu0 0.0
  %642 = vmatpush.msra.mxu0 0.0
  %643 = vmatpush.msra.mxu0 0.0
  %644 = vmatpush.msra.mxu0 0.0
  %645 = vmatpush.msra.mxu0 0.0
  %646 = vmatpush.msra.mxu0 0.0
  %647 = vmatpush.msra.mxu0 0.0
  %648 = vmatpush.msra.mxu0 0.0
  %649 = vmatpush.msra.mxu0 0.0
  %650 = vmatpush.msra.mxu0 0.0
  %651 = vmatpush.msra.mxu0 0.0
  %652 = vmatpush.msra.mxu0 %v631
  %653 = vmatpush.msra.mxu0 %v630
  %654 = vmatpush.msra.mxu0 %v629
  %655 = vmatpush.msra.mxu0 %v628
  %656 = vmatmul.f32.gmra.mxu0 %v638
  %v657 = vpop.f32.mrf.mxu0
  %v658 = vadd.f32 %v635, %v657
  %659 = vdwg.mxu0
  %s660 = scalar_lea.vmem %s6, 32
  %v661 = vld [vmem:[%s660] sm:$0xff]
  %v662 = vld [vmem:[%s660 + $0x8] sm:$0xff]
  %v663 = vld [vmem:[%s660 + $0x10] sm:$0xff]
  %v664 = vld [vmem:[%s660 + $0x18] sm:$0xff]
  %666 = vrot.lane.b32.xlu0 %v658, 96
  %v667 = vpop.permute.xlu0 %666
  %v668 = vsel %vm127, %v658, 0
  %v670 = vsel %vm127, %v667, 0
  %672 = vmatpush.xpose.msra.mxu0 0.0
  %673 = vmatpush.xpose.msra.mxu0 0.0
  %674 = vmatpush.xpose.msra.mxu0 0.0
  %675 = vmatpush.xpose.msra.mxu0 0.0
  %676 = vmatpush.xpose.msra.mxu0 0.0
  %677 = vmatpush.xpose.msra.mxu0 0.0
  %678 = vmatpush.xpose.msra.mxu0 0.0
  %679 = vmatpush.xpose.msra.mxu0 0.0
  %680 = vmatpush.xpose.msra.mxu0 0.0
  %681 = vmatpush.xpose.msra.mxu0 0.0
  %682 = vmatpush.xpose.msra.mxu0 0.0
  %683 = vmatpush.xpose.msra.mxu0 0.0
  %684 = vmatpush.xpose.msra.mxu0 0.0
  %685 = vmatpush.xpose.msra.mxu0 0.0
  %686 = vmatpush.xpose.msra.mxu0 0.0
  %687 = vmatpush.xpose.msra.mxu0 %v670
  %688 = vmatmul.f32.gmra.mxu0 %v668
  %v689 = vpop.f32.mrf.mxu0
  %v690 = vadd.f32 0.0, %v689
  %691 = vdwg.mxu0
  %v692 = vmul.f32 %v690, 0.35355338
  %v693 = vadd.f32 %v692, %v48
  %v694 = vsel %vm127, %v693, -inf
  %695 = vmax.xlane.f32.xlu0 %v694
  %v696 = vpop.xlane.xlu0 %695
  %v697 = vsub.f32 %v693, %v696
  %v698 = vmul.f32 %v697, 1.442695
  %v699 = vpow.pop %v698
  %v700 = vsel %vm127, %v699, 0.0
  %701 = vadd.xlane.f32.xlu0 %v700
  %v702 = vpop.xlane.xlu0 %701
  %v703 = vrcp.pop %v702
  %v704 = vmul.f32 %v699, %v703
  %705 = vrot.lane.b32.xlu0 %v658, 64
  %v706 = vpop.permute.xlu0 %705
  %v709 = vsel %vm127, %v704, 0
  %711 = vmatpush.msra.mxu0 0.0
  %712 = vmatpush.msra.mxu0 0.0
  %713 = vmatpush.msra.mxu0 0.0
  %714 = vmatpush.msra.mxu0 0.0
  %715 = vmatpush.msra.mxu0 0.0
  %716 = vmatpush.msra.mxu0 0.0
  %717 = vmatpush.msra.mxu0 0.0
  %718 = vmatpush.msra.mxu0 0.0
  %719 = vmatpush.msra.mxu0 0.0
  %720 = vmatpush.msra.mxu0 0.0
  %721 = vmatpush.msra.mxu0 0.0
  %722 = vmatpush.msra.mxu0 0.0
  %723 = vmatpush.msra.mxu0 0.0
  %724 = vmatpush.msra.mxu0 0.0
  %725 = vmatpush.msra.mxu0 0.0
  %726 = vmatpush.msra.mxu0 %v706
  %727 = vmatmul.f32.gmra.mxu0 %v709
  %v728 = vpop.f32.mrf.mxu0
  %v729 = vadd.f32 0.0, %v728
  %730 = vdwg.mxu0
  %731 = vrot.lane.b32.xlu0 %v658, 120
  %v732 = vpop.permute.xlu0 %731
  %733 = vrot.lane.b32.xlu0 %v658, 88
  %v734 = vpop.permute.xlu0 %733
  %v735 = vsel %vm127, %v732, 0
  %v737 = vsel %vm127, %v734, 0
  %739 = vmatpush.xpose.msra.mxu0 0.0
  %740 = vmatpush.xpose.msra.mxu0 0.0
  %741 = vmatpush.xpose.msra.mxu0 0.0
  %742 = vmatpush.xpose.msra.mxu0 0.0
  %743 = vmatpush.xpose.msra.mxu0 0.0
  %744 = vmatpush.xpose.msra.mxu0 0.0
  %745 = vmatpush.xpose.msra.mxu0 0.0
  %746 = vmatpush.xpose.msra.mxu0 0.0
  %747 = vmatpush.xpose.msra.mxu0 0.0
  %748 = vmatpush.xpose.msra.mxu0 0.0
  %749 = vmatpush.xpose.msra.mxu0 0.0
  %750 = vmatpush.xpose.msra.mxu0 0.0
  %751 = vmatpush.xpose.msra.mxu0 0.0
  %752 = vmatpush.xpose.msra.mxu0 0.0
  %753 = vmatpush.xpose.msra.mxu0 0.0
  %754 = vmatpush.xpose.msra.mxu0 %v737
  %755 = vmatmul.f32.gmra.mxu0 %v735
  %v756 = vpop.f32.mrf.mxu0
  %v757 = vadd.f32 0.0, %v756
  %758 = vdwg.mxu0
  %v759 = vmul.f32 %v757, 0.35355338
  %v760 = vadd.f32 %v759, %v48
  %v761 = vsel %vm127, %v760, -inf
  %762 = vmax.xlane.f32.xlu0 %v761
  %v763 = vpop.xlane.xlu0 %762
  %v764 = vsub.f32 %v760, %v763
  %v765 = vmul.f32 %v764, 1.442695
  %v766 = vpow.pop %v765
  %v767 = vsel %vm127, %v766, 0.0
  %768 = vadd.xlane.f32.xlu0 %v767
  %v769 = vpop.xlane.xlu0 %768
  %v770 = vrcp.pop %v769
  %v771 = vmul.f32 %v766, %v770
  %772 = vrot.lane.b32.xlu0 %v658, 56
  %v773 = vpop.permute.xlu0 %772
  %v776 = vsel %vm127, %v771, 0
  %778 = vmatpush.msra.mxu0 0.0
  %779 = vmatpush.msra.mxu0 0.0
  %780 = vmatpush.msra.mxu0 0.0
  %781 = vmatpush.msra.mxu0 0.0
  %782 = vmatpush.msra.mxu0 0.0
  %783 = vmatpush.msra.mxu0 0.0
  %784 = vmatpush.msra.mxu0 0.0
  %785 = vmatpush.msra.mxu0 0.0
  %786 = vmatpush.msra.mxu0 0.0
  %787 = vmatpush.msra.mxu0 0.0
  %788 = vmatpush.msra.mxu0 0.0
  %789 = vmatpush.msra.mxu0 0.0
  %790 = vmatpush.msra.mxu0 0.0
  %791 = vmatpush.msra.mxu0 0.0
  %792 = vmatpush.msra.mxu0 0.0
  %793 = vmatpush.msra.mxu0 %v773
  %794 = vmatmul.f32.gmra.mxu0 %v776
  %v795 = vpop.f32.mrf.mxu0
  %v796 = vadd.f32 0.0, %v795
  %797 = vdwg.mxu0
  %v799 = vsel %vm127, %v796, 0
  %801 = vmatpush.msra.mxu0 0.0
  %802 = vmatpush.msra.mxu0 0.0
  %803 = vmatpush.msra.mxu0 0.0
  %804 = vmatpush.msra.mxu0 0.0
  %805 = vmatpush.msra.mxu0 0.0
  %806 = vmatpush.msra.mxu0 0.0
  %807 = vmatpush.msra.mxu0 0.0
  %808 = vmatpush.msra.mxu0 0.0
  %809 = vmatpush.msra.mxu0 0.0
  %810 = vmatpush.msra.mxu0 0.0
  %811 = vmatpush.msra.mxu0 0.0
  %812 = vmatpush.msra.mxu0 0.0
  %813 = vmatpush.msra.mxu0 0.0
  %814 = vmatpush.msra.mxu0 0.0
  %815 = vmatpush.msra.mxu0 0.0
  %816 = vmatpush.msra.mxu0 %v662
  %817 = vmatmul.f32.gmra.mxu0 %v799
  %v818 = vpop.f32.mrf.mxu0
  %v819 = vadd.f32 0.0, %v818
  %820 = vdwg.mxu0
  %v822 = vsel %vm127, %v729, 0
  %824 = vmatpush.msra.mxu0 0.0
  %825 = vmatpush.msra.mxu0 0.0
  %826 = vmatpush.msra.mxu0 0.0
  %827 = vmatpush.msra.mxu0 0.0
  %828 = vmatpush.msra.mxu0 0.0
  %829 = vmatpush.msra.mxu0 0.0
  %830 = vmatpush.msra.mxu0 0.0
  %831 = vmatpush.msra.mxu0 0.0
  %832 = vmatpush.msra.mxu0 0.0
  %833 = vmatpush.msra.mxu0 0.0
  %834 = vmatpush.msra.mxu0 0.0
  %835 = vmatpush.msra.mxu0 0.0
  %836 = vmatpush.msra.mxu0 0.0
  %837 = vmatpush.msra.mxu0 0.0
  %838 = vmatpush.msra.mxu0 0.0
  %839 = vmatpush.msra.mxu0 %v661
  %840 = vmatmul.f32.gmra.mxu0 %v822
  %v841 = vpop.f32.mrf.mxu0
  %v842 = vadd.f32 %v819, %v841
  %843 = vdwg.mxu0
  %844 = vrot.lane.b32.xlu0 %v658, 112
  %v845 = vpop.permute.xlu0 %844
  %846 = vrot.lane.b32.xlu0 %v658, 80
  %v847 = vpop.permute.xlu0 %846
  %v848 = vsel %vm127, %v845, 0
  %v850 = vsel %vm127, %v847, 0
  %852 = vmatpush.xpose.msra.mxu0 0.0
  %853 = vmatpush.xpose.msra.mxu0 0.0
  %854 = vmatpush.xpose.msra.mxu0 0.0
  %855 = vmatpush.xpose.msra.mxu0 0.0
  %856 = vmatpush.xpose.msra.mxu0 0.0
  %857 = vmatpush.xpose.msra.mxu0 0.0
  %858 = vmatpush.xpose.msra.mxu0 0.0
  %859 = vmatpush.xpose.msra.mxu0 0.0
  %860 = vmatpush.xpose.msra.mxu0 0.0
  %861 = vmatpush.xpose.msra.mxu0 0.0
  %862 = vmatpush.xpose.msra.mxu0 0.0
  %863 = vmatpush.xpose.msra.mxu0 0.0
  %864 = vmatpush.xpose.msra.mxu0 0.0
  %865 = vmatpush.xpose.msra.mxu0 0.0
  %866 = vmatpush.xpose.msra.mxu0 0.0
  %867 = vmatpush.xpose.msra.mxu0 %v850
  %868 = vmatmul.f32.gmra.mxu0 %v848
  %v869 = vpop.f32.mrf.mxu0
  %v870 = vadd.f32 0.0, %v869
  %871 = vdwg.mxu0
  %v872 = vmul.f32 %v870, 0.35355338
  %v873 = vadd.f32 %v872, %v48
  %v874 = vsel %vm127, %v873, -inf
  %875 = vmax.xlane.f32.xlu0 %v874
  %v876 = vpop.xlane.xlu0 %875
  %v877 = vsub.f32 %v873, %v876
  %v878 = vmul.f32 %v877, 1.442695
  %v879 = vpow.pop %v878
  %v880 = vsel %vm127, %v879, 0.0
  %881 = vadd.xlane.f32.xlu0 %v880
  %v882 = vpop.xlane.xlu0 %881
  %v883 = vrcp.pop %v882
  %v884 = vmul.f32 %v879, %v883
  %885 = vrot.lane.b32.xlu0 %v658, 48
  %v886 = vpop.permute.xlu0 %885
  %v889 = vsel %vm127, %v884, 0
  %891 = vmatpush.msra.mxu0 0.0
  %892 = vmatpush.msra.mxu0 0.0
  %893 = vmatpush.msra.mxu0 0.0
  %894 = vmatpush.msra.mxu0 0.0
  %895 = vmatpush.msra.mxu0 0.0
  %896 = vmatpush.msra.mxu0 0.0
  %897 = vmatpush.msra.mxu0 0.0
  %898 = vmatpush.msra.mxu0 0.0
  %899 = vmatpush.msra.mxu0 0.0
  %900 = vmatpush.msra.mxu0 0.0
  %901 = vmatpush.msra.mxu0 0.0
  %902 = vmatpush.msra.mxu0 0.0
  %903 = vmatpush.msra.mxu0 0.0
  %904 = vmatpush.msra.mxu0 0.0
  %905 = vmatpush.msra.mxu0 0.0
  %906 = vmatpush.msra.mxu0 %v886
  %907 = vmatmul.f32.gmra.mxu0 %v889
  %v908 = vpop.f32.mrf.mxu0
  %v909 = vadd.f32 0.0, %v908
  %910 = vdwg.mxu0
  %v912 = vsel %vm127, %v909, 0
  %914 = vmatpush.msra.mxu0 0.0
  %915 = vmatpush.msra.mxu0 0.0
  %916 = vmatpush.msra.mxu0 0.0
  %917 = vmatpush.msra.mxu0 0.0
  %918 = vmatpush.msra.mxu0 0.0
  %919 = vmatpush.msra.mxu0 0.0
  %920 = vmatpush.msra.mxu0 0.0
  %921 = vmatpush.msra.mxu0 0.0
  %922 = vmatpush.msra.mxu0 0.0
  %923 = vmatpush.msra.mxu0 0.0
  %924 = vmatpush.msra.mxu0 0.0
  %925 = vmatpush.msra.mxu0 0.0
  %926 = vmatpush.msra.mxu0 0.0
  %927 = vmatpush.msra.mxu0 0.0
  %928 = vmatpush.msra.mxu0 0.0
  %929 = vmatpush.msra.mxu0 %v663
  %930 = vmatmul.f32.gmra.mxu0 %v912
  %v931 = vpop.f32.mrf.mxu0
  %v932 = vadd.f32 0.0, %v931
  %933 = vdwg.mxu0
  %v934 = vadd.f32 %v842, %v932
  %935 = vrot.lane.b32.xlu0 %v658, 104
  %v936 = vpop.permute.xlu0 %935
  %937 = vrot.lane.b32.xlu0 %v658, 72
  %v938 = vpop.permute.xlu0 %937
  %v939 = vsel %vm127, %v936, 0
  %v941 = vsel %vm127, %v938, 0
  %943 = vmatpush.xpose.msra.mxu0 0.0
  %944 = vmatpush.xpose.msra.mxu0 0.0
  %945 = vmatpush.xpose.msra.mxu0 0.0
  %946 = vmatpush.xpose.msra.mxu0 0.0
  %947 = vmatpush.xpose.msra.mxu0 0.0
  %948 = vmatpush.xpose.msra.mxu0 0.0
  %949 = vmatpush.xpose.msra.mxu0 0.0
  %950 = vmatpush.xpose.msra.mxu0 0.0
  %951 = vmatpush.xpose.msra.mxu0 0.0
  %952 = vmatpush.xpose.msra.mxu0 0.0
  %953 = vmatpush.xpose.msra.mxu0 0.0
  %954 = vmatpush.xpose.msra.mxu0 0.0
  %955 = vmatpush.xpose.msra.mxu0 0.0
  %956 = vmatpush.xpose.msra.mxu0 0.0
  %957 = vmatpush.xpose.msra.mxu0 0.0
  %958 = vmatpush.xpose.msra.mxu0 %v941
  %959 = vmatmul.f32.gmra.mxu0 %v939
  %v960 = vpop.f32.mrf.mxu0
  %v961 = vadd.f32 0.0, %v960
  %962 = vdwg.mxu0
  %v963 = vmul.f32 %v961, 0.35355338
  %v964 = vadd.f32 %v963, %v48
  %v965 = vsel %vm127, %v964, -inf
  %966 = vmax.xlane.f32.xlu0 %v965
  %v967 = vpop.xlane.xlu0 %966
  %v968 = vsub.f32 %v964, %v967
  %v969 = vmul.f32 %v968, 1.442695
  %v970 = vpow.pop %v969
  %v971 = vsel %vm127, %v970, 0.0
  %972 = vadd.xlane.f32.xlu0 %v971
  %v973 = vpop.xlane.xlu0 %972
  %v974 = vrcp.pop %v973
  %v975 = vmul.f32 %v970, %v974
  %976 = vrot.lane.b32.xlu0 %v658, 40
  %v977 = vpop.permute.xlu0 %976
  %v980 = vsel %vm127, %v975, 0
  %982 = vmatpush.msra.mxu0 0.0
  %983 = vmatpush.msra.mxu0 0.0
  %984 = vmatpush.msra.mxu0 0.0
  %985 = vmatpush.msra.mxu0 0.0
  %986 = vmatpush.msra.mxu0 0.0
  %987 = vmatpush.msra.mxu0 0.0
  %988 = vmatpush.msra.mxu0 0.0
  %989 = vmatpush.msra.mxu0 0.0
  %990 = vmatpush.msra.mxu0 0.0
  %991 = vmatpush.msra.mxu0 0.0
  %992 = vmatpush.msra.mxu0 0.0
  %993 = vmatpush.msra.mxu0 0.0
  %994 = vmatpush.msra.mxu0 0.0
  %995 = vmatpush.msra.mxu0 0.0
  %996 = vmatpush.msra.mxu0 0.0
  %997 = vmatpush.msra.mxu0 %v977
  %998 = vmatmul.f32.gmra.mxu0 %v980
  %v999 = vpop.f32.mrf.mxu0
  %v1000 = vadd.f32 0.0, %v999
  %1001 = vdwg.mxu0
  %v1003 = vsel %vm127, %v1000, 0
  %1005 = vmatpush.msra.mxu0 0.0
  %1006 = vmatpush.msra.mxu0 0.0
  %1007 = vmatpush.msra.mxu0 0.0
  %1008 = vmatpush.msra.mxu0 0.0
  %1009 = vmatpush.msra.mxu0 0.0
  %1010 = vmatpush.msra.mxu0 0.0
  %1011 = vmatpush.msra.mxu0 0.0
  %1012 = vmatpush.msra.mxu0 0.0
  %1013 = vmatpush.msra.mxu0 0.0
  %1014 = vmatpush.msra.mxu0 0.0
  %1015 = vmatpush.msra.mxu0 0.0
  %1016 = vmatpush.msra.mxu0 0.0
  %1017 = vmatpush.msra.mxu0 0.0
  %1018 = vmatpush.msra.mxu0 0.0
  %1019 = vmatpush.msra.mxu0 0.0
  %1020 = vmatpush.msra.mxu0 %v664
  %1021 = vmatmul.f32.gmra.mxu0 %v1003
  %v1022 = vpop.f32.mrf.mxu0
  %v1023 = vadd.f32 0.0, %v1022
  %1024 = vdwg.mxu0
  %v1025 = vadd.f32 %v934, %v1023
  %v1026 = vadd.f32 %v592, %v1025
  %s1027 = scalar_lea.vmem %s7, 1
  %v1028 = vld [vmem:[%s1027] sm:$0x1]
  %v1030 = vperm.slane %v1028, 0
  %v1032 = vadd.f32 %v1026, %v1030
  %s1033 = scalar_lea.vmem %s8, 1
  %v1034 = vld [vmem:[%s1033] sm:$0x1]
  %s1035 = scalar_lea.vmem %s9, 1
  %v1036 = vld [vmem:[%s1035] sm:$0x1]
  %v1037 = vsel %vm51, %v1032, 0.0
  %1038 = vadd.xlane.f32.xlu0 %v1037
  %v1039 = vpop.xlane.xlu0 %1038
  %v1040 = vmul.f32 %v1039, %v61
  %v1041 = vsub.f32 %v1032, %v1040
  %v1042 = vmul.f32 %v1041, %v1041
  %v1043 = vsel %vm51, %v1042, 0.0
  %1044 = vadd.xlane.f32.xlu0 %v1043
  %v1045 = vpop.xlane.xlu0 %1044
  %v1046 = vmul.f32 %v1045, %v61
  %v1047 = vadd.f32 %v1046, 1e-05
  %v1048 = vrsqrt.pop %v1047
  %v1049 = vmul.f32 %v1048, %v1047
  %v1050 = vmul.f32 %v1049, %v1048
  %v1051 = vmul.f32 0.5, %v1050
  %v1052 = vsub.f32 1.5, %v1051
  %v1053 = vmul.f32 %v1048, %v1052
  %vm1054 = vweird.f32 %v1047
  %vm1055 = vweird.f32 %v1048
  %vm1056 = vmor %vm1054, %vm1055
  %v1057 = vsel %vm1056, %v1048, %v1053
  %v1058 = vmul.f32 %v1041, %v1057
  %v1060 = vperm.slane %v1034, 0
  %v1062 = vmul.f32 %v1058, %v1060
  %v1064 = vperm.slane %v1036, 0
  %v1066 = vadd.f32 %v1062, %v1064
  %s1067 = scalar_lea.vmem %s10, 32
  %v1068 = vld [vmem:[%s1067] sm:$0xff]
  %v1069 = vld [vmem:[%s1067 + $0x8] sm:$0xff]
  %v1070 = vld [vmem:[%s1067 + $0x10] sm:$0xff]
  %v1071 = vld [vmem:[%s1067 + $0x18] sm:$0xff]
  %s1072 = scalar_lea.vmem %s11, 1
  %v1073 = vld [vmem:[%s1072] sm:$0x1]
  %v1075 = vperm.slane %v1073, 0
  %v1078 = vsel %vm51, %v1066, 0
  %1080 = vmatpush.msra.mxu0 0.0
  %1081 = vmatpush.msra.mxu0 0.0
  %1082 = vmatpush.msra.mxu0 0.0
  %1083 = vmatpush.msra.mxu0 0.0
  %1084 = vmatpush.msra.mxu0 0.0
  %1085 = vmatpush.msra.mxu0 0.0
  %1086 = vmatpush.msra.mxu0 0.0
  %1087 = vmatpush.msra.mxu0 0.0
  %1088 = vmatpush.msra.mxu0 0.0
  %1089 = vmatpush.msra.mxu0 0.0
  %1090 = vmatpush.msra.mxu0 0.0
  %1091 = vmatpush.msra.mxu0 0.0
  %1092 = vmatpush.msra.mxu0 %v1071
  %1093 = vmatpush.msra.mxu0 %v1070
  %1094 = vmatpush.msra.mxu0 %v1069
  %1095 = vmatpush.msra.mxu0 %v1068
  %1096 = vmatmul.f32.gmra.mxu0 %v1078
  %v1097 = vpop.f32.mrf.mxu0
  %v1098 = vadd.f32 %v1075, %v1097
  %1099 = vdwg.mxu0
  %v1100 = vmax.f32 %v1098, 0.0
  %s1101 = scalar_lea.vmem %s12, 64
  %v1102 = vld [vmem:[%s1101] sm:$0xff]
  %v1103 = vld [vmem:[%s1101 + $0x8] sm:$0xff]
  %v1104 = vld [vmem:[%s1101 + $0x10] sm:$0xff]
  %v1105 = vld [vmem:[%s1101 + $0x18] sm:$0xff]
  %v1106 = vld [vmem:[%s1101 + $0x20] sm:$0xff]
  %v1107 = vld [vmem:[%s1101 + $0x28] sm:$0xff]
  %v1108 = vld [vmem:[%s1101 + $0x30] sm:$0xff]
  %v1109 = vld [vmem:[%s1101 + $0x38] sm:$0xff]
  %s1110 = scalar_lea.vmem %s13, 1
  %v1111 = vld [vmem:[%s1110] sm:$0x1]
  %v1113 = vperm.slane %v1111, 0
  %v1116 = vsel %vm568, %v1100, 0
  %1118 = vmatpush.msra.mxu0 0.0
  %1119 = vmatpush.msra.mxu0 0.0
  %1120 = vmatpush.msra.mxu0 0.0
  %1121 = vmatpush.msra.mxu0 0.0
  %1122 = vmatpush.msra.mxu0 0.0
  %1123 = vmatpush.msra.mxu0 0.0
  %1124 = vmatpush.msra.mxu0 0.0
  %1125 = vmatpush.msra.mxu0 0.0
  %1126 = vmatpush.msra.mxu0 %v1109
  %1127 = vmatpush.msra.mxu0 %v1108
  %1128 = vmatpush.msra.mxu0 %v1107
  %1129 = vmatpush.msra.mxu0 %v1106
  %1130 = vmatpush.msra.mxu0 %v1105
  %1131 = vmatpush.msra.mxu0 %v1104
  %1132 = vmatpush.msra.mxu0 %v1103
  %1133 = vmatpush.msra.mxu0 %v1102
  %1134 = vmatmul.f32.gmra.mxu0 %v1116
  %v1135 = vpop.f32.mrf.mxu0
  %v1136 = vadd.f32 %v1113, %v1135
  %1137 = vdwg.mxu0
  %v1138 = vadd.f32 %v1032, %v1136
  %1139 = vst.msk [vmem:[%s14] sm:$0xff] %vm51, %v1138
  // Predicated region
  $region58: #{forward.4} parent=0 // pred_check
    _
  $region59: #{forward.4} parent=0 // pred_check_branch
    %1141 = sbr.rel (0) target = $region61
  $region60: #{forward.4} parent=0 // pred_region
    _
  $region61: #{forward.4} parent=0 // pred_fallthru
    _
  // Predicated region
  $region62: #{forward.4} parent=0 // pred_check
    _
  $region63: #{forward.4} parent=0 // pred_check_branch
    %1143 = sbr.rel (0) target = $region65
  $region64: #{forward.4} parent=0 // pred_region
    _
  $region65: #{forward.4} parent=0 // pred_fallthru
    _

// kernel: forward.3
$region0: #{forward.3}
  #allocation0 [shape = 'u32[]', space=smem, size = 0x4, offset = 0x4, fixed_abs, tag = 'smem constant byte address 0x4 - core index']
  #allocation1 [shape = 'u32[72,128]{1,0:T(1,128)}', space=vmem, size = 0x9000, scoped, tag = 'internal scratch']
  %s0 = inlined_call_operand.vmem [shape: f32[128,1], index: 0, kind: input, shape index: {}]
  %s1 = inlined_call_operand.vmem [shape: f32[8,1], index: 1, kind: input, shape index: {}]
  %s2 = inlined_call_operand.vmem [shape: f32[128,16], index: 2, kind: input, shape index: {}]
  %s3 = inlined_call_operand.hbm [shape: f32[3,128,128], index: 3, kind: input, shape index: {}]
  %s4 = inlined_call_operand.vmem [shape: f32[8,128], index: 4, kind: input, shape index: {}]
  %s5 = inlined_call_operand.vmem [shape: f32[8,128], index: 5, kind: input, shape index: {}]
  %s6 = inlined_call_operand.vmem [shape: f32[1,16], index: 6, kind: input, shape index: {}]
  %s7 = inlined_call_operand.vmem [shape: f32[1,16], index: 7, kind: input, shape index: {}]
  %s8 = inlined_call_operand.vmem [shape: f32[3,16,32], index: 8, kind: input, shape index: {}]
  %s9 = inlined_call_operand.vmem [shape: f32[1,32], index: 9, kind: input, shape index: {}]
  %s10 = inlined_call_operand.vmem [shape: f32[3,32,32], index: 10, kind: input, shape index: {}]
  %s11 = inlined_call_operand.vmem [shape: f32[1,32], index: 11, kind: input, shape index: {}]
  %s12 = inlined_call_operand.vmem [shape: f32[16,32], index: 12, kind: input, shape index: {}]
  %s13 = inlined_call_operand.vmem [shape: f32[1,32], index: 13, kind: input, shape index: {}]
  %s14 = inlined_call_operand.vmem [shape: f32[3,32,32], index: 14, kind: input, shape index: {}]
  %s15 = inlined_call_operand.vmem [shape: f32[1,32], index: 15, kind: input, shape index: {}]
  %s16 = inlined_call_operand.hbm [shape: f32[3,32,32], index: 16, kind: input, shape index: {}]
  %s17 = inlined_call_operand.vmem [shape: f32[1,32], index: 17, kind: input, shape index: {}]
  %s18 = inlined_call_operand.vmem [shape: f32[1,32], index: 18, kind: input, shape index: {}]
  %s19 = inlined_call_operand.vmem [shape: f32[1,32], index: 19, kind: input, shape index: {}]
  %s20 = inlined_call_operand.vmem [shape: f32[8,32], index: 20, kind: output, shape index: {0}]
  %s21 = inlined_call_operand.vmem [shape: f32[8,32], index: 21, kind: output, shape index: {1}]
  %22 = xla_tuple %s20, %s21
  %s23 = sld [smem:[#allocation0]]
  $region106: #{forward.3} parent=0
    _
  %s25 = ssub.s32 1, %s23
  %s26 = scalar_select 0, %s25, %s23
  $region1: #{forward.3} parent=0
    #allocation2 [shape = 'u8[196608]{0}', space=vmem, size = 0x30000, scoped, tag = 'input window, operand 3, single buffered']
    #allocation3 [shape = 's32[1]{0}', space=sflag, size = 0x4, scoped, tag = 'scoped memory for forward.3']
    #allocation4 [shape = 'u8[49152]{0}', space=vmem, size = 0xc000, scoped, tag = 'input window, operand 16, single buffered']
    #allocation5 [shape = 's32[1]{0}', space=sflag, size = 0x4, scoped, tag = 'scoped memory for forward.3']
    %27 = vsyncpa [#allocation3], 0
    %28 = vsyncpa [#allocation5], 0
    // Predicated region
    $region2: #{forward.3} parent=1 // pred_check
      _
    $region3: #{forward.3} parent=1 // pred_check_branch
      %30 = sbr.rel (0) target = $region5
    $region4: #{forward.3} parent=1 // pred_region
      _
    $region5: #{forward.3} parent=1 // pred_fallthru
      _
    // Predicated region
    $region6: #{forward.3} parent=1 // pred_check
      _
    $region7: #{forward.3} parent=1 // pred_check_branch
      %32 = sbr.rel (0) target = $region9
    $region8: #{forward.3} parent=1 // pred_region
      _
    $region9: #{forward.3} parent=1 // pred_fallthru
      _
    // Predicated region
    $region10: #{forward.3} parent=1 // pred_check
      _
    $region11: #{forward.3} parent=1 // pred_check_branch
      %34 = sbr.rel (0) target = $region13
    $region12: #{forward.3} parent=1 // pred_region
      _
    $region13: #{forward.3} parent=1 // pred_fallthru
      _
    // Predicated region
    $region14: #{forward.3} parent=1 // pred_check
      _
    $region15: #{forward.3} parent=1 // pred_check_branch
      %36 = sbr.rel (0) target = $region17
    $region16: #{forward.3} parent=1 // pred_region
      %38 = vsyncadd [#allocation3], 0
      %s39 = sshll.u32 %s3, 4
      %s40 = int_to_ptr.hbm [resolvable:$true] %s39
      %s41 = sshll.u32 [#allocation2], 4
      %s42 = int_to_ptr.vmem [resolvable:$true] %s41
      %47 = dma.hbm_to_vmem [thread:$0]  %s40, 6144, %s42, [#allocation3], 128, 128, 8
    $region17: #{forward.3} parent=1 // pred_fallthru
      _
    // Predicated region
    $region18: #{forward.3} parent=1 // pred_check
      _
    $region19: #{forward.3} parent=1 // pred_check_branch
      %49 = sbr.rel (0) target = $region21
    $region20: #{forward.3} parent=1 // pred_region
      _
    $region21: #{forward.3} parent=1 // pred_fallthru
      _
    // Predicated region
    $region22: #{forward.3} parent=1 // pred_check
      _
    $region23: #{forward.3} parent=1 // pred_check_branch
      %51 = sbr.rel (0) target = $region25
    $region24: #{forward.3} parent=1 // pred_region
      _
    $region25: #{forward.3} parent=1 // pred_fallthru
      _
    // Predicated region
    $region26: #{forward.3} parent=1 // pred_check
      _
    $region27: #{forward.3} parent=1 // pred_check_branch
      %53 = sbr.rel (0) target = $region29
    $region28: #{forward.3} parent=1 // pred_region
      _
    $region29: #{forward.3} parent=1 // pred_fallthru
      _
    // Predicated region
    $region30: #{forward.3} parent=1 // pred_check
      _
    $region31: #{forward.3} parent=1 // pred_check_branch
      %55 = sbr.rel (0) target = $region33
    $region32: #{forward.3} parent=1 // pred_region
      _
    $region33: #{forward.3} parent=1 // pred_fallthru
      _
    // Predicated region
    $region34: #{forward.3} parent=1 // pred_check
      _
    $region35: #{forward.3} parent=1 // pred_check_branch
      %57 = sbr.rel (0) target = $region37
    $region36: #{forward.3} parent=1 // pred_region
      _
    $region37: #{forward.3} parent=1 // pred_fallthru
      _
    // Predicated region
    $region38: #{forward.3} parent=1 // pred_check
      _
    $region39: #{forward.3} parent=1 // pred_check_branch
      %59 = sbr.rel (0) target = $region41
    $region40: #{forward.3} parent=1 // pred_region
      _
    $region41: #{forward.3} parent=1 // pred_fallthru
      _
    // Predicated region
    $region42: #{forward.3} parent=1 // pred_check
      _
    $region43: #{forward.3} parent=1 // pred_check_branch
      %61 = sbr.rel (0) target = $region45
    $region44: #{forward.3} parent=1 // pred_region
      _
    $region45: #{forward.3} parent=1 // pred_fallthru
      _
    // Predicated region
    $region46: #{forward.3} parent=1 // pred_check
      _
    $region47: #{forward.3} parent=1 // pred_check_branch
      %63 = sbr.rel (0) target = $region49
    $region48: #{forward.3} parent=1 // pred_region
      _
    $region49: #{forward.3} parent=1 // pred_fallthru
      _
    // Predicated region
    $region50: #{forward.3} parent=1 // pred_check
      _
    $region51: #{forward.3} parent=1 // pred_check_branch
      %65 = sbr.rel (0) target = $region53
    $region52: #{forward.3} parent=1 // pred_region
      _
    $region53: #{forward.3} parent=1 // pred_fallthru
      _
    // Predicated region
    $region54: #{forward.3} parent=1 // pred_check
      _
    $region55: #{forward.3} parent=1 // pred_check_branch
      %67 = sbr.rel (0) target = $region57
    $region56: #{forward.3} parent=1 // pred_region
      _
    $region57: #{forward.3} parent=1 // pred_fallthru
      _
    // Predicated region
    $region58: #{forward.3} parent=1 // pred_check
      _
    $region59: #{forward.3} parent=1 // pred_check_branch
      %69 = sbr.rel (0) target = $region61
    $region60: #{forward.3} parent=1 // pred_region
      _
    $region61: #{forward.3} parent=1 // pred_fallthru
      _
    // Predicated region
    $region62: #{forward.3} parent=1 // pred_check
      _
    $region63: #{forward.3} parent=1 // pred_check_branch
      %71 = sbr.rel (0) target = $region65
    $region64: #{forward.3} parent=1 // pred_region
      _
    $region65: #{forward.3} parent=1 // pred_fallthru
      _
    // Predicated region
    $region66: #{forward.3} parent=1 // pred_check
      _
    $region67: #{forward.3} parent=1 // pred_check_branch
      %73 = sbr.rel (0) target = $region69
    $region68: #{forward.3} parent=1 // pred_region
      %75 = vsyncadd [#allocation5], 0
      %s76 = sshll.u32 %s16, 4
      %s77 = int_to_ptr.hbm [resolvable:$true] %s76
      %s78 = sshll.u32 [#allocation4], 4
      %s79 = int_to_ptr.vmem [resolvable:$true] %s78
      %84 = dma.hbm_to_vmem [thread:$0]  %s77, 1536, %s79, [#allocation5], 128, 128, 8
    $region69: #{forward.3} parent=1 // pred_fallthru
      _
    // Predicated region
    $region70: #{forward.3} parent=1 // pred_check
      _
    $region71: #{forward.3} parent=1 // pred_check_branch
      %86 = sbr.rel (0) target = $region73
    $region72: #{forward.3} parent=1 // pred_region
      _
    $region73: #{forward.3} parent=1 // pred_fallthru
      _
    // Predicated region
    $region74: #{forward.3} parent=1 // pred_check
      _
    $region75: #{forward.3} parent=1 // pred_check_branch
      %88 = sbr.rel (0) target = $region77
    $region76: #{forward.3} parent=1 // pred_region
      _
    $region77: #{forward.3} parent=1 // pred_fallthru
      _
    // Predicated region
    $region78: #{forward.3} parent=1 // pred_check
      _
    $region79: #{forward.3} parent=1 // pred_check_branch
      %90 = sbr.rel (0) target = $region81
    $region80: #{forward.3} parent=1 // pred_region
      _
    $region81: #{forward.3} parent=1 // pred_fallthru
      _
    // Predicated region
    $region82: #{forward.3} parent=1 // pred_check
      _
    $region83: #{forward.3} parent=1 // pred_check_branch
      %92 = sbr.rel (0) target = $region85
    $region84: #{forward.3} parent=1 // pred_region
      %94 = dma.done [#allocation3], 6144
    $region85: #{forward.3} parent=1 // pred_fallthru
      _
    // Predicated region
    $region86: #{forward.3} parent=1 // pred_check
      _
    $region87: #{forward.3} parent=1 // pred_check_branch
      %96 = sbr.rel (0) target = $region89
    $region88: #{forward.3} parent=1 // pred_region
      %98 = dma.done [#allocation5], 1536
    $region89: #{forward.3} parent=1 // pred_fallthru
      _
    %v99 = vld [vmem:[%s0] sm:$0xff]
    %v100 = vld [vmem:[%s0 + $0x8] sm:$0xff]
    %v101 = vld [vmem:[%s0 + $0x10] sm:$0xff]
    %v102 = vld [vmem:[%s0 + $0x18] sm:$0xff]
    %v103 = vld [vmem:[%s0 + $0x20] sm:$0xff]
    %v104 = vld [vmem:[%s0 + $0x28] sm:$0xff]
    %v105 = vld [vmem:[%s0 + $0x30] sm:$0xff]
    %v106 = vld [vmem:[%s0 + $0x38] sm:$0xff]
    %v107 = vld [vmem:[%s0 + $0x40] sm:$0xff]
    %v108 = vld [vmem:[%s0 + $0x48] sm:$0xff]
    %v109 = vld [vmem:[%s0 + $0x50] sm:$0xff]
    %v110 = vld [vmem:[%s0 + $0x58] sm:$0xff]
    %v111 = vld [vmem:[%s0 + $0x60] sm:$0xff]
    %v112 = vld [vmem:[%s0 + $0x68] sm:$0xff]
    %v113 = vld [vmem:[%s0 + $0x70] sm:$0xff]
    %v114 = vld [vmem:[%s0 + $0x78] sm:$0xff]
    %v115 = vld [vmem:[%s6] sm:$0x1]
    %117 = vset.pattern.permute.xlu0 0
    %118 = vperm.xlu0 %117, %v99
    %v119 = vpop.permute.xlu0 %118
    %122 = vset.pattern.permute.xlu0 0
    %123 = vperm.xlu0 %122, %v100
    %v124 = vpop.permute.xlu0 %123
    %127 = vset.pattern.permute.xlu0 0
    %128 = vperm.xlu0 %127, %v101
    %v129 = vpop.permute.xlu0 %128
    %132 = vset.pattern.permute.xlu0 0
    %133 = vperm.xlu0 %132, %v102
    %v134 = vpop.permute.xlu0 %133
    %137 = vset.pattern.permute.xlu0 0
    %138 = vperm.xlu0 %137, %v103
    %v139 = vpop.permute.xlu0 %138
    %142 = vset.pattern.permute.xlu0 0
    %143 = vperm.xlu0 %142, %v104
    %v144 = vpop.permute.xlu0 %143
    %147 = vset.pattern.permute.xlu0 0
    %148 = vperm.xlu0 %147, %v105
    %v149 = vpop.permute.xlu0 %148
    %152 = vset.pattern.permute.xlu0 0
    %153 = vperm.xlu0 %152, %v106
    %v154 = vpop.permute.xlu0 %153
    %157 = vset.pattern.permute.xlu0 0
    %158 = vperm.xlu0 %157, %v107
    %v159 = vpop.permute.xlu0 %158
    %162 = vset.pattern.permute.xlu0 0
    %163 = vperm.xlu0 %162, %v108
    %v164 = vpop.permute.xlu0 %163
    %167 = vset.pattern.permute.xlu0 0
    %168 = vperm.xlu0 %167, %v109
    %v169 = vpop.permute.xlu0 %168
    %172 = vset.pattern.permute.xlu0 0
    %173 = vperm.xlu0 %172, %v110
    %v174 = vpop.permute.xlu0 %173
    %177 = vset.pattern.permute.xlu0 0
    %178 = vperm.xlu0 %177, %v111
    %v179 = vpop.permute.xlu0 %178
    %182 = vset.pattern.permute.xlu0 0
    %183 = vperm.xlu0 %182, %v112
    %v184 = vpop.permute.xlu0 %183
    %187 = vset.pattern.permute.xlu0 0
    %188 = vperm.xlu0 %187, %v113
    %v189 = vpop.permute.xlu0 %188
    %192 = vset.pattern.permute.xlu0 0
    %193 = vperm.xlu0 %192, %v114
    %v194 = vpop.permute.xlu0 %193
    %v197 = vperm.slane %v115, 0
    %v199 = vmul.f32 %v119, %v197
    %v200 = vmul.f32 %v124, %v197
    %v201 = vmul.f32 %v129, %v197
    %v202 = vmul.f32 %v134, %v197
    %v203 = vmul.f32 %v139, %v197
    %v204 = vmul.f32 %v144, %v197
    %v205 = vmul.f32 %v149, %v197
    %v206 = vmul.f32 %v154, %v197
    %v207 = vmul.f32 %v159, %v197
    %v208 = vmul.f32 %v164, %v197
    %v209 = vmul.f32 %v169, %v197
    %v210 = vmul.f32 %v174, %v197
    %v211 = vmul.f32 %v179, %v197
    %v212 = vmul.f32 %v184, %v197
    %v213 = vmul.f32 %v189, %v197
    %v214 = vmul.f32 %v194, %v197
    %v215 = vld [vmem:[%s7] sm:$0x1]
    %v217 = vperm.slane %v215, 0
    %v219 = vadd.f32 %v199, %v217
    %v220 = vadd.f32 %v200, %v217
    %v221 = vadd.f32 %v201, %v217
    %v222 = vadd.f32 %v202, %v217
    %v223 = vadd.f32 %v203, %v217
    %v224 = vadd.f32 %v204, %v217
    %v225 = vadd.f32 %v205, %v217
    %v226 = vadd.f32 %v206, %v217
    %v227 = vadd.f32 %v207, %v217
    %v228 = vadd.f32 %v208, %v217
    %v229 = vadd.f32 %v209, %v217
    %v230 = vadd.f32 %v210, %v217
    %v231 = vadd.f32 %v211, %v217
    %v232 = vadd.f32 %v212, %v217
    %v233 = vadd.f32 %v213, %v217
    %v234 = vadd.f32 %v214, %v217
    %v235 = vld [vmem:[%s2] sm:$0xff]
    %v236 = vld [vmem:[%s2 + $0x8] sm:$0xff]
    %v237 = vld [vmem:[%s2 + $0x10] sm:$0xff]
    %v238 = vld [vmem:[%s2 + $0x18] sm:$0xff]
    %v239 = vld [vmem:[%s2 + $0x20] sm:$0xff]
    %v240 = vld [vmem:[%s2 + $0x28] sm:$0xff]
    %v241 = vld [vmem:[%s2 + $0x30] sm:$0xff]
    %v242 = vld [vmem:[%s2 + $0x38] sm:$0xff]
    %v243 = vld [vmem:[%s2 + $0x40] sm:$0xff]
    %v244 = vld [vmem:[%s2 + $0x48] sm:$0xff]
    %v245 = vld [vmem:[%s2 + $0x50] sm:$0xff]
    %v246 = vld [vmem:[%s2 + $0x58] sm:$0xff]
    %v247 = vld [vmem:[%s2 + $0x60] sm:$0xff]
    %v248 = vld [vmem:[%s2 + $0x68] sm:$0xff]
    %v249 = vld [vmem:[%s2 + $0x70] sm:$0xff]
    %v250 = vld [vmem:[%s2 + $0x78] sm:$0xff]
    %v251 = vadd.f32 %v219, %v235
    %v252 = vadd.f32 %v220, %v236
    %v253 = vadd.f32 %v221, %v237
    %v254 = vadd.f32 %v222, %v238
    %v255 = vadd.f32 %v223, %v239
    %v256 = vadd.f32 %v224, %v240
    %v257 = vadd.f32 %v225, %v241
    %v258 = vadd.f32 %v226, %v242
    %v259 = vadd.f32 %v227, %v243
    %v260 = vadd.f32 %v228, %v244
    %v261 = vadd.f32 %v229, %v245
    %v262 = vadd.f32 %v230, %v246
    %v263 = vadd.f32 %v231, %v247
    %v264 = vadd.f32 %v232, %v248
    %v265 = vadd.f32 %v233, %v249
    %v266 = vadd.f32 %v234, %v250
    %v267 = vld [vmem:[%s8] sm:$0xff]
    %v268 = vld [vmem:[%s8 + $0x8] sm:$0xff]
    %vm269 = vcmask 130048
    %v271 = vsel %vm269, %v251, 0
    %v274 = vsel %vm269, %v252, 0
    %v277 = vsel %vm269, %v253, 0
    %v280 = vsel %vm269, %v254, 0
    %v283 = vsel %vm269, %v255, 0
    %v286 = vsel %vm269, %v256, 0
    %v289 = vsel %vm269, %v257, 0
    %v292 = vsel %vm269, %v258, 0
    %v295 = vsel %vm269, %v259, 0
    %v298 = vsel %vm269, %v260, 0
    %v301 = vsel %vm269, %v261, 0
    %v304 = vsel %vm269, %v262, 0
    %v307 = vsel %vm269, %v263, 0
    %v310 = vsel %vm269, %v264, 0
    %v313 = vsel %vm269, %v265, 0
    %v316 = vsel %vm269, %v266, 0
    %318 = vmatpush.msra.mxu0 0.0
    %319 = vmatpush.msra.mxu0 0.0
    %320 = vmatpush.msra.mxu0 0.0
    %321 = vmatpush.msra.mxu0 0.0
    %322 = vmatpush.msra.mxu0 0.0
    %323 = vmatpush.msra.mxu0 0.0
    %324 = vmatpush.msra.mxu0 0.0
    %325 = vmatpush.msra.mxu0 0.0
    %326 = vmatpush.msra.mxu0 0.0
    %327 = vmatpush.msra.mxu0 0.0
    %328 = vmatpush.msra.mxu0 0.0
    %329 = vmatpush.msra.mxu0 0.0
    %330 = vmatpush.msra.mxu0 0.0
    %331 = vmatpush.msra.mxu0 0.0
    %332 = vmatpush.msra.mxu0 %v268
    %333 = vmatpush.msra.mxu0 %v267
    %334 = vmatmul.f32.gmra.mxu0 %v271
    %v335 = vpop.f32.mrf.mxu0
    %v336 = vadd.f32 0.0, %v335
    %337 = vmatmul.f32.gmra.mxu0 %v274
    %v338 = vpop.f32.mrf.mxu0
    %v339 = vadd.f32 0.0, %v338
    %340 = vmatmul.f32.gmra.mxu0 %v277
    %v341 = vpop.f32.mrf.mxu0
    %v342 = vadd.f32 0.0, %v341
    %343 = vmatmul.f32.gmra.mxu0 %v280
    %v344 = vpop.f32.mrf.mxu0
    %v345 = vadd.f32 0.0, %v344
    %346 = vmatmul.f32.gmra.mxu0 %v283
    %v347 = vpop.f32.mrf.mxu0
    %v348 = vadd.f32 0.0, %v347
    %349 = vmatmul.f32.gmra.mxu0 %v286
    %v350 = vpop.f32.mrf.mxu0
    %v351 = vadd.f32 0.0, %v350
    %352 = vmatmul.f32.gmra.mxu0 %v289
    %v353 = vpop.f32.mrf.mxu0
    %v354 = vadd.f32 0.0, %v353
    %355 = vmatmul.f32.gmra.mxu0 %v292
    %v356 = vpop.f32.mrf.mxu0
    %v357 = vadd.f32 0.0, %v356
    %358 = vmatmul.f32.gmra.mxu0 %v295
    %v359 = vpop.f32.mrf.mxu0
    %v360 = vadd.f32 0.0, %v359
    %361 = vmatmul.f32.gmra.mxu0 %v298
    %v362 = vpop.f32.mrf.mxu0
    %v363 = vadd.f32 0.0, %v362
    %364 = vmatmul.f32.gmra.mxu0 %v301
    %v365 = vpop.f32.mrf.mxu0
    %v366 = vadd.f32 0.0, %v365
    %367 = vmatmul.f32.gmra.mxu0 %v304
    %v368 = vpop.f32.mrf.mxu0
    %v369 = vadd.f32 0.0, %v368
    %370 = vmatmul.f32.gmra.mxu0 %v307
    %v371 = vpop.f32.mrf.mxu0
    %v372 = vadd.f32 0.0, %v371
    %373 = vmatmul.f32.gmra.mxu0 %v310
    %v374 = vpop.f32.mrf.mxu0
    %v375 = vadd.f32 0.0, %v374
    %376 = vmatmul.f32.gmra.mxu0 %v313
    %v377 = vpop.f32.mrf.mxu0
    %v378 = vadd.f32 0.0, %v377
    %379 = vmatmul.f32.gmra.mxu0 %v316
    %v380 = vpop.f32.mrf.mxu0
    %v381 = vadd.f32 0.0, %v380
    %382 = vdwg.mxu0
    %s383 = scalar_lea.vmem [#allocation2], 128
    %v384 = vld [vmem:[%s383] sm:$0xff]
    %v385 = vld [vmem:[%s383 + $0x8] sm:$0xff]
    %v386 = vld [vmem:[%s383 + $0x10] sm:$0xff]
    %v387 = vld [vmem:[%s383 + $0x18] sm:$0xff]
    %v388 = vld [vmem:[%s383 + $0x20] sm:$0xff]
    %v389 = vld [vmem:[%s383 + $0x28] sm:$0xff]
    %v390 = vld [vmem:[%s383 + $0x30] sm:$0xff]
    %v391 = vld [vmem:[%s383 + $0x38] sm:$0xff]
    %v392 = vld [vmem:[%s383 + $0x40] sm:$0xff]
    %v393 = vld [vmem:[%s383 + $0x48] sm:$0xff]
    %v394 = vld [vmem:[%s383 + $0x50] sm:$0xff]
    %v395 = vld [vmem:[%s383 + $0x58] sm:$0xff]
    %v396 = vld [vmem:[%s383 + $0x60] sm:$0xff]
    %v397 = vld [vmem:[%s383 + $0x68] sm:$0xff]
    %v398 = vld [vmem:[%s383 + $0x70] sm:$0xff]
    %v399 = vld [vmem:[%s383 + $0x78] sm:$0xff]
    %s400 = scalar_lea.vmem %s8, 16
    %v401 = vld [vmem:[%s400] sm:$0xff]
    %v402 = vld [vmem:[%s400 + $0x8] sm:$0xff]
    %403 = vmatpush.msra.mxu0 0.0
    %404 = vmatpush.msra.mxu0 0.0
    %405 = vmatpush.msra.mxu0 0.0
    %406 = vmatpush.msra.mxu0 0.0
    %407 = vmatpush.msra.mxu0 0.0
    %408 = vmatpush.msra.mxu0 0.0
    %409 = vmatpush.msra.mxu0 0.0
    %410 = vmatpush.msra.mxu0 0.0
    %411 = vmatpush.msra.mxu0 0.0
    %412 = vmatpush.msra.mxu0 0.0
    %413 = vmatpush.msra.mxu0 0.0
    %414 = vmatpush.msra.mxu0 0.0
    %415 = vmatpush.msra.mxu0 0.0
    %416 = vmatpush.msra.mxu0 0.0
    %417 = vmatpush.msra.mxu0 %v402
    %418 = vmatpush.msra.mxu0 %v401
    %419 = vmatmul.f32.gmra.mxu0 %v271
    %v420 = vpop.f32.mrf.mxu0
    %v421 = vadd.f32 0.0, %v420
    %422 = vmatmul.f32.gmra.mxu0 %v274
    %v423 = vpop.f32.mrf.mxu0
    %v424 = vadd.f32 0.0, %v423
    %425 = vmatmul.f32.gmra.mxu0 %v277
    %v426 = vpop.f32.mrf.mxu0
    %v427 = vadd.f32 0.0, %v426
    %428 = vmatmul.f32.gmra.mxu0 %v280
    %v429 = vpop.f32.mrf.mxu0
    %v430 = vadd.f32 0.0, %v429
    %431 = vmatmul.f32.gmra.mxu0 %v283
    %v432 = vpop.f32.mrf.mxu0
    %v433 = vadd.f32 0.0, %v432
    %434 = vmatmul.f32.gmra.mxu0 %v286
    %v435 = vpop.f32.mrf.mxu0
    %v436 = vadd.f32 0.0, %v435
    %437 = vmatmul.f32.gmra.mxu0 %v289
    %v438 = vpop.f32.mrf.mxu0
    %v439 = vadd.f32 0.0, %v438
    %440 = vmatmul.f32.gmra.mxu0 %v292
    %v441 = vpop.f32.mrf.mxu0
    %v442 = vadd.f32 0.0, %v441
    %443 = vmatmul.f32.gmra.mxu0 %v295
    %v444 = vpop.f32.mrf.mxu0
    %v445 = vadd.f32 0.0, %v444
    %446 = vmatmul.f32.gmra.mxu0 %v298
    %v447 = vpop.f32.mrf.mxu0
    %v448 = vadd.f32 0.0, %v447
    %449 = vmatmul.f32.gmra.mxu0 %v301
    %v450 = vpop.f32.mrf.mxu0
    %v451 = vadd.f32 0.0, %v450
    %452 = vmatmul.f32.gmra.mxu0 %v304
    %v453 = vpop.f32.mrf.mxu0
    %v454 = vadd.f32 0.0, %v453
    %455 = vmatmul.f32.gmra.mxu0 %v307
    %v456 = vpop.f32.mrf.mxu0
    %v457 = vadd.f32 0.0, %v456
    %458 = vmatmul.f32.gmra.mxu0 %v310
    %v459 = vpop.f32.mrf.mxu0
    %v460 = vadd.f32 0.0, %v459
    %461 = vmatmul.f32.gmra.mxu0 %v313
    %v462 = vpop.f32.mrf.mxu0
    %v463 = vadd.f32 0.0, %v462
    %464 = vmatmul.f32.gmra.mxu0 %v316
    %v465 = vpop.f32.mrf.mxu0
    %v466 = vadd.f32 0.0, %v465
    %467 = vdwg.mxu0
    %v468 = vld [vmem:[#allocation2] sm:$0xff]
    %v469 = vld [vmem:[#allocation2 + $0x8] sm:$0xff]
    %v470 = vld [vmem:[#allocation2 + $0x10] sm:$0xff]
    %v471 = vld [vmem:[#allocation2 + $0x18] sm:$0xff]
    %v472 = vld [vmem:[#allocation2 + $0x20] sm:$0xff]
    %v473 = vld [vmem:[#allocation2 + $0x28] sm:$0xff]
    %v474 = vld [vmem:[#allocation2 + $0x30] sm:$0xff]
    %v475 = vld [vmem:[#allocation2 + $0x38] sm:$0xff]
    %v476 = vld [vmem:[#allocation2 + $0x40] sm:$0xff]
    %v477 = vld [vmem:[#allocation2 + $0x48] sm:$0xff]
    %v478 = vld [vmem:[#allocation2 + $0x50] sm:$0xff]
    %v479 = vld [vmem:[#allocation2 + $0x58] sm:$0xff]
    %v480 = vld [vmem:[#allocation2 + $0x60] sm:$0xff]
    %v481 = vld [vmem:[#allocation2 + $0x68] sm:$0xff]
    %v482 = vld [vmem:[#allocation2 + $0x70] sm:$0xff]
    %v483 = vld [vmem:[#allocation2 + $0x78] sm:$0xff]
    %484 = vmatpush.msra.mxu0 %v466
    %485 = vmatpush.msra.mxu0 %v463
    %486 = vmatpush.msra.mxu0 %v460
    %487 = vmatpush.msra.mxu0 %v457
    %488 = vmatpush.msra.mxu0 %v454
    %489 = vmatpush.msra.mxu0 %v451
    %490 = vmatpush.msra.mxu0 %v448
    %491 = vmatpush.msra.mxu0 %v445
    %492 = vmatpush.msra.mxu0 %v442
    %493 = vmatpush.msra.mxu0 %v439
    %494 = vmatpush.msra.mxu0 %v436
    %495 = vmatpush.msra.mxu0 %v433
    %496 = vmatpush.msra.mxu0 %v430
    %497 = vmatpush.msra.mxu0 %v427
    %498 = vmatpush.msra.mxu0 %v424
    %499 = vmatpush.msra.mxu0 %v421
    %500 = vmatmul.f32.gmra.mxu0 %v468
    %v501 = vpop.f32.mrf.mxu0
    %v502 = vadd.f32 0.0, %v501
    %503 = vmatmul.f32.gmra.mxu0 %v469
    %v504 = vpop.f32.mrf.mxu0
    %v505 = vadd.f32 0.0, %v504
    %506 = vmatmul.f32.gmra.mxu0 %v470
    %v507 = vpop.f32.mrf.mxu0
    %v508 = vadd.f32 0.0, %v507
    %509 = vmatmul.f32.gmra.mxu0 %v471
    %v510 = vpop.f32.mrf.mxu0
    %v511 = vadd.f32 0.0, %v510
    %512 = vmatmul.f32.gmra.mxu0 %v472
    %v513 = vpop.f32.mrf.mxu0
    %v514 = vadd.f32 0.0, %v513
    %515 = vmatmul.f32.gmra.mxu0 %v473
    %v516 = vpop.f32.mrf.mxu0
    %v517 = vadd.f32 0.0, %v516
    %518 = vmatmul.f32.gmra.mxu0 %v474
    %v519 = vpop.f32.mrf.mxu0
    %v520 = vadd.f32 0.0, %v519
    %521 = vmatmul.f32.gmra.mxu0 %v475
    %v522 = vpop.f32.mrf.mxu0
    %v523 = vadd.f32 0.0, %v522
    %524 = vmatmul.f32.gmra.mxu0 %v476
    %v525 = vpop.f32.mrf.mxu0
    %v526 = vadd.f32 0.0, %v525
    %527 = vmatmul.f32.gmra.mxu0 %v477
    %v528 = vpop.f32.mrf.mxu0
    %v529 = vadd.f32 0.0, %v528
    %530 = vmatmul.f32.gmra.mxu0 %v478
    %v531 = vpop.f32.mrf.mxu0
    %v532 = vadd.f32 0.0, %v531
    %533 = vmatmul.f32.gmra.mxu0 %v479
    %v534 = vpop.f32.mrf.mxu0
    %v535 = vadd.f32 0.0, %v534
    %536 = vmatmul.f32.gmra.mxu0 %v480
    %v537 = vpop.f32.mrf.mxu0
    %v538 = vadd.f32 0.0, %v537
    %539 = vmatmul.f32.gmra.mxu0 %v481
    %v540 = vpop.f32.mrf.mxu0
    %v541 = vadd.f32 0.0, %v540
    %542 = vmatmul.f32.gmra.mxu0 %v482
    %v543 = vpop.f32.mrf.mxu0
    %v544 = vadd.f32 0.0, %v543
    %545 = vmatmul.f32.gmra.mxu0 %v483
    %v546 = vpop.f32.mrf.mxu0
    %v547 = vadd.f32 0.0, %v546
    %548 = vdwg.mxu0
    %549 = vmatpush.msra.mxu0 %v381
    %550 = vmatpush.msra.mxu0 %v378
    %551 = vmatpush.msra.mxu0 %v375
    %552 = vmatpush.msra.mxu0 %v372
    %553 = vmatpush.msra.mxu0 %v369
    %554 = vmatpush.msra.mxu0 %v366
    %555 = vmatpush.msra.mxu0 %v363
    %556 = vmatpush.msra.mxu0 %v360
    %557 = vmatpush.msra.mxu0 %v357
    %558 = vmatpush.msra.mxu0 %v354
    %559 = vmatpush.msra.mxu0 %v351
    %560 = vmatpush.msra.mxu0 %v348
    %561 = vmatpush.msra.mxu0 %v345
    %562 = vmatpush.msra.mxu0 %v342
    %563 = vmatpush.msra.mxu0 %v339
    %564 = vmatpush.msra.mxu0 %v336
    %565 = vmatmul.f32.gmra.mxu0 %v384
    %v566 = vpop.f32.mrf.mxu0
    %v567 = vadd.f32 %v502, %v566
    %568 = vmatmul.f32.gmra.mxu0 %v385
    %v569 = vpop.f32.mrf.mxu0
    %v570 = vadd.f32 %v505, %v569
    %571 = vmatmul.f32.gmra.mxu0 %v386
    %v572 = vpop.f32.mrf.mxu0
    %v573 = vadd.f32 %v508, %v572
    %574 = vmatmul.f32.gmra.mxu0 %v387
    %v575 = vpop.f32.mrf.mxu0
    %v576 = vadd.f32 %v511, %v575
    %577 = vmatmul.f32.gmra.mxu0 %v388
    %v578 = vpop.f32.mrf.mxu0
    %v579 = vadd.f32 %v514, %v578
    %580 = vmatmul.f32.gmra.mxu0 %v389
    %v581 = vpop.f32.mrf.mxu0
    %v582 = vadd.f32 %v517, %v581
    %583 = vmatmul.f32.gmra.mxu0 %v390
    %v584 = vpop.f32.mrf.mxu0
    %v585 = vadd.f32 %v520, %v584
    %586 = vmatmul.f32.gmra.mxu0 %v391
    %v587 = vpop.f32.mrf.mxu0
    %v588 = vadd.f32 %v523, %v587
    %589 = vmatmul.f32.gmra.mxu0 %v392
    %v590 = vpop.f32.mrf.mxu0
    %v591 = vadd.f32 %v526, %v590
    %592 = vmatmul.f32.gmra.mxu0 %v393
    %v593 = vpop.f32.mrf.mxu0
    %v594 = vadd.f32 %v529, %v593
    %595 = vmatmul.f32.gmra.mxu0 %v394
    %v596 = vpop.f32.mrf.mxu0
    %v597 = vadd.f32 %v532, %v596
    %598 = vmatmul.f32.gmra.mxu0 %v395
    %v599 = vpop.f32.mrf.mxu0
    %v600 = vadd.f32 %v535, %v599
    %601 = vmatmul.f32.gmra.mxu0 %v396
    %v602 = vpop.f32.mrf.mxu0
    %v603 = vadd.f32 %v538, %v602
    %604 = vmatmul.f32.gmra.mxu0 %v397
    %v605 = vpop.f32.mrf.mxu0
    %v606 = vadd.f32 %v541, %v605
    %607 = vmatmul.f32.gmra.mxu0 %v398
    %v608 = vpop.f32.mrf.mxu0
    %v609 = vadd.f32 %v544, %v608
    %610 = vmatmul.f32.gmra.mxu0 %v399
    %v611 = vpop.f32.mrf.mxu0
    %v612 = vadd.f32 %v547, %v611
    %613 = vdwg.mxu0
    %s614 = scalar_lea.vmem %s8, 32
    %v615 = vld [vmem:[%s614] sm:$0xff]
    %v616 = vld [vmem:[%s614 + $0x8] sm:$0xff]
    %617 = vmatpush.msra.mxu0 0.0
    %618 = vmatpush.msra.mxu0 0.0
    %619 = vmatpush.msra.mxu0 0.0
    %620 = vmatpush.msra.mxu0 0.0
    %621 = vmatpush.msra.mxu0 0.0
    %622 = vmatpush.msra.mxu0 0.0
    %623 = vmatpush.msra.mxu0 0.0
    %624 = vmatpush.msra.mxu0 0.0
    %625 = vmatpush.msra.mxu0 0.0
    %626 = vmatpush.msra.mxu0 0.0
    %627 = vmatpush.msra.mxu0 0.0
    %628 = vmatpush.msra.mxu0 0.0
    %629 = vmatpush.msra.mxu0 0.0
    %630 = vmatpush.msra.mxu0 0.0
    %631 = vmatpush.msra.mxu0 %v616
    %632 = vmatpush.msra.mxu0 %v615
    %633 = vmatmul.f32.gmra.mxu0 %v271
    %v634 = vpop.f32.mrf.mxu0
    %v635 = vadd.f32 0.0, %v634
    %636 = vmatmul.f32.gmra.mxu0 %v274
    %v637 = vpop.f32.mrf.mxu0
    %v638 = vadd.f32 0.0, %v637
    %639 = vmatmul.f32.gmra.mxu0 %v277
    %v640 = vpop.f32.mrf.mxu0
    %v641 = vadd.f32 0.0, %v640
    %642 = vmatmul.f32.gmra.mxu0 %v280
    %v643 = vpop.f32.mrf.mxu0
    %v644 = vadd.f32 0.0, %v643
    %645 = vmatmul.f32.gmra.mxu0 %v283
    %v646 = vpop.f32.mrf.mxu0
    %v647 = vadd.f32 0.0, %v646
    %648 = vmatmul.f32.gmra.mxu0 %v286
    %v649 = vpop.f32.mrf.mxu0
    %v650 = vadd.f32 0.0, %v649
    %651 = vmatmul.f32.gmra.mxu0 %v289
    %v652 = vpop.f32.mrf.mxu0
    %v653 = vadd.f32 0.0, %v652
    %654 = vmatmul.f32.gmra.mxu0 %v292
    %v655 = vpop.f32.mrf.mxu0
    %v656 = vadd.f32 0.0, %v655
    %657 = vmatmul.f32.gmra.mxu0 %v295
    %v658 = vpop.f32.mrf.mxu0
    %v659 = vadd.f32 0.0, %v658
    %660 = vmatmul.f32.gmra.mxu0 %v298
    %v661 = vpop.f32.mrf.mxu0
    %v662 = vadd.f32 0.0, %v661
    %663 = vmatmul.f32.gmra.mxu0 %v301
    %v664 = vpop.f32.mrf.mxu0
    %v665 = vadd.f32 0.0, %v664
    %666 = vmatmul.f32.gmra.mxu0 %v304
    %v667 = vpop.f32.mrf.mxu0
    %v668 = vadd.f32 0.0, %v667
    %669 = vmatmul.f32.gmra.mxu0 %v307
    %v670 = vpop.f32.mrf.mxu0
    %v671 = vadd.f32 0.0, %v670
    %672 = vmatmul.f32.gmra.mxu0 %v310
    %v673 = vpop.f32.mrf.mxu0
    %v674 = vadd.f32 0.0, %v673
    %675 = vmatmul.f32.gmra.mxu0 %v313
    %v676 = vpop.f32.mrf.mxu0
    %v677 = vadd.f32 0.0, %v676
    %678 = vmatmul.f32.gmra.mxu0 %v316
    %v679 = vpop.f32.mrf.mxu0
    %v680 = vadd.f32 0.0, %v679
    %681 = vdwg.mxu0
    %v682 = vadd.f32 %v567, %v635
    %v683 = vadd.f32 %v570, %v638
    %v684 = vadd.f32 %v573, %v641
    %v685 = vadd.f32 %v576, %v644
    %v686 = vadd.f32 %v579, %v647
    %v687 = vadd.f32 %v582, %v650
    %v688 = vadd.f32 %v585, %v653
    %v689 = vadd.f32 %v588, %v656
    %v690 = vadd.f32 %v591, %v659
    %v691 = vadd.f32 %v594, %v662
    %v692 = vadd.f32 %v597, %v665
    %v693 = vadd.f32 %v600, %v668
    %v694 = vadd.f32 %v603, %v671
    %v695 = vadd.f32 %v606, %v674
    %v696 = vadd.f32 %v609, %v677
    %v697 = vadd.f32 %v612, %v680
    %v698 = vld [vmem:[%s9] sm:$0x1]
    %v700 = vperm.slane %v698, 0
    %v702 = vadd.f32 %v682, %v700
    %v703 = vadd.f32 %v683, %v700
    %v704 = vadd.f32 %v684, %v700
    %v705 = vadd.f32 %v685, %v700
    %v706 = vadd.f32 %v686, %v700
    %v707 = vadd.f32 %v687, %v700
    %v708 = vadd.f32 %v688, %v700
    %v709 = vadd.f32 %v689, %v700
    %v710 = vadd.f32 %v690, %v700
    %v711 = vadd.f32 %v691, %v700
    %v712 = vadd.f32 %v692, %v700
    %v713 = vadd.f32 %v693, %v700
    %v714 = vadd.f32 %v694, %v700
    %v715 = vadd.f32 %v695, %v700
    %v716 = vadd.f32 %v696, %v700
    %v717 = vadd.f32 %v697, %v700
    %v718 = vmax.f32 %v702, 0.0
    %v719 = vmax.f32 %v703, 0.0
    %v720 = vmax.f32 %v704, 0.0
    %v721 = vmax.f32 %v705, 0.0
    %v722 = vmax.f32 %v706, 0.0
    %v723 = vmax.f32 %v707, 0.0
    %v724 = vmax.f32 %v708, 0.0
    %v725 = vmax.f32 %v709, 0.0
    %v726 = vmax.f32 %v710, 0.0
    %v727 = vmax.f32 %v711, 0.0
    %v728 = vmax.f32 %v712, 0.0
    %v729 = vmax.f32 %v713, 0.0
    %v730 = vmax.f32 %v714, 0.0
    %v731 = vmax.f32 %v715, 0.0
    %v732 = vmax.f32 %v716, 0.0
    %v733 = vmax.f32 %v717, 0.0
    %v734 = vld [vmem:[%s10] sm:$0xff]
    %v735 = vld [vmem:[%s10 + $0x8] sm:$0xff]
    %v736 = vld [vmem:[%s10 + $0x10] sm:$0xff]
    %v737 = vld [vmem:[%s10 + $0x18] sm:$0xff]
    %vm738 = vcmask 261120
    %v740 = vsel %vm738, %v718, 0
    %v743 = vsel %vm738, %v719, 0
    %v746 = vsel %vm738, %v720, 0
    %v749 = vsel %vm738, %v721, 0
    %v752 = vsel %vm738, %v722, 0
    %v755 = vsel %vm738, %v723, 0
    %v758 = vsel %vm738, %v724, 0
    %v761 = vsel %vm738, %v725, 0
    %v764 = vsel %vm738, %v726, 0
    %v767 = vsel %vm738, %v727, 0
    %v770 = vsel %vm738, %v728, 0
    %v773 = vsel %vm738, %v729, 0
    %v776 = vsel %vm738, %v730, 0
    %v779 = vsel %vm738, %v731, 0
    %v782 = vsel %vm738, %v732, 0
    %v785 = vsel %vm738, %v733, 0
    %787 = vmatpush.msra.mxu0 0.0
    %788 = vmatpush.msra.mxu0 0.0
    %789 = vmatpush.msra.mxu0 0.0
    %790 = vmatpush.msra.mxu0 0.0
    %791 = vmatpush.msra.mxu0 0.0
    %792 = vmatpush.msra.mxu0 0.0
    %793 = vmatpush.msra.mxu0 0.0
    %794 = vmatpush.msra.mxu0 0.0
    %795 = vmatpush.msra.mxu0 0.0
    %796 = vmatpush.msra.mxu0 0.0
    %797 = vmatpush.msra.mxu0 0.0
    %798 = vmatpush.msra.mxu0 0.0
    %799 = vmatpush.msra.mxu0 %v737
    %800 = vmatpush.msra.mxu0 %v736
    %801 = vmatpush.msra.mxu0 %v735
    %802 = vmatpush.msra.mxu0 %v734
    %803 = vmatmul.f32.gmra.mxu0 %v740
    %v804 = vpop.f32.mrf.mxu0
    %v805 = vadd.f32 0.0, %v804
    %806 = vmatmul.f32.gmra.mxu0 %v743
    %v807 = vpop.f32.mrf.mxu0
    %v808 = vadd.f32 0.0, %v807
    %809 = vmatmul.f32.gmra.mxu0 %v746
    %v810 = vpop.f32.mrf.mxu0
    %v811 = vadd.f32 0.0, %v810
    %812 = vmatmul.f32.gmra.mxu0 %v749
    %v813 = vpop.f32.mrf.mxu0
    %v814 = vadd.f32 0.0, %v813
    %815 = vmatmul.f32.gmra.mxu0 %v752
    %v816 = vpop.f32.mrf.mxu0
    %v817 = vadd.f32 0.0, %v816
    %818 = vmatmul.f32.gmra.mxu0 %v755
    %v819 = vpop.f32.mrf.mxu0
    %v820 = vadd.f32 0.0, %v819
    %821 = vmatmul.f32.gmra.mxu0 %v758
    %v822 = vpop.f32.mrf.mxu0
    %v823 = vadd.f32 0.0, %v822
    %824 = vmatmul.f32.gmra.mxu0 %v761
    %v825 = vpop.f32.mrf.mxu0
    %v826 = vadd.f32 0.0, %v825
    %827 = vmatmul.f32.gmra.mxu0 %v764
    %v828 = vpop.f32.mrf.mxu0
    %v829 = vadd.f32 0.0, %v828
    %830 = vmatmul.f32.gmra.mxu0 %v767
    %v831 = vpop.f32.mrf.mxu0
    %v832 = vadd.f32 0.0, %v831
    %833 = vmatmul.f32.gmra.mxu0 %v770
    %v834 = vpop.f32.mrf.mxu0
    %v835 = vadd.f32 0.0, %v834
    %836 = vmatmul.f32.gmra.mxu0 %v773
    %v837 = vpop.f32.mrf.mxu0
    %v838 = vadd.f32 0.0, %v837
    %839 = vmatmul.f32.gmra.mxu0 %v776
    %v840 = vpop.f32.mrf.mxu0
    %v841 = vadd.f32 0.0, %v840
    %842 = vmatmul.f32.gmra.mxu0 %v779
    %v843 = vpop.f32.mrf.mxu0
    %v844 = vadd.f32 0.0, %v843
    %845 = vmatmul.f32.gmra.mxu0 %v782
    %v846 = vpop.f32.mrf.mxu0
    %v847 = vadd.f32 0.0, %v846
    %848 = vmatmul.f32.gmra.mxu0 %v785
    %v849 = vpop.f32.mrf.mxu0
    %v850 = vadd.f32 0.0, %v849
    %851 = vdwg.mxu0
    %s852 = scalar_lea.vmem %s10, 32
    %v853 = vld [vmem:[%s852] sm:$0xff]
    %v854 = vld [vmem:[%s852 + $0x8] sm:$0xff]
    %v855 = vld [vmem:[%s852 + $0x10] sm:$0xff]
    %v856 = vld [vmem:[%s852 + $0x18] sm:$0xff]
    %857 = vmatpush.msra.mxu0 0.0
    %858 = vmatpush.msra.mxu0 0.0
    %859 = vmatpush.msra.mxu0 0.0
    %860 = vmatpush.msra.mxu0 0.0
    %861 = vmatpush.msra.mxu0 0.0
    %862 = vmatpush.msra.mxu0 0.0
    %863 = vmatpush.msra.mxu0 0.0
    %864 = vmatpush.msra.mxu0 0.0
    %865 = vmatpush.msra.mxu0 0.0
    %866 = vmatpush.msra.mxu0 0.0
    %867 = vmatpush.msra.mxu0 0.0
    %868 = vmatpush.msra.mxu0 0.0
    %869 = vmatpush.msra.mxu0 %v856
    %870 = vmatpush.msra.mxu0 %v855
    %871 = vmatpush.msra.mxu0 %v854
    %872 = vmatpush.msra.mxu0 %v853
    %873 = vmatmul.f32.gmra.mxu0 %v740
    %v874 = vpop.f32.mrf.mxu0
    %v875 = vadd.f32 0.0, %v874
    %876 = vmatmul.f32.gmra.mxu0 %v743
    %v877 = vpop.f32.mrf.mxu0
    %v878 = vadd.f32 0.0, %v877
    %879 = vmatmul.f32.gmra.mxu0 %v746
    %v880 = vpop.f32.mrf.mxu0
    %v881 = vadd.f32 0.0, %v880
    %882 = vmatmul.f32.gmra.mxu0 %v749
    %v883 = vpop.f32.mrf.mxu0
    %v884 = vadd.f32 0.0, %v883
    %885 = vmatmul.f32.gmra.mxu0 %v752
    %v886 = vpop.f32.mrf.mxu0
    %v887 = vadd.f32 0.0, %v886
    %888 = vmatmul.f32.gmra.mxu0 %v755
    %v889 = vpop.f32.mrf.mxu0
    %v890 = vadd.f32 0.0, %v889
    %891 = vmatmul.f32.gmra.mxu0 %v758
    %v892 = vpop.f32.mrf.mxu0
    %v893 = vadd.f32 0.0, %v892
    %894 = vmatmul.f32.gmra.mxu0 %v761
    %v895 = vpop.f32.mrf.mxu0
    %v896 = vadd.f32 0.0, %v895
    %897 = vmatmul.f32.gmra.mxu0 %v764
    %v898 = vpop.f32.mrf.mxu0
    %v899 = vadd.f32 0.0, %v898
    %900 = vmatmul.f32.gmra.mxu0 %v767
    %v901 = vpop.f32.mrf.mxu0
    %v902 = vadd.f32 0.0, %v901
    %903 = vmatmul.f32.gmra.mxu0 %v770
    %v904 = vpop.f32.mrf.mxu0
    %v905 = vadd.f32 0.0, %v904
    %906 = vmatmul.f32.gmra.mxu0 %v773
    %v907 = vpop.f32.mrf.mxu0
    %v908 = vadd.f32 0.0, %v907
    %909 = vmatmul.f32.gmra.mxu0 %v776
    %v910 = vpop.f32.mrf.mxu0
    %v911 = vadd.f32 0.0, %v910
    %912 = vmatmul.f32.gmra.mxu0 %v779
    %v913 = vpop.f32.mrf.mxu0
    %v914 = vadd.f32 0.0, %v913
    %915 = vmatmul.f32.gmra.mxu0 %v782
    %v916 = vpop.f32.mrf.mxu0
    %v917 = vadd.f32 0.0, %v916
    %918 = vmatmul.f32.gmra.mxu0 %v785
    %v919 = vpop.f32.mrf.mxu0
    %v920 = vadd.f32 0.0, %v919
    %921 = vdwg.mxu0
    %922 = vmatpush.msra.mxu0 %v920
    %923 = vmatpush.msra.mxu0 %v917
    %924 = vmatpush.msra.mxu0 %v914
    %925 = vmatpush.msra.mxu0 %v911
    %926 = vmatpush.msra.mxu0 %v908
    %927 = vmatpush.msra.mxu0 %v905
    %928 = vmatpush.msra.mxu0 %v902
    %929 = vmatpush.msra.mxu0 %v899
    %930 = vmatpush.msra.mxu0 %v896
    %931 = vmatpush.msra.mxu0 %v893
    %932 = vmatpush.msra.mxu0 %v890
    %933 = vmatpush.msra.mxu0 %v887
    %934 = vmatpush.msra.mxu0 %v884
    %935 = vmatpush.msra.mxu0 %v881
    %936 = vmatpush.msra.mxu0 %v878
    %937 = vmatpush.msra.mxu0 %v875
    %938 = vmatmul.f32.gmra.mxu0 %v468
    %v939 = vpop.f32.mrf.mxu0
    %v940 = vadd.f32 0.0, %v939
    %941 = vmatmul.f32.gmra.mxu0 %v469
    %v942 = vpop.f32.mrf.mxu0
    %v943 = vadd.f32 0.0, %v942
    %944 = vmatmul.f32.gmra.mxu0 %v470
    %v945 = vpop.f32.mrf.mxu0
    %v946 = vadd.f32 0.0, %v945
    %947 = vmatmul.f32.gmra.mxu0 %v471
    %v948 = vpop.f32.mrf.mxu0
    %v949 = vadd.f32 0.0, %v948
    %950 = vmatmul.f32.gmra.mxu0 %v472
    %v951 = vpop.f32.mrf.mxu0
    %v952 = vadd.f32 0.0, %v951
    %953 = vmatmul.f32.gmra.mxu0 %v473
    %v954 = vpop.f32.mrf.mxu0
    %v955 = vadd.f32 0.0, %v954
    %956 = vmatmul.f32.gmra.mxu0 %v474
    %v957 = vpop.f32.mrf.mxu0
    %v958 = vadd.f32 0.0, %v957
    %959 = vmatmul.f32.gmra.mxu0 %v475
    %v960 = vpop.f32.mrf.mxu0
    %v961 = vadd.f32 0.0, %v960
    %962 = vmatmul.f32.gmra.mxu0 %v476
    %v963 = vpop.f32.mrf.mxu0
    %v964 = vadd.f32 0.0, %v963
    %965 = vmatmul.f32.gmra.mxu0 %v477
    %v966 = vpop.f32.mrf.mxu0
    %v967 = vadd.f32 0.0, %v966
    %968 = vmatmul.f32.gmra.mxu0 %v478
    %v969 = vpop.f32.mrf.mxu0
    %v970 = vadd.f32 0.0, %v969
    %971 = vmatmul.f32.gmra.mxu0 %v479
    %v972 = vpop.f32.mrf.mxu0
    %v973 = vadd.f32 0.0, %v972
    %974 = vmatmul.f32.gmra.mxu0 %v480
    %v975 = vpop.f32.mrf.mxu0
    %v976 = vadd.f32 0.0, %v975
    %977 = vmatmul.f32.gmra.mxu0 %v481
    %v978 = vpop.f32.mrf.mxu0
    %v979 = vadd.f32 0.0, %v978
    %980 = vmatmul.f32.gmra.mxu0 %v482
    %v981 = vpop.f32.mrf.mxu0
    %v982 = vadd.f32 0.0, %v981
    %983 = vmatmul.f32.gmra.mxu0 %v483
    %v984 = vpop.f32.mrf.mxu0
    %v985 = vadd.f32 0.0, %v984
    %986 = vdwg.mxu0
    %987 = vmatpush.msra.mxu0 %v850
    %988 = vmatpush.msra.mxu0 %v847
    %989 = vmatpush.msra.mxu0 %v844
    %990 = vmatpush.msra.mxu0 %v841
    %991 = vmatpush.msra.mxu0 %v838
    %992 = vmatpush.msra.mxu0 %v835
    %993 = vmatpush.msra.mxu0 %v832
    %994 = vmatpush.msra.mxu0 %v829
    %995 = vmatpush.msra.mxu0 %v826
    %996 = vmatpush.msra.mxu0 %v823
    %997 = vmatpush.msra.mxu0 %v820
    %998 = vmatpush.msra.mxu0 %v817
    %999 = vmatpush.msra.mxu0 %v814
    %1000 = vmatpush.msra.mxu0 %v811
    %1001 = vmatpush.msra.mxu0 %v808
    %1002 = vmatpush.msra.mxu0 %v805
    %1003 = vmatmul.f32.gmra.mxu0 %v384
    %v1004 = vpop.f32.mrf.mxu0
    %v1005 = vadd.f32 %v940, %v1004
    %1006 = vmatmul.f32.gmra.mxu0 %v385
    %v1007 = vpop.f32.mrf.mxu0
    %v1008 = vadd.f32 %v943, %v1007
    %1009 = vmatmul.f32.gmra.mxu0 %v386
    %v1010 = vpop.f32.mrf.mxu0
    %v1011 = vadd.f32 %v946, %v1010
    %1012 = vmatmul.f32.gmra.mxu0 %v387
    %v1013 = vpop.f32.mrf.mxu0
    %v1014 = vadd.f32 %v949, %v1013
    %1015 = vmatmul.f32.gmra.mxu0 %v388
    %v1016 = vpop.f32.mrf.mxu0
    %v1017 = vadd.f32 %v952, %v1016
    %1018 = vmatmul.f32.gmra.mxu0 %v389
    %v1019 = vpop.f32.mrf.mxu0
    %v1020 = vadd.f32 %v955, %v1019
    %1021 = vmatmul.f32.gmra.mxu0 %v390
    %v1022 = vpop.f32.mrf.mxu0
    %v1023 = vadd.f32 %v958, %v1022
    %1024 = vmatmul.f32.gmra.mxu0 %v391
    %v1025 = vpop.f32.mrf.mxu0
    %v1026 = vadd.f32 %v961, %v1025
    %1027 = vmatmul.f32.gmra.mxu0 %v392
    %v1028 = vpop.f32.mrf.mxu0
    %v1029 = vadd.f32 %v964, %v1028
    %1030 = vmatmul.f32.gmra.mxu0 %v393
    %v1031 = vpop.f32.mrf.mxu0
    %v1032 = vadd.f32 %v967, %v1031
    %1033 = vmatmul.f32.gmra.mxu0 %v394
    %v1034 = vpop.f32.mrf.mxu0
    %v1035 = vadd.f32 %v970, %v1034
    %1036 = vmatmul.f32.gmra.mxu0 %v395
    %v1037 = vpop.f32.mrf.mxu0
    %v1038 = vadd.f32 %v973, %v1037
    %1039 = vmatmul.f32.gmra.mxu0 %v396
    %v1040 = vpop.f32.mrf.mxu0
    %v1041 = vadd.f32 %v976, %v1040
    %1042 = vmatmul.f32.gmra.mxu0 %v397
    %v1043 = vpop.f32.mrf.mxu0
    %v1044 = vadd.f32 %v979, %v1043
    %1045 = vmatmul.f32.gmra.mxu0 %v398
    %v1046 = vpop.f32.mrf.mxu0
    %v1047 = vadd.f32 %v982, %v1046
    %1048 = vmatmul.f32.gmra.mxu0 %v399
    %v1049 = vpop.f32.mrf.mxu0
    %v1050 = vadd.f32 %v985, %v1049
    %1051 = vdwg.mxu0
    %s1052 = scalar_lea.vmem %s10, 64
    %v1053 = vld [vmem:[%s1052] sm:$0xff]
    %v1054 = vld [vmem:[%s1052 + $0x8] sm:$0xff]
    %v1055 = vld [vmem:[%s1052 + $0x10] sm:$0xff]
    %v1056 = vld [vmem:[%s1052 + $0x18] sm:$0xff]
    %1057 = vmatpush.msra.mxu0 0.0
    %1058 = vmatpush.msra.mxu0 0.0
    %1059 = vmatpush.msra.mxu0 0.0
    %1060 = vmatpush.msra.mxu0 0.0
    %1061 = vmatpush.msra.mxu0 0.0
    %1062 = vmatpush.msra.mxu0 0.0
    %1063 = vmatpush.msra.mxu0 0.0
    %1064 = vmatpush.msra.mxu0 0.0
    %1065 = vmatpush.msra.mxu0 0.0
    %1066 = vmatpush.msra.mxu0 0.0
    %1067 = vmatpush.msra.mxu0 0.0
    %1068 = vmatpush.msra.mxu0 0.0
    %1069 = vmatpush.msra.mxu0 %v1056
    %1070 = vmatpush.msra.mxu0 %v1055
    %1071 = vmatpush.msra.mxu0 %v1054
    %1072 = vmatpush.msra.mxu0 %v1053
    %1073 = vmatmul.f32.gmra.mxu0 %v740
    %v1074 = vpop.f32.mrf.mxu0
    %v1075 = vadd.f32 0.0, %v1074
    %1076 = vmatmul.f32.gmra.mxu0 %v743
    %v1077 = vpop.f32.mrf.mxu0
    %v1078 = vadd.f32 0.0, %v1077
    %1079 = vmatmul.f32.gmra.mxu0 %v746
    %v1080 = vpop.f32.mrf.mxu0
    %v1081 = vadd.f32 0.0, %v1080
    %1082 = vmatmul.f32.gmra.mxu0 %v749
    %v1083 = vpop.f32.mrf.mxu0
    %v1084 = vadd.f32 0.0, %v1083
    %1085 = vmatmul.f32.gmra.mxu0 %v752
    %v1086 = vpop.f32.mrf.mxu0
    %v1087 = vadd.f32 0.0, %v1086
    %1088 = vmatmul.f32.gmra.mxu0 %v755
    %v1089 = vpop.f32.mrf.mxu0
    %v1090 = vadd.f32 0.0, %v1089
    %1091 = vmatmul.f32.gmra.mxu0 %v758
    %v1092 = vpop.f32.mrf.mxu0
    %v1093 = vadd.f32 0.0, %v1092
    %1094 = vmatmul.f32.gmra.mxu0 %v761
    %v1095 = vpop.f32.mrf.mxu0
    %v1096 = vadd.f32 0.0, %v1095
    %1097 = vmatmul.f32.gmra.mxu0 %v764
    %v1098 = vpop.f32.mrf.mxu0
    %v1099 = vadd.f32 0.0, %v1098
    %1100 = vmatmul.f32.gmra.mxu0 %v767
    %v1101 = vpop.f32.mrf.mxu0
    %v1102 = vadd.f32 0.0, %v1101
    %1103 = vmatmul.f32.gmra.mxu0 %v770
    %v1104 = vpop.f32.mrf.mxu0
    %v1105 = vadd.f32 0.0, %v1104
    %1106 = vmatmul.f32.gmra.mxu0 %v773
    %v1107 = vpop.f32.mrf.mxu0
    %v1108 = vadd.f32 0.0, %v1107
    %1109 = vmatmul.f32.gmra.mxu0 %v776
    %v1110 = vpop.f32.mrf.mxu0
    %v1111 = vadd.f32 0.0, %v1110
    %1112 = vmatmul.f32.gmra.mxu0 %v779
    %v1113 = vpop.f32.mrf.mxu0
    %v1114 = vadd.f32 0.0, %v1113
    %1115 = vmatmul.f32.gmra.mxu0 %v782
    %v1116 = vpop.f32.mrf.mxu0
    %v1117 = vadd.f32 0.0, %v1116
    %1118 = vmatmul.f32.gmra.mxu0 %v785
    %v1119 = vpop.f32.mrf.mxu0
    %v1120 = vadd.f32 0.0, %v1119
    %1121 = vdwg.mxu0
    %v1122 = vadd.f32 %v1005, %v1075
    %v1123 = vadd.f32 %v1008, %v1078
    %v1124 = vadd.f32 %v1011, %v1081
    %v1125 = vadd.f32 %v1014, %v1084
    %v1126 = vadd.f32 %v1017, %v1087
    %v1127 = vadd.f32 %v1020, %v1090
    %v1128 = vadd.f32 %v1023, %v1093
    %v1129 = vadd.f32 %v1026, %v1096
    %v1130 = vadd.f32 %v1029, %v1099
    %v1131 = vadd.f32 %v1032, %v1102
    %v1132 = vadd.f32 %v1035, %v1105
    %v1133 = vadd.f32 %v1038, %v1108
    %v1134 = vadd.f32 %v1041, %v1111
    %v1135 = vadd.f32 %v1044, %v1114
    %v1136 = vadd.f32 %v1047, %v1117
    %v1137 = vadd.f32 %v1050, %v1120
    %v1138 = vld [vmem:[%s11] sm:$0x1]
    %v1140 = vperm.slane %v1138, 0
    %v1142 = vadd.f32 %v1122, %v1140
    %v1143 = vadd.f32 %v1123, %v1140
    %v1144 = vadd.f32 %v1124, %v1140
    %v1145 = vadd.f32 %v1125, %v1140
    %v1146 = vadd.f32 %v1126, %v1140
    %v1147 = vadd.f32 %v1127, %v1140
    %v1148 = vadd.f32 %v1128, %v1140
    %v1149 = vadd.f32 %v1129, %v1140
    %v1150 = vadd.f32 %v1130, %v1140
    %v1151 = vadd.f32 %v1131, %v1140
    %v1152 = vadd.f32 %v1132, %v1140
    %v1153 = vadd.f32 %v1133, %v1140
    %v1154 = vadd.f32 %v1134, %v1140
    %v1155 = vadd.f32 %v1135, %v1140
    %v1156 = vadd.f32 %v1136, %v1140
    %v1157 = vadd.f32 %v1137, %v1140
    %v1158 = vmax.f32 %v1142, 0.0
    %v1159 = vmax.f32 %v1143, 0.0
    %v1160 = vmax.f32 %v1144, 0.0
    %v1161 = vmax.f32 %v1145, 0.0
    %v1162 = vmax.f32 %v1146, 0.0
    %v1163 = vmax.f32 %v1147, 0.0
    %v1164 = vmax.f32 %v1148, 0.0
    %v1165 = vmax.f32 %v1149, 0.0
    %v1166 = vmax.f32 %v1150, 0.0
    %v1167 = vmax.f32 %v1151, 0.0
    %v1168 = vmax.f32 %v1152, 0.0
    %v1169 = vmax.f32 %v1153, 0.0
    %v1170 = vmax.f32 %v1154, 0.0
    %v1171 = vmax.f32 %v1155, 0.0
    %v1172 = vmax.f32 %v1156, 0.0
    %v1173 = vmax.f32 %v1157, 0.0
    %v1174 = vld [vmem:[%s12] sm:$0xff]
    %v1175 = vld [vmem:[%s12 + $0x8] sm:$0xff]
    %v1176 = vld [vmem:[%s13] sm:$0x1]
    %v1178 = vperm.slane %v1176, 0
    %1180 = vmatpush.msra.mxu0 0.0
    %1181 = vmatpush.msra.mxu0 0.0
    %1182 = vmatpush.msra.mxu0 0.0
    %1183 = vmatpush.msra.mxu0 0.0
    %1184 = vmatpush.msra.mxu0 0.0
    %1185 = vmatpush.msra.mxu0 0.0
    %1186 = vmatpush.msra.mxu0 0.0
    %1187 = vmatpush.msra.mxu0 0.0
    %1188 = vmatpush.msra.mxu0 0.0
    %1189 = vmatpush.msra.mxu0 0.0
    %1190 = vmatpush.msra.mxu0 0.0
    %1191 = vmatpush.msra.mxu0 0.0
    %1192 = vmatpush.msra.mxu0 0.0
    %1193 = vmatpush.msra.mxu0 0.0
    %1194 = vmatpush.msra.mxu0 %v1175
    %1195 = vmatpush.msra.mxu0 %v1174
    %1196 = vmatmul.f32.gmra.mxu0 %v271
    %v1197 = vpop.f32.mrf.mxu0
    %v1198 = vadd.f32 %v1178, %v1197
    %1199 = vmatmul.f32.gmra.mxu0 %v274
    %v1200 = vpop.f32.mrf.mxu0
    %v1201 = vadd.f32 %v1178, %v1200
    %1202 = vmatmul.f32.gmra.mxu0 %v277
    %v1203 = vpop.f32.mrf.mxu0
    %v1204 = vadd.f32 %v1178, %v1203
    %1205 = vmatmul.f32.gmra.mxu0 %v280
    %v1206 = vpop.f32.mrf.mxu0
    %v1207 = vadd.f32 %v1178, %v1206
    %1208 = vmatmul.f32.gmra.mxu0 %v283
    %v1209 = vpop.f32.mrf.mxu0
    %v1210 = vadd.f32 %v1178, %v1209
    %1211 = vmatmul.f32.gmra.mxu0 %v286
    %v1212 = vpop.f32.mrf.mxu0
    %v1213 = vadd.f32 %v1178, %v1212
    %1214 = vmatmul.f32.gmra.mxu0 %v289
    %v1215 = vpop.f32.mrf.mxu0
    %v1216 = vadd.f32 %v1178, %v1215
    %1217 = vmatmul.f32.gmra.mxu0 %v292
    %v1218 = vpop.f32.mrf.mxu0
    %v1219 = vadd.f32 %v1178, %v1218
    %1220 = vmatmul.f32.gmra.mxu0 %v295
    %v1221 = vpop.f32.mrf.mxu0
    %v1222 = vadd.f32 %v1178, %v1221
    %1223 = vmatmul.f32.gmra.mxu0 %v298
    %v1224 = vpop.f32.mrf.mxu0
    %v1225 = vadd.f32 %v1178, %v1224
    %1226 = vmatmul.f32.gmra.mxu0 %v301
    %v1227 = vpop.f32.mrf.mxu0
    %v1228 = vadd.f32 %v1178, %v1227
    %1229 = vmatmul.f32.gmra.mxu0 %v304
    %v1230 = vpop.f32.mrf.mxu0
    %v1231 = vadd.f32 %v1178, %v1230
    %1232 = vmatmul.f32.gmra.mxu0 %v307
    %v1233 = vpop.f32.mrf.mxu0
    %v1234 = vadd.f32 %v1178, %v1233
    %1235 = vmatmul.f32.gmra.mxu0 %v310
    %v1236 = vpop.f32.mrf.mxu0
    %v1237 = vadd.f32 %v1178, %v1236
    %1238 = vmatmul.f32.gmra.mxu0 %v313
    %v1239 = vpop.f32.mrf.mxu0
    %v1240 = vadd.f32 %v1178, %v1239
    %1241 = vmatmul.f32.gmra.mxu0 %v316
    %v1242 = vpop.f32.mrf.mxu0
    %v1243 = vadd.f32 %v1178, %v1242
    %1244 = vdwg.mxu0
    %v1245 = vadd.f32 %v1158, %v1198
    %v1246 = vadd.f32 %v1159, %v1201
    %v1247 = vadd.f32 %v1160, %v1204
    %v1248 = vadd.f32 %v1161, %v1207
    %v1249 = vadd.f32 %v1162, %v1210
    %v1250 = vadd.f32 %v1163, %v1213
    %v1251 = vadd.f32 %v1164, %v1216
    %v1252 = vadd.f32 %v1165, %v1219
    %v1253 = vadd.f32 %v1166, %v1222
    %v1254 = vadd.f32 %v1167, %v1225
    %v1255 = vadd.f32 %v1168, %v1228
    %v1256 = vadd.f32 %v1169, %v1231
    %v1257 = vadd.f32 %v1170, %v1234
    %v1258 = vadd.f32 %v1171, %v1237
    %v1259 = vadd.f32 %v1172, %v1240
    %v1260 = vadd.f32 %v1173, %v1243
    %v1261 = vmax.f32 %v1245, 0.0
    %v1262 = vmax.f32 %v1246, 0.0
    %v1263 = vmax.f32 %v1247, 0.0
    %v1264 = vmax.f32 %v1248, 0.0
    %v1265 = vmax.f32 %v1249, 0.0
    %v1266 = vmax.f32 %v1250, 0.0
    %v1267 = vmax.f32 %v1251, 0.0
    %v1268 = vmax.f32 %v1252, 0.0
    %v1269 = vmax.f32 %v1253, 0.0
    %v1270 = vmax.f32 %v1254, 0.0
    %v1271 = vmax.f32 %v1255, 0.0
    %v1272 = vmax.f32 %v1256, 0.0
    %v1273 = vmax.f32 %v1257, 0.0
    %v1274 = vmax.f32 %v1258, 0.0
    %v1275 = vmax.f32 %v1259, 0.0
    %v1276 = vmax.f32 %v1260, 0.0
    %v1277 = vld [vmem:[%s14] sm:$0xff]
    %v1278 = vld [vmem:[%s14 + $0x8] sm:$0xff]
    %v1279 = vld [vmem:[%s14 + $0x10] sm:$0xff]
    %v1280 = vld [vmem:[%s14 + $0x18] sm:$0xff]
    %v1282 = vsel %vm738, %v1261, 0
    %v1285 = vsel %vm738, %v1262, 0
    %v1288 = vsel %vm738, %v1263, 0
    %v1291 = vsel %vm738, %v1264, 0
    %v1294 = vsel %vm738, %v1265, 0
    %v1297 = vsel %vm738, %v1266, 0
    %v1300 = vsel %vm738, %v1267, 0
    %v1303 = vsel %vm738, %v1268, 0
    %v1306 = vsel %vm738, %v1269, 0
    %v1309 = vsel %vm738, %v1270, 0
    %v1312 = vsel %vm738, %v1271, 0
    %v1315 = vsel %vm738, %v1272, 0
    %v1318 = vsel %vm738, %v1273, 0
    %v1321 = vsel %vm738, %v1274, 0
    %v1324 = vsel %vm738, %v1275, 0
    %v1327 = vsel %vm738, %v1276, 0
    %1329 = vmatpush.msra.mxu0 0.0
    %1330 = vmatpush.msra.mxu0 0.0
    %1331 = vmatpush.msra.mxu0 0.0
    %1332 = vmatpush.msra.mxu0 0.0
    %1333 = vmatpush.msra.mxu0 0.0
    %1334 = vmatpush.msra.mxu0 0.0
    %1335 = vmatpush.msra.mxu0 0.0
    %1336 = vmatpush.msra.mxu0 0.0
    %1337 = vmatpush.msra.mxu0 0.0
    %1338 = vmatpush.msra.mxu0 0.0
    %1339 = vmatpush.msra.mxu0 0.0
    %1340 = vmatpush.msra.mxu0 0.0
    %1341 = vmatpush.msra.mxu0 %v1280
    %1342 = vmatpush.msra.mxu0 %v1279
    %1343 = vmatpush.msra.mxu0 %v1278
    %1344 = vmatpush.msra.mxu0 %v1277
    %1345 = vmatmul.f32.gmra.mxu0 %v1282
    %v1346 = vpop.f32.mrf.mxu0
    %v1347 = vadd.f32 0.0, %v1346
    %1348 = vmatmul.f32.gmra.mxu0 %v1285
    %v1349 = vpop.f32.mrf.mxu0
    %v1350 = vadd.f32 0.0, %v1349
    %1351 = vmatmul.f32.gmra.mxu0 %v1288
    %v1352 = vpop.f32.mrf.mxu0
    %v1353 = vadd.f32 0.0, %v1352
    %1354 = vmatmul.f32.gmra.mxu0 %v1291
    %v1355 = vpop.f32.mrf.mxu0
    %v1356 = vadd.f32 0.0, %v1355
    %1357 = vmatmul.f32.gmra.mxu0 %v1294
    %v1358 = vpop.f32.mrf.mxu0
    %v1359 = vadd.f32 0.0, %v1358
    %1360 = vmatmul.f32.gmra.mxu0 %v1297
    %v1361 = vpop.f32.mrf.mxu0
    %v1362 = vadd.f32 0.0, %v1361
    %1363 = vmatmul.f32.gmra.mxu0 %v1300
    %v1364 = vpop.f32.mrf.mxu0
    %v1365 = vadd.f32 0.0, %v1364
    %1366 = vmatmul.f32.gmra.mxu0 %v1303
    %v1367 = vpop.f32.mrf.mxu0
    %v1368 = vadd.f32 0.0, %v1367
    %1369 = vmatmul.f32.gmra.mxu0 %v1306
    %v1370 = vpop.f32.mrf.mxu0
    %v1371 = vadd.f32 0.0, %v1370
    %1372 = vmatmul.f32.gmra.mxu0 %v1309
    %v1373 = vpop.f32.mrf.mxu0
    %v1374 = vadd.f32 0.0, %v1373
    %1375 = vmatmul.f32.gmra.mxu0 %v1312
    %v1376 = vpop.f32.mrf.mxu0
    %v1377 = vadd.f32 0.0, %v1376
    %1378 = vmatmul.f32.gmra.mxu0 %v1315
    %v1379 = vpop.f32.mrf.mxu0
    %v1380 = vadd.f32 0.0, %v1379
    %1381 = vmatmul.f32.gmra.mxu0 %v1318
    %v1382 = vpop.f32.mrf.mxu0
    %v1383 = vadd.f32 0.0, %v1382
    %1384 = vmatmul.f32.gmra.mxu0 %v1321
    %v1385 = vpop.f32.mrf.mxu0
    %v1386 = vadd.f32 0.0, %v1385
    %1387 = vmatmul.f32.gmra.mxu0 %v1324
    %v1388 = vpop.f32.mrf.mxu0
    %v1389 = vadd.f32 0.0, %v1388
    %1390 = vmatmul.f32.gmra.mxu0 %v1327
    %v1391 = vpop.f32.mrf.mxu0
    %v1392 = vadd.f32 0.0, %v1391
    %1393 = vdwg.mxu0
    %s1394 = scalar_lea.vmem [#allocation2], 256
    %v1395 = vld [vmem:[%s1394] sm:$0xff]
    %v1396 = vld [vmem:[%s1394 + $0x8] sm:$0xff]
    %v1397 = vld [vmem:[%s1394 + $0x10] sm:$0xff]
    %v1398 = vld [vmem:[%s1394 + $0x18] sm:$0xff]
    %v1399 = vld [vmem:[%s1394 + $0x20] sm:$0xff]
    %v1400 = vld [vmem:[%s1394 + $0x28] sm:$0xff]
    %v1401 = vld [vmem:[%s1394 + $0x30] sm:$0xff]
    %v1402 = vld [vmem:[%s1394 + $0x38] sm:$0xff]
    %v1403 = vld [vmem:[%s1394 + $0x40] sm:$0xff]
    %v1404 = vld [vmem:[%s1394 + $0x48] sm:$0xff]
    %v1405 = vld [vmem:[%s1394 + $0x50] sm:$0xff]
    %v1406 = vld [vmem:[%s1394 + $0x58] sm:$0xff]
    %v1407 = vld [vmem:[%s1394 + $0x60] sm:$0xff]
    %v1408 = vld [vmem:[%s1394 + $0x68] sm:$0xff]
    %v1409 = vld [vmem:[%s1394 + $0x70] sm:$0xff]
    %v1410 = vld [vmem:[%s1394 + $0x78] sm:$0xff]
    %s1411 = scalar_lea.vmem %s14, 32
    %v1412 = vld [vmem:[%s1411] sm:$0xff]
    %v1413 = vld [vmem:[%s1411 + $0x8] sm:$0xff]
    %v1414 = vld [vmem:[%s1411 + $0x10] sm:$0xff]
    %v1415 = vld [vmem:[%s1411 + $0x18] sm:$0xff]
    %1416 = vmatpush.msra.mxu0 0.0
    %1417 = vmatpush.msra.mxu0 0.0
    %1418 = vmatpush.msra.mxu0 0.0
    %1419 = vmatpush.msra.mxu0 0.0
    %1420 = vmatpush.msra.mxu0 0.0
    %1421 = vmatpush.msra.mxu0 0.0
    %1422 = vmatpush.msra.mxu0 0.0
    %1423 = vmatpush.msra.mxu0 0.0
    %1424 = vmatpush.msra.mxu0 0.0
    %1425 = vmatpush.msra.mxu0 0.0
    %1426 = vmatpush.msra.mxu0 0.0
    %1427 = vmatpush.msra.mxu0 0.0
    %1428 = vmatpush.msra.mxu0 %v1415
    %1429 = vmatpush.msra.mxu0 %v1414
    %1430 = vmatpush.msra.mxu0 %v1413
    %1431 = vmatpush.msra.mxu0 %v1412
    %1432 = vmatmul.f32.gmra.mxu0 %v1282
    %v1433 = vpop.f32.mrf.mxu0
    %v1434 = vadd.f32 0.0, %v1433
    %1435 = vmatmul.f32.gmra.mxu0 %v1285
    %v1436 = vpop.f32.mrf.mxu0
    %v1437 = vadd.f32 0.0, %v1436
    %1438 = vmatmul.f32.gmra.mxu0 %v1288
    %v1439 = vpop.f32.mrf.mxu0
    %v1440 = vadd.f32 0.0, %v1439
    %1441 = vmatmul.f32.gmra.mxu0 %v1291
    %v1442 = vpop.f32.mrf.mxu0
    %v1443 = vadd.f32 0.0, %v1442
    %1444 = vmatmul.f32.gmra.mxu0 %v1294
    %v1445 = vpop.f32.mrf.mxu0
    %v1446 = vadd.f32 0.0, %v1445
    %1447 = vmatmul.f32.gmra.mxu0 %v1297
    %v1448 = vpop.f32.mrf.mxu0
    %v1449 = vadd.f32 0.0, %v1448
    %1450 = vmatmul.f32.gmra.mxu0 %v1300
    %v1451 = vpop.f32.mrf.mxu0
    %v1452 = vadd.f32 0.0, %v1451
    %1453 = vmatmul.f32.gmra.mxu0 %v1303
    %v1454 = vpop.f32.mrf.mxu0
    %v1455 = vadd.f32 0.0, %v1454
    %1456 = vmatmul.f32.gmra.mxu0 %v1306
    %v1457 = vpop.f32.mrf.mxu0
    %v1458 = vadd.f32 0.0, %v1457
    %1459 = vmatmul.f32.gmra.mxu0 %v1309
    %v1460 = vpop.f32.mrf.mxu0
    %v1461 = vadd.f32 0.0, %v1460
    %1462 = vmatmul.f32.gmra.mxu0 %v1312
    %v1463 = vpop.f32.mrf.mxu0
    %v1464 = vadd.f32 0.0, %v1463
    %1465 = vmatmul.f32.gmra.mxu0 %v1315
    %v1466 = vpop.f32.mrf.mxu0
    %v1467 = vadd.f32 0.0, %v1466
    %1468 = vmatmul.f32.gmra.mxu0 %v1318
    %v1469 = vpop.f32.mrf.mxu0
    %v1470 = vadd.f32 0.0, %v1469
    %1471 = vmatmul.f32.gmra.mxu0 %v1321
    %v1472 = vpop.f32.mrf.mxu0
    %v1473 = vadd.f32 0.0, %v1472
    %1474 = vmatmul.f32.gmra.mxu0 %v1324
    %v1475 = vpop.f32.mrf.mxu0
    %v1476 = vadd.f32 0.0, %v1475
    %1477 = vmatmul.f32.gmra.mxu0 %v1327
    %v1478 = vpop.f32.mrf.mxu0
    %v1479 = vadd.f32 0.0, %v1478
    %1480 = vdwg.mxu0
    %1481 = vmatpush.msra.mxu0 %v1479
    %1482 = vmatpush.msra.mxu0 %v1476
    %1483 = vmatpush.msra.mxu0 %v1473
    %1484 = vmatpush.msra.mxu0 %v1470
    %1485 = vmatpush.msra.mxu0 %v1467
    %1486 = vmatpush.msra.mxu0 %v1464
    %1487 = vmatpush.msra.mxu0 %v1461
    %1488 = vmatpush.msra.mxu0 %v1458
    %1489 = vmatpush.msra.mxu0 %v1455
    %1490 = vmatpush.msra.mxu0 %v1452
    %1491 = vmatpush.msra.mxu0 %v1449
    %1492 = vmatpush.msra.mxu0 %v1446
    %1493 = vmatpush.msra.mxu0 %v1443
    %1494 = vmatpush.msra.mxu0 %v1440
    %1495 = vmatpush.msra.mxu0 %v1437
    %1496 = vmatpush.msra.mxu0 %v1434
    %1497 = vmatmul.f32.gmra.mxu0 %v384
    %v1498 = vpop.f32.mrf.mxu0
    %v1499 = vadd.f32 0.0, %v1498
    %1500 = vmatmul.f32.gmra.mxu0 %v385
    %v1501 = vpop.f32.mrf.mxu0
    %v1502 = vadd.f32 0.0, %v1501
    %1503 = vmatmul.f32.gmra.mxu0 %v386
    %v1504 = vpop.f32.mrf.mxu0
    %v1505 = vadd.f32 0.0, %v1504
    %1506 = vmatmul.f32.gmra.mxu0 %v387
    %v1507 = vpop.f32.mrf.mxu0
    %v1508 = vadd.f32 0.0, %v1507
    %1509 = vmatmul.f32.gmra.mxu0 %v388
    %v1510 = vpop.f32.mrf.mxu0
    %v1511 = vadd.f32 0.0, %v1510
    %1512 = vmatmul.f32.gmra.mxu0 %v389
    %v1513 = vpop.f32.mrf.mxu0
    %v1514 = vadd.f32 0.0, %v1513
    %1515 = vmatmul.f32.gmra.mxu0 %v390
    %v1516 = vpop.f32.mrf.mxu0
    %v1517 = vadd.f32 0.0, %v1516
    %1518 = vmatmul.f32.gmra.mxu0 %v391
    %v1519 = vpop.f32.mrf.mxu0
    %v1520 = vadd.f32 0.0, %v1519
    %1521 = vmatmul.f32.gmra.mxu0 %v392
    %v1522 = vpop.f32.mrf.mxu0
    %v1523 = vadd.f32 0.0, %v1522
    %1524 = vmatmul.f32.gmra.mxu0 %v393
    %v1525 = vpop.f32.mrf.mxu0
    %v1526 = vadd.f32 0.0, %v1525
    %1527 = vmatmul.f32.gmra.mxu0 %v394
    %v1528 = vpop.f32.mrf.mxu0
    %v1529 = vadd.f32 0.0, %v1528
    %1530 = vmatmul.f32.gmra.mxu0 %v395
    %v1531 = vpop.f32.mrf.mxu0
    %v1532 = vadd.f32 0.0, %v1531
    %1533 = vmatmul.f32.gmra.mxu0 %v396
    %v1534 = vpop.f32.mrf.mxu0
    %v1535 = vadd.f32 0.0, %v1534
    %1536 = vmatmul.f32.gmra.mxu0 %v397
    %v1537 = vpop.f32.mrf.mxu0
    %v1538 = vadd.f32 0.0, %v1537
    %1539 = vmatmul.f32.gmra.mxu0 %v398
    %v1540 = vpop.f32.mrf.mxu0
    %v1541 = vadd.f32 0.0, %v1540
    %1542 = vmatmul.f32.gmra.mxu0 %v399
    %v1543 = vpop.f32.mrf.mxu0
    %v1544 = vadd.f32 0.0, %v1543
    %1545 = vdwg.mxu0
    %1546 = vmatpush.msra.mxu0 %v1392
    %1547 = vmatpush.msra.mxu0 %v1389
    %1548 = vmatpush.msra.mxu0 %v1386
    %1549 = vmatpush.msra.mxu0 %v1383
    %1550 = vmatpush.msra.mxu0 %v1380
    %1551 = vmatpush.msra.mxu0 %v1377
    %1552 = vmatpush.msra.mxu0 %v1374
    %1553 = vmatpush.msra.mxu0 %v1371
    %1554 = vmatpush.msra.mxu0 %v1368
    %1555 = vmatpush.msra.mxu0 %v1365
    %1556 = vmatpush.msra.mxu0 %v1362
    %1557 = vmatpush.msra.mxu0 %v1359
    %1558 = vmatpush.msra.mxu0 %v1356
    %1559 = vmatpush.msra.mxu0 %v1353
    %1560 = vmatpush.msra.mxu0 %v1350
    %1561 = vmatpush.msra.mxu0 %v1347
    %1562 = vmatmul.f32.gmra.mxu0 %v1395
    %v1563 = vpop.f32.mrf.mxu0
    %v1564 = vadd.f32 %v1499, %v1563
    %1565 = vmatmul.f32.gmra.mxu0 %v1396
    %v1566 = vpop.f32.mrf.mxu0
    %v1567 = vadd.f32 %v1502, %v1566
    %1568 = vmatmul.f32.gmra.mxu0 %v1397
    %v1569 = vpop.f32.mrf.mxu0
    %v1570 = vadd.f32 %v1505, %v1569
    %1571 = vmatmul.f32.gmra.mxu0 %v1398
    %v1572 = vpop.f32.mrf.mxu0
    %v1573 = vadd.f32 %v1508, %v1572
    %1574 = vmatmul.f32.gmra.mxu0 %v1399
    %v1575 = vpop.f32.mrf.mxu0
    %v1576 = vadd.f32 %v1511, %v1575
    %1577 = vmatmul.f32.gmra.mxu0 %v1400
    %v1578 = vpop.f32.mrf.mxu0
    %v1579 = vadd.f32 %v1514, %v1578
    %1580 = vmatmul.f32.gmra.mxu0 %v1401
    %v1581 = vpop.f32.mrf.mxu0
    %v1582 = vadd.f32 %v1517, %v1581
    %1583 = vmatmul.f32.gmra.mxu0 %v1402
    %v1584 = vpop.f32.mrf.mxu0
    %v1585 = vadd.f32 %v1520, %v1584
    %1586 = vmatmul.f32.gmra.mxu0 %v1403
    %v1587 = vpop.f32.mrf.mxu0
    %v1588 = vadd.f32 %v1523, %v1587
    %1589 = vmatmul.f32.gmra.mxu0 %v1404
    %v1590 = vpop.f32.mrf.mxu0
    %v1591 = vadd.f32 %v1526, %v1590
    %1592 = vmatmul.f32.gmra.mxu0 %v1405
    %v1593 = vpop.f32.mrf.mxu0
    %v1594 = vadd.f32 %v1529, %v1593
    %1595 = vmatmul.f32.gmra.mxu0 %v1406
    %v1596 = vpop.f32.mrf.mxu0
    %v1597 = vadd.f32 %v1532, %v1596
    %1598 = vmatmul.f32.gmra.mxu0 %v1407
    %v1599 = vpop.f32.mrf.mxu0
    %v1600 = vadd.f32 %v1535, %v1599
    %1601 = vmatmul.f32.gmra.mxu0 %v1408
    %v1602 = vpop.f32.mrf.mxu0
    %v1603 = vadd.f32 %v1538, %v1602
    %1604 = vmatmul.f32.gmra.mxu0 %v1409
    %v1605 = vpop.f32.mrf.mxu0
    %v1606 = vadd.f32 %v1541, %v1605
    %1607 = vmatmul.f32.gmra.mxu0 %v1410
    %v1608 = vpop.f32.mrf.mxu0
    %v1609 = vadd.f32 %v1544, %v1608
    %1610 = vdwg.mxu0
    %s1611 = scalar_lea.vmem %s14, 64
    %v1612 = vld [vmem:[%s1611] sm:$0xff]
    %v1613 = vld [vmem:[%s1611 + $0x8] sm:$0xff]
    %v1614 = vld [vmem:[%s1611 + $0x10] sm:$0xff]
    %v1615 = vld [vmem:[%s1611 + $0x18] sm:$0xff]
    %1616 = vmatpush.msra.mxu0 0.0
    %1617 = vmatpush.msra.mxu0 0.0
    %1618 = vmatpush.msra.mxu0 0.0
    %1619 = vmatpush.msra.mxu0 0.0
    %1620 = vmatpush.msra.mxu0 0.0
    %1621 = vmatpush.msra.mxu0 0.0
    %1622 = vmatpush.msra.mxu0 0.0
    %1623 = vmatpush.msra.mxu0 0.0
    %1624 = vmatpush.msra.mxu0 0.0
    %1625 = vmatpush.msra.mxu0 0.0
    %1626 = vmatpush.msra.mxu0 0.0
    %1627 = vmatpush.msra.mxu0 0.0
    %1628 = vmatpush.msra.mxu0 %v1615
    %1629 = vmatpush.msra.mxu0 %v1614
    %1630 = vmatpush.msra.mxu0 %v1613
    %1631 = vmatpush.msra.mxu0 %v1612
    %1632 = vmatmul.f32.gmra.mxu0 %v1282
    %v1633 = vpop.f32.mrf.mxu0
    %v1634 = vadd.f32 0.0, %v1633
    %1635 = vmatmul.f32.gmra.mxu0 %v1285
    %v1636 = vpop.f32.mrf.mxu0
    %v1637 = vadd.f32 0.0, %v1636
    %1638 = vmatmul.f32.gmra.mxu0 %v1288
    %v1639 = vpop.f32.mrf.mxu0
    %v1640 = vadd.f32 0.0, %v1639
    %1641 = vmatmul.f32.gmra.mxu0 %v1291
    %v1642 = vpop.f32.mrf.mxu0
    %v1643 = vadd.f32 0.0, %v1642
    %1644 = vmatmul.f32.gmra.mxu0 %v1294
    %v1645 = vpop.f32.mrf.mxu0
    %v1646 = vadd.f32 0.0, %v1645
    %1647 = vmatmul.f32.gmra.mxu0 %v1297
    %v1648 = vpop.f32.mrf.mxu0
    %v1649 = vadd.f32 0.0, %v1648
    %1650 = vmatmul.f32.gmra.mxu0 %v1300
    %v1651 = vpop.f32.mrf.mxu0
    %v1652 = vadd.f32 0.0, %v1651
    %1653 = vmatmul.f32.gmra.mxu0 %v1303
    %v1654 = vpop.f32.mrf.mxu0
    %v1655 = vadd.f32 0.0, %v1654
    %1656 = vmatmul.f32.gmra.mxu0 %v1306
    %v1657 = vpop.f32.mrf.mxu0
    %v1658 = vadd.f32 0.0, %v1657
    %1659 = vmatmul.f32.gmra.mxu0 %v1309
    %v1660 = vpop.f32.mrf.mxu0
    %v1661 = vadd.f32 0.0, %v1660
    %1662 = vmatmul.f32.gmra.mxu0 %v1312
    %v1663 = vpop.f32.mrf.mxu0
    %v1664 = vadd.f32 0.0, %v1663
    %1665 = vmatmul.f32.gmra.mxu0 %v1315
    %v1666 = vpop.f32.mrf.mxu0
    %v1667 = vadd.f32 0.0, %v1666
    %1668 = vmatmul.f32.gmra.mxu0 %v1318
    %v1669 = vpop.f32.mrf.mxu0
    %v1670 = vadd.f32 0.0, %v1669
    %1671 = vmatmul.f32.gmra.mxu0 %v1321
    %v1672 = vpop.f32.mrf.mxu0
    %v1673 = vadd.f32 0.0, %v1672
    %1674 = vmatmul.f32.gmra.mxu0 %v1324
    %v1675 = vpop.f32.mrf.mxu0
    %v1676 = vadd.f32 0.0, %v1675
    %1677 = vmatmul.f32.gmra.mxu0 %v1327
    %v1678 = vpop.f32.mrf.mxu0
    %v1679 = vadd.f32 0.0, %v1678
    %1680 = vdwg.mxu0
    %v1681 = vadd.f32 %v1564, %v1634
    %v1682 = vadd.f32 %v1567, %v1637
    %v1683 = vadd.f32 %v1570, %v1640
    %v1684 = vadd.f32 %v1573, %v1643
    %v1685 = vadd.f32 %v1576, %v1646
    %v1686 = vadd.f32 %v1579, %v1649
    %v1687 = vadd.f32 %v1582, %v1652
    %v1688 = vadd.f32 %v1585, %v1655
    %v1689 = vadd.f32 %v1588, %v1658
    %v1690 = vadd.f32 %v1591, %v1661
    %v1691 = vadd.f32 %v1594, %v1664
    %v1692 = vadd.f32 %v1597, %v1667
    %v1693 = vadd.f32 %v1600, %v1670
    %v1694 = vadd.f32 %v1603, %v1673
    %v1695 = vadd.f32 %v1606, %v1676
    %v1696 = vadd.f32 %v1609, %v1679
    %v1697 = vld [vmem:[%s15] sm:$0x1]
    %v1699 = vperm.slane %v1697, 0
    %v1701 = vadd.f32 %v1681, %v1699
    %v1702 = vadd.f32 %v1682, %v1699
    %v1703 = vadd.f32 %v1683, %v1699
    %v1704 = vadd.f32 %v1684, %v1699
    %v1705 = vadd.f32 %v1685, %v1699
    %v1706 = vadd.f32 %v1686, %v1699
    %v1707 = vadd.f32 %v1687, %v1699
    %v1708 = vadd.f32 %v1688, %v1699
    %v1709 = vadd.f32 %v1689, %v1699
    %v1710 = vadd.f32 %v1690, %v1699
    %v1711 = vadd.f32 %v1691, %v1699
    %v1712 = vadd.f32 %v1692, %v1699
    %v1713 = vadd.f32 %v1693, %v1699
    %v1714 = vadd.f32 %v1694, %v1699
    %v1715 = vadd.f32 %v1695, %v1699
    %v1716 = vadd.f32 %v1696, %v1699
    %v1717 = vmax.f32 %v1701, 0.0
    %v1718 = vmax.f32 %v1702, 0.0
    %v1719 = vmax.f32 %v1703, 0.0
    %v1720 = vmax.f32 %v1704, 0.0
    %v1721 = vmax.f32 %v1705, 0.0
    %v1722 = vmax.f32 %v1706, 0.0
    %v1723 = vmax.f32 %v1707, 0.0
    %v1724 = vmax.f32 %v1708, 0.0
    %v1725 = vmax.f32 %v1709, 0.0
    %v1726 = vmax.f32 %v1710, 0.0
    %v1727 = vmax.f32 %v1711, 0.0
    %v1728 = vmax.f32 %v1712, 0.0
    %v1729 = vmax.f32 %v1713, 0.0
    %v1730 = vmax.f32 %v1714, 0.0
    %v1731 = vmax.f32 %v1715, 0.0
    %v1732 = vmax.f32 %v1716, 0.0
    %v1733 = vld [vmem:[#allocation4] sm:$0xff]
    %v1734 = vld [vmem:[#allocation4 + $0x8] sm:$0xff]
    %v1735 = vld [vmem:[#allocation4 + $0x10] sm:$0xff]
    %v1736 = vld [vmem:[#allocation4 + $0x18] sm:$0xff]
    %v1738 = vsel %vm738, %v1717, 0
    %v1741 = vsel %vm738, %v1718, 0
    %v1744 = vsel %vm738, %v1719, 0
    %v1747 = vsel %vm738, %v1720, 0
    %v1750 = vsel %vm738, %v1721, 0
    %v1753 = vsel %vm738, %v1722, 0
    %v1756 = vsel %vm738, %v1723, 0
    %v1759 = vsel %vm738, %v1724, 0
    %v1762 = vsel %vm738, %v1725, 0
    %v1765 = vsel %vm738, %v1726, 0
    %v1768 = vsel %vm738, %v1727, 0
    %v1771 = vsel %vm738, %v1728, 0
    %v1774 = vsel %vm738, %v1729, 0
    %v1777 = vsel %vm738, %v1730, 0
    %v1780 = vsel %vm738, %v1731, 0
    %v1783 = vsel %vm738, %v1732, 0
    %1785 = vmatpush.msra.mxu0 0.0
    %1786 = vmatpush.msra.mxu0 0.0
    %1787 = vmatpush.msra.mxu0 0.0
    %1788 = vmatpush.msra.mxu0 0.0
    %1789 = vmatpush.msra.mxu0 0.0
    %1790 = vmatpush.msra.mxu0 0.0
    %1791 = vmatpush.msra.mxu0 0.0
    %1792 = vmatpush.msra.mxu0 0.0
    %1793 = vmatpush.msra.mxu0 0.0
    %1794 = vmatpush.msra.mxu0 0.0
    %1795 = vmatpush.msra.mxu0 0.0
    %1796 = vmatpush.msra.mxu0 0.0
    %1797 = vmatpush.msra.mxu0 %v1736
    %1798 = vmatpush.msra.mxu0 %v1735
    %1799 = vmatpush.msra.mxu0 %v1734
    %1800 = vmatpush.msra.mxu0 %v1733
    %1801 = vmatmul.f32.gmra.mxu0 %v1738
    %v1802 = vpop.f32.mrf.mxu0
    %v1803 = vadd.f32 0.0, %v1802
    %1804 = vmatmul.f32.gmra.mxu0 %v1741
    %v1805 = vpop.f32.mrf.mxu0
    %v1806 = vadd.f32 0.0, %v1805
    %1807 = vmatmul.f32.gmra.mxu0 %v1744
    %v1808 = vpop.f32.mrf.mxu0
    %v1809 = vadd.f32 0.0, %v1808
    %1810 = vmatmul.f32.gmra.mxu0 %v1747
    %v1811 = vpop.f32.mrf.mxu0
    %v1812 = vadd.f32 0.0, %v1811
    %1813 = vmatmul.f32.gmra.mxu0 %v1750
    %v1814 = vpop.f32.mrf.mxu0
    %v1815 = vadd.f32 0.0, %v1814
    %1816 = vmatmul.f32.gmra.mxu0 %v1753
    %v1817 = vpop.f32.mrf.mxu0
    %v1818 = vadd.f32 0.0, %v1817
    %1819 = vmatmul.f32.gmra.mxu0 %v1756
    %v1820 = vpop.f32.mrf.mxu0
    %v1821 = vadd.f32 0.0, %v1820
    %1822 = vmatmul.f32.gmra.mxu0 %v1759
    %v1823 = vpop.f32.mrf.mxu0
    %v1824 = vadd.f32 0.0, %v1823
    %1825 = vmatmul.f32.gmra.mxu0 %v1762
    %v1826 = vpop.f32.mrf.mxu0
    %v1827 = vadd.f32 0.0, %v1826
    %1828 = vmatmul.f32.gmra.mxu0 %v1765
    %v1829 = vpop.f32.mrf.mxu0
    %v1830 = vadd.f32 0.0, %v1829
    %1831 = vmatmul.f32.gmra.mxu0 %v1768
    %v1832 = vpop.f32.mrf.mxu0
    %v1833 = vadd.f32 0.0, %v1832
    %1834 = vmatmul.f32.gmra.mxu0 %v1771
    %v1835 = vpop.f32.mrf.mxu0
    %v1836 = vadd.f32 0.0, %v1835
    %1837 = vmatmul.f32.gmra.mxu0 %v1774
    %v1838 = vpop.f32.mrf.mxu0
    %v1839 = vadd.f32 0.0, %v1838
    %1840 = vmatmul.f32.gmra.mxu0 %v1777
    %v1841 = vpop.f32.mrf.mxu0
    %v1842 = vadd.f32 0.0, %v1841
    %1843 = vmatmul.f32.gmra.mxu0 %v1780
    %v1844 = vpop.f32.mrf.mxu0
    %v1845 = vadd.f32 0.0, %v1844
    %1846 = vmatmul.f32.gmra.mxu0 %v1783
    %v1847 = vpop.f32.mrf.mxu0
    %v1848 = vadd.f32 0.0, %v1847
    %1849 = vdwg.mxu0
    %s1850 = scalar_lea.vmem [#allocation4], 32
    %v1851 = vld [vmem:[%s1850] sm:$0xff]
    %v1852 = vld [vmem:[%s1850 + $0x8] sm:$0xff]
    %v1853 = vld [vmem:[%s1850 + $0x10] sm:$0xff]
    %v1854 = vld [vmem:[%s1850 + $0x18] sm:$0xff]
    %1855 = vmatpush.msra.mxu0 0.0
    %1856 = vmatpush.msra.mxu0 0.0
    %1857 = vmatpush.msra.mxu0 0.0
    %1858 = vmatpush.msra.mxu0 0.0
    %1859 = vmatpush.msra.mxu0 0.0
    %1860 = vmatpush.msra.mxu0 0.0
    %1861 = vmatpush.msra.mxu0 0.0
    %1862 = vmatpush.msra.mxu0 0.0
    %1863 = vmatpush.msra.mxu0 0.0
    %1864 = vmatpush.msra.mxu0 0.0
    %1865 = vmatpush.msra.mxu0 0.0
    %1866 = vmatpush.msra.mxu0 0.0
    %1867 = vmatpush.msra.mxu0 %v1854
    %1868 = vmatpush.msra.mxu0 %v1853
    %1869 = vmatpush.msra.mxu0 %v1852
    %1870 = vmatpush.msra.mxu0 %v1851
    %1871 = vmatmul.f32.gmra.mxu0 %v1738
    %v1872 = vpop.f32.mrf.mxu0
    %v1873 = vadd.f32 0.0, %v1872
    %1874 = vmatmul.f32.gmra.mxu0 %v1741
    %v1875 = vpop.f32.mrf.mxu0
    %v1876 = vadd.f32 0.0, %v1875
    %1877 = vmatmul.f32.gmra.mxu0 %v1744
    %v1878 = vpop.f32.mrf.mxu0
    %v1879 = vadd.f32 0.0, %v1878
    %1880 = vmatmul.f32.gmra.mxu0 %v1747
    %v1881 = vpop.f32.mrf.mxu0
    %v1882 = vadd.f32 0.0, %v1881
    %1883 = vmatmul.f32.gmra.mxu0 %v1750
    %v1884 = vpop.f32.mrf.mxu0
    %v1885 = vadd.f32 0.0, %v1884
    %1886 = vmatmul.f32.gmra.mxu0 %v1753
    %v1887 = vpop.f32.mrf.mxu0
    %v1888 = vadd.f32 0.0, %v1887
    %1889 = vmatmul.f32.gmra.mxu0 %v1756
    %v1890 = vpop.f32.mrf.mxu0
    %v1891 = vadd.f32 0.0, %v1890
    %1892 = vmatmul.f32.gmra.mxu0 %v1759
    %v1893 = vpop.f32.mrf.mxu0
    %v1894 = vadd.f32 0.0, %v1893
    %1895 = vmatmul.f32.gmra.mxu0 %v1762
    %v1896 = vpop.f32.mrf.mxu0
    %v1897 = vadd.f32 0.0, %v1896
    %1898 = vmatmul.f32.gmra.mxu0 %v1765
    %v1899 = vpop.f32.mrf.mxu0
    %v1900 = vadd.f32 0.0, %v1899
    %1901 = vmatmul.f32.gmra.mxu0 %v1768
    %v1902 = vpop.f32.mrf.mxu0
    %v1903 = vadd.f32 0.0, %v1902
    %1904 = vmatmul.f32.gmra.mxu0 %v1771
    %v1905 = vpop.f32.mrf.mxu0
    %v1906 = vadd.f32 0.0, %v1905
    %1907 = vmatmul.f32.gmra.mxu0 %v1774
    %v1908 = vpop.f32.mrf.mxu0
    %v1909 = vadd.f32 0.0, %v1908
    %1910 = vmatmul.f32.gmra.mxu0 %v1777
    %v1911 = vpop.f32.mrf.mxu0
    %v1912 = vadd.f32 0.0, %v1911
    %1913 = vmatmul.f32.gmra.mxu0 %v1780
    %v1914 = vpop.f32.mrf.mxu0
    %v1915 = vadd.f32 0.0, %v1914
    %1916 = vmatmul.f32.gmra.mxu0 %v1783
    %v1917 = vpop.f32.mrf.mxu0
    %v1918 = vadd.f32 0.0, %v1917
    %1919 = vdwg.mxu0
    %1920 = vmatpush.msra.mxu0 %v1918
    %1921 = vmatpush.msra.mxu0 %v1915
    %1922 = vmatpush.msra.mxu0 %v1912
    %1923 = vmatpush.msra.mxu0 %v1909
    %1924 = vmatpush.msra.mxu0 %v1906
    %1925 = vmatpush.msra.mxu0 %v1903
    %1926 = vmatpush.msra.mxu0 %v1900
    %1927 = vmatpush.msra.mxu0 %v1897
    %1928 = vmatpush.msra.mxu0 %v1894
    %1929 = vmatpush.msra.mxu0 %v1891
    %1930 = vmatpush.msra.mxu0 %v1888
    %1931 = vmatpush.msra.mxu0 %v1885
    %1932 = vmatpush.msra.mxu0 %v1882
    %1933 = vmatpush.msra.mxu0 %v1879
    %1934 = vmatpush.msra.mxu0 %v1876
    %1935 = vmatpush.msra.mxu0 %v1873
    %1936 = vmatmul.f32.gmra.mxu0 %v384
    %v1937 = vpop.f32.mrf.mxu0
    %v1938 = vadd.f32 0.0, %v1937
    %1939 = vmatmul.f32.gmra.mxu0 %v385
    %v1940 = vpop.f32.mrf.mxu0
    %v1941 = vadd.f32 0.0, %v1940
    %1942 = vmatmul.f32.gmra.mxu0 %v386
    %v1943 = vpop.f32.mrf.mxu0
    %v1944 = vadd.f32 0.0, %v1943
    %1945 = vmatmul.f32.gmra.mxu0 %v387
    %v1946 = vpop.f32.mrf.mxu0
    %v1947 = vadd.f32 0.0, %v1946
    %1948 = vmatmul.f32.gmra.mxu0 %v388
    %v1949 = vpop.f32.mrf.mxu0
    %v1950 = vadd.f32 0.0, %v1949
    %1951 = vmatmul.f32.gmra.mxu0 %v389
    %v1952 = vpop.f32.mrf.mxu0
    %v1953 = vadd.f32 0.0, %v1952
    %1954 = vmatmul.f32.gmra.mxu0 %v390
    %v1955 = vpop.f32.mrf.mxu0
    %v1956 = vadd.f32 0.0, %v1955
    %1957 = vmatmul.f32.gmra.mxu0 %v391
    %v1958 = vpop.f32.mrf.mxu0
    %v1959 = vadd.f32 0.0, %v1958
    %1960 = vmatmul.f32.gmra.mxu0 %v392
    %v1961 = vpop.f32.mrf.mxu0
    %v1962 = vadd.f32 0.0, %v1961
    %1963 = vmatmul.f32.gmra.mxu0 %v393
    %v1964 = vpop.f32.mrf.mxu0
    %v1965 = vadd.f32 0.0, %v1964
    %1966 = vmatmul.f32.gmra.mxu0 %v394
    %v1967 = vpop.f32.mrf.mxu0
    %v1968 = vadd.f32 0.0, %v1967
    %1969 = vmatmul.f32.gmra.mxu0 %v395
    %v1970 = vpop.f32.mrf.mxu0
    %v1971 = vadd.f32 0.0, %v1970
    %1972 = vmatmul.f32.gmra.mxu0 %v396
    %v1973 = vpop.f32.mrf.mxu0
    %v1974 = vadd.f32 0.0, %v1973
    %1975 = vmatmul.f32.gmra.mxu0 %v397
    %v1976 = vpop.f32.mrf.mxu0
    %v1977 = vadd.f32 0.0, %v1976
    %1978 = vmatmul.f32.gmra.mxu0 %v398
    %v1979 = vpop.f32.mrf.mxu0
    %v1980 = vadd.f32 0.0, %v1979
    %1981 = vmatmul.f32.gmra.mxu0 %v399
    %v1982 = vpop.f32.mrf.mxu0
    %v1983 = vadd.f32 0.0, %v1982
    %1984 = vdwg.mxu0
    %1985 = vmatpush.msra.mxu0 %v1848
    %1986 = vmatpush.msra.mxu0 %v1845
    %1987 = vmatpush.msra.mxu0 %v1842
    %1988 = vmatpush.msra.mxu0 %v1839
    %1989 = vmatpush.msra.mxu0 %v1836
    %1990 = vmatpush.msra.mxu0 %v1833
    %1991 = vmatpush.msra.mxu0 %v1830
    %1992 = vmatpush.msra.mxu0 %v1827
    %1993 = vmatpush.msra.mxu0 %v1824
    %1994 = vmatpush.msra.mxu0 %v1821
    %1995 = vmatpush.msra.mxu0 %v1818
    %1996 = vmatpush.msra.mxu0 %v1815
    %1997 = vmatpush.msra.mxu0 %v1812
    %1998 = vmatpush.msra.mxu0 %v1809
    %1999 = vmatpush.msra.mxu0 %v1806
    %2000 = vmatpush.msra.mxu0 %v1803
    %2001 = vmatmul.f32.gmra.mxu0 %v1395
    %v2002 = vpop.f32.mrf.mxu0
    %v2003 = vadd.f32 %v1938, %v2002
    %2004 = vmatmul.f32.gmra.mxu0 %v1396
    %v2005 = vpop.f32.mrf.mxu0
    %v2006 = vadd.f32 %v1941, %v2005
    %2007 = vmatmul.f32.gmra.mxu0 %v1397
    %v2008 = vpop.f32.mrf.mxu0
    %v2009 = vadd.f32 %v1944, %v2008
    %2010 = vmatmul.f32.gmra.mxu0 %v1398
    %v2011 = vpop.f32.mrf.mxu0
    %v2012 = vadd.f32 %v1947, %v2011
    %2013 = vmatmul.f32.gmra.mxu0 %v1399
    %v2014 = vpop.f32.mrf.mxu0
    %v2015 = vadd.f32 %v1950, %v2014
    %2016 = vmatmul.f32.gmra.mxu0 %v1400
    %v2017 = vpop.f32.mrf.mxu0
    %v2018 = vadd.f32 %v1953, %v2017
    %2019 = vmatmul.f32.gmra.mxu0 %v1401
    %v2020 = vpop.f32.mrf.mxu0
    %v2021 = vadd.f32 %v1956, %v2020
    %2022 = vmatmul.f32.gmra.mxu0 %v1402
    %v2023 = vpop.f32.mrf.mxu0
    %v2024 = vadd.f32 %v1959, %v2023
    %2025 = vmatmul.f32.gmra.mxu0 %v1403
    %v2026 = vpop.f32.mrf.mxu0
    %v2027 = vadd.f32 %v1962, %v2026
    %2028 = vmatmul.f32.gmra.mxu0 %v1404
    %v2029 = vpop.f32.mrf.mxu0
    %v2030 = vadd.f32 %v1965, %v2029
    %2031 = vmatmul.f32.gmra.mxu0 %v1405
    %v2032 = vpop.f32.mrf.mxu0
    %v2033 = vadd.f32 %v1968, %v2032
    %2034 = vmatmul.f32.gmra.mxu0 %v1406
    %v2035 = vpop.f32.mrf.mxu0
    %v2036 = vadd.f32 %v1971, %v2035
    %2037 = vmatmul.f32.gmra.mxu0 %v1407
    %v2038 = vpop.f32.mrf.mxu0
    %v2039 = vadd.f32 %v1974, %v2038
    %2040 = vmatmul.f32.gmra.mxu0 %v1408
    %v2041 = vpop.f32.mrf.mxu0
    %v2042 = vadd.f32 %v1977, %v2041
    %2043 = vmatmul.f32.gmra.mxu0 %v1409
    %v2044 = vpop.f32.mrf.mxu0
    %v2045 = vadd.f32 %v1980, %v2044
    %2046 = vmatmul.f32.gmra.mxu0 %v1410
    %v2047 = vpop.f32.mrf.mxu0
    %v2048 = vadd.f32 %v1983, %v2047
    %2049 = vdwg.mxu0
    %s2050 = scalar_lea.vmem [#allocation4], 64
    %v2051 = vld [vmem:[%s2050] sm:$0xff]
    %v2052 = vld [vmem:[%s2050 + $0x8] sm:$0xff]
    %v2053 = vld [vmem:[%s2050 + $0x10] sm:$0xff]
    %v2054 = vld [vmem:[%s2050 + $0x18] sm:$0xff]
    %2055 = vmatpush.msra.mxu0 0.0
    %2056 = vmatpush.msra.mxu0 0.0
    %2057 = vmatpush.msra.mxu0 0.0
    %2058 = vmatpush.msra.mxu0 0.0
    %2059 = vmatpush.msra.mxu0 0.0
    %2060 = vmatpush.msra.mxu0 0.0
    %2061 = vmatpush.msra.mxu0 0.0
    %2062 = vmatpush.msra.mxu0 0.0
    %2063 = vmatpush.msra.mxu0 0.0
    %2064 = vmatpush.msra.mxu0 0.0
    %2065 = vmatpush.msra.mxu0 0.0
    %2066 = vmatpush.msra.mxu0 0.0
    %2067 = vmatpush.msra.mxu0 %v2054
    %2068 = vmatpush.msra.mxu0 %v2053
    %2069 = vmatpush.msra.mxu0 %v2052
    %2070 = vmatpush.msra.mxu0 %v2051
    %2071 = vmatmul.f32.gmra.mxu0 %v1738
    %v2072 = vpop.f32.mrf.mxu0
    %v2073 = vadd.f32 0.0, %v2072
    %2074 = vmatmul.f32.gmra.mxu0 %v1741
    %v2075 = vpop.f32.mrf.mxu0
    %v2076 = vadd.f32 0.0, %v2075
    %2077 = vmatmul.f32.gmra.mxu0 %v1744
    %v2078 = vpop.f32.mrf.mxu0
    %v2079 = vadd.f32 0.0, %v2078
    %2080 = vmatmul.f32.gmra.mxu0 %v1747
    %v2081 = vpop.f32.mrf.mxu0
    %v2082 = vadd.f32 0.0, %v2081
    %2083 = vmatmul.f32.gmra.mxu0 %v1750
    %v2084 = vpop.f32.mrf.mxu0
    %v2085 = vadd.f32 0.0, %v2084
    %2086 = vmatmul.f32.gmra.mxu0 %v1753
    %v2087 = vpop.f32.mrf.mxu0
    %v2088 = vadd.f32 0.0, %v2087
    %2089 = vmatmul.f32.gmra.mxu0 %v1756
    %v2090 = vpop.f32.mrf.mxu0
    %v2091 = vadd.f32 0.0, %v2090
    %2092 = vmatmul.f32.gmra.mxu0 %v1759
    %v2093 = vpop.f32.mrf.mxu0
    %v2094 = vadd.f32 0.0, %v2093
    %2095 = vmatmul.f32.gmra.mxu0 %v1762
    %v2096 = vpop.f32.mrf.mxu0
    %v2097 = vadd.f32 0.0, %v2096
    %2098 = vmatmul.f32.gmra.mxu0 %v1765
    %v2099 = vpop.f32.mrf.mxu0
    %v2100 = vadd.f32 0.0, %v2099
    %2101 = vmatmul.f32.gmra.mxu0 %v1768
    %v2102 = vpop.f32.mrf.mxu0
    %v2103 = vadd.f32 0.0, %v2102
    %2104 = vmatmul.f32.gmra.mxu0 %v1771
    %v2105 = vpop.f32.mrf.mxu0
    %v2106 = vadd.f32 0.0, %v2105
    %2107 = vmatmul.f32.gmra.mxu0 %v1774
    %v2108 = vpop.f32.mrf.mxu0
    %v2109 = vadd.f32 0.0, %v2108
    %2110 = vmatmul.f32.gmra.mxu0 %v1777
    %v2111 = vpop.f32.mrf.mxu0
    %v2112 = vadd.f32 0.0, %v2111
    %2113 = vmatmul.f32.gmra.mxu0 %v1780
    %v2114 = vpop.f32.mrf.mxu0
    %v2115 = vadd.f32 0.0, %v2114
    %2116 = vmatmul.f32.gmra.mxu0 %v1783
    %v2117 = vpop.f32.mrf.mxu0
    %v2118 = vadd.f32 0.0, %v2117
    %2119 = vdwg.mxu0
    %v2120 = vadd.f32 %v2003, %v2073
    %v2121 = vadd.f32 %v2006, %v2076
    %v2122 = vadd.f32 %v2009, %v2079
    %v2123 = vadd.f32 %v2012, %v2082
    %v2124 = vadd.f32 %v2015, %v2085
    %v2125 = vadd.f32 %v2018, %v2088
    %v2126 = vadd.f32 %v2021, %v2091
    %v2127 = vadd.f32 %v2024, %v2094
    %v2128 = vadd.f32 %v2027, %v2097
    %v2129 = vadd.f32 %v2030, %v2100
    %v2130 = vadd.f32 %v2033, %v2103
    %v2131 = vadd.f32 %v2036, %v2106
    %v2132 = vadd.f32 %v2039, %v2109
    %v2133 = vadd.f32 %v2042, %v2112
    %v2134 = vadd.f32 %v2045, %v2115
    %v2135 = vadd.f32 %v2048, %v2118
    %v2136 = vld [vmem:[%s17] sm:$0x1]
    %v2138 = vperm.slane %v2136, 0
    %v2140 = vadd.f32 %v2120, %v2138
    %v2141 = vadd.f32 %v2121, %v2138
    %v2142 = vadd.f32 %v2122, %v2138
    %v2143 = vadd.f32 %v2123, %v2138
    %v2144 = vadd.f32 %v2124, %v2138
    %v2145 = vadd.f32 %v2125, %v2138
    %v2146 = vadd.f32 %v2126, %v2138
    %v2147 = vadd.f32 %v2127, %v2138
    %v2148 = vadd.f32 %v2128, %v2138
    %v2149 = vadd.f32 %v2129, %v2138
    %v2150 = vadd.f32 %v2130, %v2138
    %v2151 = vadd.f32 %v2131, %v2138
    %v2152 = vadd.f32 %v2132, %v2138
    %v2153 = vadd.f32 %v2133, %v2138
    %v2154 = vadd.f32 %v2134, %v2138
    %v2155 = vadd.f32 %v2135, %v2138
    %v2156 = vmax.f32 %v2140, 0.0
    %v2157 = vmax.f32 %v2141, 0.0
    %v2158 = vmax.f32 %v2142, 0.0
    %v2159 = vmax.f32 %v2143, 0.0
    %v2160 = vmax.f32 %v2144, 0.0
    %v2161 = vmax.f32 %v2145, 0.0
    %v2162 = vmax.f32 %v2146, 0.0
    %v2163 = vmax.f32 %v2147, 0.0
    %v2164 = vmax.f32 %v2148, 0.0
    %v2165 = vmax.f32 %v2149, 0.0
    %v2166 = vmax.f32 %v2150, 0.0
    %v2167 = vmax.f32 %v2151, 0.0
    %v2168 = vmax.f32 %v2152, 0.0
    %v2169 = vmax.f32 %v2153, 0.0
    %v2170 = vmax.f32 %v2154, 0.0
    %v2171 = vmax.f32 %v2155, 0.0
    %v2172 = vadd.f32 %v2156, %v1261
    %v2173 = vadd.f32 %v2157, %v1262
    %v2174 = vadd.f32 %v2158, %v1263
    %v2175 = vadd.f32 %v2159, %v1264
    %v2176 = vadd.f32 %v2160, %v1265
    %v2177 = vadd.f32 %v2161, %v1266
    %v2178 = vadd.f32 %v2162, %v1267
    %v2179 = vadd.f32 %v2163, %v1268
    %v2180 = vadd.f32 %v2164, %v1269
    %v2181 = vadd.f32 %v2165, %v1270
    %v2182 = vadd.f32 %v2166, %v1271
    %v2183 = vadd.f32 %v2167, %v1272
    %v2184 = vadd.f32 %v2168, %v1273
    %v2185 = vadd.f32 %v2169, %v1274
    %v2186 = vadd.f32 %v2170, %v1275
    %v2187 = vadd.f32 %v2171, %v1276
    %v2188 = vmax.f32 %v2172, 0.0
    %v2189 = vmax.f32 %v2173, 0.0
    %v2190 = vmax.f32 %v2174, 0.0
    %v2191 = vmax.f32 %v2175, 0.0
    %v2192 = vmax.f32 %v2176, 0.0
    %v2193 = vmax.f32 %v2177, 0.0
    %v2194 = vmax.f32 %v2178, 0.0
    %v2195 = vmax.f32 %v2179, 0.0
    %v2196 = vmax.f32 %v2180, 0.0
    %v2197 = vmax.f32 %v2181, 0.0
    %v2198 = vmax.f32 %v2182, 0.0
    %v2199 = vmax.f32 %v2183, 0.0
    %v2200 = vmax.f32 %v2184, 0.0
    %v2201 = vmax.f32 %v2185, 0.0
    %v2202 = vmax.f32 %v2186, 0.0
    %v2203 = vmax.f32 %v2187, 0.0
    %v2204 = vld [vmem:[%s18] sm:$0x1]
    %v2205 = vld [vmem:[%s19] sm:$0x1]
    %v2206 = vsel %vm738, %v2188, 0.0
    %2207 = vadd.xlane.f32.xlu0 %v2206
    %v2208 = vpop.xlane.xlu0 %2207
    %v2209 = vsel %vm738, %v2189, 0.0
    %2210 = vadd.xlane.f32.xlu0 %v2209
    %v2211 = vpop.xlane.xlu0 %2210
    %v2212 = vsel %vm738, %v2190, 0.0
    %2213 = vadd.xlane.f32.xlu0 %v2212
    %v2214 = vpop.xlane.xlu0 %2213
    %v2215 = vsel %vm738, %v2191, 0.0
    %2216 = vadd.xlane.f32.xlu0 %v2215
    %v2217 = vpop.xlane.xlu0 %2216
    %v2218 = vsel %vm738, %v2192, 0.0
    %2219 = vadd.xlane.f32.xlu0 %v2218
    %v2220 = vpop.xlane.xlu0 %2219
    %v2221 = vsel %vm738, %v2193, 0.0
    %2222 = vadd.xlane.f32.xlu0 %v2221
    %v2223 = vpop.xlane.xlu0 %2222
    %v2224 = vsel %vm738, %v2194, 0.0
    %2225 = vadd.xlane.f32.xlu0 %v2224
    %v2226 = vpop.xlane.xlu0 %2225
    %v2227 = vsel %vm738, %v2195, 0.0
    %2228 = vadd.xlane.f32.xlu0 %v2227
    %v2229 = vpop.xlane.xlu0 %2228
    %v2230 = vsel %vm738, %v2196, 0.0
    %2231 = vadd.xlane.f32.xlu0 %v2230
    %v2232 = vpop.xlane.xlu0 %2231
    %v2233 = vsel %vm738, %v2197, 0.0
    %2234 = vadd.xlane.f32.xlu0 %v2233
    %v2235 = vpop.xlane.xlu0 %2234
    %v2236 = vsel %vm738, %v2198, 0.0
    %2237 = vadd.xlane.f32.xlu0 %v2236
    %v2238 = vpop.xlane.xlu0 %2237
    %v2239 = vsel %vm738, %v2199, 0.0
    %2240 = vadd.xlane.f32.xlu0 %v2239
    %v2241 = vpop.xlane.xlu0 %2240
    %v2242 = vsel %vm738, %v2200, 0.0
    %2243 = vadd.xlane.f32.xlu0 %v2242
    %v2244 = vpop.xlane.xlu0 %2243
    %v2245 = vsel %vm738, %v2201, 0.0
    %2246 = vadd.xlane.f32.xlu0 %v2245
    %v2247 = vpop.xlane.xlu0 %2246
    %v2248 = vsel %vm738, %v2202, 0.0
    %2249 = vadd.xlane.f32.xlu0 %v2248
    %v2250 = vpop.xlane.xlu0 %2249
    %v2251 = vsel %vm738, %v2203, 0.0
    %2252 = vadd.xlane.f32.xlu0 %v2251
    %v2253 = vpop.xlane.xlu0 %2252
    %v2254 = vrcp.pop 32.0
    %v2255 = vmul.f32 32.0, %v2254
    %v2256 = vsub.f32 1.0, %v2255
    %v2257 = vmul.f32 %v2254, %v2256
    %v2258 = vadd.f32 %v2254, %v2257
    %vm2259 = vweird.f32 %v2254
    %v2260 = vsel %vm2259, %v2254, %v2258
    %v2261 = vmul.f32 %v2208, %v2260
    %v2262 = vmul.f32 %v2211, %v2260
    %v2263 = vmul.f32 %v2214, %v2260
    %v2264 = vmul.f32 %v2217, %v2260
    %v2265 = vmul.f32 %v2220, %v2260
    %v2266 = vmul.f32 %v2223, %v2260
    %v2267 = vmul.f32 %v2226, %v2260
    %v2268 = vmul.f32 %v2229, %v2260
    %v2269 = vmul.f32 %v2232, %v2260
    %v2270 = vmul.f32 %v2235, %v2260
    %v2271 = vmul.f32 %v2238, %v2260
    %v2272 = vmul.f32 %v2241, %v2260
    %v2273 = vmul.f32 %v2244, %v2260
    %v2274 = vmul.f32 %v2247, %v2260
    %v2275 = vmul.f32 %v2250, %v2260
    %v2276 = vmul.f32 %v2253, %v2260
    %v2277 = vsub.f32 %v2188, %v2261
    %v2278 = vsub.f32 %v2189, %v2262
    %v2279 = vsub.f32 %v2190, %v2263
    %v2280 = vsub.f32 %v2191, %v2264
    %v2281 = vsub.f32 %v2192, %v2265
    %v2282 = vsub.f32 %v2193, %v2266
    %v2283 = vsub.f32 %v2194, %v2267
    %v2284 = vsub.f32 %v2195, %v2268
    %v2285 = vsub.f32 %v2196, %v2269
    %v2286 = vsub.f32 %v2197, %v2270
    %v2287 = vsub.f32 %v2198, %v2271
    %v2288 = vsub.f32 %v2199, %v2272
    %v2289 = vsub.f32 %v2200, %v2273
    %v2290 = vsub.f32 %v2201, %v2274
    %v2291 = vsub.f32 %v2202, %v2275
    %v2292 = vsub.f32 %v2203, %v2276
    %v2293 = vmul.f32 %v2277, %v2277
    %v2294 = vmul.f32 %v2278, %v2278
    %v2295 = vmul.f32 %v2279, %v2279
    %v2296 = vmul.f32 %v2280, %v2280
    %v2297 = vmul.f32 %v2281, %v2281
    %v2298 = vmul.f32 %v2282, %v2282
    %v2299 = vmul.f32 %v2283, %v2283
    %v2300 = vmul.f32 %v2284, %v2284
    %v2301 = vmul.f32 %v2285, %v2285
    %v2302 = vmul.f32 %v2286, %v2286
    %v2303 = vmul.f32 %v2287, %v2287
    %v2304 = vmul.f32 %v2288, %v2288
    %v2305 = vmul.f32 %v2289, %v2289
    %v2306 = vmul.f32 %v2290, %v2290
    %v2307 = vmul.f32 %v2291, %v2291
    %v2308 = vmul.f32 %v2292, %v2292
    %v2309 = vsel %vm738, %v2293, 0.0
    %2310 = vadd.xlane.f32.xlu0 %v2309
    %v2311 = vpop.xlane.xlu0 %2310
    %v2312 = vsel %vm738, %v2294, 0.0
    %2313 = vadd.xlane.f32.xlu0 %v2312
    %v2314 = vpop.xlane.xlu0 %2313
    %v2315 = vsel %vm738, %v2295, 0.0
    %2316 = vadd.xlane.f32.xlu0 %v2315
    %v2317 = vpop.xlane.xlu0 %2316
    %v2318 = vsel %vm738, %v2296, 0.0
    %2319 = vadd.xlane.f32.xlu0 %v2318
    %v2320 = vpop.xlane.xlu0 %2319
    %v2321 = vsel %vm738, %v2297, 0.0
    %2322 = vadd.xlane.f32.xlu0 %v2321
    %v2323 = vpop.xlane.xlu0 %2322
    %v2324 = vsel %vm738, %v2298, 0.0
    %2325 = vadd.xlane.f32.xlu0 %v2324
    %v2326 = vpop.xlane.xlu0 %2325
    %v2327 = vsel %vm738, %v2299, 0.0
    %2328 = vadd.xlane.f32.xlu0 %v2327
    %v2329 = vpop.xlane.xlu0 %2328
    %v2330 = vsel %vm738, %v2300, 0.0
    %2331 = vadd.xlane.f32.xlu0 %v2330
    %v2332 = vpop.xlane.xlu0 %2331
    %v2333 = vsel %vm738, %v2301, 0.0
    %2334 = vadd.xlane.f32.xlu0 %v2333
    %v2335 = vpop.xlane.xlu0 %2334
    %v2336 = vsel %vm738, %v2302, 0.0
    %2337 = vadd.xlane.f32.xlu0 %v2336
    %v2338 = vpop.xlane.xlu0 %2337
    %v2339 = vsel %vm738, %v2303, 0.0
    %2340 = vadd.xlane.f32.xlu0 %v2339
    %v2341 = vpop.xlane.xlu0 %2340
    %v2342 = vsel %vm738, %v2304, 0.0
    %2343 = vadd.xlane.f32.xlu0 %v2342
    %v2344 = vpop.xlane.xlu0 %2343
    %v2345 = vsel %vm738, %v2305, 0.0
    %2346 = vadd.xlane.f32.xlu0 %v2345
    %v2347 = vpop.xlane.xlu0 %2346
    %v2348 = vsel %vm738, %v2306, 0.0
    %2349 = vadd.xlane.f32.xlu0 %v2348
    %v2350 = vpop.xlane.xlu0 %2349
    %v2351 = vsel %vm738, %v2307, 0.0
    %2352 = vadd.xlane.f32.xlu0 %v2351
    %v2353 = vpop.xlane.xlu0 %2352
    %v2354 = vsel %vm738, %v2308, 0.0
    %2355 = vadd.xlane.f32.xlu0 %v2354
    %v2356 = vpop.xlane.xlu0 %2355
    %v2357 = vmul.f32 %v2311, %v2260
    %v2358 = vmul.f32 %v2314, %v2260
    %v2359 = vmul.f32 %v2317, %v2260
    %v2360 = vmul.f32 %v2320, %v2260
    %v2361 = vmul.f32 %v2323, %v2260
    %v2362 = vmul.f32 %v2326, %v2260
    %v2363 = vmul.f32 %v2329, %v2260
    %v2364 = vmul.f32 %v2332, %v2260
    %v2365 = vmul.f32 %v2335, %v2260
    %v2366 = vmul.f32 %v2338, %v2260
    %v2367 = vmul.f32 %v2341, %v2260
    %v2368 = vmul.f32 %v2344, %v2260
    %v2369 = vmul.f32 %v2347, %v2260
    %v2370 = vmul.f32 %v2350, %v2260
    %v2371 = vmul.f32 %v2353, %v2260
    %v2372 = vmul.f32 %v2356, %v2260
    %v2373 = vadd.f32 %v2357, 1e-05
    %v2374 = vadd.f32 %v2358, 1e-05
    %v2375 = vadd.f32 %v2359, 1e-05
    %v2376 = vadd.f32 %v2360, 1e-05
    %v2377 = vadd.f32 %v2361, 1e-05
    %v2378 = vadd.f32 %v2362, 1e-05
    %v2379 = vadd.f32 %v2363, 1e-05
    %v2380 = vadd.f32 %v2364, 1e-05
    %v2381 = vadd.f32 %v2365, 1e-05
    %v2382 = vadd.f32 %v2366, 1e-05
    %v2383 = vadd.f32 %v2367, 1e-05
    %v2384 = vadd.f32 %v2368, 1e-05
    %v2385 = vadd.f32 %v2369, 1e-05
    %v2386 = vadd.f32 %v2370, 1e-05
    %v2387 = vadd.f32 %v2371, 1e-05
    %v2388 = vadd.f32 %v2372, 1e-05
    %v2389 = vrsqrt.pop %v2373
    %v2390 = vmul.f32 %v2389, %v2373
    %v2391 = vmul.f32 %v2390, %v2389
    %v2392 = vmul.f32 0.5, %v2391
    %v2393 = vsub.f32 1.5, %v2392
    %v2394 = vmul.f32 %v2389, %v2393
    %vm2395 = vweird.f32 %v2373
    %vm2396 = vweird.f32 %v2389
    %vm2397 = vmor %vm2395, %vm2396
    %v2398 = vsel %vm2397, %v2389, %v2394
    %v2399 = vrsqrt.pop %v2374
    %v2400 = vmul.f32 %v2399, %v2374
    %v2401 = vmul.f32 %v2400, %v2399
    %v2402 = vmul.f32 0.5, %v2401
    %v2403 = vsub.f32 1.5, %v2402
    %v2404 = vmul.f32 %v2399, %v2403
    %vm2405 = vweird.f32 %v2374
    %vm2406 = vweird.f32 %v2399
    %vm2407 = vmor %vm2405, %vm2406
    %v2408 = vsel %vm2407, %v2399, %v2404
    %v2409 = vrsqrt.pop %v2375
    %v2410 = vmul.f32 %v2409, %v2375
    %v2411 = vmul.f32 %v2410, %v2409
    %v2412 = vmul.f32 0.5, %v2411
    %v2413 = vsub.f32 1.5, %v2412
    %v2414 = vmul.f32 %v2409, %v2413
    %vm2415 = vweird.f32 %v2375
    %vm2416 = vweird.f32 %v2409
    %vm2417 = vmor %vm2415, %vm2416
    %v2418 = vsel %vm2417, %v2409, %v2414
    %v2419 = vrsqrt.pop %v2376
    %v2420 = vmul.f32 %v2419, %v2376
    %v2421 = vmul.f32 %v2420, %v2419
    %v2422 = vmul.f32 0.5, %v2421
    %v2423 = vsub.f32 1.5, %v2422
    %v2424 = vmul.f32 %v2419, %v2423
    %vm2425 = vweird.f32 %v2376
    %vm2426 = vweird.f32 %v2419
    %vm2427 = vmor %vm2425, %vm2426
    %v2428 = vsel %vm2427, %v2419, %v2424
    %v2429 = vrsqrt.pop %v2377
    %v2430 = vmul.f32 %v2429, %v2377
    %v2431 = vmul.f32 %v2430, %v2429
    %v2432 = vmul.f32 0.5, %v2431
    %v2433 = vsub.f32 1.5, %v2432
    %v2434 = vmul.f32 %v2429, %v2433
    %vm2435 = vweird.f32 %v2377
    %vm2436 = vweird.f32 %v2429
    %vm2437 = vmor %vm2435, %vm2436
    %v2438 = vsel %vm2437, %v2429, %v2434
    %v2439 = vrsqrt.pop %v2378
    %v2440 = vmul.f32 %v2439, %v2378
    %v2441 = vmul.f32 %v2440, %v2439
    %v2442 = vmul.f32 0.5, %v2441
    %v2443 = vsub.f32 1.5, %v2442
    %v2444 = vmul.f32 %v2439, %v2443
    %vm2445 = vweird.f32 %v2378
    %vm2446 = vweird.f32 %v2439
    %vm2447 = vmor %vm2445, %vm2446
    %v2448 = vsel %vm2447, %v2439, %v2444
    %v2449 = vrsqrt.pop %v2379
    %v2450 = vmul.f32 %v2449, %v2379
    %v2451 = vmul.f32 %v2450, %v2449
    %v2452 = vmul.f32 0.5, %v2451
    %v2453 = vsub.f32 1.5, %v2452
    %v2454 = vmul.f32 %v2449, %v2453
    %vm2455 = vweird.f32 %v2379
    %vm2456 = vweird.f32 %v2449
    %vm2457 = vmor %vm2455, %vm2456
    %v2458 = vsel %vm2457, %v2449, %v2454
    %v2459 = vrsqrt.pop %v2380
    %v2460 = vmul.f32 %v2459, %v2380
    %v2461 = vmul.f32 %v2460, %v2459
    %v2462 = vmul.f32 0.5, %v2461
    %v2463 = vsub.f32 1.5, %v2462
    %v2464 = vmul.f32 %v2459, %v2463
    %vm2465 = vweird.f32 %v2380
    %vm2466 = vweird.f32 %v2459
    %vm2467 = vmor %vm2465, %vm2466
    %v2468 = vsel %vm2467, %v2459, %v2464
    %v2469 = vrsqrt.pop %v2381
    %v2470 = vmul.f32 %v2469, %v2381
    %v2471 = vmul.f32 %v2470, %v2469
    %v2472 = vmul.f32 0.5, %v2471
    %v2473 = vsub.f32 1.5, %v2472
    %v2474 = vmul.f32 %v2469, %v2473
    %vm2475 = vweird.f32 %v2381
    %vm2476 = vweird.f32 %v2469
    %vm2477 = vmor %vm2475, %vm2476
    %v2478 = vsel %vm2477, %v2469, %v2474
    %v2479 = vrsqrt.pop %v2382
    %v2480 = vmul.f32 %v2479, %v2382
    %v2481 = vmul.f32 %v2480, %v2479
    %v2482 = vmul.f32 0.5, %v2481
    %v2483 = vsub.f32 1.5, %v2482
    %v2484 = vmul.f32 %v2479, %v2483
    %vm2485 = vweird.f32 %v2382
    %vm2486 = vweird.f32 %v2479
    %vm2487 = vmor %vm2485, %vm2486
    %v2488 = vsel %vm2487, %v2479, %v2484
    %v2489 = vrsqrt.pop %v2383
    %v2490 = vmul.f32 %v2489, %v2383
    %v2491 = vmul.f32 %v2490, %v2489
    %v2492 = vmul.f32 0.5, %v2491
    %v2493 = vsub.f32 1.5, %v2492
    %v2494 = vmul.f32 %v2489, %v2493
    %vm2495 = vweird.f32 %v2383
    %vm2496 = vweird.f32 %v2489
    %vm2497 = vmor %vm2495, %vm2496
    %v2498 = vsel %vm2497, %v2489, %v2494
    %v2499 = vrsqrt.pop %v2384
    %v2500 = vmul.f32 %v2499, %v2384
    %v2501 = vmul.f32 %v2500, %v2499
    %v2502 = vmul.f32 0.5, %v2501
    %v2503 = vsub.f32 1.5, %v2502
    %v2504 = vmul.f32 %v2499, %v2503
    %vm2505 = vweird.f32 %v2384
    %vm2506 = vweird.f32 %v2499
    %vm2507 = vmor %vm2505, %vm2506
    %v2508 = vsel %vm2507, %v2499, %v2504
    %v2509 = vrsqrt.pop %v2385
    %v2510 = vmul.f32 %v2509, %v2385
    %v2511 = vmul.f32 %v2510, %v2509
    %v2512 = vmul.f32 0.5, %v2511
    %v2513 = vsub.f32 1.5, %v2512
    %v2514 = vmul.f32 %v2509, %v2513
    %vm2515 = vweird.f32 %v2385
    %vm2516 = vweird.f32 %v2509
    %vm2517 = vmor %vm2515, %vm2516
    %v2518 = vsel %vm2517, %v2509, %v2514
    %v2519 = vrsqrt.pop %v2386
    %v2520 = vmul.f32 %v2519, %v2386
    %v2521 = vmul.f32 %v2520, %v2519
    %v2522 = vmul.f32 0.5, %v2521
    %v2523 = vsub.f32 1.5, %v2522
    %v2524 = vmul.f32 %v2519, %v2523
    %vm2525 = vweird.f32 %v2386
    %vm2526 = vweird.f32 %v2519
    %vm2527 = vmor %vm2525, %vm2526
    %v2528 = vsel %vm2527, %v2519, %v2524
    %v2529 = vrsqrt.pop %v2387
    %v2530 = vmul.f32 %v2529, %v2387
    %v2531 = vmul.f32 %v2530, %v2529
    %v2532 = vmul.f32 0.5, %v2531
    %v2533 = vsub.f32 1.5, %v2532
    %v2534 = vmul.f32 %v2529, %v2533
    %vm2535 = vweird.f32 %v2387
    %vm2536 = vweird.f32 %v2529
    %vm2537 = vmor %vm2535, %vm2536
    %v2538 = vsel %vm2537, %v2529, %v2534
    %v2539 = vrsqrt.pop %v2388
    %v2540 = vmul.f32 %v2539, %v2388
    %v2541 = vmul.f32 %v2540, %v2539
    %v2542 = vmul.f32 0.5, %v2541
    %v2543 = vsub.f32 1.5, %v2542
    %v2544 = vmul.f32 %v2539, %v2543
    %vm2545 = vweird.f32 %v2388
    %vm2546 = vweird.f32 %v2539
    %vm2547 = vmor %vm2545, %vm2546
    %v2548 = vsel %vm2547, %v2539, %v2544
    %v2549 = vmul.f32 %v2277, %v2398
    %v2550 = vmul.f32 %v2278, %v2408
    %v2551 = vmul.f32 %v2279, %v2418
    %v2552 = vmul.f32 %v2280, %v2428
    %v2553 = vmul.f32 %v2281, %v2438
    %v2554 = vmul.f32 %v2282, %v2448
    %v2555 = vmul.f32 %v2283, %v2458
    %v2556 = vmul.f32 %v2284, %v2468
    %v2557 = vmul.f32 %v2285, %v2478
    %v2558 = vmul.f32 %v2286, %v2488
    %v2559 = vmul.f32 %v2287, %v2498
    %v2560 = vmul.f32 %v2288, %v2508
    %v2561 = vmul.f32 %v2289, %v2518
    %v2562 = vmul.f32 %v2290, %v2528
    %v2563 = vmul.f32 %v2291, %v2538
    %v2564 = vmul.f32 %v2292, %v2548
    %v2566 = vperm.slane %v2204, 0
    %v2568 = vmul.f32 %v2549, %v2566
    %v2569 = vmul.f32 %v2550, %v2566
    %v2570 = vmul.f32 %v2551, %v2566
    %v2571 = vmul.f32 %v2552, %v2566
    %v2572 = vmul.f32 %v2553, %v2566
    %v2573 = vmul.f32 %v2554, %v2566
    %v2574 = vmul.f32 %v2555, %v2566
    %v2575 = vmul.f32 %v2556, %v2566
    %v2576 = vmul.f32 %v2557, %v2566
    %v2577 = vmul.f32 %v2558, %v2566
    %v2578 = vmul.f32 %v2559, %v2566
    %v2579 = vmul.f32 %v2560, %v2566
    %v2580 = vmul.f32 %v2561, %v2566
    %v2581 = vmul.f32 %v2562, %v2566
    %v2582 = vmul.f32 %v2563, %v2566
    %v2583 = vmul.f32 %v2564, %v2566
    %v2585 = vperm.slane %v2205, 0
    %v2587 = vadd.f32 %v2568, %v2585
    %v2588 = vadd.f32 %v2569, %v2585
    %v2589 = vadd.f32 %v2570, %v2585
    %v2590 = vadd.f32 %v2571, %v2585
    %v2591 = vadd.f32 %v2572, %v2585
    %v2592 = vadd.f32 %v2573, %v2585
    %v2593 = vadd.f32 %v2574, %v2585
    %v2594 = vadd.f32 %v2575, %v2585
    %v2595 = vadd.f32 %v2576, %v2585
    %v2596 = vadd.f32 %v2577, %v2585
    %v2597 = vadd.f32 %v2578, %v2585
    %v2598 = vadd.f32 %v2579, %v2585
    %v2599 = vadd.f32 %v2580, %v2585
    %v2600 = vadd.f32 %v2581, %v2585
    %v2601 = vadd.f32 %v2582, %v2585
    %v2602 = vadd.f32 %v2583, %v2585
    %v2603 = vld [vmem:[%s1] sm:$0xff]
    %v2604 = vld [vmem:[%s4] sm:$0xff]
    %2605 = vmatpush.msra.mxu0 %v2602
    %2606 = vmatpush.msra.mxu0 %v2601
    %2607 = vmatpush.msra.mxu0 %v2600
    %2608 = vmatpush.msra.mxu0 %v2599
    %2609 = vmatpush.msra.mxu0 %v2598
    %2610 = vmatpush.msra.mxu0 %v2597
    %2611 = vmatpush.msra.mxu0 %v2596
    %2612 = vmatpush.msra.mxu0 %v2595
    %2613 = vmatpush.msra.mxu0 %v2594
    %2614 = vmatpush.msra.mxu0 %v2593
    %2615 = vmatpush.msra.mxu0 %v2592
    %2616 = vmatpush.msra.mxu0 %v2591
    %2617 = vmatpush.msra.mxu0 %v2590
    %2618 = vmatpush.msra.mxu0 %v2589
    %2619 = vmatpush.msra.mxu0 %v2588
    %2620 = vmatpush.msra.mxu0 %v2587
    %2621 = vmatmul.f32.gmra.mxu0 %v2604
    %v2622 = vpop.f32.mrf.mxu0
    %v2623 = vadd.f32 0.0, %v2622
    %2624 = vdwg.mxu0
    %2626 = vset.pattern.permute.xlu0 0
    %2627 = vperm.xlu0 %2626, %v2603
    %v2628 = vpop.permute.xlu0 %2627
    %v2630 = vmul.f32 %v2623, %v2628
    %2631 = vst.msk [vmem:[%s20] sm:$0xff] %vm738, %v2630
    %v2632 = vld [vmem:[%s5] sm:$0xff]
    %2633 = vmatpush.msra.mxu0 %v2602
    %2634 = vmatpush.msra.mxu0 %v2601
    %2635 = vmatpush.msra.mxu0 %v2600
    %2636 = vmatpush.msra.mxu0 %v2599
    %2637 = vmatpush.msra.mxu0 %v2598
    %2638 = vmatpush.msra.mxu0 %v2597
    %2639 = vmatpush.msra.mxu0 %v2596
    %2640 = vmatpush.msra.mxu0 %v2595
    %2641 = vmatpush.msra.mxu0 %v2594
    %2642 = vmatpush.msra.mxu0 %v2593
    %2643 = vmatpush.msra.mxu0 %v2592
    %2644 = vmatpush.msra.mxu0 %v2591
    %2645 = vmatpush.msra.mxu0 %v2590
    %2646 = vmatpush.msra.mxu0 %v2589
    %2647 = vmatpush.msra.mxu0 %v2588
    %2648 = vmatpush.msra.mxu0 %v2587
    %2649 = vmatmul.f32.gmra.mxu0 %v2632
    %v2650 = vpop.f32.mrf.mxu0
    %v2651 = vadd.f32 0.0, %v2650
    %2652 = vdwg.mxu0
    %v2653 = vmul.f32 %v2651, %v2628
    %2654 = vst.msk [vmem:[%s21] sm:$0xff] %vm738, %v2653
    // Predicated region
    $region90: #{forward.3} parent=1 // pred_check
      _
    $region91: #{forward.3} parent=1 // pred_check_branch
      %2656 = sbr.rel (0) target = $region93
    $region92: #{forward.3} parent=1 // pred_region
      _
    $region93: #{forward.3} parent=1 // pred_fallthru
      _
    // Predicated region
    $region94: #{forward.3} parent=1 // pred_check
      _
    $region95: #{forward.3} parent=1 // pred_check_branch
      %2658 = sbr.rel (0) target = $region97
    $region96: #{forward.3} parent=1 // pred_region
      _
    $region97: #{forward.3} parent=1 // pred_fallthru
      _
    // Predicated region
    $region98: #{forward.3} parent=1 // pred_check
      _
    $region99: #{forward.3} parent=1 // pred_check_branch
      %2660 = sbr.rel (0) target = $region101
    $region100: #{forward.3} parent=1 // pred_region
      _
    $region101: #{forward.3} parent=1 // pred_fallthru
      _
    // Predicated region
    $region102: #{forward.3} parent=1 // pred_check
      _
    $region103: #{forward.3} parent=1 // pred_check_branch
      %2662 = sbr.rel (0) target = $region105
    $region104: #{forward.3} parent=1 // pred_region
      _
    $region105: #{forward.3} parent=1 // pred_fallthru
      _
    %2663 = vsyncpa [#allocation3], 1
    %2664 = vsyncpa [#allocation5], 1

// kernel: forward.5
$region0: #{forward.5}
  #allocation0 [shape = 'u32[]', space=smem, size = 0x4, offset = 0x4, fixed_abs, tag = 'smem constant byte address 0x4 - core index']
  #allocation1 [shape = 'u32[72,128]{1,0:T(1,128)}', space=vmem, size = 0x9000, scoped, tag = 'internal scratch']
  #allocation2 [shape = 'f32[1,1]{1,0:T(1,128)S(1)}', space=vmem, size = 0x200, scoped, tag = 'scoped memory for forward.5']
  %s0 = inlined_call_operand.vmem [shape: f32[8,32], index: 0, kind: input, shape index: {}]
  %s1 = inlined_call_operand.vmem [shape: f32[8,32], index: 1, kind: input, shape index: {}]
  %s2 = inlined_call_operand.vmem [shape: f32[8,1], index: 2, kind: input, shape index: {}]
  %s3 = inlined_call_operand.vmem [shape: f32[8,1], index: 3, kind: input, shape index: {}]
  %s4 = inlined_call_operand.vmem [shape: f32[2,8], index: 4, kind: input, shape index: {}]
  %s5 = inlined_call_operand.vmem [shape: f32[8,2], index: 5, kind: input, shape index: {}]
  %s6 = inlined_call_operand.vmem [shape: f32[1,32], index: 6, kind: input, shape index: {}]
  %s7 = inlined_call_operand.vmem [shape: f32[1,32], index: 7, kind: input, shape index: {}]
  %s8 = inlined_call_operand.vmem [shape: f32[64,4], index: 8, kind: input, shape index: {}]
  %s9 = inlined_call_operand.vmem [shape: f32[1,4], index: 9, kind: input, shape index: {}]
  %s10 = inlined_call_operand.vmem [shape: f32[64,4], index: 10, kind: input, shape index: {}]
  %s11 = inlined_call_operand.vmem [shape: f32[1,4], index: 11, kind: input, shape index: {}]
  %s12 = inlined_call_operand.vmem [shape: f32[32,4], index: 12, kind: input, shape index: {}]
  %s13 = inlined_call_operand.vmem [shape: f32[1,4], index: 13, kind: input, shape index: {}]
  %s14 = inlined_call_operand.vmem [shape: f32[32,128], index: 14, kind: input, shape index: {}]
  %s15 = inlined_call_operand.vmem [shape: f32[1,128], index: 15, kind: input, shape index: {}]
  %s16 = inlined_call_operand.vmem [shape: f32[4,32,32], index: 16, kind: input, shape index: {}]
  %s17 = inlined_call_operand.vmem [shape: f32[4,1,32], index: 17, kind: input, shape index: {}]
  %s18 = inlined_call_operand.vmem [shape: f32[96,3], index: 18, kind: input, shape index: {}]
  %s19 = inlined_call_operand.vmem [shape: f32[1,3], index: 19, kind: input, shape index: {}]
  %s20 = inlined_call_operand.vmem [shape: f32[32,2], index: 20, kind: input, shape index: {}]
  %s21 = inlined_call_operand.vmem [shape: f32[1,2], index: 21, kind: input, shape index: {}]
  %s22 = inlined_call_operand.vmem [shape: f32[96,1], index: 22, kind: input, shape index: {}]
  %s23 = inlined_call_operand.<no memory space> [shape: f32[1,1], index: 23, kind: input, shape index: {}]
  %s24 = inlined_call_operand.vmem [shape: f32[8,3], index: 24, kind: output, shape index: {0}]
  %s25 = inlined_call_operand.hbm [shape: f32[2,2], index: 25, kind: output, shape index: {1}]
  %s26 = inlined_call_operand.vmem [shape: f32[8,1], index: 26, kind: output, shape index: {2}]
  %s27 = inlined_call_operand.hbm [shape: f32[1,1], index: 27, kind: output, shape index: {3}]
  %28 = xla_tuple %s24, %s25, %s26, %s27
  %s29 = sld [smem:[#allocation0]]
  $region130: #{forward.5} parent=0
    _
  %s31 = ssub.s32 1, %s29
  %s32 = scalar_select 0, %s31, %s29
  %v33 = vstv %s23
  %34 = vst [vmem:[#allocation2] sm:$0x1] %v33
  $region1: #{forward.5} parent=0
    #allocation3 [shape = 'u8[1024]{0}', space=vmem, size = 0x400, scoped, tag = 'output window, operand 1, single buffered']
    #allocation4 [shape = 's32[1]{0}', space=sflag, size = 0x4, scoped, tag = 'scoped memory for forward.5']
    #allocation5 [shape = 'u8[512]{0}', space=vmem, size = 0x400, scoped, tag = 'output window, operand 3, single buffered']
    #allocation6 [shape = 's32[1]{0}', space=sflag, size = 0x4, scoped, tag = 'scoped memory for forward.5']
    %35 = vsyncpa [#allocation4], 0
    %36 = vsyncpa [#allocation6], 0
    // Predicated region
    $region2: #{forward.5} parent=1 // pred_check
      _
    $region3: #{forward.5} parent=1 // pred_check_branch
      %38 = sbr.rel (0) target = $region5
    $region4: #{forward.5} parent=1 // pred_region
      _
    $region5: #{forward.5} parent=1 // pred_fallthru
      _
    // Predicated region
    $region6: #{forward.5} parent=1 // pred_check
      _
    $region7: #{forward.5} parent=1 // pred_check_branch
      %40 = sbr.rel (0) target = $region9
    $region8: #{forward.5} parent=1 // pred_region
      _
    $region9: #{forward.5} parent=1 // pred_fallthru
      _
    // Predicated region
    $region10: #{forward.5} parent=1 // pred_check
      _
    $region11: #{forward.5} parent=1 // pred_check_branch
      %42 = sbr.rel (0) target = $region13
    $region12: #{forward.5} parent=1 // pred_region
      _
    $region13: #{forward.5} parent=1 // pred_fallthru
      _
    // Predicated region
    $region14: #{forward.5} parent=1 // pred_check
      _
    $region15: #{forward.5} parent=1 // pred_check_branch
      %44 = sbr.rel (0) target = $region17
    $region16: #{forward.5} parent=1 // pred_region
      _
    $region17: #{forward.5} parent=1 // pred_fallthru
      _
    // Predicated region
    $region18: #{forward.5} parent=1 // pred_check
      _
    $region19: #{forward.5} parent=1 // pred_check_branch
      %46 = sbr.rel (0) target = $region21
    $region20: #{forward.5} parent=1 // pred_region
      _
    $region21: #{forward.5} parent=1 // pred_fallthru
      _
    // Predicated region
    $region22: #{forward.5} parent=1 // pred_check
      _
    $region23: #{forward.5} parent=1 // pred_check_branch
      %48 = sbr.rel (0) target = $region25
    $region24: #{forward.5} parent=1 // pred_region
      _
    $region25: #{forward.5} parent=1 // pred_fallthru
      _
    // Predicated region
    $region26: #{forward.5} parent=1 // pred_check
      _
    $region27: #{forward.5} parent=1 // pred_check_branch
      %50 = sbr.rel (0) target = $region29
    $region28: #{forward.5} parent=1 // pred_region
      _
    $region29: #{forward.5} parent=1 // pred_fallthru
      _
    // Predicated region
    $region30: #{forward.5} parent=1 // pred_check
      _
    $region31: #{forward.5} parent=1 // pred_check_branch
      %52 = sbr.rel (0) target = $region33
    $region32: #{forward.5} parent=1 // pred_region
      _
    $region33: #{forward.5} parent=1 // pred_fallthru
      _
    // Predicated region
    $region34: #{forward.5} parent=1 // pred_check
      _
    $region35: #{forward.5} parent=1 // pred_check_branch
      %54 = sbr.rel (0) target = $region37
    $region36: #{forward.5} parent=1 // pred_region
      _
    $region37: #{forward.5} parent=1 // pred_fallthru
      _
    // Predicated region
    $region38: #{forward.5} parent=1 // pred_check
      _
    $region39: #{forward.5} parent=1 // pred_check_branch
      %56 = sbr.rel (0) target = $region41
    $region40: #{forward.5} parent=1 // pred_region
      _
    $region41: #{forward.5} parent=1 // pred_fallthru
      _
    // Predicated region
    $region42: #{forward.5} parent=1 // pred_check
      _
    $region43: #{forward.5} parent=1 // pred_check_branch
      %58 = sbr.rel (0) target = $region45
    $region44: #{forward.5} parent=1 // pred_region
      _
    $region45: #{forward.5} parent=1 // pred_fallthru
      _
    // Predicated region
    $region46: #{forward.5} parent=1 // pred_check
      _
    $region47: #{forward.5} parent=1 // pred_check_branch
      %60 = sbr.rel (0) target = $region49
    $region48: #{forward.5} parent=1 // pred_region
      _
    $region49: #{forward.5} parent=1 // pred_fallthru
      _
    // Predicated region
    $region50: #{forward.5} parent=1 // pred_check
      _
    $region51: #{forward.5} parent=1 // pred_check_branch
      %62 = sbr.rel (0) target = $region53
    $region52: #{forward.5} parent=1 // pred_region
      _
    $region53: #{forward.5} parent=1 // pred_fallthru
      _
    // Predicated region
    $region54: #{forward.5} parent=1 // pred_check
      _
    $region55: #{forward.5} parent=1 // pred_check_branch
      %64 = sbr.rel (0) target = $region57
    $region56: #{forward.5} parent=1 // pred_region
      _
    $region57: #{forward.5} parent=1 // pred_fallthru
      _
    // Predicated region
    $region58: #{forward.5} parent=1 // pred_check
      _
    $region59: #{forward.5} parent=1 // pred_check_branch
      %66 = sbr.rel (0) target = $region61
    $region60: #{forward.5} parent=1 // pred_region
      _
    $region61: #{forward.5} parent=1 // pred_fallthru
      _
    // Predicated region
    $region62: #{forward.5} parent=1 // pred_check
      _
    $region63: #{forward.5} parent=1 // pred_check_branch
      %68 = sbr.rel (0) target = $region65
    $region64: #{forward.5} parent=1 // pred_region
      _
    $region65: #{forward.5} parent=1 // pred_fallthru
      _
    // Predicated region
    $region66: #{forward.5} parent=1 // pred_check
      _
    $region67: #{forward.5} parent=1 // pred_check_branch
      %70 = sbr.rel (0) target = $region69
    $region68: #{forward.5} parent=1 // pred_region
      _
    $region69: #{forward.5} parent=1 // pred_fallthru
      _
    // Predicated region
    $region70: #{forward.5} parent=1 // pred_check
      _
    $region71: #{forward.5} parent=1 // pred_check_branch
      %72 = sbr.rel (0) target = $region73
    $region72: #{forward.5} parent=1 // pred_region
      _
    $region73: #{forward.5} parent=1 // pred_fallthru
      _
    // Predicated region
    $region74: #{forward.5} parent=1 // pred_check
      _
    $region75: #{forward.5} parent=1 // pred_check_branch
      %74 = sbr.rel (0) target = $region77
    $region76: #{forward.5} parent=1 // pred_region
      _
    $region77: #{forward.5} parent=1 // pred_fallthru
      _
    // Predicated region
    $region78: #{forward.5} parent=1 // pred_check
      _
    $region79: #{forward.5} parent=1 // pred_check_branch
      %76 = sbr.rel (0) target = $region81
    $region80: #{forward.5} parent=1 // pred_region
      _
    $region81: #{forward.5} parent=1 // pred_fallthru
      _
    // Predicated region
    $region82: #{forward.5} parent=1 // pred_check
      _
    $region83: #{forward.5} parent=1 // pred_check_branch
      %78 = sbr.rel (0) target = $region85
    $region84: #{forward.5} parent=1 // pred_region
      _
    $region85: #{forward.5} parent=1 // pred_fallthru
      _
    // Predicated region
    $region86: #{forward.5} parent=1 // pred_check
      _
    $region87: #{forward.5} parent=1 // pred_check_branch
      %80 = sbr.rel (0) target = $region89
    $region88: #{forward.5} parent=1 // pred_region
      _
    $region89: #{forward.5} parent=1 // pred_fallthru
      _
    // Predicated region
    $region90: #{forward.5} parent=1 // pred_check
      _
    $region91: #{forward.5} parent=1 // pred_check_branch
      %82 = sbr.rel (0) target = $region93
    $region92: #{forward.5} parent=1 // pred_region
      _
    $region93: #{forward.5} parent=1 // pred_fallthru
      _
    // Predicated region
    $region94: #{forward.5} parent=1 // pred_check
      _
    $region95: #{forward.5} parent=1 // pred_check_branch
      %84 = sbr.rel (0) target = $region97
    $region96: #{forward.5} parent=1 // pred_region
      _
    $region97: #{forward.5} parent=1 // pred_fallthru
      _
    %v85 = vld [vmem:[%s2] sm:$0xff]
    %v86 = vld [vmem:[%s0] sm:$0xff]
    %v87 = vld [vmem:[%s6] sm:$0x1]
    %v88 = vld [vmem:[%s7] sm:$0x1]
    %vm89 = vcmask 261120
    %v90 = vsel %vm89, %v86, 0.0
    %91 = vadd.xlane.f32.xlu0 %v90
    %v92 = vpop.xlane.xlu0 %91
    %v93 = vrcp.pop 32.0
    %v94 = vmul.f32 32.0, %v93
    %v95 = vsub.f32 1.0, %v94
    %v96 = vmul.f32 %v93, %v95
    %v97 = vadd.f32 %v93, %v96
    %vm98 = vweird.f32 %v93
    %v99 = vsel %vm98, %v93, %v97
    %v100 = vmul.f32 %v92, %v99
    %v101 = vsub.f32 %v86, %v100
    %v102 = vmul.f32 %v101, %v101
    %v103 = vsel %vm89, %v102, 0.0
    %104 = vadd.xlane.f32.xlu0 %v103
    %v105 = vpop.xlane.xlu0 %104
    %v106 = vmul.f32 %v105, %v99
    %v107 = vadd.f32 %v106, 1e-05
    %v108 = vrsqrt.pop %v107
    %v109 = vmul.f32 %v108, %v107
    %v110 = vmul.f32 %v109, %v108
    %v111 = vmul.f32 0.5, %v110
    %v112 = vsub.f32 1.5, %v111
    %v113 = vmul.f32 %v108, %v112
    %vm114 = vweird.f32 %v107
    %vm115 = vweird.f32 %v108
    %vm116 = vmor %vm114, %vm115
    %v117 = vsel %vm116, %v108, %v113
    %v118 = vmul.f32 %v101, %v117
    %v120 = vperm.slane %v87, 0
    %v122 = vmul.f32 %v118, %v120
    %v124 = vperm.slane %v88, 0
    %v126 = vadd.f32 %v122, %v124
    %128 = vset.pattern.permute.xlu0 0
    %129 = vperm.xlu0 %128, %v85
    %v130 = vpop.permute.xlu0 %129
    %v132 = vmul.f32 %v126, %v130
    %v133 = vld [vmem:[%s4] sm:$0x3]
    %vm134 = vcmask 64512
    %v136 = vsel %vm134, %v133, 0
    %138 = vmatpush.msra.mxu0 0.0
    %139 = vmatpush.msra.mxu0 0.0
    %140 = vmatpush.msra.mxu0 0.0
    %141 = vmatpush.msra.mxu0 0.0
    %142 = vmatpush.msra.mxu0 0.0
    %143 = vmatpush.msra.mxu0 0.0
    %144 = vmatpush.msra.mxu0 0.0
    %145 = vmatpush.msra.mxu0 0.0
    %146 = vmatpush.msra.mxu0 0.0
    %147 = vmatpush.msra.mxu0 0.0
    %148 = vmatpush.msra.mxu0 0.0
    %149 = vmatpush.msra.mxu0 0.0
    %150 = vmatpush.msra.mxu0 0.0
    %151 = vmatpush.msra.mxu0 0.0
    %152 = vmatpush.msra.mxu0 0.0
    %153 = vmatpush.msra.mxu0 %v85
    %154 = vmatmul.f32.gmra.mxu0 %v136
    %v155 = vpop.f32.mrf.mxu0
    %v156 = vadd.f32 0.0, %v155
    %157 = vdwg.mxu0
    %v158 = vmax.f32 %v156, 1.0
    %159 = vmatpush.msra.mxu0 0.0
    %160 = vmatpush.msra.mxu0 0.0
    %161 = vmatpush.msra.mxu0 0.0
    %162 = vmatpush.msra.mxu0 0.0
    %163 = vmatpush.msra.mxu0 0.0
    %164 = vmatpush.msra.mxu0 0.0
    %165 = vmatpush.msra.mxu0 0.0
    %166 = vmatpush.msra.mxu0 0.0
    %167 = vmatpush.msra.mxu0 0.0
    %168 = vmatpush.msra.mxu0 0.0
    %169 = vmatpush.msra.mxu0 0.0
    %170 = vmatpush.msra.mxu0 0.0
    %171 = vmatpush.msra.mxu0 0.0
    %172 = vmatpush.msra.mxu0 0.0
    %173 = vmatpush.msra.mxu0 0.0
    %174 = vmatpush.msra.mxu0 %v132
    %175 = vmatmul.f32.gmra.mxu0 %v136
    %v176 = vpop.f32.mrf.mxu0
    %v177 = vadd.f32 0.0, %v176
    %178 = vdwg.mxu0
    %180 = vset.pattern.permute.xlu0 0
    %181 = vperm.xlu0 %180, %v158
    %v182 = vpop.permute.xlu0 %181
    %v184 = vrcp.pop %v182
    %v185 = vmul.f32 %v182, %v184
    %v186 = vsub.f32 1.0, %v185
    %v187 = vmul.f32 %v184, %v186
    %v188 = vadd.f32 %v184, %v187
    %vm189 = vweird.f32 %v182
    %vm190 = vweird.f32 %v184
    %vm191 = vmor %vm189, %vm190
    %v192 = vsel %vm191, %v184, %v188
    %v193 = vand.u32 2147483647, %v182
    %vm194 = vcmp.eq.f32.partialorder %v193, 8.507059e+37
    %v195 = vand.u32 %v182, 2147483648
    %v196 = vor.u32 1.1754944e-38, %v195
    %v197 = vsel %vm194, %v196, %v192
    %v198 = vmul.f32 %v177, %v197
    %v199 = vmul.f32 %v132, %v132
    %v200 = vmul.f32 %v199, %v130
    %201 = vmatpush.msra.mxu0 0.0
    %202 = vmatpush.msra.mxu0 0.0
    %203 = vmatpush.msra.mxu0 0.0
    %204 = vmatpush.msra.mxu0 0.0
    %205 = vmatpush.msra.mxu0 0.0
    %206 = vmatpush.msra.mxu0 0.0
    %207 = vmatpush.msra.mxu0 0.0
    %208 = vmatpush.msra.mxu0 0.0
    %209 = vmatpush.msra.mxu0 0.0
    %210 = vmatpush.msra.mxu0 0.0
    %211 = vmatpush.msra.mxu0 0.0
    %212 = vmatpush.msra.mxu0 0.0
    %213 = vmatpush.msra.mxu0 0.0
    %214 = vmatpush.msra.mxu0 0.0
    %215 = vmatpush.msra.mxu0 0.0
    %216 = vmatpush.msra.mxu0 %v200
    %217 = vmatmul.f32.gmra.mxu0 %v136
    %v218 = vpop.f32.mrf.mxu0
    %v219 = vadd.f32 0.0, %v218
    %220 = vdwg.mxu0
    %v221 = vmul.f32 %v219, %v197
    %v222 = vmul.f32 %v198, %v198
    %v223 = vsub.f32 %v221, %v222
    %v224 = vmax.f32 %v223, 1e-06
    %v225 = vrsqrt.pop %v224
    %v226 = vmul.f32 %v225, %v224
    %v227 = vmul.f32 %v226, %v225
    %v228 = vmul.f32 0.5, %v227
    %v229 = vsub.f32 1.5, %v228
    %v230 = vmul.f32 %v225, %v229
    %v231 = vmul.f32 %v224, %v230
    %vm232 = vcmp.eq.f32.partialorder %v224, inf
    %v233 = vsel %vm232, %v224, %v231
    %vm234 = vcmp.eq.f32.partialorder %v224, 0.0
    %v235 = vand.u32 %v224, 2147483648
    %v236 = vsel %vm234, %v235, %v233
    %v237 = vld [vmem:[%s8] sm:$0xff]
    %v238 = vld [vmem:[%s8 + $0x8] sm:$0xff]
    %v239 = vld [vmem:[%s8 + $0x10] sm:$0xff]
    %v240 = vld [vmem:[%s8 + $0x18] sm:$0xff]
    %v241 = vld [vmem:[%s8 + $0x20] sm:$0xff]
    %v242 = vld [vmem:[%s8 + $0x28] sm:$0xff]
    %v243 = vld [vmem:[%s8 + $0x30] sm:$0xff]
    %v244 = vld [vmem:[%s8 + $0x38] sm:$0xff]
    %v245 = vld [vmem:[%s10] sm:$0xff]
    %v246 = vld [vmem:[%s10 + $0x8] sm:$0xff]
    %v247 = vld [vmem:[%s10 + $0x10] sm:$0xff]
    %v248 = vld [vmem:[%s10 + $0x18] sm:$0xff]
    %v249 = vld [vmem:[%s10 + $0x20] sm:$0xff]
    %v250 = vld [vmem:[%s10 + $0x28] sm:$0xff]
    %v251 = vld [vmem:[%s10 + $0x30] sm:$0xff]
    %v252 = vld [vmem:[%s10 + $0x38] sm:$0xff]
    %v254 = vsel %vm89, %v236, 0
    %256 = vmatpush.msra.mxu0 0.0
    %257 = vmatpush.msra.mxu0 0.0
    %258 = vmatpush.msra.mxu0 0.0
    %259 = vmatpush.msra.mxu0 0.0
    %260 = vmatpush.msra.mxu0 0.0
    %261 = vmatpush.msra.mxu0 0.0
    %262 = vmatpush.msra.mxu0 0.0
    %263 = vmatpush.msra.mxu0 0.0
    %264 = vmatpush.msra.mxu0 0.0
    %265 = vmatpush.msra.mxu0 0.0
    %266 = vmatpush.msra.mxu0 0.0
    %267 = vmatpush.msra.mxu0 0.0
    %268 = vmatpush.msra.mxu0 %v244
    %269 = vmatpush.msra.mxu0 %v243
    %270 = vmatpush.msra.mxu0 %v242
    %271 = vmatpush.msra.mxu0 %v241
    %272 = vmatmul.f32.gmra.mxu0 %v254
    %v273 = vpop.f32.mrf.mxu0
    %v274 = vadd.f32 0.0, %v273
    %275 = vdwg.mxu0
    %v277 = vsel %vm89, %v198, 0
    %279 = vmatpush.msra.mxu0 0.0
    %280 = vmatpush.msra.mxu0 0.0
    %281 = vmatpush.msra.mxu0 0.0
    %282 = vmatpush.msra.mxu0 0.0
    %283 = vmatpush.msra.mxu0 0.0
    %284 = vmatpush.msra.mxu0 0.0
    %285 = vmatpush.msra.mxu0 0.0
    %286 = vmatpush.msra.mxu0 0.0
    %287 = vmatpush.msra.mxu0 0.0
    %288 = vmatpush.msra.mxu0 0.0
    %289 = vmatpush.msra.mxu0 0.0
    %290 = vmatpush.msra.mxu0 0.0
    %291 = vmatpush.msra.mxu0 %v240
    %292 = vmatpush.msra.mxu0 %v239
    %293 = vmatpush.msra.mxu0 %v238
    %294 = vmatpush.msra.mxu0 %v237
    %295 = vmatmul.f32.gmra.mxu0 %v277
    %v296 = vpop.f32.mrf.mxu0
    %v297 = vadd.f32 %v274, %v296
    %298 = vdwg.mxu0
    %v299 = vld [vmem:[%s9] sm:$0x1]
    %v301 = vperm.slane %v299, 0
    %v303 = vadd.f32 %v297, %v301
    %304 = vmatpush.msra.mxu0 0.0
    %305 = vmatpush.msra.mxu0 0.0
    %306 = vmatpush.msra.mxu0 0.0
    %307 = vmatpush.msra.mxu0 0.0
    %308 = vmatpush.msra.mxu0 0.0
    %309 = vmatpush.msra.mxu0 0.0
    %310 = vmatpush.msra.mxu0 0.0
    %311 = vmatpush.msra.mxu0 0.0
    %312 = vmatpush.msra.mxu0 0.0
    %313 = vmatpush.msra.mxu0 0.0
    %314 = vmatpush.msra.mxu0 0.0
    %315 = vmatpush.msra.mxu0 0.0
    %316 = vmatpush.msra.mxu0 %v252
    %317 = vmatpush.msra.mxu0 %v251
    %318 = vmatpush.msra.mxu0 %v250
    %319 = vmatpush.msra.mxu0 %v249
    %320 = vmatmul.f32.gmra.mxu0 %v254
    %v321 = vpop.f32.mrf.mxu0
    %v322 = vadd.f32 0.0, %v321
    %323 = vdwg.mxu0
    %324 = vmatpush.msra.mxu0 0.0
    %325 = vmatpush.msra.mxu0 0.0
    %326 = vmatpush.msra.mxu0 0.0
    %327 = vmatpush.msra.mxu0 0.0
    %328 = vmatpush.msra.mxu0 0.0
    %329 = vmatpush.msra.mxu0 0.0
    %330 = vmatpush.msra.mxu0 0.0
    %331 = vmatpush.msra.mxu0 0.0
    %332 = vmatpush.msra.mxu0 0.0
    %333 = vmatpush.msra.mxu0 0.0
    %334 = vmatpush.msra.mxu0 0.0
    %335 = vmatpush.msra.mxu0 0.0
    %336 = vmatpush.msra.mxu0 %v248
    %337 = vmatpush.msra.mxu0 %v247
    %338 = vmatpush.msra.mxu0 %v246
    %339 = vmatpush.msra.mxu0 %v245
    %340 = vmatmul.f32.gmra.mxu0 %v277
    %v341 = vpop.f32.mrf.mxu0
    %v342 = vadd.f32 %v322, %v341
    %343 = vdwg.mxu0
    %v344 = vld [vmem:[%s11] sm:$0x1]
    %v346 = vperm.slane %v344, 0
    %v348 = vadd.f32 %v342, %v346
    %v349 = vld [vmem:[%s12] sm:$0xff]
    %v350 = vld [vmem:[%s12 + $0x8] sm:$0xff]
    %v351 = vld [vmem:[%s12 + $0x10] sm:$0xff]
    %v352 = vld [vmem:[%s12 + $0x18] sm:$0xff]
    %v353 = vld [vmem:[%s13] sm:$0x1]
    %v355 = vperm.slane %v353, 0
    %v358 = vsel %vm89, %v132, 0
    %360 = vmatpush.msra.mxu0 0.0
    %361 = vmatpush.msra.mxu0 0.0
    %362 = vmatpush.msra.mxu0 0.0
    %363 = vmatpush.msra.mxu0 0.0
    %364 = vmatpush.msra.mxu0 0.0
    %365 = vmatpush.msra.mxu0 0.0
    %366 = vmatpush.msra.mxu0 0.0
    %367 = vmatpush.msra.mxu0 0.0
    %368 = vmatpush.msra.mxu0 0.0
    %369 = vmatpush.msra.mxu0 0.0
    %370 = vmatpush.msra.mxu0 0.0
    %371 = vmatpush.msra.mxu0 0.0
    %372 = vmatpush.msra.mxu0 %v352
    %373 = vmatpush.msra.mxu0 %v351
    %374 = vmatpush.msra.mxu0 %v350
    %375 = vmatpush.msra.mxu0 %v349
    %376 = vmatmul.f32.gmra.mxu0 %v358
    %v377 = vpop.f32.mrf.mxu0
    %v378 = vadd.f32 %v355, %v377
    %379 = vdwg.mxu0
    %v380 = vld [vmem:[%s14] sm:$0xff]
    %v381 = vld [vmem:[%s14 + $0x8] sm:$0xff]
    %v382 = vld [vmem:[%s14 + $0x10] sm:$0xff]
    %v383 = vld [vmem:[%s14 + $0x18] sm:$0xff]
    %v384 = vld [vmem:[%s15] sm:$0x1]
    %v386 = vperm.slane %v384, 0
    %388 = vmatpush.msra.mxu0 0.0
    %389 = vmatpush.msra.mxu0 0.0
    %390 = vmatpush.msra.mxu0 0.0
    %391 = vmatpush.msra.mxu0 0.0
    %392 = vmatpush.msra.mxu0 0.0
    %393 = vmatpush.msra.mxu0 0.0
    %394 = vmatpush.msra.mxu0 0.0
    %395 = vmatpush.msra.mxu0 0.0
    %396 = vmatpush.msra.mxu0 0.0
    %397 = vmatpush.msra.mxu0 0.0
    %398 = vmatpush.msra.mxu0 0.0
    %399 = vmatpush.msra.mxu0 0.0
    %400 = vmatpush.msra.mxu0 %v383
    %401 = vmatpush.msra.mxu0 %v382
    %402 = vmatpush.msra.mxu0 %v381
    %403 = vmatpush.msra.mxu0 %v380
    %404 = vmatmul.f32.gmra.mxu0 %v277
    %v405 = vpop.f32.mrf.mxu0
    %v406 = vadd.f32 %v386, %v405
    %407 = vdwg.mxu0
    %v408 = vmax.f32 %v406, 0.0
    %v409 = vld [vmem:[%s16] sm:$0xff]
    %v410 = vld [vmem:[%s16 + $0x8] sm:$0xff]
    %v411 = vld [vmem:[%s16 + $0x10] sm:$0xff]
    %v412 = vld [vmem:[%s16 + $0x18] sm:$0xff]
    %v413 = vld [vmem:[%s17] sm:$0x1]
    %v415 = vperm.slane %v413, 0
    %v418 = vsel %vm89, %v408, 0
    %420 = vmatpush.msra.mxu0 0.0
    %421 = vmatpush.msra.mxu0 0.0
    %422 = vmatpush.msra.mxu0 0.0
    %423 = vmatpush.msra.mxu0 0.0
    %424 = vmatpush.msra.mxu0 0.0
    %425 = vmatpush.msra.mxu0 0.0
    %426 = vmatpush.msra.mxu0 0.0
    %427 = vmatpush.msra.mxu0 0.0
    %428 = vmatpush.msra.mxu0 0.0
    %429 = vmatpush.msra.mxu0 0.0
    %430 = vmatpush.msra.mxu0 0.0
    %431 = vmatpush.msra.mxu0 0.0
    %432 = vmatpush.msra.mxu0 %v412
    %433 = vmatpush.msra.mxu0 %v411
    %434 = vmatpush.msra.mxu0 %v410
    %435 = vmatpush.msra.mxu0 %v409
    %436 = vmatmul.f32.gmra.mxu0 %v418
    %v437 = vpop.f32.mrf.mxu0
    %v438 = vadd.f32 %v415, %v437
    %439 = vdwg.mxu0
    %s440 = scalar_lea.vmem %s16, 32
    %v441 = vld [vmem:[%s440] sm:$0xff]
    %v442 = vld [vmem:[%s440 + $0x8] sm:$0xff]
    %v443 = vld [vmem:[%s440 + $0x10] sm:$0xff]
    %v444 = vld [vmem:[%s440 + $0x18] sm:$0xff]
    %s445 = scalar_lea.vmem %s17, 1
    %v446 = vld [vmem:[%s445] sm:$0x1]
    %v448 = vperm.slane %v446, 0
    %450 = vrot.lane.b32.xlu0 %v408, 96
    %v451 = vpop.permute.xlu0 %450
    %v452 = vsel %vm89, %v451, 0
    %454 = vmatpush.msra.mxu0 0.0
    %455 = vmatpush.msra.mxu0 0.0
    %456 = vmatpush.msra.mxu0 0.0
    %457 = vmatpush.msra.mxu0 0.0
    %458 = vmatpush.msra.mxu0 0.0
    %459 = vmatpush.msra.mxu0 0.0
    %460 = vmatpush.msra.mxu0 0.0
    %461 = vmatpush.msra.mxu0 0.0
    %462 = vmatpush.msra.mxu0 0.0
    %463 = vmatpush.msra.mxu0 0.0
    %464 = vmatpush.msra.mxu0 0.0
    %465 = vmatpush.msra.mxu0 0.0
    %466 = vmatpush.msra.mxu0 %v444
    %467 = vmatpush.msra.mxu0 %v443
    %468 = vmatpush.msra.mxu0 %v442
    %469 = vmatpush.msra.mxu0 %v441
    %470 = vmatmul.f32.gmra.mxu0 %v452
    %v471 = vpop.f32.mrf.mxu0
    %v472 = vadd.f32 %v448, %v471
    %473 = vdwg.mxu0
    %s474 = scalar_lea.vmem %s16, 64
    %v475 = vld [vmem:[%s474] sm:$0xff]
    %v476 = vld [vmem:[%s474 + $0x8] sm:$0xff]
    %v477 = vld [vmem:[%s474 + $0x10] sm:$0xff]
    %v478 = vld [vmem:[%s474 + $0x18] sm:$0xff]
    %s479 = scalar_lea.vmem %s17, 2
    %v480 = vld [vmem:[%s479] sm:$0x1]
    %v482 = vperm.slane %v480, 0
    %484 = vrot.lane.b32.xlu0 %v408, 64
    %v485 = vpop.permute.xlu0 %484
    %v486 = vsel %vm89, %v485, 0
    %488 = vmatpush.msra.mxu0 0.0
    %489 = vmatpush.msra.mxu0 0.0
    %490 = vmatpush.msra.mxu0 0.0
    %491 = vmatpush.msra.mxu0 0.0
    %492 = vmatpush.msra.mxu0 0.0
    %493 = vmatpush.msra.mxu0 0.0
    %494 = vmatpush.msra.mxu0 0.0
    %495 = vmatpush.msra.mxu0 0.0
    %496 = vmatpush.msra.mxu0 0.0
    %497 = vmatpush.msra.mxu0 0.0
    %498 = vmatpush.msra.mxu0 0.0
    %499 = vmatpush.msra.mxu0 0.0
    %500 = vmatpush.msra.mxu0 %v478
    %501 = vmatpush.msra.mxu0 %v477
    %502 = vmatpush.msra.mxu0 %v476
    %503 = vmatpush.msra.mxu0 %v475
    %504 = vmatmul.f32.gmra.mxu0 %v486
    %v505 = vpop.f32.mrf.mxu0
    %v506 = vadd.f32 %v482, %v505
    %507 = vdwg.mxu0
    %s508 = scalar_lea.vmem %s16, 96
    %v509 = vld [vmem:[%s508] sm:$0xff]
    %v510 = vld [vmem:[%s508 + $0x8] sm:$0xff]
    %v511 = vld [vmem:[%s508 + $0x10] sm:$0xff]
    %v512 = vld [vmem:[%s508 + $0x18] sm:$0xff]
    %s513 = scalar_lea.vmem %s17, 3
    %v514 = vld [vmem:[%s513] sm:$0x1]
    %v516 = vperm.slane %v514, 0
    %518 = vrot.lane.b32.xlu0 %v408, 32
    %v519 = vpop.permute.xlu0 %518
    %v520 = vsel %vm89, %v519, 0
    %522 = vmatpush.msra.mxu0 0.0
    %523 = vmatpush.msra.mxu0 0.0
    %524 = vmatpush.msra.mxu0 0.0
    %525 = vmatpush.msra.mxu0 0.0
    %526 = vmatpush.msra.mxu0 0.0
    %527 = vmatpush.msra.mxu0 0.0
    %528 = vmatpush.msra.mxu0 0.0
    %529 = vmatpush.msra.mxu0 0.0
    %530 = vmatpush.msra.mxu0 0.0
    %531 = vmatpush.msra.mxu0 0.0
    %532 = vmatpush.msra.mxu0 0.0
    %533 = vmatpush.msra.mxu0 0.0
    %534 = vmatpush.msra.mxu0 %v512
    %535 = vmatpush.msra.mxu0 %v511
    %536 = vmatpush.msra.mxu0 %v510
    %537 = vmatpush.msra.mxu0 %v509
    %538 = vmatmul.f32.gmra.mxu0 %v520
    %v539 = vpop.f32.mrf.mxu0
    %v540 = vadd.f32 %v516, %v539
    %541 = vdwg.mxu0
    %542 = vmatpush.msra.mxu0 0.0
    %543 = vmatpush.msra.mxu0 0.0
    %544 = vmatpush.msra.mxu0 0.0
    %545 = vmatpush.msra.mxu0 0.0
    %546 = vmatpush.msra.mxu0 0.0
    %547 = vmatpush.msra.mxu0 0.0
    %548 = vmatpush.msra.mxu0 0.0
    %549 = vmatpush.msra.mxu0 0.0
    %550 = vmatpush.msra.mxu0 0.0
    %551 = vmatpush.msra.mxu0 0.0
    %552 = vmatpush.msra.mxu0 0.0
    %553 = vmatpush.msra.mxu0 0.0
    %554 = vmatpush.msra.mxu0 %v383
    %555 = vmatpush.msra.mxu0 %v382
    %556 = vmatpush.msra.mxu0 %v381
    %557 = vmatpush.msra.mxu0 %v380
    %558 = vmatmul.f32.gmra.mxu0 %v358
    %v559 = vpop.f32.mrf.mxu0
    %v560 = vadd.f32 %v386, %v559
    %561 = vdwg.mxu0
    %v562 = vmax.f32 %v560, 0.0
    %v564 = vsel %vm89, %v562, 0
    %566 = vmatpush.msra.mxu0 0.0
    %567 = vmatpush.msra.mxu0 0.0
    %568 = vmatpush.msra.mxu0 0.0
    %569 = vmatpush.msra.mxu0 0.0
    %570 = vmatpush.msra.mxu0 0.0
    %571 = vmatpush.msra.mxu0 0.0
    %572 = vmatpush.msra.mxu0 0.0
    %573 = vmatpush.msra.mxu0 0.0
    %574 = vmatpush.msra.mxu0 0.0
    %575 = vmatpush.msra.mxu0 0.0
    %576 = vmatpush.msra.mxu0 0.0
    %577 = vmatpush.msra.mxu0 0.0
    %578 = vmatpush.msra.mxu0 %v412
    %579 = vmatpush.msra.mxu0 %v411
    %580 = vmatpush.msra.mxu0 %v410
    %581 = vmatpush.msra.mxu0 %v409
    %582 = vmatmul.f32.gmra.mxu0 %v564
    %v583 = vpop.f32.mrf.mxu0
    %v584 = vadd.f32 %v415, %v583
    %585 = vdwg.mxu0
    %586 = vrot.lane.b32.xlu0 %v562, 96
    %v587 = vpop.permute.xlu0 %586
    %v588 = vsel %vm89, %v587, 0
    %590 = vmatpush.msra.mxu0 0.0
    %591 = vmatpush.msra.mxu0 0.0
    %592 = vmatpush.msra.mxu0 0.0
    %593 = vmatpush.msra.mxu0 0.0
    %594 = vmatpush.msra.mxu0 0.0
    %595 = vmatpush.msra.mxu0 0.0
    %596 = vmatpush.msra.mxu0 0.0
    %597 = vmatpush.msra.mxu0 0.0
    %598 = vmatpush.msra.mxu0 0.0
    %599 = vmatpush.msra.mxu0 0.0
    %600 = vmatpush.msra.mxu0 0.0
    %601 = vmatpush.msra.mxu0 0.0
    %602 = vmatpush.msra.mxu0 %v444
    %603 = vmatpush.msra.mxu0 %v443
    %604 = vmatpush.msra.mxu0 %v442
    %605 = vmatpush.msra.mxu0 %v441
    %606 = vmatmul.f32.gmra.mxu0 %v588
    %v607 = vpop.f32.mrf.mxu0
    %v608 = vadd.f32 %v448, %v607
    %609 = vdwg.mxu0
    %610 = vrot.lane.b32.xlu0 %v562, 64
    %v611 = vpop.permute.xlu0 %610
    %v612 = vsel %vm89, %v611, 0
    %614 = vmatpush.msra.mxu0 0.0
    %615 = vmatpush.msra.mxu0 0.0
    %616 = vmatpush.msra.mxu0 0.0
    %617 = vmatpush.msra.mxu0 0.0
    %618 = vmatpush.msra.mxu0 0.0
    %619 = vmatpush.msra.mxu0 0.0
    %620 = vmatpush.msra.mxu0 0.0
    %621 = vmatpush.msra.mxu0 0.0
    %622 = vmatpush.msra.mxu0 0.0
    %623 = vmatpush.msra.mxu0 0.0
    %624 = vmatpush.msra.mxu0 0.0
    %625 = vmatpush.msra.mxu0 0.0
    %626 = vmatpush.msra.mxu0 %v478
    %627 = vmatpush.msra.mxu0 %v477
    %628 = vmatpush.msra.mxu0 %v476
    %629 = vmatpush.msra.mxu0 %v475
    %630 = vmatmul.f32.gmra.mxu0 %v612
    %v631 = vpop.f32.mrf.mxu0
    %v632 = vadd.f32 %v482, %v631
    %633 = vdwg.mxu0
    %634 = vrot.lane.b32.xlu0 %v562, 32
    %v635 = vpop.permute.xlu0 %634
    %v636 = vsel %vm89, %v635, 0
    %638 = vmatpush.msra.mxu0 0.0
    %639 = vmatpush.msra.mxu0 0.0
    %640 = vmatpush.msra.mxu0 0.0
    %641 = vmatpush.msra.mxu0 0.0
    %642 = vmatpush.msra.mxu0 0.0
    %643 = vmatpush.msra.mxu0 0.0
    %644 = vmatpush.msra.mxu0 0.0
    %645 = vmatpush.msra.mxu0 0.0
    %646 = vmatpush.msra.mxu0 0.0
    %647 = vmatpush.msra.mxu0 0.0
    %648 = vmatpush.msra.mxu0 0.0
    %649 = vmatpush.msra.mxu0 0.0
    %650 = vmatpush.msra.mxu0 %v512
    %651 = vmatpush.msra.mxu0 %v511
    %652 = vmatpush.msra.mxu0 %v510
    %653 = vmatpush.msra.mxu0 %v509
    %654 = vmatmul.f32.gmra.mxu0 %v636
    %v655 = vpop.f32.mrf.mxu0
    %v656 = vadd.f32 %v516, %v655
    %657 = vdwg.mxu0
    %v658 = vlaneseq
    %v659 = vand.u32 %v658, 127
    %v660 = vcvt.s32.f32 %v659
    %vm661 = vcmask 25600
    %v662 = vsel %vm661, %v303, -inf
    %663 = vmax.xlane.f32.xlu0 %v662
    %v664 = vpop.xlane.xlu0 %663
    %vm665 = vcmp.ge.f32.partialorder %v303, %v664
    %v666 = vsel %vm665, %v660, 4.0
    %v667 = vsel %vm661, %v666, inf
    %668 = vmin.xlane.f32.xlu0 %v667
    %v669 = vpop.xlane.xlu0 %668
    %vm670 = vcmp.eq.f32.partialorder %v660, %v669
    %v671 = vsel %vm670, 1, 0
    %v672 = vcvt.s32.f32 %v671
    %vm673 = vcmp.gt.f32.partialorder %v672, 0.5
    %v674 = vsel %vm673, -1e+30, %v303
    %v675 = vsel %vm661, %v674, -inf
    %676 = vmax.xlane.f32.xlu0 %v675
    %v677 = vpop.xlane.xlu0 %676
    %vm678 = vcmp.ge.f32.partialorder %v674, %v677
    %v679 = vsel %vm678, %v660, 4.0
    %v680 = vsel %vm661, %v679, inf
    %681 = vmin.xlane.f32.xlu0 %v680
    %v682 = vpop.xlane.xlu0 %681
    %vm683 = vcmp.eq.f32.partialorder %v660, %v682
    %v684 = vsel %vm683, 1, 0
    %v685 = vcvt.s32.f32 %v684
    %v686 = vsub.f32 %v677, %v664
    %v687 = vmul.f32 %v686, 1.442695
    %v688 = vpow.pop %v687
    %v689 = vadd.f32 %v688, 1.0
    %v690 = vrcp.pop %v689
    %v691 = vmul.f32 %v689, %v690
    %v692 = vsub.f32 1.0, %v691
    %v693 = vmul.f32 %v690, %v692
    %v694 = vadd.f32 %v690, %v693
    %vm695 = vweird.f32 %v689
    %vm696 = vweird.f32 %v690
    %vm697 = vmor %vm695, %vm696
    %v698 = vsel %vm697, %v690, %v694
    %v699 = vand.u32 2147483647, %v689
    %vm700 = vcmp.eq.f32.partialorder %v699, 8.507059e+37
    %v701 = vand.u32 %v689, 2147483648
    %v702 = vor.u32 1.1754944e-38, %v701
    %v703 = vsel %vm700, %v702, %v698
    %v704 = vmul.f32 1.0, %v703
    %v705 = vmul.f32 %v688, %v704
    %v706 = vmul.f32 %v704, %v672
    %v707 = vmul.f32 %v705, %v685
    %v708 = vadd.f32 %v706, %v707
    %710 = vset.pattern.permute.xlu0 0
    %711 = vperm.xlu0 %710, %v708
    %v712 = vpop.permute.xlu0 %711
    %v714 = vmul.f32 %v712, %v438
    %715 = vset.pattern.permute.xlu0 1
    %716 = vperm.xlu0 %715, %v708
    %v717 = vpop.permute.xlu0 %716
    %v719 = vmul.f32 %v717, %v472
    %v720 = vadd.f32 %v714, %v719
    %721 = vset.pattern.permute.xlu0 2
    %722 = vperm.xlu0 %721, %v708
    %v723 = vpop.permute.xlu0 %722
    %v725 = vmul.f32 %v723, %v506
    %v726 = vadd.f32 %v720, %v725
    %727 = vset.pattern.permute.xlu0 3
    %728 = vperm.xlu0 %727, %v708
    %v729 = vpop.permute.xlu0 %728
    %v731 = vmul.f32 %v729, %v540
    %v732 = vadd.f32 %v726, %v731
    %v733 = vsub.f32 %v303, %v664
    %v734 = vmul.f32 %v733, 1.442695
    %v735 = vpow.pop %v734
    %v736 = vsel %vm661, %v735, 0.0
    %737 = vadd.xlane.f32.xlu0 %v736
    %v738 = vpop.xlane.xlu0 %737
    %v739 = vrcp.pop %v738
    %v740 = vmul.f32 %v738, %v739
    %v741 = vsub.f32 1.0, %v740
    %v742 = vmul.f32 %v739, %v741
    %v743 = vadd.f32 %v739, %v742
    %vm744 = vweird.f32 %v738
    %vm745 = vweird.f32 %v739
    %vm746 = vmor %vm744, %vm745
    %v747 = vsel %vm746, %v739, %v743
    %v748 = vand.u32 2147483647, %v738
    %vm749 = vcmp.eq.f32.partialorder %v748, 8.507059e+37
    %v750 = vand.u32 %v738, 2147483648
    %v751 = vor.u32 1.1754944e-38, %v750
    %v752 = vsel %vm749, %v751, %v747
    %v753 = vmul.f32 %v735, %v752
    %v754 = vadd.f32 %v672, %v685
    %v755 = vsel %vm661, %v753, 0.0
    %v756 = vrot.slane %v755, 4
    %v757 = vadd.f32 %v755, %v756
    %v758 = vrot.slane %v757, 2
    %v759 = vadd.f32 %v757, %v758
    %v760 = vrot.slane %v759, 1
    %v761 = vadd.f32 %v759, %v760
    %v762 = vrcp.pop 2.0
    %v763 = vmul.f32 2.0, %v762
    %v764 = vsub.f32 1.0, %v763
    %v765 = vmul.f32 %v762, %v764
    %v766 = vadd.f32 %v762, %v765
    %vm767 = vweird.f32 %v762
    %v768 = vsel %vm767, %v762, %v766
    %v769 = vmul.f32 %v761, %v768
    %v770 = vsel %vm661, %v754, 0.0
    %v771 = vrot.slane %v770, 4
    %v772 = vadd.f32 %v770, %v771
    %v773 = vrot.slane %v772, 2
    %v774 = vadd.f32 %v772, %v773
    %v775 = vrot.slane %v774, 1
    %v776 = vadd.f32 %v774, %v775
    %v777 = vrcp.pop 4.0
    %v778 = vmul.f32 4.0, %v777
    %v779 = vsub.f32 1.0, %v778
    %v780 = vmul.f32 %v777, %v779
    %v781 = vadd.f32 %v777, %v780
    %vm782 = vweird.f32 %v777
    %v783 = vsel %vm782, %v777, %v781
    %v784 = vmul.f32 %v776, %v783
    %v785 = vmul.f32 %v769, %v784
    %vm786 = vcmask 31744
    %v787 = vsel %vm786, %v785, 0.0
    %788 = vadd.xlane.f32.xlu0 %v787
    %v789 = vpop.xlane.xlu0 %788
    %v790 = vmul.f32 %v789, 4.0
    %v791 = vsel %vm661, %v348, -inf
    %792 = vmax.xlane.f32.xlu0 %v791
    %v793 = vpop.xlane.xlu0 %792
    %vm794 = vcmp.ge.f32.partialorder %v348, %v793
    %v795 = vsel %vm794, %v660, 4.0
    %v796 = vsel %vm661, %v795, inf
    %797 = vmin.xlane.f32.xlu0 %v796
    %v798 = vpop.xlane.xlu0 %797
    %vm799 = vcmp.eq.f32.partialorder %v660, %v798
    %v800 = vsel %vm799, 1, 0
    %v801 = vcvt.s32.f32 %v800
    %vm802 = vcmp.gt.f32.partialorder %v801, 0.5
    %v803 = vsel %vm802, -1e+30, %v348
    %v804 = vsel %vm661, %v803, -inf
    %805 = vmax.xlane.f32.xlu0 %v804
    %v806 = vpop.xlane.xlu0 %805
    %vm807 = vcmp.ge.f32.partialorder %v803, %v806
    %v808 = vsel %vm807, %v660, 4.0
    %v809 = vsel %vm661, %v808, inf
    %810 = vmin.xlane.f32.xlu0 %v809
    %v811 = vpop.xlane.xlu0 %810
    %vm812 = vcmp.eq.f32.partialorder %v660, %v811
    %v813 = vsel %vm812, 1, 0
    %v814 = vcvt.s32.f32 %v813
    %v815 = vsub.f32 %v806, %v793
    %v816 = vmul.f32 %v815, 1.442695
    %v817 = vpow.pop %v816
    %v818 = vadd.f32 %v817, 1.0
    %v819 = vrcp.pop %v818
    %v820 = vmul.f32 %v818, %v819
    %v821 = vsub.f32 1.0, %v820
    %v822 = vmul.f32 %v819, %v821
    %v823 = vadd.f32 %v819, %v822
    %vm824 = vweird.f32 %v818
    %vm825 = vweird.f32 %v819
    %vm826 = vmor %vm824, %vm825
    %v827 = vsel %vm826, %v819, %v823
    %v828 = vand.u32 2147483647, %v818
    %vm829 = vcmp.eq.f32.partialorder %v828, 8.507059e+37
    %v830 = vand.u32 %v818, 2147483648
    %v831 = vor.u32 1.1754944e-38, %v830
    %v832 = vsel %vm829, %v831, %v827
    %v833 = vmul.f32 1.0, %v832
    %v834 = vmul.f32 %v817, %v833
    %v835 = vmul.f32 %v833, %v801
    %v836 = vmul.f32 %v834, %v814
    %v837 = vadd.f32 %v835, %v836
    %839 = vset.pattern.permute.xlu0 0
    %840 = vperm.xlu0 %839, %v837
    %v841 = vpop.permute.xlu0 %840
    %v843 = vmul.f32 %v841, %v438
    %844 = vset.pattern.permute.xlu0 1
    %845 = vperm.xlu0 %844, %v837
    %v846 = vpop.permute.xlu0 %845
    %v848 = vmul.f32 %v846, %v472
    %v849 = vadd.f32 %v843, %v848
    %850 = vset.pattern.permute.xlu0 2
    %851 = vperm.xlu0 %850, %v837
    %v852 = vpop.permute.xlu0 %851
    %v854 = vmul.f32 %v852, %v506
    %v855 = vadd.f32 %v849, %v854
    %856 = vset.pattern.permute.xlu0 3
    %857 = vperm.xlu0 %856, %v837
    %v858 = vpop.permute.xlu0 %857
    %v860 = vmul.f32 %v858, %v540
    %v861 = vadd.f32 %v855, %v860
    %v862 = vsub.f32 %v348, %v793
    %v863 = vmul.f32 %v862, 1.442695
    %v864 = vpow.pop %v863
    %v865 = vsel %vm661, %v864, 0.0
    %866 = vadd.xlane.f32.xlu0 %v865
    %v867 = vpop.xlane.xlu0 %866
    %v868 = vrcp.pop %v867
    %v869 = vmul.f32 %v867, %v868
    %v870 = vsub.f32 1.0, %v869
    %v871 = vmul.f32 %v868, %v870
    %v872 = vadd.f32 %v868, %v871
    %vm873 = vweird.f32 %v867
    %vm874 = vweird.f32 %v868
    %vm875 = vmor %vm873, %vm874
    %v876 = vsel %vm875, %v868, %v872
    %v877 = vand.u32 2147483647, %v867
    %vm878 = vcmp.eq.f32.partialorder %v877, 8.507059e+37
    %v879 = vand.u32 %v867, 2147483648
    %v880 = vor.u32 1.1754944e-38, %v879
    %v881 = vsel %vm878, %v880, %v876
    %v882 = vmul.f32 %v864, %v881
    %v883 = vadd.f32 %v801, %v814
    %v884 = vsel %vm661, %v882, 0.0
    %v885 = vrot.slane %v884, 4
    %v886 = vadd.f32 %v884, %v885
    %v887 = vrot.slane %v886, 2
    %v888 = vadd.f32 %v886, %v887
    %v889 = vrot.slane %v888, 1
    %v890 = vadd.f32 %v888, %v889
    %v891 = vmul.f32 %v890, %v768
    %v892 = vsel %vm661, %v883, 0.0
    %v893 = vrot.slane %v892, 4
    %v894 = vadd.f32 %v892, %v893
    %v895 = vrot.slane %v894, 2
    %v896 = vadd.f32 %v894, %v895
    %v897 = vrot.slane %v896, 1
    %v898 = vadd.f32 %v896, %v897
    %v899 = vmul.f32 %v898, %v783
    %v900 = vmul.f32 %v891, %v899
    %v901 = vsel %vm786, %v900, 0.0
    %902 = vadd.xlane.f32.xlu0 %v901
    %v903 = vpop.xlane.xlu0 %902
    %v904 = vmul.f32 %v903, 4.0
    %v905 = vsel %vm786, %v378, -inf
    %906 = vmax.xlane.f32.xlu0 %v905
    %v907 = vpop.xlane.xlu0 %906
    %vm908 = vcmp.ge.f32.partialorder %v378, %v907
    %v909 = vsel %vm908, %v660, 4.0
    %v910 = vsel %vm786, %v909, inf
    %911 = vmin.xlane.f32.xlu0 %v910
    %v912 = vpop.xlane.xlu0 %911
    %vm913 = vcmp.eq.f32.partialorder %v660, %v912
    %v914 = vsel %vm913, 1, 0
    %v915 = vcvt.s32.f32 %v914
    %vm916 = vcmp.gt.f32.partialorder %v915, 0.5
    %v917 = vsel %vm916, -1e+30, %v378
    %v918 = vsel %vm786, %v917, -inf
    %919 = vmax.xlane.f32.xlu0 %v918
    %v920 = vpop.xlane.xlu0 %919
    %vm921 = vcmp.ge.f32.partialorder %v917, %v920
    %v922 = vsel %vm921, %v660, 4.0
    %v923 = vsel %vm786, %v922, inf
    %924 = vmin.xlane.f32.xlu0 %v923
    %v925 = vpop.xlane.xlu0 %924
    %vm926 = vcmp.eq.f32.partialorder %v660, %v925
    %v927 = vsel %vm926, 1, 0
    %v928 = vcvt.s32.f32 %v927
    %v929 = vsub.f32 %v920, %v907
    %v930 = vmul.f32 %v929, 1.442695
    %v931 = vpow.pop %v930
    %v932 = vadd.f32 %v931, 1.0
    %v933 = vrcp.pop %v932
    %v934 = vmul.f32 %v932, %v933
    %v935 = vsub.f32 1.0, %v934
    %v936 = vmul.f32 %v933, %v935
    %v937 = vadd.f32 %v933, %v936
    %vm938 = vweird.f32 %v932
    %vm939 = vweird.f32 %v933
    %vm940 = vmor %vm938, %vm939
    %v941 = vsel %vm940, %v933, %v937
    %v942 = vand.u32 2147483647, %v932
    %vm943 = vcmp.eq.f32.partialorder %v942, 8.507059e+37
    %v944 = vand.u32 %v932, 2147483648
    %v945 = vor.u32 1.1754944e-38, %v944
    %v946 = vsel %vm943, %v945, %v941
    %v947 = vmul.f32 1.0, %v946
    %v948 = vmul.f32 %v931, %v947
    %v949 = vmul.f32 %v947, %v915
    %v950 = vmul.f32 %v948, %v928
    %v951 = vadd.f32 %v949, %v950
    %953 = vset.pattern.permute.xlu0 0
    %954 = vperm.xlu0 %953, %v951
    %v955 = vpop.permute.xlu0 %954
    %v957 = vmul.f32 %v955, %v584
    %958 = vset.pattern.permute.xlu0 1
    %959 = vperm.xlu0 %958, %v951
    %v960 = vpop.permute.xlu0 %959
    %v962 = vmul.f32 %v960, %v608
    %v963 = vadd.f32 %v957, %v962
    %964 = vset.pattern.permute.xlu0 2
    %965 = vperm.xlu0 %964, %v951
    %v966 = vpop.permute.xlu0 %965
    %v968 = vmul.f32 %v966, %v632
    %v969 = vadd.f32 %v963, %v968
    %970 = vset.pattern.permute.xlu0 3
    %971 = vperm.xlu0 %970, %v951
    %v972 = vpop.permute.xlu0 %971
    %v974 = vmul.f32 %v972, %v656
    %v975 = vadd.f32 %v969, %v974
    %v976 = vsub.f32 %v378, %v907
    %v977 = vmul.f32 %v976, 1.442695
    %v978 = vpow.pop %v977
    %v979 = vsel %vm786, %v978, 0.0
    %980 = vadd.xlane.f32.xlu0 %v979
    %v981 = vpop.xlane.xlu0 %980
    %v982 = vrcp.pop %v981
    %v983 = vmul.f32 %v981, %v982
    %v984 = vsub.f32 1.0, %v983
    %v985 = vmul.f32 %v982, %v984
    %v986 = vadd.f32 %v982, %v985
    %vm987 = vweird.f32 %v981
    %vm988 = vweird.f32 %v982
    %vm989 = vmor %vm987, %vm988
    %v990 = vsel %vm989, %v982, %v986
    %v991 = vand.u32 2147483647, %v981
    %vm992 = vcmp.eq.f32.partialorder %v991, 8.507059e+37
    %v993 = vand.u32 %v981, 2147483648
    %v994 = vor.u32 1.1754944e-38, %v993
    %v995 = vsel %vm992, %v994, %v990
    %v996 = vmul.f32 %v978, %v995
    %v997 = vadd.f32 %v915, %v928
    %vm998 = vcmask 7168
    %v999 = vsel %vm998, %v85, 0.0
    %v1000 = vrot.slane %v999, 4
    %v1001 = vadd.f32 %v999, %v1000
    %v1002 = vrot.slane %v1001, 2
    %v1003 = vadd.f32 %v1001, %v1002
    %v1004 = vrot.slane %v1003, 1
    %v1005 = vadd.f32 %v1003, %v1004
    %v1006 = vmax.f32 %v1005, 1.0
    %v1007 = vmul.f32 %v996, %v130
    %v1008 = vsel %vm786, %v1007, 0.0
    %v1009 = vrot.slane %v1008, 4
    %v1010 = vadd.f32 %v1008, %v1009
    %v1011 = vrot.slane %v1010, 2
    %v1012 = vadd.f32 %v1010, %v1011
    %v1013 = vrot.slane %v1012, 1
    %v1014 = vadd.f32 %v1012, %v1013
    %1016 = vset.pattern.permute.xlu0 0
    %1017 = vperm.xlu0 %1016, %v1006
    %v1018 = vpop.permute.xlu0 %1017
    %v1020 = vrcp.pop %v1018
    %v1021 = vmul.f32 %v1018, %v1020
    %v1022 = vsub.f32 1.0, %v1021
    %v1023 = vmul.f32 %v1020, %v1022
    %v1024 = vadd.f32 %v1020, %v1023
    %vm1025 = vweird.f32 %v1018
    %vm1026 = vweird.f32 %v1020
    %vm1027 = vmor %vm1025, %vm1026
    %v1028 = vsel %vm1027, %v1020, %v1024
    %v1029 = vand.u32 2147483647, %v1018
    %vm1030 = vcmp.eq.f32.partialorder %v1029, 8.507059e+37
    %v1031 = vand.u32 %v1018, 2147483648
    %v1032 = vor.u32 1.1754944e-38, %v1031
    %v1033 = vsel %vm1030, %v1032, %v1028
    %v1034 = vmul.f32 %v1014, %v1033
    %v1035 = vmul.f32 %v997, %v130
    %v1036 = vsel %vm786, %v1035, 0.0
    %v1037 = vrot.slane %v1036, 4
    %v1038 = vadd.f32 %v1036, %v1037
    %v1039 = vrot.slane %v1038, 2
    %v1040 = vadd.f32 %v1038, %v1039
    %v1041 = vrot.slane %v1040, 1
    %v1042 = vadd.f32 %v1040, %v1041
    %v1043 = vmul.f32 %v1006, 2.0
    %1045 = vset.pattern.permute.xlu0 0
    %1046 = vperm.xlu0 %1045, %v1043
    %v1047 = vpop.permute.xlu0 %1046
    %v1049 = vrcp.pop %v1047
    %v1050 = vmul.f32 %v1047, %v1049
    %v1051 = vsub.f32 1.0, %v1050
    %v1052 = vmul.f32 %v1049, %v1051
    %v1053 = vadd.f32 %v1049, %v1052
    %vm1054 = vweird.f32 %v1047
    %vm1055 = vweird.f32 %v1049
    %vm1056 = vmor %vm1054, %vm1055
    %v1057 = vsel %vm1056, %v1049, %v1053
    %v1058 = vand.u32 2147483647, %v1047
    %vm1059 = vcmp.eq.f32.partialorder %v1058, 8.507059e+37
    %v1060 = vand.u32 %v1047, 2147483648
    %v1061 = vor.u32 1.1754944e-38, %v1060
    %v1062 = vsel %vm1059, %v1061, %v1057
    %v1063 = vmul.f32 %v1042, %v1062
    %v1064 = vmul.f32 %v1034, %v1063
    %v1065 = vsel %vm786, %v1064, 0.0
    %1066 = vadd.xlane.f32.xlu0 %v1065
    %v1067 = vpop.xlane.xlu0 %1066
    %v1068 = vmul.f32 %v1067, 4.0
    %v1069 = vmul.f32 %v975, %v130
    %v1070 = vadd.f32 %v790, %v904
    %v1071 = vadd.f32 %v1070, %v1068
    %v1072 = vmul.f32 %v1071, 0.01
    %vm1073 = vcmask 0
    %1074 = vst.msk [vmem:[#allocation5] sm:$0x1] %vm1073, %v1072
    %v1075 = vld [vmem:[%s20] sm:$0xff]
    %v1076 = vld [vmem:[%s20 + $0x8] sm:$0xff]
    %v1077 = vld [vmem:[%s20 + $0x10] sm:$0xff]
    %v1078 = vld [vmem:[%s20 + $0x18] sm:$0xff]
    %v1079 = vld [vmem:[%s21] sm:$0x1]
    %v1081 = vperm.slane %v1079, 0
    %v1084 = vsel %vm89, %v861, 0
    %1086 = vmatpush.msra.mxu0 0.0
    %1087 = vmatpush.msra.mxu0 0.0
    %1088 = vmatpush.msra.mxu0 0.0
    %1089 = vmatpush.msra.mxu0 0.0
    %1090 = vmatpush.msra.mxu0 0.0
    %1091 = vmatpush.msra.mxu0 0.0
    %1092 = vmatpush.msra.mxu0 0.0
    %1093 = vmatpush.msra.mxu0 0.0
    %1094 = vmatpush.msra.mxu0 0.0
    %1095 = vmatpush.msra.mxu0 0.0
    %1096 = vmatpush.msra.mxu0 0.0
    %1097 = vmatpush.msra.mxu0 0.0
    %1098 = vmatpush.msra.mxu0 %v1078
    %1099 = vmatpush.msra.mxu0 %v1077
    %1100 = vmatpush.msra.mxu0 %v1076
    %1101 = vmatpush.msra.mxu0 %v1075
    %1102 = vmatmul.f32.gmra.mxu0 %v1084
    %v1103 = vpop.f32.mrf.mxu0
    %v1104 = vadd.f32 %v1081, %v1103
    %1105 = vdwg.mxu0
    %vm1106 = vcmask 9216
    %1107 = vst.msk [vmem:[#allocation3] sm:$0x3] %vm1106, %v1104
    %v1108 = vld [vmem:[%s1] sm:$0xff]
    %v1109 = vld [vmem:[%s5] sm:$0xff]
    %vm1110 = vcmask 15360
    %v1112 = vsel %vm1110, %v1109, 0
    %vm1114 = vcmask 1041408
    %v1116 = vsel %vm1114, %v732, 0
    %1118 = vmatpush.msra.mxu0 0.0
    %1119 = vmatpush.msra.mxu0 0.0
    %1120 = vmatpush.msra.mxu0 0.0
    %1121 = vmatpush.msra.mxu0 0.0
    %1122 = vmatpush.msra.mxu0 0.0
    %1123 = vmatpush.msra.mxu0 0.0
    %1124 = vmatpush.msra.mxu0 0.0
    %1125 = vmatpush.msra.mxu0 0.0
    %1126 = vmatpush.msra.mxu0 0.0
    %1127 = vmatpush.msra.mxu0 0.0
    %1128 = vmatpush.msra.mxu0 0.0
    %1129 = vmatpush.msra.mxu0 0.0
    %1130 = vmatpush.msra.mxu0 0.0
    %1131 = vmatpush.msra.mxu0 0.0
    %1132 = vmatpush.msra.mxu0 0.0
    %1133 = vmatpush.msra.mxu0 %v1116
    %1134 = vmatmul.f32.gmra.mxu0 %v1112
    %v1135 = vpop.f32.mrf.mxu0
    %v1136 = vadd.f32 0.0, %v1135
    %1137 = vdwg.mxu0
    %v1138 = vld [vmem:[%s18] sm:$0xff]
    %v1139 = vld [vmem:[%s18 + $0x8] sm:$0xff]
    %v1140 = vld [vmem:[%s18 + $0x10] sm:$0xff]
    %v1141 = vld [vmem:[%s18 + $0x18] sm:$0xff]
    %v1142 = vld [vmem:[%s18 + $0x20] sm:$0xff]
    %v1143 = vld [vmem:[%s18 + $0x28] sm:$0xff]
    %v1144 = vld [vmem:[%s18 + $0x30] sm:$0xff]
    %v1145 = vld [vmem:[%s18 + $0x38] sm:$0xff]
    %v1146 = vld [vmem:[%s18 + $0x40] sm:$0xff]
    %v1147 = vld [vmem:[%s18 + $0x48] sm:$0xff]
    %v1148 = vld [vmem:[%s18 + $0x50] sm:$0xff]
    %v1149 = vld [vmem:[%s18 + $0x58] sm:$0xff]
    %1150 = vmatpush.msra.mxu0 0.0
    %1151 = vmatpush.msra.mxu0 0.0
    %1152 = vmatpush.msra.mxu0 0.0
    %1153 = vmatpush.msra.mxu0 0.0
    %1154 = vmatpush.msra.mxu0 0.0
    %1155 = vmatpush.msra.mxu0 0.0
    %1156 = vmatpush.msra.mxu0 0.0
    %1157 = vmatpush.msra.mxu0 0.0
    %1158 = vmatpush.msra.mxu0 0.0
    %1159 = vmatpush.msra.mxu0 0.0
    %1160 = vmatpush.msra.mxu0 0.0
    %1161 = vmatpush.msra.mxu0 0.0
    %1162 = vmatpush.msra.mxu0 %v1145
    %1163 = vmatpush.msra.mxu0 %v1144
    %1164 = vmatpush.msra.mxu0 %v1143
    %1165 = vmatpush.msra.mxu0 %v1142
    %1166 = vmatmul.f32.gmra.mxu0 %v358
    %v1167 = vpop.f32.mrf.mxu0
    %v1168 = vadd.f32 0.0, %v1167
    %1169 = vdwg.mxu0
    %v1171 = vsel %vm89, %v1108, 0
    %1173 = vmatpush.msra.mxu0 0.0
    %1174 = vmatpush.msra.mxu0 0.0
    %1175 = vmatpush.msra.mxu0 0.0
    %1176 = vmatpush.msra.mxu0 0.0
    %1177 = vmatpush.msra.mxu0 0.0
    %1178 = vmatpush.msra.mxu0 0.0
    %1179 = vmatpush.msra.mxu0 0.0
    %1180 = vmatpush.msra.mxu0 0.0
    %1181 = vmatpush.msra.mxu0 0.0
    %1182 = vmatpush.msra.mxu0 0.0
    %1183 = vmatpush.msra.mxu0 0.0
    %1184 = vmatpush.msra.mxu0 0.0
    %1185 = vmatpush.msra.mxu0 %v1141
    %1186 = vmatpush.msra.mxu0 %v1140
    %1187 = vmatpush.msra.mxu0 %v1139
    %1188 = vmatpush.msra.mxu0 %v1138
    %1189 = vmatmul.f32.gmra.mxu0 %v1171
    %v1190 = vpop.f32.mrf.mxu0
    %v1191 = vadd.f32 %v1168, %v1190
    %1192 = vdwg.mxu0
    %v1194 = vsel %vm89, %v1136, 0
    %1196 = vmatpush.msra.mxu0 0.0
    %1197 = vmatpush.msra.mxu0 0.0
    %1198 = vmatpush.msra.mxu0 0.0
    %1199 = vmatpush.msra.mxu0 0.0
    %1200 = vmatpush.msra.mxu0 0.0
    %1201 = vmatpush.msra.mxu0 0.0
    %1202 = vmatpush.msra.mxu0 0.0
    %1203 = vmatpush.msra.mxu0 0.0
    %1204 = vmatpush.msra.mxu0 0.0
    %1205 = vmatpush.msra.mxu0 0.0
    %1206 = vmatpush.msra.mxu0 0.0
    %1207 = vmatpush.msra.mxu0 0.0
    %1208 = vmatpush.msra.mxu0 %v1149
    %1209 = vmatpush.msra.mxu0 %v1148
    %1210 = vmatpush.msra.mxu0 %v1147
    %1211 = vmatpush.msra.mxu0 %v1146
    %1212 = vmatmul.f32.gmra.mxu0 %v1194
    %v1213 = vpop.f32.mrf.mxu0
    %v1214 = vadd.f32 0.0, %v1213
    %1215 = vdwg.mxu0
    %v1216 = vadd.f32 %v1191, %v1214
    %v1217 = vld [vmem:[%s19] sm:$0x1]
    %v1219 = vperm.slane %v1217, 0
    %v1221 = vadd.f32 %v1216, %v1219
    %v1222 = vld [vmem:[%s3] sm:$0xff]
    %1224 = vset.pattern.permute.xlu0 0
    %1225 = vperm.xlu0 %1224, %v1222
    %v1226 = vpop.permute.xlu0 %1225
    %v1228 = vadd.f32 %v1226, %v1221
    %v1229 = vmul.f32 %v1228, %v130
    %vm1230 = vcmask 23552
    %1231 = vst.msk [vmem:[%s24] sm:$0xff] %vm1230, %v1229
    %v1232 = vld [vmem:[%s22] sm:$0xff]
    %v1233 = vld [vmem:[%s22 + $0x8] sm:$0xff]
    %v1234 = vld [vmem:[%s22 + $0x10] sm:$0xff]
    %v1235 = vld [vmem:[%s22 + $0x18] sm:$0xff]
    %v1236 = vld [vmem:[%s22 + $0x20] sm:$0xff]
    %v1237 = vld [vmem:[%s22 + $0x28] sm:$0xff]
    %v1238 = vld [vmem:[%s22 + $0x30] sm:$0xff]
    %v1239 = vld [vmem:[%s22 + $0x38] sm:$0xff]
    %v1240 = vld [vmem:[%s22 + $0x40] sm:$0xff]
    %v1241 = vld [vmem:[%s22 + $0x48] sm:$0xff]
    %v1242 = vld [vmem:[%s22 + $0x50] sm:$0xff]
    %v1243 = vld [vmem:[%s22 + $0x58] sm:$0xff]
    %1244 = vmatpush.msra.mxu0 0.0
    %1245 = vmatpush.msra.mxu0 0.0
    %1246 = vmatpush.msra.mxu0 0.0
    %1247 = vmatpush.msra.mxu0 0.0
    %1248 = vmatpush.msra.mxu0 0.0
    %1249 = vmatpush.msra.mxu0 0.0
    %1250 = vmatpush.msra.mxu0 0.0
    %1251 = vmatpush.msra.mxu0 0.0
    %1252 = vmatpush.msra.mxu0 0.0
    %1253 = vmatpush.msra.mxu0 0.0
    %1254 = vmatpush.msra.mxu0 0.0
    %1255 = vmatpush.msra.mxu0 0.0
    %1256 = vmatpush.msra.mxu0 %v1239
    %1257 = vmatpush.msra.mxu0 %v1238
    %1258 = vmatpush.msra.mxu0 %v1237
    %1259 = vmatpush.msra.mxu0 %v1236
    %1260 = vmatmul.f32.gmra.mxu0 %v358
    %v1261 = vpop.f32.mrf.mxu0
    %v1262 = vadd.f32 0.0, %v1261
    %1263 = vdwg.mxu0
    %1264 = vmatpush.msra.mxu0 0.0
    %1265 = vmatpush.msra.mxu0 0.0
    %1266 = vmatpush.msra.mxu0 0.0
    %1267 = vmatpush.msra.mxu0 0.0
    %1268 = vmatpush.msra.mxu0 0.0
    %1269 = vmatpush.msra.mxu0 0.0
    %1270 = vmatpush.msra.mxu0 0.0
    %1271 = vmatpush.msra.mxu0 0.0
    %1272 = vmatpush.msra.mxu0 0.0
    %1273 = vmatpush.msra.mxu0 0.0
    %1274 = vmatpush.msra.mxu0 0.0
    %1275 = vmatpush.msra.mxu0 0.0
    %1276 = vmatpush.msra.mxu0 %v1235
    %1277 = vmatpush.msra.mxu0 %v1234
    %1278 = vmatpush.msra.mxu0 %v1233
    %1279 = vmatpush.msra.mxu0 %v1232
    %1280 = vmatmul.f32.gmra.mxu0 %v1171
    %v1281 = vpop.f32.mrf.mxu0
    %v1282 = vadd.f32 %v1262, %v1281
    %1283 = vdwg.mxu0
    %v1285 = vsel %vm89, %v1069, 0
    %1287 = vmatpush.msra.mxu0 0.0
    %1288 = vmatpush.msra.mxu0 0.0
    %1289 = vmatpush.msra.mxu0 0.0
    %1290 = vmatpush.msra.mxu0 0.0
    %1291 = vmatpush.msra.mxu0 0.0
    %1292 = vmatpush.msra.mxu0 0.0
    %1293 = vmatpush.msra.mxu0 0.0
    %1294 = vmatpush.msra.mxu0 0.0
    %1295 = vmatpush.msra.mxu0 0.0
    %1296 = vmatpush.msra.mxu0 0.0
    %1297 = vmatpush.msra.mxu0 0.0
    %1298 = vmatpush.msra.mxu0 0.0
    %1299 = vmatpush.msra.mxu0 %v1243
    %1300 = vmatpush.msra.mxu0 %v1242
    %1301 = vmatpush.msra.mxu0 %v1241
    %1302 = vmatpush.msra.mxu0 %v1240
    %1303 = vmatmul.f32.gmra.mxu0 %v1285
    %v1304 = vpop.f32.mrf.mxu0
    %v1305 = vadd.f32 0.0, %v1304
    %1306 = vdwg.mxu0
    %v1307 = vadd.f32 %v1282, %v1305
    %v1308 = vld [vmem:[#allocation2] sm:$0x1]
    %v1310 = vperm.slane %v1308, 0
    %v1312 = vadd.f32 %v1307, %v1310
    %1313 = vst.msk [vmem:[%s26] sm:$0xff] %vm998, %v1312
    // Predicated region
    $region98: #{forward.5} parent=1 // pred_check
      _
    $region99: #{forward.5} parent=1 // pred_check_branch
      %1315 = sbr.rel (0) target = $region101
    $region100: #{forward.5} parent=1 // pred_region
      _
    $region101: #{forward.5} parent=1 // pred_fallthru
      _
    // Predicated region
    $region102: #{forward.5} parent=1 // pred_check
      _
    $region103: #{forward.5} parent=1 // pred_check_branch
      %1317 = sbr.rel (0) target = $region105
    $region104: #{forward.5} parent=1 // pred_region
      %1319 = vsyncadd [#allocation4], 0
      %s1321 = sshll.u32 [#allocation3], 4
      %s1322 = int_to_ptr.vmem [resolvable:$true] %s1321
      %s1323 = sshll.u32 %s25, 4
      %s1324 = int_to_ptr.hbm [resolvable:$true] %s1323
      %1326 = dma.vmem_to_hbm [thread:$0]  %s1322, 32, %s1324, [#allocation4]
    $region105: #{forward.5} parent=1 // pred_fallthru
      _
    // Predicated region
    $region106: #{forward.5} parent=1 // pred_check
      _
    $region107: #{forward.5} parent=1 // pred_check_branch
      %1328 = sbr.rel (0) target = $region109
    $region108: #{forward.5} parent=1 // pred_region
      _
    $region109: #{forward.5} parent=1 // pred_fallthru
      _
    // Predicated region
    $region110: #{forward.5} parent=1 // pred_check
      _
    $region111: #{forward.5} parent=1 // pred_check_branch
      %1330 = sbr.rel (0) target = $region113
    $region112: #{forward.5} parent=1 // pred_region
      %1332 = vsyncadd [#allocation6], 0
      %s1334 = sshll.u32 [#allocation5], 4
      %s1335 = int_to_ptr.vmem [resolvable:$true] %s1334
      %s1336 = sshll.u32 %s27, 4
      %s1337 = int_to_ptr.hbm [resolvable:$true] %s1336
      %1339 = dma.vmem_to_hbm [thread:$0]  %s1335, 16, %s1337, [#allocation6]
    $region113: #{forward.5} parent=1 // pred_fallthru
      _
    // Predicated region
    $region114: #{forward.5} parent=1 // pred_check
      _
    $region115: #{forward.5} parent=1 // pred_check_branch
      %1341 = sbr.rel (0) target = $region117
    $region116: #{forward.5} parent=1 // pred_region
      _
    $region117: #{forward.5} parent=1 // pred_fallthru
      _
    // Predicated region
    $region118: #{forward.5} parent=1 // pred_check
      _
    $region119: #{forward.5} parent=1 // pred_check_branch
      %1343 = sbr.rel (0) target = $region121
    $region120: #{forward.5} parent=1 // pred_region
      %1345 = dma.done [#allocation4], 32
    $region121: #{forward.5} parent=1 // pred_fallthru
      _
    // Predicated region
    $region122: #{forward.5} parent=1 // pred_check
      _
    $region123: #{forward.5} parent=1 // pred_check_branch
      %1347 = sbr.rel (0) target = $region125
    $region124: #{forward.5} parent=1 // pred_region
      _
    $region125: #{forward.5} parent=1 // pred_fallthru
      _
    // Predicated region
    $region126: #{forward.5} parent=1 // pred_check
      _
    $region127: #{forward.5} parent=1 // pred_check_branch
      %1349 = sbr.rel (0) target = $region129
    $region128: #{forward.5} parent=1 // pred_region
      %1351 = dma.done [#allocation6], 16
    $region129: #{forward.5} parent=1 // pred_fallthru
      _
    %1352 = vsyncpa [#allocation4], 1
    %1353 = vsyncpa [#allocation6], 1

</llo_original>
